<compile_context>
chip_gen: v7x
topology: tpu7x:2x2x1
jax: 0.10.0
libtpu: 0.0.40
codegen_flags: <defaults>
</compile_context>

<pallas_src>
import functools

import jax
import jax.numpy as jnp
from jax import lax
from jax.experimental import pallas as pl
from jax.experimental.pallas import tpu as pltpu


# ----------------------------------------------------------------------------
# Pallas kernel 1: fused conv1 + conv2 (per batch item).
#   y1 = relu(p1 @ W1 + b1)                          # conv1 via im2col patches
#   y2[s] = relu(sum_off y1[s+off] @ W2[off] + b2)   # conv2 as 4 shifted matmuls
# Output rows live on the 12x13 conv1 grid; the w=12 column is garbage (handled
# by zero fc1 weights), so no row compaction is needed.
# ----------------------------------------------------------------------------
def _make_conv12_kernel(offs, s_out):
    def kernel(p1_ref, w1_ref, b1_ref, w2s_ref, b2_ref, o_ref):
        p1 = p1_ref[0]                                                # (rows_pad, c*k*k)
        a1 = jnp.dot(p1, w1_ref[...], preferred_element_type=jnp.float32)
        y1 = jnp.maximum(a1 + b1_ref[...], 0.0).astype(jnp.bfloat16)  # (rows_pad, 128)

        acc = jnp.dot(y1[offs[0]:offs[0] + s_out], w2s_ref[0],
                      preferred_element_type=jnp.float32)
        for i in range(1, 4):
            acc = acc + jnp.dot(y1[offs[i]:offs[i] + s_out], w2s_ref[i],
                                preferred_element_type=jnp.float32)
        o_ref[0] = jnp.maximum(acc + b2_ref[...], 0.0).astype(o_ref.dtype)
    return kernel


def conv12_fused(p1, w1, b1, w2s, b2, *, s_out, offs):
    """p1:(N,rows_pad,cin_k) bf16 -> (N, s_out, 128) bf16 fused conv1+relu+conv2+relu."""
    n, rows_pad, cin_k = p1.shape
    c2 = w2s.shape[-1]
    return pl.pallas_call(
        _make_conv12_kernel(offs, s_out),
        out_shape=jax.ShapeDtypeStruct((n, s_out, c2), jnp.bfloat16),
        grid=(n,),
        in_specs=[
            pl.BlockSpec((1, rows_pad, cin_k), lambda b: (b, 0, 0)),
            pl.BlockSpec((cin_k, 128), lambda b: (0, 0)),
            pl.BlockSpec((1, 128), lambda b: (0, 0)),
            pl.BlockSpec((4, 128, c2), lambda b: (0, 0, 0)),
            pl.BlockSpec((1, c2), lambda b: (0, 0)),
        ],
        out_specs=pl.BlockSpec((1, s_out, c2), lambda b: (b, 0, 0)),
        compiler_params=pltpu.CompilerParams(
            dimension_semantics=("parallel",)),   # second TensorCore on v7x
    )(p1, w1, b1, w2s, b2)


# ----------------------------------------------------------------------------
# Pallas kernel 2: fused head  out = relu(x @ w1 + b1) @ w2 + b2
# K-tiled over the fc1 reduction (2 big tiles); fc2 weight/bias stay resident.
# ----------------------------------------------------------------------------
def _head_kernel(x_ref, w1_ref, b1_ref, w2_ref, b2_ref, o_ref, acc_ref):
    k = pl.program_id(0)

    @pl.when(k == 0)
    def _():
        acc_ref[...] = jnp.zeros_like(acc_ref)

    acc_ref[...] += jnp.dot(x_ref[...], w1_ref[...],
                            preferred_element_type=jnp.float32)

    @pl.when(k == pl.num_programs(0) - 1)
    def _():
        h = jnp.maximum(acc_ref[...] + b1_ref[...], 0.0)
        # dropout(p=0.25) is identity at inference time.
        out = jnp.dot(h.astype(w2_ref.dtype), w2_ref[...],
                      preferred_element_type=jnp.float32)
        o_ref[...] = (out + b2_ref[...]).astype(o_ref.dtype)


def _pick_k_tile(K, n_cols, max_tile_bytes=3 << 20):
    """Largest divisor of K whose (tk, n_cols) bf16 weight slab fits the budget."""
    max_tk = max(1, max_tile_bytes // (n_cols * 2))
    for steps in range(1, 65):
        if K % steps == 0 and K // steps <= max_tk:
            return K // steps
    return K


def fused_fc_head(x, w1, b1, w2, b2):
    """relu(x @ w1 + b1) @ w2 + b2 in one pallas_call, pipelined over K."""
    M, K = x.shape
    _, N1 = w1.shape
    _, N2 = w2.shape
    tk = _pick_k_tile(K, N1)
    return pl.pallas_call(
        _head_kernel,
        out_shape=jax.ShapeDtypeStruct((M, N2), jnp.float32),
        grid=(K // tk,),
        in_specs=[
            pl.BlockSpec((M, tk), lambda k: (0, k)),
            pl.BlockSpec((tk, N1), lambda k: (k, 0)),
            pl.BlockSpec((1, N1), lambda k: (0, 0)),
            pl.BlockSpec((N1, N2), lambda k: (0, 0)),
            pl.BlockSpec((1, N2), lambda k: (0, 0)),
        ],
        out_specs=pl.BlockSpec((M, N2), lambda k: (0, 0)),
        scratch_shapes=[pltpu.VMEM((M, N1), jnp.float32)],
        compiler_params=pltpu.CompilerParams(
            dimension_semantics=("arbitrary",)),
    )(x, w1, b1, w2, b2)


# ----------------------------------------------------------------------------
# One-time weight preparation (hoisted out of the forward pass).
# ----------------------------------------------------------------------------
def prepare_params(params, input_shape, n_actions):
    c, h, w = input_shape
    bf, f32 = jnp.bfloat16, jnp.float32
    h1, w1 = h - 3, w - 3            # conv1 output grid (13, 13)
    h2, w2 = h1 - 1, w1 - 1          # conv2 output grid (12, 12)

    # conv1: (O=64, C, 4, 4) -> rows ordered (C, kh, kw) -> pad O to 128 lanes.
    o1 = params["conv1_w"].shape[0]
    o1p = 128
    cw1 = jnp.transpose(params["conv1_w"], (1, 2, 3, 0)).reshape(-1, o1)
    cw1 = jnp.pad(cw1, ((0, 0), (0, o1p - o1)))
    cb1 = jnp.pad(params["conv1_b"], (0, o1p - o1)).reshape(1, o1p)

    # conv2 as 4 shift matrices: (dh, dw) -> (in_ch padded 64->128, out 128).
    o2 = params["conv2_w"].shape[0]
    cw2 = jnp.transpose(params["conv2_w"], (2, 3, 1, 0))            # (2,2,64,128)
    cw2 = jnp.pad(cw2, ((0, 0), (0, 0), (0, o1p - o1), (0, 0)))     # pad in_ch
    cw2 = cw2.reshape(4, o1p, o2)
    cb2 = params["conv2_b"].reshape(1, o2)

    # fc1: columns reordered from NCHW flatten (c,h,w) to the kernel's (h, w-padded, c)
    # layout; the extra w column (conv grid col w2=12) gets zero weights so the
    # garbage rows the conv kernel emits there contribute exactly nothing.
    fc1 = params["fc1_w"].reshape(-1, o2, h2, w2)                   # (out, c, h, w)
    fc1 = jnp.transpose(fc1, (2, 3, 1, 0))                          # (h, w, c, out)
    fc1 = jnp.pad(fc1, ((0, 0), (0, w1 - w2), (0, 0), (0, 0)))      # w: 12 -> 13
    fc1 = fc1.reshape(h2 * w1 * o2, -1)                             # (19968, 128)

    # fc2 padded to 128 output lanes (unmasked store); wrapper slices :n_actions.
    n_act_pad = 128
    fc2 = jnp.pad(params["fc2_w"].T, ((0, 0), (0, n_act_pad - n_actions)))
    fc2_b = jnp.pad(params["fc2_b"], (0, n_act_pad - n_actions)).reshape(1, n_act_pad)

    return {
        "w1": cw1.astype(bf), "b1": cb1.astype(f32),
        "w2s": cw2.astype(bf), "b2": cb2.astype(f32),
        "fc1_w": fc1.astype(bf), "fc1_b": params["fc1_b"].reshape(1, -1).astype(f32),
        "fc2_w": fc2.astype(bf), "fc2_b": fc2_b.astype(f32),
    }


# ----------------------------------------------------------------------------
# DQNCNN forward (inference). jit-compiled at the call site.
# ----------------------------------------------------------------------------
def dqn_cnn_forward(x_nchw, prep, *, n_actions):
    x = jnp.transpose(x_nchw, (0, 2, 3, 1)).astype(jnp.bfloat16)    # NHWC bf16
    n, h, w, c = x.shape
    h1, w1 = h - 3, w - 3
    h2 = h1 - 1
    s1, s_out = h1 * w1, (h1 - 1) * w1                              # 169, 156
    offs = (0, 1, w1, w1 + 1)                                       # conv2 2x2 shifts

    # conv1 im2col (tiny: ~43 KB); feature order = (C, kh, kw).
    p = lax.conv_general_dilated_patches(
        x, filter_shape=(4, 4), window_strides=(1, 1), padding="VALID",
        dimension_numbers=("NHWC", "HWIO", "NHWC"))                 # (n, h1, w1, c*16)
    p1 = p.reshape(n, s1, c * 16)
    # Pad patch rows so the shifted conv2 matmuls never index past the end; the
    # padding only feeds w-boundary outputs whose fc1 weights are zero.
    p1 = jnp.pad(p1, ((0, 0), (0, s_out + offs[-1] - s1), (0, 0)))

    y2 = conv12_fused(p1, prep["w1"], prep["b1"], prep["w2s"], prep["b2"],
                      s_out=s_out, offs=offs)                       # (n, 156, 128)

    flat = y2.reshape(n, s_out * y2.shape[-1])                      # free HBM reshape
    out = fused_fc_head(flat, prep["fc1_w"], prep["fc1_b"],
                        prep["fc2_w"], prep["fc2_b"])               # (n, 128)
    return out[:, :n_actions]


# ----------------------------------------------------------------------------
# References for correctness check.
# ----------------------------------------------------------------------------
def dqn_cnn_reference_f32(x_nchw, params):
    dn = ("NCHW", "OIHW", "NCHW")
    y = lax.conv_general_dilated(x_nchw, params["conv1_w"], (1, 1), "VALID",
                                 dimension_numbers=dn)
    y = jax.nn.relu(y + params["conv1_b"][None, :, None, None])
    y = lax.conv_general_dilated(y, params["conv2_w"], (1, 1), "VALID",
                                 dimension_numbers=dn)
    y = jax.nn.relu(y + params["conv2_b"][None, :, None, None])
    y = y.reshape(y.shape[0], -1)
    y = jax.nn.relu(y @ params["fc1_w"].T + params["fc1_b"])
    return y @ params["fc2_w"].T + params["fc2_b"]


def dqn_cnn_reference_bf16(x_nchw, params):
    """Mirrors the kernel's numerics: bf16 operands, f32 accumulation, bf16 acts."""
    dn = ("NCHW", "OIHW", "NCHW")
    bf = jnp.bfloat16
    y = lax.conv_general_dilated(x_nchw.astype(bf), params["conv1_w"].astype(bf),
                                 (1, 1), "VALID", dimension_numbers=dn,
                                 preferred_element_type=jnp.float32)
    y = jax.nn.relu(y + params["conv1_b"][None, :, None, None]).astype(bf)
    y = lax.conv_general_dilated(y, params["conv2_w"].astype(bf), (1, 1), "VALID",
                                 dimension_numbers=dn,
                                 preferred_element_type=jnp.float32)
    y = jax.nn.relu(y + params["conv2_b"][None, :, None, None]).astype(bf)
    flat = y.reshape(y.shape[0], -1)
    h = jnp.dot(flat, params["fc1_w"].T.astype(bf),
                preferred_element_type=jnp.float32)
    h = jax.nn.relu(h + params["fc1_b"]).astype(bf)
    out = jnp.dot(h, params["fc2_w"].T.astype(bf),
                  preferred_element_type=jnp.float32)
    return out + params["fc2_b"]


def init_params(key, c, h, w, n_actions):
    """Deterministic uniform init (mirrors PyTorch layer shapes)."""
    ho1, wo1 = h - 4 + 1, w - 4 + 1
    ho2, wo2 = ho1 - 2 + 1, wo1 - 2 + 1
    flat_dim = 128 * ho2 * wo2
    keys = jax.random.split(key, 8)

    def u(k, shape, fan_in):
        bound = 1.0 / jnp.sqrt(fan_in)
        return jax.random.uniform(k, shape, jnp.float32, -bound, bound)

    return {
        "conv1_w": u(keys[0], (64, c, 4, 4), c * 16),
        "conv1_b": u(keys[1], (64,), c * 16),
        "conv2_w": u(keys[2], (128, 64, 2, 2), 64 * 4),
        "conv2_b": u(keys[3], (128,), 64 * 4),
        "fc1_w": u(keys[4], (128, flat_dim), flat_dim),
        "fc1_b": u(keys[5], (128,), flat_dim),
        "fc2_w": u(keys[6], (n_actions, 128), 128),
        "fc2_b": u(keys[7], (n_actions,), 128),
    }


if __name__ == "__main__":
    key = jax.random.PRNGKey(0)
    k_x, k_p = jax.random.split(key)

    N, C, H, W = 2, 4, 16, 16
    n_actions = 8

    x = jax.random.normal(k_x, (N, C, H, W), jnp.float32)
    params = init_params(k_p, C, H, W, n_actions)
    prep = prepare_params(params, (C, H, W), n_actions)   # one-time layout transforms

    fwd = jax.jit(functools.partial(dqn_cnn_forward, n_actions=n_actions))
    out = jax.block_until_ready(fwd(x, prep))

    ref_bf16 = jax.block_until_ready(dqn_cnn_reference_bf16(x, params))
    ref_f32 = jax.block_until_ready(dqn_cnn_reference_f32(x, params))

    assert out.shape == (N, n_actions), out.shape
    # Tight check against a reference with identical bf16/f32 numerics.
    assert jnp.allclose(out, ref_bf16, atol=3e-3, rtol=2e-2), \
        float(jnp.max(jnp.abs(out - ref_bf16)))
    # Loose sanity check against the pure-f32 reference (bf16 rounding only).
    assert jnp.allclose(out, ref_f32, atol=5e-2, rtol=5e-2), \
        float(jnp.max(jnp.abs(out - ref_f32)))

    print("KERNEL_OK")
</pallas_src>

<mosaic_0001>
module attributes {stable_mosaic.version = 11 : i64} {
  func.func @kernel(%arg0: i32, %arg1: memref<1x170x64xbf16, #tpu.memory_space<vmem>>, %arg2: memref<64x128xbf16, #tpu.memory_space<vmem>>, %arg3: memref<1x128xf32, #tpu.memory_space<vmem>>, %arg4: memref<4x128x128xbf16, #tpu.memory_space<vmem>>, %arg5: memref<1x128xf32, #tpu.memory_space<vmem>>, %arg6: memref<1x156x128xbf16, #tpu.memory_space<vmem>>) attributes {dimension_semantics = [#tpu.dimension_semantics<parallel>], iteration_bounds = array<i64: 2>, scalar_prefetch = 0 : i64, scratch_operands = 0 : i64, tpu.core_type = #tpu.core_type<tc>, window_params = [{transform_indices = @transform_0, window_bounds = array<i64: 1, 170, 64>}, {pipeline_mode = #tpu.pipeline_mode<synchronous>, transform_indices = @transform_1, window_bounds = array<i64: 64, 128>}, {pipeline_mode = #tpu.pipeline_mode<synchronous>, transform_indices = @transform_2, window_bounds = array<i64: 1, 128>}, {pipeline_mode = #tpu.pipeline_mode<synchronous>, transform_indices = @transform_3, window_bounds = array<i64: 4, 128, 128>}, {pipeline_mode = #tpu.pipeline_mode<synchronous>, transform_indices = @transform_4, window_bounds = array<i64: 1, 128>}, {transform_indices = @transform_5, window_bounds = array<i64: 1, 156, 128>}]} {
    %c0 = arith.constant 0 : index
    %c0_0 = arith.constant 0 : index
    %c0_1 = arith.constant 0 : index
    %0 = vector.load %arg1[%c0, %c0_0, %c0_1] : memref<1x170x64xbf16, #tpu.memory_space<vmem>>, vector<1x170x64xbf16>
    %1 = vector.shape_cast %0 : vector<1x170x64xbf16> to vector<170x64xbf16>
    %c0_2 = arith.constant 0 : index
    %c0_3 = arith.constant 0 : index
    %2 = vector.load %arg2[%c0_2, %c0_3] : memref<64x128xbf16, #tpu.memory_space<vmem>>, vector<64x128xbf16>
    %cst = arith.constant dense<0.000000e+00> : vector<170x128xf32>
    %3 = tpu.matmul %1, %2, %cst {dimension_numbers = #tpu.dot_dimension_numbers<[1], [0], [0], [1], [0, 0, 1, 1], [], []>} : vector<170x64xbf16>, vector<64x128xbf16>, vector<170x128xf32> -> vector<170x128xf32>
    %c0_4 = arith.constant 0 : index
    %c0_5 = arith.constant 0 : index
    %4 = vector.load %arg3[%c0_4, %c0_5] : memref<1x128xf32, #tpu.memory_space<vmem>>, vector<1x128xf32>
    %5 = vector.broadcast %4 : vector<1x128xf32> to vector<170x128xf32>
    %6 = arith.addf %3, %5 : vector<170x128xf32>
    %cst_6 = arith.constant 0.000000e+00 : f32
    %7 = vector.broadcast %cst_6 : f32 to vector<170x128xf32>
    %8 = arith.maximumf %6, %7 : vector<170x128xf32>
    %9 = arith.truncf %8 : vector<170x128xf32> to vector<170x128xbf16>
    %10 = vector.extract_strided_slice %9 {offsets = [0, 0], sizes = [156, 128], strides = [1, 1]} : vector<170x128xbf16> to vector<156x128xbf16>
    %c0_7 = arith.constant 0 : index
    %c0_8 = arith.constant 0 : index
    %c0_9 = arith.constant 0 : index
    %11 = vector.load %arg4[%c0_7, %c0_8, %c0_9] : memref<4x128x128xbf16, #tpu.memory_space<vmem>>, vector<1x128x128xbf16>
    %12 = vector.shape_cast %11 : vector<1x128x128xbf16> to vector<128x128xbf16>
    %cst_10 = arith.constant dense<0.000000e+00> : vector<156x128xf32>
    %13 = tpu.matmul %10, %12, %cst_10 {dimension_numbers = #tpu.dot_dimension_numbers<[1], [0], [0], [1], [0, 0, 1, 1], [], []>} : vector<156x128xbf16>, vector<128x128xbf16>, vector<156x128xf32> -> vector<156x128xf32>
    %14 = vector.extract_strided_slice %9 {offsets = [1, 0], sizes = [156, 128], strides = [1, 1]} : vector<170x128xbf16> to vector<156x128xbf16>
    %c1 = arith.constant 1 : index
    %c0_11 = arith.constant 0 : index
    %c0_12 = arith.constant 0 : index
    %15 = vector.load %arg4[%c1, %c0_11, %c0_12] : memref<4x128x128xbf16, #tpu.memory_space<vmem>>, vector<1x128x128xbf16>
    %16 = vector.shape_cast %15 : vector<1x128x128xbf16> to vector<128x128xbf16>
    %cst_13 = arith.constant dense<0.000000e+00> : vector<156x128xf32>
    %17 = tpu.matmul %14, %16, %cst_13 {dimension_numbers = #tpu.dot_dimension_numbers<[1], [0], [0], [1], [0, 0, 1, 1], [], []>} : vector<156x128xbf16>, vector<128x128xbf16>, vector<156x128xf32> -> vector<156x128xf32>
    %18 = arith.addf %13, %17 : vector<156x128xf32>
    %19 = vector.extract_strided_slice %9 {offsets = [13, 0], sizes = [156, 128], strides = [1, 1]} : vector<170x128xbf16> to vector<156x128xbf16>
    %c2 = arith.constant 2 : index
    %c0_14 = arith.constant 0 : index
    %c0_15 = arith.constant 0 : index
    %20 = vector.load %arg4[%c2, %c0_14, %c0_15] : memref<4x128x128xbf16, #tpu.memory_space<vmem>>, vector<1x128x128xbf16>
    %21 = vector.shape_cast %20 : vector<1x128x128xbf16> to vector<128x128xbf16>
    %cst_16 = arith.constant dense<0.000000e+00> : vector<156x128xf32>
    %22 = tpu.matmul %19, %21, %cst_16 {dimension_numbers = #tpu.dot_dimension_numbers<[1], [0], [0], [1], [0, 0, 1, 1], [], []>} : vector<156x128xbf16>, vector<128x128xbf16>, vector<156x128xf32> -> vector<156x128xf32>
    %23 = arith.addf %18, %22 : vector<156x128xf32>
    %24 = vector.extract_strided_slice %9 {offsets = [14, 0], sizes = [156, 128], strides = [1, 1]} : vector<170x128xbf16> to vector<156x128xbf16>
    %c3 = arith.constant 3 : index
    %c0_17 = arith.constant 0 : index
    %c0_18 = arith.constant 0 : index
    %25 = vector.load %arg4[%c3, %c0_17, %c0_18] : memref<4x128x128xbf16, #tpu.memory_space<vmem>>, vector<1x128x128xbf16>
    %26 = vector.shape_cast %25 : vector<1x128x128xbf16> to vector<128x128xbf16>
    %cst_19 = arith.constant dense<0.000000e+00> : vector<156x128xf32>
    %27 = tpu.matmul %24, %26, %cst_19 {dimension_numbers = #tpu.dot_dimension_numbers<[1], [0], [0], [1], [0, 0, 1, 1], [], []>} : vector<156x128xbf16>, vector<128x128xbf16>, vector<156x128xf32> -> vector<156x128xf32>
    %28 = arith.addf %23, %27 : vector<156x128xf32>
    %c0_20 = arith.constant 0 : index
    %c0_21 = arith.constant 0 : index
    %29 = vector.load %arg5[%c0_20, %c0_21] : memref<1x128xf32, #tpu.memory_space<vmem>>, vector<1x128xf32>
    %30 = vector.broadcast %29 : vector<1x128xf32> to vector<156x128xf32>
    %31 = arith.addf %28, %30 : vector<156x128xf32>
    %cst_22 = arith.constant 0.000000e+00 : f32
    %32 = vector.broadcast %cst_22 : f32 to vector<156x128xf32>
    %33 = arith.maximumf %31, %32 : vector<156x128xf32>
    %34 = arith.truncf %33 : vector<156x128xf32> to vector<156x128xbf16>
    %c0_23 = arith.constant 0 : index
    %c0_24 = arith.constant 0 : index
    %c0_25 = arith.constant 0 : index
    %35 = vector.load %arg6[%c0_23, %c0_24, %c0_25] : memref<1x156x128xbf16, #tpu.memory_space<vmem>>, vector<1x156x128xbf16>
    %36 = vector.shape_cast %35 : vector<1x156x128xbf16> to vector<156x128xbf16>
    %37 = vector.shape_cast %34 : vector<156x128xbf16> to vector<1x156x128xbf16>
    tpu.vector_store %arg6[%c0_23, %c0_24, %c0_25], %37 {strides = array<i32>} : memref<1x156x128xbf16, #tpu.memory_space<vmem>>, vector<1x156x128xbf16>,
    return
  }
  func.func @transform_0(%arg0: i32) -> (i32, i32, i32) {
    %c0_i32 = arith.constant 0 : i32
    %c0_i32_0 = arith.constant 0 : i32
    %c0_i32_1 = arith.constant 0 : i32
    return %arg0, %c0_i32, %c0_i32_0 : i32, i32, i32
  }
  func.func @transform_1(%arg0: i32) -> (i32, i32) {
    %c0_i32 = arith.constant 0 : i32
    %c0_i32_0 = arith.constant 0 : i32
    %c0_i32_1 = arith.constant 0 : i32
    return %c0_i32, %c0_i32_0 : i32, i32
  }
  func.func @transform_2(%arg0: i32) -> (i32, i32) {
    %c0_i32 = arith.constant 0 : i32
    %c0_i32_0 = arith.constant 0 : i32
    %c0_i32_1 = arith.constant 0 : i32
    return %c0_i32, %c0_i32_0 : i32, i32
  }
  func.func @transform_3(%arg0: i32) -> (i32, i32, i32) {
    %c0_i32 = arith.constant 0 : i32
    %c0_i32_0 = arith.constant 0 : i32
    %c0_i32_1 = arith.constant 0 : i32
    %c0_i32_2 = arith.constant 0 : i32
    return %c0_i32, %c0_i32_0, %c0_i32_1 : i32, i32, i32
  }
  func.func @transform_4(%arg0: i32) -> (i32, i32) {
    %c0_i32 = arith.constant 0 : i32
    %c0_i32_0 = arith.constant 0 : i32
    %c0_i32_1 = arith.constant 0 : i32
    return %c0_i32, %c0_i32_0 : i32, i32
  }
  func.func @transform_5(%arg0: i32) -> (i32, i32, i32) {
    %c0_i32 = arith.constant 0 : i32
    %c0_i32_0 = arith.constant 0 : i32
    %c0_i32_1 = arith.constant 0 : i32
    return %arg0, %c0_i32, %c0_i32_0 : i32, i32, i32
  }
}

module attributes {stable_mosaic.version = 11 : i64} {
  func.func @_head_kernel(%arg0: i32, %arg1: memref<2x9984xbf16, #tpu.memory_space<vmem>>, %arg2: memref<9984x128xbf16, #tpu.memory_space<vmem>>, %arg3: memref<1x128xf32, #tpu.memory_space<vmem>>, %arg4: memref<128x128xbf16, #tpu.memory_space<vmem>>, %arg5: memref<1x128xf32, #tpu.memory_space<vmem>>, %arg6: memref<2x128xf32, #tpu.memory_space<vmem>>, %arg7: memref<2x128xf32, #tpu.memory_space<vmem>>) attributes {dimension_semantics = [#tpu.dimension_semantics<arbitrary>], iteration_bounds = array<i64: 2>, scalar_prefetch = 0 : i64, scratch_operands = 1 : i64, tpu.core_type = #tpu.core_type<tc>, window_params = [{transform_indices = @transform_0, window_bounds = array<i64: 2, 9984>}, {transform_indices = @transform_1, window_bounds = array<i64: 9984, 128>}, {pipeline_mode = #tpu.pipeline_mode<synchronous>, transform_indices = @transform_2, window_bounds = array<i64: 1, 128>}, {pipeline_mode = #tpu.pipeline_mode<synchronous>, transform_indices = @transform_3, window_bounds = array<i64: 128, 128>}, {pipeline_mode = #tpu.pipeline_mode<synchronous>, transform_indices = @transform_4, window_bounds = array<i64: 1, 128>}, {pipeline_mode = #tpu.pipeline_mode<synchronous>, transform_indices = @transform_5, window_bounds = array<i64: 2, 128>}]} {
    %c0_i32 = arith.constant 0 : i32
    %0 = arith.cmpi eq, %arg0, %c0_i32 : i32
    %1 = arith.extui %0 : i1 to i32
    %c0_i32_0 = arith.constant 0 : i32
    %2 = arith.cmpi ne, %1, %c0_i32_0 : i32
    scf.if %2 {
      %cst_9 = arith.constant 0.000000e+00 : f32
      %12 = vector.broadcast %cst_9 : f32 to vector<2x128xf32>
      %c0_10 = arith.constant 0 : index
      %c0_11 = arith.constant 0 : index
      %13 = vector.load %arg7[%c0_10, %c0_11] : memref<2x128xf32, #tpu.memory_space<vmem>>, vector<2x128xf32>
      tpu.vector_store %arg7[%c0_10, %c0_11], %12 {strides = array<i32>} : memref<2x128xf32, #tpu.memory_space<vmem>>, vector<2x128xf32>,
    } else {
    }
    %c0 = arith.constant 0 : index
    %c0_1 = arith.constant 0 : index
    %3 = vector.load %arg7[%c0, %c0_1] : memref<2x128xf32, #tpu.memory_space<vmem>>, vector<2x128xf32>
    %c0_2 = arith.constant 0 : index
    %c0_3 = arith.constant 0 : index
    %4 = vector.load %arg1[%c0_2, %c0_3] : memref<2x9984xbf16, #tpu.memory_space<vmem>>, vector<2x9984xbf16>
    %c0_4 = arith.constant 0 : index
    %c0_5 = arith.constant 0 : index
    %5 = vector.load %arg2[%c0_4, %c0_5] : memref<9984x128xbf16, #tpu.memory_space<vmem>>, vector<9984x128xbf16>
    %cst = arith.constant dense<0.000000e+00> : vector<2x128xf32>
    %6 = tpu.matmul %4, %5, %cst {dimension_numbers = #tpu.dot_dimension_numbers<[1], [0], [0], [1], [0, 0, 1, 1], [], []>} : vector<2x9984xbf16>, vector<9984x128xbf16>, vector<2x128xf32> -> vector<2x128xf32>
    %7 = arith.addf %3, %6 : vector<2x128xf32>
    %c0_6 = arith.constant 0 : index
    %c0_7 = arith.constant 0 : index
    %8 = vector.load %arg7[%c0_6, %c0_7] : memref<2x128xf32, #tpu.memory_space<vmem>>, vector<2x128xf32>
    tpu.vector_store %arg7[%c0_6, %c0_7], %7 {strides = array<i32>} : memref<2x128xf32, #tpu.memory_space<vmem>>, vector<2x128xf32>,
    %c1_i32 = arith.constant 1 : i32
    %9 = arith.cmpi eq, %arg0, %c1_i32 : i32
    %10 = arith.extui %9 : i1 to i32
    %c0_i32_8 = arith.constant 0 : i32
    %11 = arith.cmpi ne, %10, %c0_i32_8 : i32
    scf.if %11 {
      %c0_9 = arith.constant 0 : index
      %c0_10 = arith.constant 0 : index
      %12 = vector.load %arg7[%c0_9, %c0_10] : memref<2x128xf32, #tpu.memory_space<vmem>>, vector<2x128xf32>
      %c0_11 = arith.constant 0 : index
      %c0_12 = arith.constant 0 : index
      %13 = vector.load %arg3[%c0_11, %c0_12] : memref<1x128xf32, #tpu.memory_space<vmem>>, vector<1x128xf32>
      %14 = vector.broadcast %13 : vector<1x128xf32> to vector<2x128xf32>
      %15 = arith.addf %12, %14 : vector<2x128xf32>
      %cst_13 = arith.constant 0.000000e+00 : f32
      %16 = vector.broadcast %cst_13 : f32 to vector<2x128xf32>
      %17 = arith.maximumf %15, %16 : vector<2x128xf32>
      %18 = arith.truncf %17 : vector<2x128xf32> to vector<2x128xbf16>
      %c0_14 = arith.constant 0 : index
      %c0_15 = arith.constant 0 : index
      %19 = vector.load %arg4[%c0_14, %c0_15] : memref<128x128xbf16, #tpu.memory_space<vmem>>, vector<128x128xbf16>
      %cst_16 = arith.constant dense<0.000000e+00> : vector<2x128xf32>
      %20 = tpu.matmul %18, %19, %cst_16 {dimension_numbers = #tpu.dot_dimension_numbers<[1], [0], [0], [1], [0, 0, 1, 1], [], []>} : vector<2x128xbf16>, vector<128x128xbf16>, vector<2x128xf32> -> vector<2x128xf32>
      %c0_17 = arith.constant 0 : index
      %c0_18 = arith.constant 0 : index
      %21 = vector.load %arg5[%c0_17, %c0_18] : memref<1x128xf32, #tpu.memory_space<vmem>>, vector<1x128xf32>
      %22 = vector.broadcast %21 : vector<1x128xf32> to vector<2x128xf32>
      %23 = arith.addf %20, %22 : vector<2x128xf32>
      %c0_19 = arith.constant 0 : index
      %c0_20 = arith.constant 0 : index
      %24 = vector.load %arg6[%c0_19, %c0_20] : memref<2x128xf32, #tpu.memory_space<vmem>>, vector<2x128xf32>
      tpu.vector_store %arg6[%c0_19, %c0_20], %23 {strides = array<i32>} : memref<2x128xf32, #tpu.memory_space<vmem>>, vector<2x128xf32>,
    } else {
    }
    return
  }
  func.func @transform_0(%arg0: i32) -> (i32, i32) {
    %c0_i32 = arith.constant 0 : i32
    %c0_i32_0 = arith.constant 0 : i32
    return %c0_i32, %arg0 : i32, i32
  }
  func.func @transform_1(%arg0: i32) -> (i32, i32) {
    %c0_i32 = arith.constant 0 : i32
    %c0_i32_0 = arith.constant 0 : i32
    return %arg0, %c0_i32 : i32, i32
  }
  func.func @transform_2(%arg0: i32) -> (i32, i32) {
    %c0_i32 = arith.constant 0 : i32
    %c0_i32_0 = arith.constant 0 : i32
    %c0_i32_1 = arith.constant 0 : i32
    return %c0_i32, %c0_i32_0 : i32, i32
  }
  func.func @transform_3(%arg0: i32) -> (i32, i32) {
    %c0_i32 = arith.constant 0 : i32
    %c0_i32_0 = arith.constant 0 : i32
    %c0_i32_1 = arith.constant 0 : i32
    return %c0_i32, %c0_i32_0 : i32, i32
  }
  func.func @transform_4(%arg0: i32) -> (i32, i32) {
    %c0_i32 = arith.constant 0 : i32
    %c0_i32_0 = arith.constant 0 : i32
    %c0_i32_1 = arith.constant 0 : i32
    return %c0_i32, %c0_i32_0 : i32, i32
  }
  func.func @transform_5(%arg0: i32) -> (i32, i32) {
    %c0_i32 = arith.constant 0 : i32
    %c0_i32_0 = arith.constant 0 : i32
    %c0_i32_1 = arith.constant 0 : i32
    return %c0_i32, %c0_i32_0 : i32, i32
  }
}

</mosaic_0001>

<llo_original>
// kernel: dqn_cnn_forward.2
$region0: #{dqn_cnn_forward.2}
  #allocation0 [shape = 'u32[]', space=smem, size = 0x4, offset = 0x4, fixed_abs, tag = 'smem constant byte address 0x4 - core index']
  #allocation1 [shape = 'u32[144,128]{1,0:T(1,128)}', space=vmem, size = 0x12000, scoped, tag = 'internal scratch']
  %s0 = inlined_call_operand.vmem [shape: bf16[2,170,64], index: 0, kind: input, shape index: {}]
  %s1 = inlined_call_operand.hbm [shape: bf16[64,128], index: 1, kind: input, shape index: {}]
  %s2 = inlined_call_operand.hbm [shape: f32[1,128], index: 2, kind: input, shape index: {}]
  %s3 = inlined_call_operand.hbm [shape: bf16[4,128,128], index: 3, kind: input, shape index: {}]
  %s4 = inlined_call_operand.hbm [shape: f32[1,128], index: 4, kind: input, shape index: {}]
  %s5 = inlined_call_operand.vmem [shape: bf16[2,156,128], index: 5, kind: output, shape index: {}]
  %s6 = sld [smem:[#allocation0]]
  $region69: #{dqn_cnn_forward.2} parent=0
    _
  %s8 = ssub.s32 1, %s6
  %s9 = scalar_select 0, %s8, %s6
  $region1: #{dqn_cnn_forward.2} parent=0
    #allocation2 [shape = 'u8[16384]{0}', space=vmem, size = 0x4000, scoped, tag = 'input window, operand 1, single buffered']
    #allocation3 [shape = 's32[2]{0}', space=sflag, size = 0x8, scoped, tag = 'scoped memory for dqn_cnn_forward.2']
    #allocation4 [shape = 'u8[512]{0}', space=vmem, size = 0x400, scoped, tag = 'input window, operand 2, single buffered']
    #allocation5 [shape = 's32[1]{0}', space=sflag, size = 0x4, scoped, tag = 'scoped memory for dqn_cnn_forward.2']
    #allocation6 [shape = 'u8[131072]{0}', space=vmem, size = 0x20000, scoped, tag = 'input window, operand 3, single buffered']
    #allocation7 [shape = 'u8[512]{0}', space=vmem, size = 0x400, scoped, tag = 'input window, operand 4, single buffered']
    #allocation8 [shape = 's32[1]{0}', space=sflag, size = 0x4, scoped, tag = 'scoped memory for dqn_cnn_forward.2']
    %10 = vsyncpa [#allocation3], 0
    %11 = vsyncpa [#allocation5], 0
    %12 = vsyncpa [#allocation8], 0
    loop: start=0, step=1, limit=4
    $region2: #{dqn_cnn_forward.2} parent=1 // loop_pre_header
      _
    $region3: #{dqn_cnn_forward.2} parent=1 // loop_header
      %s14 = sphi 0, %s18
      %p15 = scmp.ge.s32.totalorder %s14, 4
      %s24 = sphi 0, %s26
      %s27 = sphi 0, %s24
      %s28 = sphi 0, %s27
      %s44 = sphi 0, %s28
      %s48 = sphi 0, %s48
      %s50 = sphi 0, %s48
      %s51 = sphi 0, %s50
      %s65 = sphi 0, %s51
      %s69 = sphi 0, %s69
      %s71 = sphi 0, %s69
      %s72 = sphi 0, %s71
      %s86 = sphi 0, %s72
      %s90 = sphi 0, %s90
      %s92 = sphi 0, %s90
      %s93 = sphi 0, %s92
      %s107 = sphi 0, %s93
      %s111 = sphi 0, %s111
      %s113 = sphi 0, %s111
      %s114 = sphi 0, %s113
      %s128 = sphi 0, %s114
      %s134 = sphi 0, %s136
      %s137 = sphi 0, %s134
      %s138 = sphi 0, %s137
      %s154 = sphi 0, %s138
    $region4: #{dqn_cnn_forward.2} parent=1 // loop_header_branch
      %17 = sbr.rel (%p15) target = $region8
    $region5: #{dqn_cnn_forward.2} parent=1 // loop_body
      %s19 = ssub.s32 %s14, 1
      %s20 = ssub.s32 %s14, 2
      %s21 = sadd.s32 %s14, 1
      %s22 = ssub.s32 %s14, %s21
      %p23 = scmp.eq.s32.totalorder %s22, 0
      %s25 = sadd.s32 %s24, 1
      %s26 = scalar_select %p23, %s24, %s25
      %p29 = pneg %p23
      %p30 = scmp.eq.s32.totalorder %s14, 1
      %p31 = por %p29, %p30
      %p32 = scmp.ne.s32.totalorder %s24, %s27
      %p33 = scmp.eq.s32.totalorder %s14, 0
      %p34 = por %p32, %p33
      %p35 = scmp.ne.s32.totalorder %s24, %s27
      %p36 = scmp.eq.s32.totalorder %s19, 1
      %p37 = por %p35, %p36
      %p38 = scmp.ne.s32.totalorder %s27, %s28
      %p39 = scmp.eq.s32.totalorder %s19, 0
      %p40 = por %p38, %p39
      %p41 = scmp.ne.s32.totalorder %s27, %s28
      %p42 = scmp.eq.s32.totalorder %s20, 1
      %p43 = por %p41, %p42
      %p45 = scmp.ne.s32.totalorder %s28, %s44
      %p46 = scmp.eq.s32.totalorder %s20, 0
      %p47 = por %p45, %p46
      %s49 = sadd.s32 %s48, 1
      %p52 = scmp.eq.s32.totalorder %s14, 1
      %p53 = scmp.ne.s32.totalorder %s48, %s50
      %p54 = scmp.eq.s32.totalorder %s14, 0
      %p55 = por %p53, %p54
      %p56 = scmp.ne.s32.totalorder %s48, %s50
      %p57 = scmp.eq.s32.totalorder %s19, 1
      %p58 = por %p56, %p57
      %p59 = scmp.ne.s32.totalorder %s50, %s51
      %p60 = scmp.eq.s32.totalorder %s19, 0
      %p61 = por %p59, %p60
      %p62 = scmp.ne.s32.totalorder %s50, %s51
      %p63 = scmp.eq.s32.totalorder %s20, 1
      %p64 = por %p62, %p63
      %p66 = scmp.ne.s32.totalorder %s51, %s65
      %p67 = scmp.eq.s32.totalorder %s20, 0
      %p68 = por %p66, %p67
      %s70 = sadd.s32 %s69, 1
      %p73 = scmp.eq.s32.totalorder %s14, 1
      %p74 = scmp.ne.s32.totalorder %s69, %s71
      %p75 = scmp.eq.s32.totalorder %s14, 0
      %p76 = por %p74, %p75
      %p77 = scmp.ne.s32.totalorder %s69, %s71
      %p78 = scmp.eq.s32.totalorder %s19, 1
      %p79 = por %p77, %p78
      %p80 = scmp.ne.s32.totalorder %s71, %s72
      %p81 = scmp.eq.s32.totalorder %s19, 0
      %p82 = por %p80, %p81
      %p83 = scmp.ne.s32.totalorder %s71, %s72
      %p84 = scmp.eq.s32.totalorder %s20, 1
      %p85 = por %p83, %p84
      %p87 = scmp.ne.s32.totalorder %s72, %s86
      %p88 = scmp.eq.s32.totalorder %s20, 0
      %p89 = por %p87, %p88
      %s91 = sadd.s32 %s90, 1
      %p94 = scmp.eq.s32.totalorder %s14, 1
      %p95 = scmp.ne.s32.totalorder %s90, %s92
      %p96 = scmp.eq.s32.totalorder %s14, 0
      %p97 = por %p95, %p96
      %p98 = scmp.ne.s32.totalorder %s90, %s92
      %p99 = scmp.eq.s32.totalorder %s19, 1
      %p100 = por %p98, %p99
      %p101 = scmp.ne.s32.totalorder %s92, %s93
      %p102 = scmp.eq.s32.totalorder %s19, 0
      %p103 = por %p101, %p102
      %p104 = scmp.ne.s32.totalorder %s92, %s93
      %p105 = scmp.eq.s32.totalorder %s20, 1
      %p106 = por %p104, %p105
      %p108 = scmp.ne.s32.totalorder %s93, %s107
      %p109 = scmp.eq.s32.totalorder %s20, 0
      %p110 = por %p108, %p109
      %s112 = sadd.s32 %s111, 1
      %p115 = scmp.eq.s32.totalorder %s14, 1
      %p116 = scmp.ne.s32.totalorder %s111, %s113
      %p117 = scmp.eq.s32.totalorder %s14, 0
      %p118 = por %p116, %p117
      %p119 = scmp.ne.s32.totalorder %s111, %s113
      %p120 = scmp.eq.s32.totalorder %s19, 1
      %p121 = por %p119, %p120
      %p122 = scmp.ne.s32.totalorder %s113, %s114
      %p123 = scmp.eq.s32.totalorder %s19, 0
      %p124 = por %p122, %p123
      %p125 = scmp.ne.s32.totalorder %s113, %s114
      %p126 = scmp.eq.s32.totalorder %s20, 1
      %p127 = por %p125, %p126
      %p129 = scmp.ne.s32.totalorder %s114, %s128
      %p130 = scmp.eq.s32.totalorder %s20, 0
      %p131 = por %p129, %p130
      %s132 = ssub.s32 %s14, %s21
      %p133 = scmp.eq.s32.totalorder %s132, 0
      %s135 = sadd.s32 %s134, 1
      %s136 = scalar_select %p133, %s134, %s135
      %p139 = pneg %p133
      %p140 = scmp.eq.s32.totalorder %s14, 1
      %p141 = por %p139, %p140
      %p142 = scmp.ne.s32.totalorder %s134, %s137
      %p143 = scmp.eq.s32.totalorder %s14, 0
      %p144 = por %p142, %p143
      %p145 = scmp.ne.s32.totalorder %s134, %s137
      %p146 = scmp.eq.s32.totalorder %s19, 1
      %p147 = por %p145, %p146
      %p148 = scmp.ne.s32.totalorder %s137, %s138
      %p149 = scmp.eq.s32.totalorder %s19, 0
      %p150 = por %p148, %p149
      %p151 = scmp.ne.s32.totalorder %s137, %s138
      %p152 = scmp.eq.s32.totalorder %s20, 1
      %p153 = por %p151, %p152
      %p155 = scmp.ne.s32.totalorder %s138, %s154
      %p156 = scmp.eq.s32.totalorder %s20, 0
      %p157 = por %p155, %p156
      %p158 = scmp.le.s32.totalorder 1, %s14
      %p159 = scmp.lt.s32.totalorder %s14, 3
      %p160 = pnand %p158, %p159
      %p161 = pneg %p160
      // Predicated region
      $region9: #{dqn_cnn_forward.2} parent=5 // pred_check
        _
      $region10: #{dqn_cnn_forward.2} parent=5 // pred_check_branch
        %163 = sbr.rel (%p160) target = $region12
      $region11: #{dqn_cnn_forward.2} parent=5 // pred_region
        %s164 = ssub.s32 %s14, 1
        // Predicated region
        $region13: #{dqn_cnn_forward.2} parent=11 // pred_check
          %p165 = pneg %p61
        $region14: #{dqn_cnn_forward.2} parent=11 // pred_check_branch
          %167 = sbr.rel (%p165) target = $region16
        $region15: #{dqn_cnn_forward.2} parent=11 // pred_region
          %s169 = ssub.s32 512, 512
          %170 = vsyncadd [#allocation3], %s169
          %s171 = sshll.u32 [#allocation2], 4
          %s172 = int_to_ptr.vmem [resolvable:$true] %s171
          %177 = dma.hbm_to_vmem [thread:$0]  %s1, 512, %s172, [#allocation3], 64, 64, 4
        $region16: #{dqn_cnn_forward.2} parent=11 // pred_fallthru
          _
        // Predicated region
        $region17: #{dqn_cnn_forward.2} parent=11 // pred_check
          %p178 = pneg %p82
        $region18: #{dqn_cnn_forward.2} parent=11 // pred_check_branch
          %180 = sbr.rel (%p178) target = $region20
        $region19: #{dqn_cnn_forward.2} parent=11 // pred_region
          %s182 = ssub.s32 16, 16
          %183 = vsyncadd [#allocation5], %s182
          %s185 = sshll.u32 [#allocation4], 4
          %s186 = int_to_ptr.vmem [resolvable:$true] %s185
          %188 = dma.hbm_to_vmem [thread:$0]  %s2, 16, %s186, [#allocation5]
        $region20: #{dqn_cnn_forward.2} parent=11 // pred_fallthru
          _
        // Predicated region
        $region21: #{dqn_cnn_forward.2} parent=11 // pred_check
          %p189 = pneg %p103
        $region22: #{dqn_cnn_forward.2} parent=11 // pred_check_branch
          %191 = sbr.rel (%p189) target = $region24
        $region23: #{dqn_cnn_forward.2} parent=11 // pred_region
          %s193 = ssub.s32 4096, 4096
          %194 = vsyncadd [#allocation5], %s193
          %s195 = sshll.u32 [#allocation6], 4
          %s196 = int_to_ptr.vmem [resolvable:$true] %s195
          %201 = dma.hbm_to_vmem [thread:$0]  %s3, 4096, %s196, [#allocation5], 64, 64, 4
        $region24: #{dqn_cnn_forward.2} parent=11 // pred_fallthru
          _
        // Predicated region
        $region25: #{dqn_cnn_forward.2} parent=11 // pred_check
          %p202 = pneg %p124
        $region26: #{dqn_cnn_forward.2} parent=11 // pred_check_branch
          %204 = sbr.rel (%p202) target = $region28
        $region27: #{dqn_cnn_forward.2} parent=11 // pred_region
          %s206 = ssub.s32 16, 16
          %207 = vsyncadd [#allocation8], %s206
          %s209 = sshll.u32 [#allocation7], 4
          %s210 = int_to_ptr.vmem [resolvable:$true] %s209
          %212 = dma.hbm_to_vmem [thread:$0]  %s4, 16, %s210, [#allocation8]
        $region28: #{dqn_cnn_forward.2} parent=11 // pred_fallthru
          _
      $region12: #{dqn_cnn_forward.2} parent=5 // pred_fallthru
        _
      %p213 = scmp.lt.s32.totalorder %s14, 2
      // Predicated region
      $region29: #{dqn_cnn_forward.2} parent=5 // pred_check
        %p214 = pneg %p213
      $region30: #{dqn_cnn_forward.2} parent=5 // pred_check_branch
        %216 = sbr.rel (%p214) target = $region32
      $region31: #{dqn_cnn_forward.2} parent=5 // pred_region
        // Predicated region
        $region33: #{dqn_cnn_forward.2} parent=31 // pred_check
          %p217 = pneg %p34
        $region34: #{dqn_cnn_forward.2} parent=31 // pred_check_branch
          %219 = sbr.rel (%p217) target = $region36
        $region35: #{dqn_cnn_forward.2} parent=31 // pred_region
          %p220 = scmp.lt.s32.totalorder %s14, 1
          %s221 = scalar_select %p220, %s14, 1
          %s222 = smul.addr %s221, 22
          %s223 = smul.addr %s222, 4
          %s224 = scalar_lea.vmem %s0, %s223
        $region36: #{dqn_cnn_forward.2} parent=31 // pred_fallthru
          _
      $region32: #{dqn_cnn_forward.2} parent=5 // pred_fallthru
        _
      %p225 = scmp.le.s32.totalorder 1, %s14
      %p226 = scmp.lt.s32.totalorder %s14, 3
      %p227 = pnand %p225, %p226
      %p228 = pneg %p227
      // Predicated region
      $region37: #{dqn_cnn_forward.2} parent=5 // pred_check
        _
      $region38: #{dqn_cnn_forward.2} parent=5 // pred_check_branch
        %230 = sbr.rel (%p227) target = $region40
      $region39: #{dqn_cnn_forward.2} parent=5 // pred_region
        %s231 = ssub.s32 %s14, 1
        // Predicated region
        $region41: #{dqn_cnn_forward.2} parent=39 // pred_check
          %p232 = pneg %p61
        $region42: #{dqn_cnn_forward.2} parent=39 // pred_check_branch
          %234 = sbr.rel (%p232) target = $region44
        $region43: #{dqn_cnn_forward.2} parent=39 // pred_region
          %235 = dma.done [#allocation3], 512
        $region44: #{dqn_cnn_forward.2} parent=39 // pred_fallthru
          _
        // Predicated region
        $region45: #{dqn_cnn_forward.2} parent=39 // pred_check
          %p236 = pneg %p82
        $region46: #{dqn_cnn_forward.2} parent=39 // pred_check_branch
          %238 = sbr.rel (%p236) target = $region48
        $region47: #{dqn_cnn_forward.2} parent=39 // pred_region
          %239 = dma.done [#allocation5], 16
        $region48: #{dqn_cnn_forward.2} parent=39 // pred_fallthru
          _
        // Predicated region
        $region49: #{dqn_cnn_forward.2} parent=39 // pred_check
          %p240 = pneg %p103
        $region50: #{dqn_cnn_forward.2} parent=39 // pred_check_branch
          %242 = sbr.rel (%p240) target = $region52
        $region51: #{dqn_cnn_forward.2} parent=39 // pred_region
          %243 = dma.done [#allocation5], 4096
        $region52: #{dqn_cnn_forward.2} parent=39 // pred_fallthru
          _
        // Predicated region
        $region53: #{dqn_cnn_forward.2} parent=39 // pred_check
          %p244 = pneg %p124
        $region54: #{dqn_cnn_forward.2} parent=39 // pred_check_branch
          %246 = sbr.rel (%p244) target = $region56
        $region55: #{dqn_cnn_forward.2} parent=39 // pred_region
          %247 = dma.done [#allocation8], 16
        $region56: #{dqn_cnn_forward.2} parent=39 // pred_fallthru
          _
        %p248 = scmp.lt.s32.totalorder %s19, 1
        %s249 = scalar_select %p248, %s19, 1
        %s250 = smul.addr %s249, 22
        %s251 = smul.addr %s250, 4
        %s252 = scalar_lea.vmem %s0, %s251
        %p253 = pneg %p40
        %p254 = pneg %p37
        %p255 = pneg %p61
        %p256 = pneg %p58
        %p257 = pneg %p82
        %p258 = pneg %p79
        %p259 = pneg %p103
        %p260 = pneg %p100
        %p261 = pneg %p124
        %p262 = pneg %p121
        %p263 = pneg %p150
        %p264 = pneg %p147
        %p265 = scmp.lt.s32.totalorder %s19, 1
        %s266 = scalar_select %p265, %s19, 1
        %s267 = smul.addr %s266, 20
        %s268 = smul.addr %s267, 4
        %s269 = scalar_lea.vmem %s5, %s268
        %p270 = scmp.lt.s32.totalorder %s19, 1
        %s271 = scalar_select %p270, %s19, 1
        %s272 = smul.addr %s271, 22
        %s273 = smul.addr %s272, 4
        %s274 = scalar_lea.vmem %s0, %s273
        %p275 = scmp.lt.s32.totalorder %s19, 1
        %s276 = scalar_select %p275, %s19, 1
        %s277 = smul.addr %s276, 20
        %s278 = smul.addr %s277, 4
        %s279 = scalar_lea.vmem %s5, %s278
        %v281 = vld [vmem:[%s274] sm:$0xf]
        %v282 = vld [vmem:[%s274 + $0x4] sm:$0xf]
        %v283 = vld [vmem:[%s274 + $0x8] sm:$0xf]
        %v284 = vld [vmem:[%s274 + $0xc] sm:$0xf]
        %v285 = vld [vmem:[%s274 + $0x10] sm:$0xf]
        %v286 = vld [vmem:[%s274 + $0x14] sm:$0xf]
        %v287 = vld [vmem:[%s274 + $0x18] sm:$0xf]
        %v288 = vld [vmem:[%s274 + $0x1c] sm:$0xf]
        %v289 = vld [vmem:[%s274 + $0x20] sm:$0xf]
        %v290 = vld [vmem:[%s274 + $0x24] sm:$0xf]
        %v291 = vld [vmem:[%s274 + $0x28] sm:$0xf]
        %v292 = vld [vmem:[%s274 + $0x2c] sm:$0xf]
        %v293 = vld [vmem:[%s274 + $0x30] sm:$0xf]
        %v294 = vld [vmem:[%s274 + $0x34] sm:$0xf]
        %v295 = vld [vmem:[%s274 + $0x38] sm:$0xf]
        %v296 = vld [vmem:[%s274 + $0x3c] sm:$0xf]
        %v297 = vld [vmem:[%s274 + $0x40] sm:$0xf]
        %v298 = vld [vmem:[%s274 + $0x44] sm:$0xf]
        %v299 = vld [vmem:[%s274 + $0x48] sm:$0xf]
        %v300 = vld [vmem:[%s274 + $0x4c] sm:$0xf]
        %v301 = vld [vmem:[%s274 + $0x50] sm:$0xf]
        %v302 = vld [vmem:[%s274 + $0x54] sm:$0x1]
        %v303 = vld [vmem:[#allocation2] sm:$0xf]
        %v304 = vld [vmem:[#allocation2 + $0x4] sm:$0xf]
        %v305 = vld [vmem:[#allocation2 + $0x8] sm:$0xf]
        %v306 = vld [vmem:[#allocation2 + $0xc] sm:$0xf]
        %v307 = vld [vmem:[#allocation2 + $0x10] sm:$0xf]
        %v308 = vld [vmem:[#allocation2 + $0x14] sm:$0xf]
        %v309 = vld [vmem:[#allocation2 + $0x18] sm:$0xf]
        %v310 = vld [vmem:[#allocation2 + $0x1c] sm:$0xf]
        %v311 = vld [vmem:[#allocation4] sm:$0x1]
        %v313 = vlaneseq
        %v314 = vshrl.u32 %v313, 7
        %v315 = vsub.s32 0, %v314
        %v316 = vrot.slane %v311, %v315
        %v340 = vunpack.c.l.b16 %v281
        %v341 = vunpack.c.l.b16 %v282
        %v342 = vunpack.c.l.b16 %v283
        %v343 = vunpack.c.l.b16 %v284
        %v344 = vunpack.c.l.b16 %v285
        %v345 = vunpack.c.l.b16 %v286
        %v346 = vunpack.c.l.b16 %v287
        %v347 = vunpack.c.l.b16 %v288
        %v348 = vunpack.c.l.b16 %v289
        %v349 = vunpack.c.l.b16 %v290
        %v350 = vunpack.c.l.b16 %v291
        %v351 = vunpack.c.l.b16 %v292
        %v352 = vunpack.c.l.b16 %v293
        %v353 = vunpack.c.l.b16 %v294
        %v354 = vunpack.c.l.b16 %v295
        %v355 = vunpack.c.l.b16 %v296
        %v356 = vunpack.c.l.b16 %v297
        %v357 = vunpack.c.l.b16 %v298
        %v358 = vunpack.c.l.b16 %v299
        %v359 = vunpack.c.l.b16 %v300
        %v360 = vunpack.c.l.b16 %v301
        %v361 = vunpack.c.l.b16 %v302
        %v362 = vpack.c.b16 %v341, %v340
        %v363 = vpack.c.b16 %v343, %v342
        %v364 = vpack.c.b16 %v345, %v344
        %v365 = vpack.c.b16 %v347, %v346
        %v366 = vpack.c.b16 %v349, %v348
        %v367 = vpack.c.b16 %v351, %v350
        %v368 = vpack.c.b16 %v353, %v352
        %v369 = vpack.c.b16 %v355, %v354
        %v370 = vpack.c.b16 %v357, %v356
        %v371 = vpack.c.b16 %v359, %v358
        %v372 = vpack.c.b16 %v361, %v360
        %v381 = vunpack.c.l.b16 %v303
        %v382 = vunpack.c.l.b16 %v304
        %v383 = vunpack.c.l.b16 %v305
        %v384 = vunpack.c.l.b16 %v306
        %v385 = vunpack.c.l.b16 %v307
        %v386 = vunpack.c.l.b16 %v308
        %v387 = vunpack.c.l.b16 %v309
        %v388 = vunpack.c.l.b16 %v310
        %v389 = vpack.c.b16 %v382, %v381
        %v390 = vpack.c.b16 %v384, %v383
        %v391 = vpack.c.b16 %v386, %v385
        %v392 = vpack.c.b16 %v388, %v387
        %vm397 = vcmask 523264
        %v399 = vsel %vm397, %v362, 0
        %v402 = vsel %vm397, %v363, 0
        %v405 = vsel %vm397, %v364, 0
        %v408 = vsel %vm397, %v365, 0
        %v411 = vsel %vm397, %v366, 0
        %v414 = vsel %vm397, %v367, 0
        %v417 = vsel %vm397, %v368, 0
        %v420 = vsel %vm397, %v369, 0
        %v423 = vsel %vm397, %v370, 0
        %v426 = vsel %vm397, %v371, 0
        %v429 = vsel %vm397, %v372, 0
        %431 = vmatprep.subr.bf16.mxu0 0
        %432 = vmatpush1.bf16.msra.mxu0 %v389
        %433 = vmatprep.subr.bf16.mxu0 0
        %434 = vmatpush1.bf16.msra.mxu0 %v390
        %435 = vmatprep.subr.bf16.mxu0 0
        %436 = vmatpush1.bf16.msra.mxu0 %v391
        %437 = vmatprep.subr.bf16.mxu0 0
        %438 = vmatpush1.bf16.msra.mxu0 %v392
        %439 = vmatprep.subr.bf16.mxu0 0
        %440 = vmatpush1.bf16.msra.mxu0 0
        %441 = vmatprep.subr.bf16.mxu0 0
        %442 = vmatpush1.bf16.msra.mxu0 0
        %443 = vmatprep.subr.bf16.mxu0 0
        %444 = vmatpush1.bf16.msra.mxu0 0
        %445 = vmatprep.subr.bf16.mxu0 0
        %446 = vmatpush1.bf16.msra.mxu0 0
        %447 = vmatprep.subr.bf16.mxu0 0
        %448 = vmatpush1.bf16.msra.mxu0 0
        %449 = vmatprep.subr.bf16.mxu0 0
        %450 = vmatpush1.bf16.msra.mxu0 0
        %451 = vmatprep.subr.bf16.mxu0 0
        %452 = vmatpush1.bf16.msra.mxu0 0
        %453 = vmatprep.subr.bf16.mxu0 0
        %454 = vmatpush1.bf16.msra.mxu0 0
        %455 = vmatprep.subr.bf16.mxu0 0
        %456 = vmatpush1.bf16.msra.mxu0 0
        %457 = vmatprep.subr.bf16.mxu0 0
        %458 = vmatpush1.bf16.msra.mxu0 0
        %459 = vmatprep.subr.bf16.mxu0 0
        %460 = vmatpush1.bf16.msra.mxu0 0
        %461 = vmatprep.subr.bf16.mxu0 0
        %462 = vmatpush1.bf16.msra.mxu0 0
        %463 = vmatprep.mubr.bf16.mxu0 0
        %464 = vmatmul.mubr.bf16.gmra.mrb[0].mxu0 %v399
        %v465 = vpop.f32.mrb[0].mxu0
        %v466 = vadd.f32 %v316, %v465
        %v467 = vpop.f32.mrb[0].mxu0
        %v468 = vpop.f32.mrb[0].mxu0
        %v469 = vadd.f32 %v316, %v468
        %v470 = vpop.f32.mrb[0].mxu0
        %471 = vmatprep.mubr.bf16.mxu0 0
        %472 = vmatmul.mubr.bf16.gmra.mrb[0].mxu0 %v402
        %v473 = vpop.f32.mrb[0].mxu0
        %v474 = vadd.f32 %v316, %v473
        %v475 = vpop.f32.mrb[0].mxu0
        %v476 = vpop.f32.mrb[0].mxu0
        %v477 = vadd.f32 %v316, %v476
        %v478 = vpop.f32.mrb[0].mxu0
        %479 = vmatprep.mubr.bf16.mxu0 0
        %480 = vmatmul.mubr.bf16.gmra.mrb[0].mxu0 %v405
        %v481 = vpop.f32.mrb[0].mxu0
        %v482 = vadd.f32 %v316, %v481
        %v483 = vpop.f32.mrb[0].mxu0
        %v484 = vpop.f32.mrb[0].mxu0
        %v485 = vadd.f32 %v316, %v484
        %v486 = vpop.f32.mrb[0].mxu0
        %487 = vmatprep.mubr.bf16.mxu0 0
        %488 = vmatmul.mubr.bf16.gmra.mrb[0].mxu0 %v408
        %v489 = vpop.f32.mrb[0].mxu0
        %v490 = vadd.f32 %v316, %v489
        %v491 = vpop.f32.mrb[0].mxu0
        %v492 = vpop.f32.mrb[0].mxu0
        %v493 = vadd.f32 %v316, %v492
        %v494 = vpop.f32.mrb[0].mxu0
        %495 = vmatprep.mubr.bf16.mxu0 0
        %496 = vmatmul.mubr.bf16.gmra.mrb[0].mxu0 %v411
        %v497 = vpop.f32.mrb[0].mxu0
        %v498 = vadd.f32 %v316, %v497
        %v499 = vpop.f32.mrb[0].mxu0
        %v500 = vpop.f32.mrb[0].mxu0
        %v501 = vadd.f32 %v316, %v500
        %v502 = vpop.f32.mrb[0].mxu0
        %503 = vmatprep.mubr.bf16.mxu0 0
        %504 = vmatmul.mubr.bf16.gmra.mrb[0].mxu0 %v414
        %v505 = vpop.f32.mrb[0].mxu0
        %v506 = vadd.f32 %v316, %v505
        %v507 = vpop.f32.mrb[0].mxu0
        %v508 = vpop.f32.mrb[0].mxu0
        %v509 = vadd.f32 %v316, %v508
        %v510 = vpop.f32.mrb[0].mxu0
        %511 = vmatprep.mubr.bf16.mxu0 0
        %512 = vmatmul.mubr.bf16.gmra.mrb[0].mxu0 %v417
        %v513 = vpop.f32.mrb[0].mxu0
        %v514 = vadd.f32 %v316, %v513
        %v515 = vpop.f32.mrb[0].mxu0
        %v516 = vpop.f32.mrb[0].mxu0
        %v517 = vadd.f32 %v316, %v516
        %v518 = vpop.f32.mrb[0].mxu0
        %519 = vmatprep.mubr.bf16.mxu0 0
        %520 = vmatmul.mubr.bf16.gmra.mrb[0].mxu0 %v420
        %v521 = vpop.f32.mrb[0].mxu0
        %v522 = vadd.f32 %v316, %v521
        %v523 = vpop.f32.mrb[0].mxu0
        %v524 = vpop.f32.mrb[0].mxu0
        %v525 = vadd.f32 %v316, %v524
        %v526 = vpop.f32.mrb[0].mxu0
        %527 = vmatprep.mubr.bf16.mxu0 0
        %528 = vmatmul.mubr.bf16.gmra.mrb[0].mxu0 %v423
        %v529 = vpop.f32.mrb[0].mxu0
        %v530 = vadd.f32 %v316, %v529
        %v531 = vpop.f32.mrb[0].mxu0
        %v532 = vpop.f32.mrb[0].mxu0
        %v533 = vadd.f32 %v316, %v532
        %v534 = vpop.f32.mrb[0].mxu0
        %535 = vmatprep.mubr.bf16.mxu0 0
        %536 = vmatmul.mubr.bf16.gmra.mrb[0].mxu0 %v426
        %v537 = vpop.f32.mrb[0].mxu0
        %v538 = vadd.f32 %v316, %v537
        %v539 = vpop.f32.mrb[0].mxu0
        %v540 = vpop.f32.mrb[0].mxu0
        %v541 = vadd.f32 %v316, %v540
        %v542 = vpop.f32.mrb[0].mxu0
        %543 = vmatprep.mubr.bf16.mxu0 0
        %544 = vmatmul.mubr.bf16.gmra.mrb[0].mxu0 %v429
        %v545 = vpop.f32.mrb[0].mxu0
        %v546 = vadd.f32 %v316, %v545
        %v547 = vpop.f32.mrb[0].mxu0
        %v548 = vpop.f32.mrb[0].mxu0
        %v549 = vadd.f32 %v316, %v548
        %v550 = vpop.f32.mrb[0].mxu0
        %551 = vdwg.mxu0
        %v552 = vmax.f32 %v466, 0.0
        %v553 = vmax.f32 %v469, 0.0
        %v554 = vmax.f32 %v474, 0.0
        %v555 = vmax.f32 %v477, 0.0
        %v556 = vmax.f32 %v482, 0.0
        %v557 = vmax.f32 %v485, 0.0
        %v558 = vmax.f32 %v490, 0.0
        %v559 = vmax.f32 %v493, 0.0
        %v560 = vmax.f32 %v498, 0.0
        %v561 = vmax.f32 %v501, 0.0
        %v562 = vmax.f32 %v506, 0.0
        %v563 = vmax.f32 %v509, 0.0
        %v564 = vmax.f32 %v514, 0.0
        %v565 = vmax.f32 %v517, 0.0
        %v566 = vmax.f32 %v522, 0.0
        %v567 = vmax.f32 %v525, 0.0
        %v568 = vmax.f32 %v530, 0.0
        %v569 = vmax.f32 %v533, 0.0
        %v570 = vmax.f32 %v538, 0.0
        %v571 = vmax.f32 %v541, 0.0
        %v572 = vmax.f32 %v546, 0.0
        %v573 = vmax.f32 %v549, 0.0
        %v574 = vpack.c.bf16 %v553, %v552
        %v575 = vpack.c.bf16 %v555, %v554
        %v576 = vpack.c.bf16 %v557, %v556
        %v577 = vpack.c.bf16 %v559, %v558
        %v578 = vpack.c.bf16 %v561, %v560
        %v579 = vpack.c.bf16 %v563, %v562
        %v580 = vpack.c.bf16 %v565, %v564
        %v581 = vpack.c.bf16 %v567, %v566
        %v582 = vpack.c.bf16 %v569, %v568
        %v583 = vpack.c.bf16 %v571, %v570
        %v584 = vpack.c.bf16 %v573, %v572
        %v585 = vld [vmem:[#allocation6] sm:$0xf]
        %v586 = vld [vmem:[#allocation6 + $0x4] sm:$0xf]
        %v587 = vld [vmem:[#allocation6 + $0x8] sm:$0xf]
        %v588 = vld [vmem:[#allocation6 + $0xc] sm:$0xf]
        %v589 = vld [vmem:[#allocation6 + $0x10] sm:$0xf]
        %v590 = vld [vmem:[#allocation6 + $0x14] sm:$0xf]
        %v591 = vld [vmem:[#allocation6 + $0x18] sm:$0xf]
        %v592 = vld [vmem:[#allocation6 + $0x1c] sm:$0xf]
        %v593 = vld [vmem:[#allocation6 + $0x20] sm:$0xf]
        %v594 = vld [vmem:[#allocation6 + $0x24] sm:$0xf]
        %v595 = vld [vmem:[#allocation6 + $0x28] sm:$0xf]
        %v596 = vld [vmem:[#allocation6 + $0x2c] sm:$0xf]
        %v597 = vld [vmem:[#allocation6 + $0x30] sm:$0xf]
        %v598 = vld [vmem:[#allocation6 + $0x34] sm:$0xf]
        %v599 = vld [vmem:[#allocation6 + $0x38] sm:$0xf]
        %v600 = vld [vmem:[#allocation6 + $0x3c] sm:$0xf]
        %s601 = scalar_lea.vmem [#allocation6], 64
        %v602 = vld [vmem:[%s601] sm:$0xf]
        %v603 = vld [vmem:[%s601 + $0x4] sm:$0xf]
        %v604 = vld [vmem:[%s601 + $0x8] sm:$0xf]
        %v605 = vld [vmem:[%s601 + $0xc] sm:$0xf]
        %v606 = vld [vmem:[%s601 + $0x10] sm:$0xf]
        %v607 = vld [vmem:[%s601 + $0x14] sm:$0xf]
        %v608 = vld [vmem:[%s601 + $0x18] sm:$0xf]
        %v609 = vld [vmem:[%s601 + $0x1c] sm:$0xf]
        %v610 = vld [vmem:[%s601 + $0x20] sm:$0xf]
        %v611 = vld [vmem:[%s601 + $0x24] sm:$0xf]
        %v612 = vld [vmem:[%s601 + $0x28] sm:$0xf]
        %v613 = vld [vmem:[%s601 + $0x2c] sm:$0xf]
        %v614 = vld [vmem:[%s601 + $0x30] sm:$0xf]
        %v615 = vld [vmem:[%s601 + $0x34] sm:$0xf]
        %v616 = vld [vmem:[%s601 + $0x38] sm:$0xf]
        %v617 = vld [vmem:[%s601 + $0x3c] sm:$0xf]
        %vm618 = vsmask.f32 7424
        %v620 = vshrl.u32 %v574, 16
        %v622 = vshll.u32 %v574, 16
        %v624 = vrot.slane %v622, 1
        %v625 = vor.u32 %v620, %v624
        %v627 = vshll.u32 %v575, 16
        %v629 = vrot.slane %v627, 1
        %v630 = vsel %vm618, %v625, %v629
        %v631 = vshrl.u32 %v575, 16
        %v633 = vor.u32 %v631, %v629
        %v635 = vshll.u32 %v576, 16
        %v637 = vrot.slane %v635, 1
        %v638 = vsel %vm618, %v633, %v637
        %v639 = vshrl.u32 %v576, 16
        %v641 = vor.u32 %v639, %v637
        %v643 = vshll.u32 %v577, 16
        %v645 = vrot.slane %v643, 1
        %v646 = vsel %vm618, %v641, %v645
        %v647 = vshrl.u32 %v577, 16
        %v649 = vor.u32 %v647, %v645
        %v651 = vshll.u32 %v578, 16
        %v653 = vrot.slane %v651, 1
        %v654 = vsel %vm618, %v649, %v653
        %v655 = vshrl.u32 %v578, 16
        %v657 = vor.u32 %v655, %v653
        %v659 = vshll.u32 %v579, 16
        %v661 = vrot.slane %v659, 1
        %v662 = vsel %vm618, %v657, %v661
        %v663 = vshrl.u32 %v579, 16
        %v665 = vor.u32 %v663, %v661
        %v667 = vshll.u32 %v580, 16
        %v669 = vrot.slane %v667, 1
        %v670 = vsel %vm618, %v665, %v669
        %v671 = vshrl.u32 %v580, 16
        %v673 = vor.u32 %v671, %v669
        %v675 = vshll.u32 %v581, 16
        %v677 = vrot.slane %v675, 1
        %v678 = vsel %vm618, %v673, %v677
        %v679 = vshrl.u32 %v581, 16
        %v681 = vor.u32 %v679, %v677
        %v683 = vshll.u32 %v582, 16
        %v685 = vrot.slane %v683, 1
        %v686 = vsel %vm618, %v681, %v685
        %v687 = vshrl.u32 %v582, 16
        %v689 = vor.u32 %v687, %v685
        %v691 = vshll.u32 %v583, 16
        %v693 = vrot.slane %v691, 1
        %v694 = vsel %vm618, %v689, %v693
        %v695 = vshrl.u32 %v583, 16
        %v697 = vor.u32 %v695, %v693
        %v724 = vunpack.c.l.b16 %v602
        %v725 = vunpack.c.l.b16 %v603
        %v726 = vunpack.c.l.b16 %v604
        %v727 = vunpack.c.l.b16 %v605
        %v728 = vunpack.c.l.b16 %v606
        %v729 = vunpack.c.l.b16 %v607
        %v730 = vunpack.c.l.b16 %v608
        %v731 = vunpack.c.l.b16 %v609
        %v732 = vunpack.c.l.b16 %v610
        %v733 = vunpack.c.l.b16 %v611
        %v734 = vunpack.c.l.b16 %v612
        %v735 = vunpack.c.l.b16 %v613
        %v736 = vunpack.c.l.b16 %v614
        %v737 = vunpack.c.l.b16 %v615
        %v738 = vunpack.c.l.b16 %v616
        %v739 = vunpack.c.l.b16 %v617
        %v740 = vpack.c.b16 %v725, %v724
        %v741 = vpack.c.b16 %v727, %v726
        %v742 = vpack.c.b16 %v729, %v728
        %v743 = vpack.c.b16 %v731, %v730
        %v744 = vpack.c.b16 %v733, %v732
        %v745 = vpack.c.b16 %v735, %v734
        %v746 = vpack.c.b16 %v737, %v736
        %v747 = vpack.c.b16 %v739, %v738
        %756 = vmatprep.subr.bf16.mxu0 0
        %757 = vmatpush1.bf16.msra.mxu0 %v740
        %758 = vmatprep.subr.bf16.mxu0 0
        %759 = vmatpush1.bf16.msra.mxu0 %v741
        %760 = vmatprep.subr.bf16.mxu0 0
        %761 = vmatpush1.bf16.msra.mxu0 %v742
        %762 = vmatprep.subr.bf16.mxu0 0
        %763 = vmatpush1.bf16.msra.mxu0 %v743
        %764 = vmatprep.subr.bf16.mxu0 0
        %765 = vmatpush1.bf16.msra.mxu0 %v744
        %766 = vmatprep.subr.bf16.mxu0 0
        %767 = vmatpush1.bf16.msra.mxu0 %v745
        %768 = vmatprep.subr.bf16.mxu0 0
        %769 = vmatpush1.bf16.msra.mxu0 %v746
        %770 = vmatprep.subr.bf16.mxu0 0
        %771 = vmatpush1.bf16.msra.mxu0 %v747
        %772 = vmatprep.subr.bf16.mxu0 0
        %773 = vmatpush1.bf16.msra.mxu0 0
        %774 = vmatprep.subr.bf16.mxu0 0
        %775 = vmatpush1.bf16.msra.mxu0 0
        %776 = vmatprep.subr.bf16.mxu0 0
        %777 = vmatpush1.bf16.msra.mxu0 0
        %778 = vmatprep.subr.bf16.mxu0 0
        %779 = vmatpush1.bf16.msra.mxu0 0
        %780 = vmatprep.subr.bf16.mxu0 0
        %781 = vmatpush1.bf16.msra.mxu0 0
        %782 = vmatprep.subr.bf16.mxu0 0
        %783 = vmatpush1.bf16.msra.mxu0 0
        %784 = vmatprep.subr.bf16.mxu0 0
        %785 = vmatpush1.bf16.msra.mxu0 0
        %786 = vmatprep.subr.bf16.mxu0 0
        %787 = vmatpush1.bf16.msra.mxu0 0
        %788 = vmatprep.mubr.bf16.mxu0 0
        %789 = vmatmul.mubr.bf16.gmra.mrb[0].mxu0 %v630
        %v790 = vpop.f32.mrb[0].mxu0
        %v791 = vadd.f32 0.0, %v790
        %v792 = vpop.f32.mrb[0].mxu0
        %v793 = vpop.f32.mrb[0].mxu0
        %v794 = vadd.f32 0.0, %v793
        %v795 = vpop.f32.mrb[0].mxu0
        %796 = vmatprep.mubr.bf16.mxu0 0
        %797 = vmatmul.mubr.bf16.gmra.mrb[0].mxu0 %v638
        %v798 = vpop.f32.mrb[0].mxu0
        %v799 = vadd.f32 0.0, %v798
        %v800 = vpop.f32.mrb[0].mxu0
        %v801 = vpop.f32.mrb[0].mxu0
        %v802 = vadd.f32 0.0, %v801
        %v803 = vpop.f32.mrb[0].mxu0
        %804 = vmatprep.mubr.bf16.mxu0 0
        %805 = vmatmul.mubr.bf16.gmra.mrb[0].mxu0 %v646
        %v806 = vpop.f32.mrb[0].mxu0
        %v807 = vadd.f32 0.0, %v806
        %v808 = vpop.f32.mrb[0].mxu0
        %v809 = vpop.f32.mrb[0].mxu0
        %v810 = vadd.f32 0.0, %v809
        %v811 = vpop.f32.mrb[0].mxu0
        %812 = vmatprep.mubr.bf16.mxu0 0
        %813 = vmatmul.mubr.bf16.gmra.mrb[0].mxu0 %v654
        %v814 = vpop.f32.mrb[0].mxu0
        %v815 = vadd.f32 0.0, %v814
        %v816 = vpop.f32.mrb[0].mxu0
        %v817 = vpop.f32.mrb[0].mxu0
        %v818 = vadd.f32 0.0, %v817
        %v819 = vpop.f32.mrb[0].mxu0
        %820 = vmatprep.mubr.bf16.mxu0 0
        %821 = vmatmul.mubr.bf16.gmra.mrb[0].mxu0 %v662
        %v822 = vpop.f32.mrb[0].mxu0
        %v823 = vadd.f32 0.0, %v822
        %v824 = vpop.f32.mrb[0].mxu0
        %v825 = vpop.f32.mrb[0].mxu0
        %v826 = vadd.f32 0.0, %v825
        %v827 = vpop.f32.mrb[0].mxu0
        %828 = vmatprep.mubr.bf16.mxu0 0
        %829 = vmatmul.mubr.bf16.gmra.mrb[0].mxu0 %v670
        %v830 = vpop.f32.mrb[0].mxu0
        %v831 = vadd.f32 0.0, %v830
        %v832 = vpop.f32.mrb[0].mxu0
        %v833 = vpop.f32.mrb[0].mxu0
        %v834 = vadd.f32 0.0, %v833
        %v835 = vpop.f32.mrb[0].mxu0
        %836 = vmatprep.mubr.bf16.mxu0 0
        %837 = vmatmul.mubr.bf16.gmra.mrb[0].mxu0 %v678
        %v838 = vpop.f32.mrb[0].mxu0
        %v839 = vadd.f32 0.0, %v838
        %v840 = vpop.f32.mrb[0].mxu0
        %v841 = vpop.f32.mrb[0].mxu0
        %v842 = vadd.f32 0.0, %v841
        %v843 = vpop.f32.mrb[0].mxu0
        %844 = vmatprep.mubr.bf16.mxu0 0
        %845 = vmatmul.mubr.bf16.gmra.mrb[0].mxu0 %v686
        %v846 = vpop.f32.mrb[0].mxu0
        %v847 = vadd.f32 0.0, %v846
        %v848 = vpop.f32.mrb[0].mxu0
        %v849 = vpop.f32.mrb[0].mxu0
        %v850 = vadd.f32 0.0, %v849
        %v851 = vpop.f32.mrb[0].mxu0
        %852 = vmatprep.mubr.bf16.mxu0 0
        %853 = vmatmul.mubr.bf16.gmra.mrb[0].mxu0 %v694
        %v854 = vpop.f32.mrb[0].mxu0
        %v855 = vadd.f32 0.0, %v854
        %v856 = vpop.f32.mrb[0].mxu0
        %v857 = vpop.f32.mrb[0].mxu0
        %v858 = vadd.f32 0.0, %v857
        %v859 = vpop.f32.mrb[0].mxu0
        %860 = vmatprep.mubr.bf16.mxu0 0
        %861 = vmatmul.mubr.bf16.gmra.mrb[0].mxu0 %v697
        %v862 = vpop.f32.mrb[0].mxu0
        %v863 = vadd.f32 0.0, %v862
        %v864 = vpop.f32.mrb[0].mxu0
        %v865 = vpop.f32.mrb[0].mxu0
        %v866 = vadd.f32 0.0, %v865
        %v867 = vpop.f32.mrb[0].mxu0
        %868 = vdwg.mxu0
        %v885 = vunpack.c.l.b16 %v585
        %v886 = vunpack.c.l.b16 %v586
        %v887 = vunpack.c.l.b16 %v587
        %v888 = vunpack.c.l.b16 %v588
        %v889 = vunpack.c.l.b16 %v589
        %v890 = vunpack.c.l.b16 %v590
        %v891 = vunpack.c.l.b16 %v591
        %v892 = vunpack.c.l.b16 %v592
        %v893 = vunpack.c.l.b16 %v593
        %v894 = vunpack.c.l.b16 %v594
        %v895 = vunpack.c.l.b16 %v595
        %v896 = vunpack.c.l.b16 %v596
        %v897 = vunpack.c.l.b16 %v597
        %v898 = vunpack.c.l.b16 %v598
        %v899 = vunpack.c.l.b16 %v599
        %v900 = vunpack.c.l.b16 %v600
        %v901 = vpack.c.b16 %v886, %v885
        %v902 = vpack.c.b16 %v888, %v887
        %v903 = vpack.c.b16 %v890, %v889
        %v904 = vpack.c.b16 %v892, %v891
        %v905 = vpack.c.b16 %v894, %v893
        %v906 = vpack.c.b16 %v896, %v895
        %v907 = vpack.c.b16 %v898, %v897
        %v908 = vpack.c.b16 %v900, %v899
        %917 = vmatprep.subr.bf16.mxu0 0
        %918 = vmatpush1.bf16.msra.mxu0 %v901
        %919 = vmatprep.subr.bf16.mxu0 0
        %920 = vmatpush1.bf16.msra.mxu0 %v902
        %921 = vmatprep.subr.bf16.mxu0 0
        %922 = vmatpush1.bf16.msra.mxu0 %v903
        %923 = vmatprep.subr.bf16.mxu0 0
        %924 = vmatpush1.bf16.msra.mxu0 %v904
        %925 = vmatprep.subr.bf16.mxu0 0
        %926 = vmatpush1.bf16.msra.mxu0 %v905
        %927 = vmatprep.subr.bf16.mxu0 0
        %928 = vmatpush1.bf16.msra.mxu0 %v906
        %929 = vmatprep.subr.bf16.mxu0 0
        %930 = vmatpush1.bf16.msra.mxu0 %v907
        %931 = vmatprep.subr.bf16.mxu0 0
        %932 = vmatpush1.bf16.msra.mxu0 %v908
        %933 = vmatprep.subr.bf16.mxu0 0
        %934 = vmatpush1.bf16.msra.mxu0 0
        %935 = vmatprep.subr.bf16.mxu0 0
        %936 = vmatpush1.bf16.msra.mxu0 0
        %937 = vmatprep.subr.bf16.mxu0 0
        %938 = vmatpush1.bf16.msra.mxu0 0
        %939 = vmatprep.subr.bf16.mxu0 0
        %940 = vmatpush1.bf16.msra.mxu0 0
        %941 = vmatprep.subr.bf16.mxu0 0
        %942 = vmatpush1.bf16.msra.mxu0 0
        %943 = vmatprep.subr.bf16.mxu0 0
        %944 = vmatpush1.bf16.msra.mxu0 0
        %945 = vmatprep.subr.bf16.mxu0 0
        %946 = vmatpush1.bf16.msra.mxu0 0
        %947 = vmatprep.subr.bf16.mxu0 0
        %948 = vmatpush1.bf16.msra.mxu0 0
        %949 = vmatprep.mubr.bf16.mxu0 0
        %950 = vmatmul.mubr.bf16.gmra.mrb[0].mxu0 %v574
        %v951 = vpop.f32.mrb[0].mxu0
        %v952 = vadd.f32 %v791, %v951
        %v953 = vpop.f32.mrb[0].mxu0
        %v954 = vpop.f32.mrb[0].mxu0
        %v955 = vadd.f32 %v794, %v954
        %v956 = vpop.f32.mrb[0].mxu0
        %957 = vmatprep.mubr.bf16.mxu0 0
        %958 = vmatmul.mubr.bf16.gmra.mrb[0].mxu0 %v575
        %v959 = vpop.f32.mrb[0].mxu0
        %v960 = vadd.f32 %v799, %v959
        %v961 = vpop.f32.mrb[0].mxu0
        %v962 = vpop.f32.mrb[0].mxu0
        %v963 = vadd.f32 %v802, %v962
        %v964 = vpop.f32.mrb[0].mxu0
        %965 = vmatprep.mubr.bf16.mxu0 0
        %966 = vmatmul.mubr.bf16.gmra.mrb[0].mxu0 %v576
        %v967 = vpop.f32.mrb[0].mxu0
        %v968 = vadd.f32 %v807, %v967
        %v969 = vpop.f32.mrb[0].mxu0
        %v970 = vpop.f32.mrb[0].mxu0
        %v971 = vadd.f32 %v810, %v970
        %v972 = vpop.f32.mrb[0].mxu0
        %973 = vmatprep.mubr.bf16.mxu0 0
        %974 = vmatmul.mubr.bf16.gmra.mrb[0].mxu0 %v577
        %v975 = vpop.f32.mrb[0].mxu0
        %v976 = vadd.f32 %v815, %v975
        %v977 = vpop.f32.mrb[0].mxu0
        %v978 = vpop.f32.mrb[0].mxu0
        %v979 = vadd.f32 %v818, %v978
        %v980 = vpop.f32.mrb[0].mxu0
        %981 = vmatprep.mubr.bf16.mxu0 0
        %982 = vmatmul.mubr.bf16.gmra.mrb[0].mxu0 %v578
        %v983 = vpop.f32.mrb[0].mxu0
        %v984 = vadd.f32 %v823, %v983
        %v985 = vpop.f32.mrb[0].mxu0
        %v986 = vpop.f32.mrb[0].mxu0
        %v987 = vadd.f32 %v826, %v986
        %v988 = vpop.f32.mrb[0].mxu0
        %989 = vmatprep.mubr.bf16.mxu0 0
        %990 = vmatmul.mubr.bf16.gmra.mrb[0].mxu0 %v579
        %v991 = vpop.f32.mrb[0].mxu0
        %v992 = vadd.f32 %v831, %v991
        %v993 = vpop.f32.mrb[0].mxu0
        %v994 = vpop.f32.mrb[0].mxu0
        %v995 = vadd.f32 %v834, %v994
        %v996 = vpop.f32.mrb[0].mxu0
        %997 = vmatprep.mubr.bf16.mxu0 0
        %998 = vmatmul.mubr.bf16.gmra.mrb[0].mxu0 %v580
        %v999 = vpop.f32.mrb[0].mxu0
        %v1000 = vadd.f32 %v839, %v999
        %v1001 = vpop.f32.mrb[0].mxu0
        %v1002 = vpop.f32.mrb[0].mxu0
        %v1003 = vadd.f32 %v842, %v1002
        %v1004 = vpop.f32.mrb[0].mxu0
        %1005 = vmatprep.mubr.bf16.mxu0 0
        %1006 = vmatmul.mubr.bf16.gmra.mrb[0].mxu0 %v581
        %v1007 = vpop.f32.mrb[0].mxu0
        %v1008 = vadd.f32 %v847, %v1007
        %v1009 = vpop.f32.mrb[0].mxu0
        %v1010 = vpop.f32.mrb[0].mxu0
        %v1011 = vadd.f32 %v850, %v1010
        %v1012 = vpop.f32.mrb[0].mxu0
        %1013 = vmatprep.mubr.bf16.mxu0 0
        %1014 = vmatmul.mubr.bf16.gmra.mrb[0].mxu0 %v582
        %v1015 = vpop.f32.mrb[0].mxu0
        %v1016 = vadd.f32 %v855, %v1015
        %v1017 = vpop.f32.mrb[0].mxu0
        %v1018 = vpop.f32.mrb[0].mxu0
        %v1019 = vadd.f32 %v858, %v1018
        %v1020 = vpop.f32.mrb[0].mxu0
        %1021 = vmatprep.mubr.bf16.mxu0 0
        %1022 = vmatmul.mubr.bf16.gmra.mrb[0].mxu0 %v583
        %v1023 = vpop.f32.mrb[0].mxu0
        %v1024 = vadd.f32 %v863, %v1023
        %v1025 = vpop.f32.mrb[0].mxu0
        %v1026 = vpop.f32.mrb[0].mxu0
        %v1027 = vadd.f32 %v866, %v1026
        %v1028 = vpop.f32.mrb[0].mxu0
        %1029 = vdwg.mxu0
        %s1030 = scalar_lea.vmem [#allocation6], 128
        %v1031 = vld [vmem:[%s1030] sm:$0xf]
        %v1032 = vld [vmem:[%s1030 + $0x4] sm:$0xf]
        %v1033 = vld [vmem:[%s1030 + $0x8] sm:$0xf]
        %v1034 = vld [vmem:[%s1030 + $0xc] sm:$0xf]
        %v1035 = vld [vmem:[%s1030 + $0x10] sm:$0xf]
        %v1036 = vld [vmem:[%s1030 + $0x14] sm:$0xf]
        %v1037 = vld [vmem:[%s1030 + $0x18] sm:$0xf]
        %v1038 = vld [vmem:[%s1030 + $0x1c] sm:$0xf]
        %v1039 = vld [vmem:[%s1030 + $0x20] sm:$0xf]
        %v1040 = vld [vmem:[%s1030 + $0x24] sm:$0xf]
        %v1041 = vld [vmem:[%s1030 + $0x28] sm:$0xf]
        %v1042 = vld [vmem:[%s1030 + $0x2c] sm:$0xf]
        %v1043 = vld [vmem:[%s1030 + $0x30] sm:$0xf]
        %v1044 = vld [vmem:[%s1030 + $0x34] sm:$0xf]
        %v1045 = vld [vmem:[%s1030 + $0x38] sm:$0xf]
        %v1046 = vld [vmem:[%s1030 + $0x3c] sm:$0xf]
        %vm1047 = vsmask.f32 1280
        %v1048 = vrot.slane %v620, 6
        %v1049 = vrot.slane %v622, 7
        %v1050 = vor.u32 %v1048, %v1049
        %v1051 = vrot.slane %v631, 6
        %v1052 = vrot.slane %v627, 7
        %v1053 = vor.u32 %v1051, %v1052
        %v1054 = vsel %vm1047, %v1050, %v1053
        %v1055 = vrot.slane %v639, 6
        %v1056 = vrot.slane %v635, 7
        %v1057 = vor.u32 %v1055, %v1056
        %v1058 = vsel %vm1047, %v1053, %v1057
        %v1059 = vrot.slane %v647, 6
        %v1060 = vrot.slane %v643, 7
        %v1061 = vor.u32 %v1059, %v1060
        %v1062 = vsel %vm1047, %v1057, %v1061
        %v1063 = vrot.slane %v655, 6
        %v1064 = vrot.slane %v651, 7
        %v1065 = vor.u32 %v1063, %v1064
        %v1066 = vsel %vm1047, %v1061, %v1065
        %v1067 = vrot.slane %v663, 6
        %v1068 = vrot.slane %v659, 7
        %v1069 = vor.u32 %v1067, %v1068
        %v1070 = vsel %vm1047, %v1065, %v1069
        %v1071 = vrot.slane %v671, 6
        %v1072 = vrot.slane %v667, 7
        %v1073 = vor.u32 %v1071, %v1072
        %v1074 = vsel %vm1047, %v1069, %v1073
        %v1075 = vrot.slane %v679, 6
        %v1076 = vrot.slane %v675, 7
        %v1077 = vor.u32 %v1075, %v1076
        %v1078 = vsel %vm1047, %v1073, %v1077
        %v1079 = vrot.slane %v687, 6
        %v1080 = vrot.slane %v683, 7
        %v1081 = vor.u32 %v1079, %v1080
        %v1082 = vsel %vm1047, %v1077, %v1081
        %v1083 = vrot.slane %v695, 6
        %v1084 = vrot.slane %v691, 7
        %v1085 = vor.u32 %v1083, %v1084
        %v1086 = vsel %vm1047, %v1081, %v1085
        %v1088 = vshrl.u32 %v584, 16
        %v1090 = vrot.slane %v1088, 6
        %v1091 = vshll.u32 %v584, 16
        %v1093 = vrot.slane %v1091, 7
        %v1094 = vor.u32 %v1090, %v1093
        %v1095 = vsel %vm1047, %v1085, %v1094
        %v1122 = vunpack.c.l.b16 %v1031
        %v1123 = vunpack.c.l.b16 %v1032
        %v1124 = vunpack.c.l.b16 %v1033
        %v1125 = vunpack.c.l.b16 %v1034
        %v1126 = vunpack.c.l.b16 %v1035
        %v1127 = vunpack.c.l.b16 %v1036
        %v1128 = vunpack.c.l.b16 %v1037
        %v1129 = vunpack.c.l.b16 %v1038
        %v1130 = vunpack.c.l.b16 %v1039
        %v1131 = vunpack.c.l.b16 %v1040
        %v1132 = vunpack.c.l.b16 %v1041
        %v1133 = vunpack.c.l.b16 %v1042
        %v1134 = vunpack.c.l.b16 %v1043
        %v1135 = vunpack.c.l.b16 %v1044
        %v1136 = vunpack.c.l.b16 %v1045
        %v1137 = vunpack.c.l.b16 %v1046
        %v1138 = vpack.c.b16 %v1123, %v1122
        %v1139 = vpack.c.b16 %v1125, %v1124
        %v1140 = vpack.c.b16 %v1127, %v1126
        %v1141 = vpack.c.b16 %v1129, %v1128
        %v1142 = vpack.c.b16 %v1131, %v1130
        %v1143 = vpack.c.b16 %v1133, %v1132
        %v1144 = vpack.c.b16 %v1135, %v1134
        %v1145 = vpack.c.b16 %v1137, %v1136
        %1154 = vmatprep.subr.bf16.mxu0 0
        %1155 = vmatpush1.bf16.msra.mxu0 %v1138
        %1156 = vmatprep.subr.bf16.mxu0 0
        %1157 = vmatpush1.bf16.msra.mxu0 %v1139
        %1158 = vmatprep.subr.bf16.mxu0 0
        %1159 = vmatpush1.bf16.msra.mxu0 %v1140
        %1160 = vmatprep.subr.bf16.mxu0 0
        %1161 = vmatpush1.bf16.msra.mxu0 %v1141
        %1162 = vmatprep.subr.bf16.mxu0 0
        %1163 = vmatpush1.bf16.msra.mxu0 %v1142
        %1164 = vmatprep.subr.bf16.mxu0 0
        %1165 = vmatpush1.bf16.msra.mxu0 %v1143
        %1166 = vmatprep.subr.bf16.mxu0 0
        %1167 = vmatpush1.bf16.msra.mxu0 %v1144
        %1168 = vmatprep.subr.bf16.mxu0 0
        %1169 = vmatpush1.bf16.msra.mxu0 %v1145
        %1170 = vmatprep.subr.bf16.mxu0 0
        %1171 = vmatpush1.bf16.msra.mxu0 0
        %1172 = vmatprep.subr.bf16.mxu0 0
        %1173 = vmatpush1.bf16.msra.mxu0 0
        %1174 = vmatprep.subr.bf16.mxu0 0
        %1175 = vmatpush1.bf16.msra.mxu0 0
        %1176 = vmatprep.subr.bf16.mxu0 0
        %1177 = vmatpush1.bf16.msra.mxu0 0
        %1178 = vmatprep.subr.bf16.mxu0 0
        %1179 = vmatpush1.bf16.msra.mxu0 0
        %1180 = vmatprep.subr.bf16.mxu0 0
        %1181 = vmatpush1.bf16.msra.mxu0 0
        %1182 = vmatprep.subr.bf16.mxu0 0
        %1183 = vmatpush1.bf16.msra.mxu0 0
        %1184 = vmatprep.subr.bf16.mxu0 0
        %1185 = vmatpush1.bf16.msra.mxu0 0
        %1186 = vmatprep.mubr.bf16.mxu0 0
        %1187 = vmatmul.mubr.bf16.gmra.mrb[0].mxu0 %v1054
        %v1188 = vpop.f32.mrb[0].mxu0
        %v1189 = vadd.f32 0.0, %v1188
        %v1190 = vpop.f32.mrb[0].mxu0
        %v1191 = vpop.f32.mrb[0].mxu0
        %v1192 = vadd.f32 0.0, %v1191
        %v1193 = vpop.f32.mrb[0].mxu0
        %1194 = vmatprep.mubr.bf16.mxu0 0
        %1195 = vmatmul.mubr.bf16.gmra.mrb[0].mxu0 %v1058
        %v1196 = vpop.f32.mrb[0].mxu0
        %v1197 = vadd.f32 0.0, %v1196
        %v1198 = vpop.f32.mrb[0].mxu0
        %v1199 = vpop.f32.mrb[0].mxu0
        %v1200 = vadd.f32 0.0, %v1199
        %v1201 = vpop.f32.mrb[0].mxu0
        %1202 = vmatprep.mubr.bf16.mxu0 0
        %1203 = vmatmul.mubr.bf16.gmra.mrb[0].mxu0 %v1062
        %v1204 = vpop.f32.mrb[0].mxu0
        %v1205 = vadd.f32 0.0, %v1204
        %v1206 = vpop.f32.mrb[0].mxu0
        %v1207 = vpop.f32.mrb[0].mxu0
        %v1208 = vadd.f32 0.0, %v1207
        %v1209 = vpop.f32.mrb[0].mxu0
        %1210 = vmatprep.mubr.bf16.mxu0 0
        %1211 = vmatmul.mubr.bf16.gmra.mrb[0].mxu0 %v1066
        %v1212 = vpop.f32.mrb[0].mxu0
        %v1213 = vadd.f32 0.0, %v1212
        %v1214 = vpop.f32.mrb[0].mxu0
        %v1215 = vpop.f32.mrb[0].mxu0
        %v1216 = vadd.f32 0.0, %v1215
        %v1217 = vpop.f32.mrb[0].mxu0
        %1218 = vmatprep.mubr.bf16.mxu0 0
        %1219 = vmatmul.mubr.bf16.gmra.mrb[0].mxu0 %v1070
        %v1220 = vpop.f32.mrb[0].mxu0
        %v1221 = vadd.f32 0.0, %v1220
        %v1222 = vpop.f32.mrb[0].mxu0
        %v1223 = vpop.f32.mrb[0].mxu0
        %v1224 = vadd.f32 0.0, %v1223
        %v1225 = vpop.f32.mrb[0].mxu0
        %1226 = vmatprep.mubr.bf16.mxu0 0
        %1227 = vmatmul.mubr.bf16.gmra.mrb[0].mxu0 %v1074
        %v1228 = vpop.f32.mrb[0].mxu0
        %v1229 = vadd.f32 0.0, %v1228
        %v1230 = vpop.f32.mrb[0].mxu0
        %v1231 = vpop.f32.mrb[0].mxu0
        %v1232 = vadd.f32 0.0, %v1231
        %v1233 = vpop.f32.mrb[0].mxu0
        %1234 = vmatprep.mubr.bf16.mxu0 0
        %1235 = vmatmul.mubr.bf16.gmra.mrb[0].mxu0 %v1078
        %v1236 = vpop.f32.mrb[0].mxu0
        %v1237 = vadd.f32 0.0, %v1236
        %v1238 = vpop.f32.mrb[0].mxu0
        %v1239 = vpop.f32.mrb[0].mxu0
        %v1240 = vadd.f32 0.0, %v1239
        %v1241 = vpop.f32.mrb[0].mxu0
        %1242 = vmatprep.mubr.bf16.mxu0 0
        %1243 = vmatmul.mubr.bf16.gmra.mrb[0].mxu0 %v1082
        %v1244 = vpop.f32.mrb[0].mxu0
        %v1245 = vadd.f32 0.0, %v1244
        %v1246 = vpop.f32.mrb[0].mxu0
        %v1247 = vpop.f32.mrb[0].mxu0
        %v1248 = vadd.f32 0.0, %v1247
        %v1249 = vpop.f32.mrb[0].mxu0
        %1250 = vmatprep.mubr.bf16.mxu0 0
        %1251 = vmatmul.mubr.bf16.gmra.mrb[0].mxu0 %v1086
        %v1252 = vpop.f32.mrb[0].mxu0
        %v1253 = vadd.f32 0.0, %v1252
        %v1254 = vpop.f32.mrb[0].mxu0
        %v1255 = vpop.f32.mrb[0].mxu0
        %v1256 = vadd.f32 0.0, %v1255
        %v1257 = vpop.f32.mrb[0].mxu0
        %1258 = vmatprep.mubr.bf16.mxu0 0
        %1259 = vmatmul.mubr.bf16.gmra.mrb[0].mxu0 %v1095
        %v1260 = vpop.f32.mrb[0].mxu0
        %v1261 = vadd.f32 0.0, %v1260
        %v1262 = vpop.f32.mrb[0].mxu0
        %v1263 = vpop.f32.mrb[0].mxu0
        %v1264 = vadd.f32 0.0, %v1263
        %v1265 = vpop.f32.mrb[0].mxu0
        %1266 = vdwg.mxu0
        %v1267 = vadd.f32 %v952, %v1189
        %v1268 = vadd.f32 %v955, %v1192
        %v1269 = vadd.f32 %v960, %v1197
        %v1270 = vadd.f32 %v963, %v1200
        %v1271 = vadd.f32 %v968, %v1205
        %v1272 = vadd.f32 %v971, %v1208
        %v1273 = vadd.f32 %v976, %v1213
        %v1274 = vadd.f32 %v979, %v1216
        %v1275 = vadd.f32 %v984, %v1221
        %v1276 = vadd.f32 %v987, %v1224
        %v1277 = vadd.f32 %v992, %v1229
        %v1278 = vadd.f32 %v995, %v1232
        %v1279 = vadd.f32 %v1000, %v1237
        %v1280 = vadd.f32 %v1003, %v1240
        %v1281 = vadd.f32 %v1008, %v1245
        %v1282 = vadd.f32 %v1011, %v1248
        %v1283 = vadd.f32 %v1016, %v1253
        %v1284 = vadd.f32 %v1019, %v1256
        %v1285 = vadd.f32 %v1024, %v1261
        %v1286 = vadd.f32 %v1027, %v1264
        %s1287 = scalar_lea.vmem [#allocation6], 192
        %v1288 = vld [vmem:[%s1287] sm:$0xf]
        %v1289 = vld [vmem:[%s1287 + $0x4] sm:$0xf]
        %v1290 = vld [vmem:[%s1287 + $0x8] sm:$0xf]
        %v1291 = vld [vmem:[%s1287 + $0xc] sm:$0xf]
        %v1292 = vld [vmem:[%s1287 + $0x10] sm:$0xf]
        %v1293 = vld [vmem:[%s1287 + $0x14] sm:$0xf]
        %v1294 = vld [vmem:[%s1287 + $0x18] sm:$0xf]
        %v1295 = vld [vmem:[%s1287 + $0x1c] sm:$0xf]
        %v1296 = vld [vmem:[%s1287 + $0x20] sm:$0xf]
        %v1297 = vld [vmem:[%s1287 + $0x24] sm:$0xf]
        %v1298 = vld [vmem:[%s1287 + $0x28] sm:$0xf]
        %v1299 = vld [vmem:[%s1287 + $0x2c] sm:$0xf]
        %v1300 = vld [vmem:[%s1287 + $0x30] sm:$0xf]
        %v1301 = vld [vmem:[%s1287 + $0x34] sm:$0xf]
        %v1302 = vld [vmem:[%s1287 + $0x38] sm:$0xf]
        %v1303 = vld [vmem:[%s1287 + $0x3c] sm:$0xf]
        %vm1315 = vcmask 1040384
        %v1316 = vrot.slane %v574, 7
        %v1317 = vrot.slane %v575, 7
        %v1318 = vsel %vm1315, %v1316, %v1317
        %v1319 = vrot.slane %v576, 7
        %v1320 = vsel %vm1315, %v1317, %v1319
        %v1321 = vrot.slane %v577, 7
        %v1322 = vsel %vm1315, %v1319, %v1321
        %v1323 = vrot.slane %v578, 7
        %v1324 = vsel %vm1315, %v1321, %v1323
        %v1325 = vrot.slane %v579, 7
        %v1326 = vsel %vm1315, %v1323, %v1325
        %v1327 = vrot.slane %v580, 7
        %v1328 = vsel %vm1315, %v1325, %v1327
        %v1329 = vrot.slane %v581, 7
        %v1330 = vsel %vm1315, %v1327, %v1329
        %v1331 = vrot.slane %v582, 7
        %v1332 = vsel %vm1315, %v1329, %v1331
        %v1333 = vrot.slane %v583, 7
        %v1334 = vsel %vm1315, %v1331, %v1333
        %v1335 = vrot.slane %v584, 7
        %v1336 = vsel %vm1315, %v1333, %v1335
        %v1363 = vunpack.c.l.b16 %v1288
        %v1364 = vunpack.c.l.b16 %v1289
        %v1365 = vunpack.c.l.b16 %v1290
        %v1366 = vunpack.c.l.b16 %v1291
        %v1367 = vunpack.c.l.b16 %v1292
        %v1368 = vunpack.c.l.b16 %v1293
        %v1369 = vunpack.c.l.b16 %v1294
        %v1370 = vunpack.c.l.b16 %v1295
        %v1371 = vunpack.c.l.b16 %v1296
        %v1372 = vunpack.c.l.b16 %v1297
        %v1373 = vunpack.c.l.b16 %v1298
        %v1374 = vunpack.c.l.b16 %v1299
        %v1375 = vunpack.c.l.b16 %v1300
        %v1376 = vunpack.c.l.b16 %v1301
        %v1377 = vunpack.c.l.b16 %v1302
        %v1378 = vunpack.c.l.b16 %v1303
        %v1379 = vpack.c.b16 %v1364, %v1363
        %v1380 = vpack.c.b16 %v1366, %v1365
        %v1381 = vpack.c.b16 %v1368, %v1367
        %v1382 = vpack.c.b16 %v1370, %v1369
        %v1383 = vpack.c.b16 %v1372, %v1371
        %v1384 = vpack.c.b16 %v1374, %v1373
        %v1385 = vpack.c.b16 %v1376, %v1375
        %v1386 = vpack.c.b16 %v1378, %v1377
        %1395 = vmatprep.subr.bf16.mxu0 0
        %1396 = vmatpush1.bf16.msra.mxu0 %v1379
        %1397 = vmatprep.subr.bf16.mxu0 0
        %1398 = vmatpush1.bf16.msra.mxu0 %v1380
        %1399 = vmatprep.subr.bf16.mxu0 0
        %1400 = vmatpush1.bf16.msra.mxu0 %v1381
        %1401 = vmatprep.subr.bf16.mxu0 0
        %1402 = vmatpush1.bf16.msra.mxu0 %v1382
        %1403 = vmatprep.subr.bf16.mxu0 0
        %1404 = vmatpush1.bf16.msra.mxu0 %v1383
        %1405 = vmatprep.subr.bf16.mxu0 0
        %1406 = vmatpush1.bf16.msra.mxu0 %v1384
        %1407 = vmatprep.subr.bf16.mxu0 0
        %1408 = vmatpush1.bf16.msra.mxu0 %v1385
        %1409 = vmatprep.subr.bf16.mxu0 0
        %1410 = vmatpush1.bf16.msra.mxu0 %v1386
        %1411 = vmatprep.subr.bf16.mxu0 0
        %1412 = vmatpush1.bf16.msra.mxu0 0
        %1413 = vmatprep.subr.bf16.mxu0 0
        %1414 = vmatpush1.bf16.msra.mxu0 0
        %1415 = vmatprep.subr.bf16.mxu0 0
        %1416 = vmatpush1.bf16.msra.mxu0 0
        %1417 = vmatprep.subr.bf16.mxu0 0
        %1418 = vmatpush1.bf16.msra.mxu0 0
        %1419 = vmatprep.subr.bf16.mxu0 0
        %1420 = vmatpush1.bf16.msra.mxu0 0
        %1421 = vmatprep.subr.bf16.mxu0 0
        %1422 = vmatpush1.bf16.msra.mxu0 0
        %1423 = vmatprep.subr.bf16.mxu0 0
        %1424 = vmatpush1.bf16.msra.mxu0 0
        %1425 = vmatprep.subr.bf16.mxu0 0
        %1426 = vmatpush1.bf16.msra.mxu0 0
        %1427 = vmatprep.mubr.bf16.mxu0 0
        %1428 = vmatmul.mubr.bf16.gmra.mrb[0].mxu0 %v1318
        %v1429 = vpop.f32.mrb[0].mxu0
        %v1430 = vadd.f32 0.0, %v1429
        %v1431 = vpop.f32.mrb[0].mxu0
        %v1432 = vpop.f32.mrb[0].mxu0
        %v1433 = vadd.f32 0.0, %v1432
        %v1434 = vpop.f32.mrb[0].mxu0
        %1435 = vmatprep.mubr.bf16.mxu0 0
        %1436 = vmatmul.mubr.bf16.gmra.mrb[0].mxu0 %v1320
        %v1437 = vpop.f32.mrb[0].mxu0
        %v1438 = vadd.f32 0.0, %v1437
        %v1439 = vpop.f32.mrb[0].mxu0
        %v1440 = vpop.f32.mrb[0].mxu0
        %v1441 = vadd.f32 0.0, %v1440
        %v1442 = vpop.f32.mrb[0].mxu0
        %1443 = vmatprep.mubr.bf16.mxu0 0
        %1444 = vmatmul.mubr.bf16.gmra.mrb[0].mxu0 %v1322
        %v1445 = vpop.f32.mrb[0].mxu0
        %v1446 = vadd.f32 0.0, %v1445
        %v1447 = vpop.f32.mrb[0].mxu0
        %v1448 = vpop.f32.mrb[0].mxu0
        %v1449 = vadd.f32 0.0, %v1448
        %v1450 = vpop.f32.mrb[0].mxu0
        %1451 = vmatprep.mubr.bf16.mxu0 0
        %1452 = vmatmul.mubr.bf16.gmra.mrb[0].mxu0 %v1324
        %v1453 = vpop.f32.mrb[0].mxu0
        %v1454 = vadd.f32 0.0, %v1453
        %v1455 = vpop.f32.mrb[0].mxu0
        %v1456 = vpop.f32.mrb[0].mxu0
        %v1457 = vadd.f32 0.0, %v1456
        %v1458 = vpop.f32.mrb[0].mxu0
        %1459 = vmatprep.mubr.bf16.mxu0 0
        %1460 = vmatmul.mubr.bf16.gmra.mrb[0].mxu0 %v1326
        %v1461 = vpop.f32.mrb[0].mxu0
        %v1462 = vadd.f32 0.0, %v1461
        %v1463 = vpop.f32.mrb[0].mxu0
        %v1464 = vpop.f32.mrb[0].mxu0
        %v1465 = vadd.f32 0.0, %v1464
        %v1466 = vpop.f32.mrb[0].mxu0
        %1467 = vmatprep.mubr.bf16.mxu0 0
        %1468 = vmatmul.mubr.bf16.gmra.mrb[0].mxu0 %v1328
        %v1469 = vpop.f32.mrb[0].mxu0
        %v1470 = vadd.f32 0.0, %v1469
        %v1471 = vpop.f32.mrb[0].mxu0
        %v1472 = vpop.f32.mrb[0].mxu0
        %v1473 = vadd.f32 0.0, %v1472
        %v1474 = vpop.f32.mrb[0].mxu0
        %1475 = vmatprep.mubr.bf16.mxu0 0
        %1476 = vmatmul.mubr.bf16.gmra.mrb[0].mxu0 %v1330
        %v1477 = vpop.f32.mrb[0].mxu0
        %v1478 = vadd.f32 0.0, %v1477
        %v1479 = vpop.f32.mrb[0].mxu0
        %v1480 = vpop.f32.mrb[0].mxu0
        %v1481 = vadd.f32 0.0, %v1480
        %v1482 = vpop.f32.mrb[0].mxu0
        %1483 = vmatprep.mubr.bf16.mxu0 0
        %1484 = vmatmul.mubr.bf16.gmra.mrb[0].mxu0 %v1332
        %v1485 = vpop.f32.mrb[0].mxu0
        %v1486 = vadd.f32 0.0, %v1485
        %v1487 = vpop.f32.mrb[0].mxu0
        %v1488 = vpop.f32.mrb[0].mxu0
        %v1489 = vadd.f32 0.0, %v1488
        %v1490 = vpop.f32.mrb[0].mxu0
        %1491 = vmatprep.mubr.bf16.mxu0 0
        %1492 = vmatmul.mubr.bf16.gmra.mrb[0].mxu0 %v1334
        %v1493 = vpop.f32.mrb[0].mxu0
        %v1494 = vadd.f32 0.0, %v1493
        %v1495 = vpop.f32.mrb[0].mxu0
        %v1496 = vpop.f32.mrb[0].mxu0
        %v1497 = vadd.f32 0.0, %v1496
        %v1498 = vpop.f32.mrb[0].mxu0
        %1499 = vmatprep.mubr.bf16.mxu0 0
        %1500 = vmatmul.mubr.bf16.gmra.mrb[0].mxu0 %v1336
        %v1501 = vpop.f32.mrb[0].mxu0
        %v1502 = vadd.f32 0.0, %v1501
        %v1503 = vpop.f32.mrb[0].mxu0
        %v1504 = vpop.f32.mrb[0].mxu0
        %v1505 = vadd.f32 0.0, %v1504
        %v1506 = vpop.f32.mrb[0].mxu0
        %1507 = vdwg.mxu0
        %v1508 = vadd.f32 %v1267, %v1430
        %v1509 = vadd.f32 %v1268, %v1433
        %v1510 = vadd.f32 %v1269, %v1438
        %v1511 = vadd.f32 %v1270, %v1441
        %v1512 = vadd.f32 %v1271, %v1446
        %v1513 = vadd.f32 %v1272, %v1449
        %v1514 = vadd.f32 %v1273, %v1454
        %v1515 = vadd.f32 %v1274, %v1457
        %v1516 = vadd.f32 %v1275, %v1462
        %v1517 = vadd.f32 %v1276, %v1465
        %v1518 = vadd.f32 %v1277, %v1470
        %v1519 = vadd.f32 %v1278, %v1473
        %v1520 = vadd.f32 %v1279, %v1478
        %v1521 = vadd.f32 %v1280, %v1481
        %v1522 = vadd.f32 %v1281, %v1486
        %v1523 = vadd.f32 %v1282, %v1489
        %v1524 = vadd.f32 %v1283, %v1494
        %v1525 = vadd.f32 %v1284, %v1497
        %v1526 = vadd.f32 %v1285, %v1502
        %v1527 = vadd.f32 %v1286, %v1505
        %v1528 = vld [vmem:[#allocation7] sm:$0x1]
        %v1530 = vlaneseq
        %v1531 = vshrl.u32 %v1530, 7
        %v1532 = vsub.s32 0, %v1531
        %v1533 = vrot.slane %v1528, %v1532
        %v1535 = vadd.f32 %v1508, %v1533
        %v1536 = vadd.f32 %v1509, %v1533
        %v1537 = vadd.f32 %v1510, %v1533
        %v1538 = vadd.f32 %v1511, %v1533
        %v1539 = vadd.f32 %v1512, %v1533
        %v1540 = vadd.f32 %v1513, %v1533
        %v1541 = vadd.f32 %v1514, %v1533
        %v1542 = vadd.f32 %v1515, %v1533
        %v1543 = vadd.f32 %v1516, %v1533
        %v1544 = vadd.f32 %v1517, %v1533
        %v1545 = vadd.f32 %v1518, %v1533
        %v1546 = vadd.f32 %v1519, %v1533
        %v1547 = vadd.f32 %v1520, %v1533
        %v1548 = vadd.f32 %v1521, %v1533
        %v1549 = vadd.f32 %v1522, %v1533
        %v1550 = vadd.f32 %v1523, %v1533
        %v1551 = vadd.f32 %v1524, %v1533
        %v1552 = vadd.f32 %v1525, %v1533
        %v1553 = vadd.f32 %v1526, %v1533
        %v1554 = vadd.f32 %v1527, %v1533
        %v1555 = vmax.f32 %v1535, 0.0
        %v1556 = vmax.f32 %v1536, 0.0
        %v1557 = vmax.f32 %v1537, 0.0
        %v1558 = vmax.f32 %v1538, 0.0
        %v1559 = vmax.f32 %v1539, 0.0
        %v1560 = vmax.f32 %v1540, 0.0
        %v1561 = vmax.f32 %v1541, 0.0
        %v1562 = vmax.f32 %v1542, 0.0
        %v1563 = vmax.f32 %v1543, 0.0
        %v1564 = vmax.f32 %v1544, 0.0
        %v1565 = vmax.f32 %v1545, 0.0
        %v1566 = vmax.f32 %v1546, 0.0
        %v1567 = vmax.f32 %v1547, 0.0
        %v1568 = vmax.f32 %v1548, 0.0
        %v1569 = vmax.f32 %v1549, 0.0
        %v1570 = vmax.f32 %v1550, 0.0
        %v1571 = vmax.f32 %v1551, 0.0
        %v1572 = vmax.f32 %v1552, 0.0
        %v1573 = vmax.f32 %v1553, 0.0
        %v1574 = vmax.f32 %v1554, 0.0
        %v1575 = vpack.c.bf16 %v1556, %v1555
        %v1576 = vpack.c.bf16 %v1558, %v1557
        %v1577 = vpack.c.bf16 %v1560, %v1559
        %v1578 = vpack.c.bf16 %v1562, %v1561
        %v1579 = vpack.c.bf16 %v1564, %v1563
        %v1580 = vpack.c.bf16 %v1566, %v1565
        %v1581 = vpack.c.bf16 %v1568, %v1567
        %v1582 = vpack.c.bf16 %v1570, %v1569
        %v1583 = vpack.c.bf16 %v1572, %v1571
        %v1584 = vpack.c.bf16 %v1574, %v1573
        %v1595 = vunpack.c.l.b16 %v1575
        %v1596 = vunpack.c.h.b16 %v1575
        %v1597 = vunpack.c.l.b16 %v1576
        %v1598 = vunpack.c.h.b16 %v1576
        %v1599 = vunpack.c.l.b16 %v1577
        %v1600 = vunpack.c.h.b16 %v1577
        %v1601 = vunpack.c.l.b16 %v1578
        %v1602 = vunpack.c.h.b16 %v1578
        %v1603 = vunpack.c.l.b16 %v1579
        %v1604 = vunpack.c.h.b16 %v1579
        %v1605 = vunpack.c.l.b16 %v1580
        %v1606 = vunpack.c.h.b16 %v1580
        %v1607 = vunpack.c.l.b16 %v1581
        %v1608 = vunpack.c.h.b16 %v1581
        %v1609 = vunpack.c.l.b16 %v1582
        %v1610 = vunpack.c.h.b16 %v1582
        %v1611 = vunpack.c.l.b16 %v1583
        %v1612 = vunpack.c.h.b16 %v1583
        %v1613 = vunpack.c.l.b16 %v1584
        %v1614 = vunpack.c.h.b16 %v1584
        %v1615 = vpack.c.b16 %v1595, %v1595
        %v1616 = vpack.c.b16 %v1596, %v1596
        %v1617 = vpack.c.b16 %v1597, %v1597
        %v1618 = vpack.c.b16 %v1598, %v1598
        %v1619 = vpack.c.b16 %v1599, %v1599
        %v1620 = vpack.c.b16 %v1600, %v1600
        %v1621 = vpack.c.b16 %v1601, %v1601
        %v1622 = vpack.c.b16 %v1602, %v1602
        %v1623 = vpack.c.b16 %v1603, %v1603
        %v1624 = vpack.c.b16 %v1604, %v1604
        %v1625 = vpack.c.b16 %v1605, %v1605
        %v1626 = vpack.c.b16 %v1606, %v1606
        %v1627 = vpack.c.b16 %v1607, %v1607
        %v1628 = vpack.c.b16 %v1608, %v1608
        %v1629 = vpack.c.b16 %v1609, %v1609
        %v1630 = vpack.c.b16 %v1610, %v1610
        %v1631 = vpack.c.b16 %v1611, %v1611
        %v1632 = vpack.c.b16 %v1612, %v1612
        %v1633 = vpack.c.b16 %v1613, %v1613
        %v1634 = vpack.c.b16 %v1614, %v1614
        %1655 = vst [vmem:[%s279] sm:$0xf] %v1615
        %1656 = vst [vmem:[%s279 + $0x4] sm:$0xf] %v1616
        %1657 = vst [vmem:[%s279 + $0x8] sm:$0xf] %v1617
        %1658 = vst [vmem:[%s279 + $0xc] sm:$0xf] %v1618
        %1659 = vst [vmem:[%s279 + $0x10] sm:$0xf] %v1619
        %1660 = vst [vmem:[%s279 + $0x14] sm:$0xf] %v1620
        %1661 = vst [vmem:[%s279 + $0x18] sm:$0xf] %v1621
        %1662 = vst [vmem:[%s279 + $0x1c] sm:$0xf] %v1622
        %1663 = vst [vmem:[%s279 + $0x20] sm:$0xf] %v1623
        %1664 = vst [vmem:[%s279 + $0x24] sm:$0xf] %v1624
        %1665 = vst [vmem:[%s279 + $0x28] sm:$0xf] %v1625
        %1666 = vst [vmem:[%s279 + $0x2c] sm:$0xf] %v1626
        %1667 = vst [vmem:[%s279 + $0x30] sm:$0xf] %v1627
        %1668 = vst [vmem:[%s279 + $0x34] sm:$0xf] %v1628
        %1669 = vst [vmem:[%s279 + $0x38] sm:$0xf] %v1629
        %1670 = vst [vmem:[%s279 + $0x3c] sm:$0xf] %v1630
        %1671 = vst [vmem:[%s279 + $0x40] sm:$0xf] %v1631
        %1672 = vst [vmem:[%s279 + $0x44] sm:$0xf] %v1632
        %1673 = vst [vmem:[%s279 + $0x48] sm:$0xf] %v1633
        %1674 = vst [vmem:[%s279 + $0x4c] sm:$0x3] %v1634
        %p1675 = scmp.lt.s32.totalorder %s19, 1
        %s1676 = scalar_select %p1675, %s19, 1
        %s1677 = smul.addr %s1676, 20
        %s1678 = smul.addr %s1677, 4
        %s1679 = scalar_lea.vmem %s5, %s1678
        // Predicated region
        $region57: #{dqn_cnn_forward.2} parent=39 // pred_check
          %p1680 = pneg %p147
        $region58: #{dqn_cnn_forward.2} parent=39 // pred_check_branch
          %1682 = sbr.rel (%p1680) target = $region60
        $region59: #{dqn_cnn_forward.2} parent=39 // pred_region
          _
        $region60: #{dqn_cnn_forward.2} parent=39 // pred_fallthru
          _
      $region40: #{dqn_cnn_forward.2} parent=5 // pred_fallthru
        _
      %p1683 = scmp.le.s32.totalorder 2, %s14
      // Predicated region
      $region61: #{dqn_cnn_forward.2} parent=5 // pred_check
        %p1684 = pneg %p1683
      $region62: #{dqn_cnn_forward.2} parent=5 // pred_check_branch
        %1686 = sbr.rel (%p1684) target = $region64
      $region63: #{dqn_cnn_forward.2} parent=5 // pred_region
        %s1687 = ssub.s32 %s14, 2
        // Predicated region
        $region65: #{dqn_cnn_forward.2} parent=63 // pred_check
          %p1688 = pneg %p153
        $region66: #{dqn_cnn_forward.2} parent=63 // pred_check_branch
          %1690 = sbr.rel (%p1688) target = $region68
        $region67: #{dqn_cnn_forward.2} parent=63 // pred_region
          %p1691 = scmp.lt.s32.totalorder %s20, 1
          %s1692 = scalar_select %p1691, %s20, 1
          %s1693 = smul.addr %s1692, 20
          %s1694 = smul.addr %s1693, 4
          %s1695 = scalar_lea.vmem %s5, %s1694
        $region68: #{dqn_cnn_forward.2} parent=63 // pred_fallthru
          _
      $region64: #{dqn_cnn_forward.2} parent=5 // pred_fallthru
        _
    $region6: #{dqn_cnn_forward.2} parent=1 // loop_footer
      %s18 = sadd.s32 1, %s14
    $region7: #{dqn_cnn_forward.2} parent=1 // loop_footer_branch
      %13 = sbr.rel target = $region3
    $region8: #{dqn_cnn_forward.2} parent=1 // loop_exit
      _
    %1696 = vsyncpa [#allocation3], 1
    %s1697 = scalar_lea.sflag [#allocation3], 1
    %1698 = vsyncpa %s1697, 1
    %1699 = vsyncpa [#allocation5], 1
    %1700 = vsyncpa [#allocation8], 1

// kernel: dqn_cnn_forward.3
$region0: #{dqn_cnn_forward.3}
  #allocation0 [shape = 'u32[]', space=smem, size = 0x4, offset = 0x4, fixed_abs, tag = 'smem constant byte address 0x4 - core index']
  #allocation1 [shape = 'u32[144,128]{1,0:T(1,128)}', space=vmem, size = 0x12000, scoped, tag = 'internal scratch']
  #allocation2 [shape = 'f32[2,128]{1,0:T(2,128)}', space=vmem, size = 0x400, scoped, tag = 'scratch operand']
  %s0 = inlined_call_operand.vmem [shape: bf16[2,19968], index: 0, kind: input, shape index: {}]
  %s1 = inlined_call_operand.hbm [shape: bf16[19968,128], index: 1, kind: input, shape index: {}]
  %s2 = inlined_call_operand.hbm [shape: f32[1,128], index: 2, kind: input, shape index: {}]
  %s3 = inlined_call_operand.hbm [shape: bf16[128,128], index: 3, kind: input, shape index: {}]
  %s4 = inlined_call_operand.hbm [shape: f32[1,128], index: 4, kind: input, shape index: {}]
  %s5 = inlined_call_operand.hbm [shape: f32[2,128], index: 5, kind: output, shape index: {}]
  %s6 = sld [smem:[#allocation0]]
  $region77: #{dqn_cnn_forward.3} parent=0
    _
  %s8 = ssub.s32 1, %s6
  %s9 = scalar_select 0, %s8, %s6
  $region1: #{dqn_cnn_forward.3} parent=0
    #allocation3 [shape = 'u8[5111808]{0}', space=vmem, size = 0x4e0000, scoped, tag = 'input window, operand 1']
    #allocation4 [shape = 's32[2]{0}', space=sflag, size = 0x8, scoped, tag = 'scoped memory for dqn_cnn_forward.3']
    #allocation5 [shape = 's32[2]{0}', space=sflag, size = 0x8, scoped, tag = 'scoped memory for dqn_cnn_forward.3']
    #allocation6 [shape = 'u8[512]{0}', space=vmem, size = 0x400, scoped, tag = 'input window, operand 2, single buffered']
    #allocation7 [shape = 's32[1]{0}', space=sflag, size = 0x4, scoped, tag = 'scoped memory for dqn_cnn_forward.3']
    #allocation8 [shape = 'u8[32768]{0}', space=vmem, size = 0x8000, scoped, tag = 'input window, operand 3, single buffered']
    #allocation9 [shape = 'u8[512]{0}', space=vmem, size = 0x400, scoped, tag = 'input window, operand 4, single buffered']
    #allocation10 [shape = 's32[1]{0}', space=sflag, size = 0x4, scoped, tag = 'scoped memory for dqn_cnn_forward.3']
    #allocation11 [shape = 'u8[1024]{0}', space=vmem, size = 0x400, scoped, tag = 'output window, operand 0, single buffered']
    %10 = vsyncpa [#allocation4], 0
    %s11 = scalar_lea.sflag [#allocation4], 1
    %12 = vsyncpa %s11, 0
    %13 = vsyncpa [#allocation7], 0
    %14 = vsyncpa [#allocation10], 0
    %15 = vsyncpa [#allocation5], 0
    loop: start=0, step=1, limit=4
    $region2: #{dqn_cnn_forward.3} parent=1 // loop_pre_header
      _
    $region3: #{dqn_cnn_forward.3} parent=1 // loop_header
      %s17 = sphi 0, %s21
      %p18 = scmp.ge.s32.totalorder %s17, 4
      %s27 = sphi 0, %s29
      %s30 = sphi 0, %s27
      %s31 = sphi 0, %s30
      %s47 = sphi 0, %s31
      %s53 = sphi 0, %s55
      %s56 = sphi 0, %s53
      %s57 = sphi 0, %s56
      %s73 = sphi 0, %s57
      %s77 = sphi 0, %s77
      %s79 = sphi 0, %s77
      %s80 = sphi 0, %s79
      %s94 = sphi 0, %s80
      %s98 = sphi 0, %s98
      %s100 = sphi 0, %s98
      %s101 = sphi 0, %s100
      %s115 = sphi 0, %s101
      %s119 = sphi 0, %s119
      %s121 = sphi 0, %s119
      %s122 = sphi 0, %s121
      %s136 = sphi 0, %s122
      %s140 = sphi 0, %s140
      %s142 = sphi 0, %s140
      %s143 = sphi 0, %s142
      %s157 = sphi 0, %s143
    $region4: #{dqn_cnn_forward.3} parent=1 // loop_header_branch
      %20 = sbr.rel (%p18) target = $region8
    $region5: #{dqn_cnn_forward.3} parent=1 // loop_body
      %s22 = ssub.s32 %s17, 1
      %s23 = ssub.s32 %s17, 2
      %s24 = sadd.s32 %s17, 1
      %s25 = ssub.s32 %s17, %s24
      %p26 = scmp.eq.s32.totalorder %s25, 0
      %s28 = sadd.s32 %s27, 1
      %s29 = scalar_select %p26, %s27, %s28
      %p32 = pneg %p26
      %p33 = scmp.eq.s32.totalorder %s17, 1
      %p34 = por %p32, %p33
      %p35 = scmp.ne.s32.totalorder %s27, %s30
      %p36 = scmp.eq.s32.totalorder %s17, 0
      %p37 = por %p35, %p36
      %p38 = scmp.ne.s32.totalorder %s27, %s30
      %p39 = scmp.eq.s32.totalorder %s22, 1
      %p40 = por %p38, %p39
      %p41 = scmp.ne.s32.totalorder %s30, %s31
      %p42 = scmp.eq.s32.totalorder %s22, 0
      %p43 = por %p41, %p42
      %p44 = scmp.ne.s32.totalorder %s30, %s31
      %p45 = scmp.eq.s32.totalorder %s23, 1
      %p46 = por %p44, %p45
      %p48 = scmp.ne.s32.totalorder %s31, %s47
      %p49 = scmp.eq.s32.totalorder %s23, 0
      %p50 = por %p48, %p49
      %s51 = ssub.s32 %s17, %s24
      %p52 = scmp.eq.s32.totalorder %s51, 0
      %s54 = sadd.s32 %s53, 1
      %s55 = scalar_select %p52, %s53, %s54
      %p58 = pneg %p52
      %p59 = scmp.eq.s32.totalorder %s17, 1
      %p60 = por %p58, %p59
      %p61 = scmp.ne.s32.totalorder %s53, %s56
      %p62 = scmp.eq.s32.totalorder %s17, 0
      %p63 = por %p61, %p62
      %p64 = scmp.ne.s32.totalorder %s53, %s56
      %p65 = scmp.eq.s32.totalorder %s22, 1
      %p66 = por %p64, %p65
      %p67 = scmp.ne.s32.totalorder %s56, %s57
      %p68 = scmp.eq.s32.totalorder %s22, 0
      %p69 = por %p67, %p68
      %p70 = scmp.ne.s32.totalorder %s56, %s57
      %p71 = scmp.eq.s32.totalorder %s23, 1
      %p72 = por %p70, %p71
      %p74 = scmp.ne.s32.totalorder %s57, %s73
      %p75 = scmp.eq.s32.totalorder %s23, 0
      %p76 = por %p74, %p75
      %s78 = sadd.s32 %s77, 1
      %p81 = scmp.eq.s32.totalorder %s17, 1
      %p82 = scmp.ne.s32.totalorder %s77, %s79
      %p83 = scmp.eq.s32.totalorder %s17, 0
      %p84 = por %p82, %p83
      %p85 = scmp.ne.s32.totalorder %s77, %s79
      %p86 = scmp.eq.s32.totalorder %s22, 1
      %p87 = por %p85, %p86
      %p88 = scmp.ne.s32.totalorder %s79, %s80
      %p89 = scmp.eq.s32.totalorder %s22, 0
      %p90 = por %p88, %p89
      %p91 = scmp.ne.s32.totalorder %s79, %s80
      %p92 = scmp.eq.s32.totalorder %s23, 1
      %p93 = por %p91, %p92
      %p95 = scmp.ne.s32.totalorder %s80, %s94
      %p96 = scmp.eq.s32.totalorder %s23, 0
      %p97 = por %p95, %p96
      %s99 = sadd.s32 %s98, 1
      %p102 = scmp.eq.s32.totalorder %s17, 1
      %p103 = scmp.ne.s32.totalorder %s98, %s100
      %p104 = scmp.eq.s32.totalorder %s17, 0
      %p105 = por %p103, %p104
      %p106 = scmp.ne.s32.totalorder %s98, %s100
      %p107 = scmp.eq.s32.totalorder %s22, 1
      %p108 = por %p106, %p107
      %p109 = scmp.ne.s32.totalorder %s100, %s101
      %p110 = scmp.eq.s32.totalorder %s22, 0
      %p111 = por %p109, %p110
      %p112 = scmp.ne.s32.totalorder %s100, %s101
      %p113 = scmp.eq.s32.totalorder %s23, 1
      %p114 = por %p112, %p113
      %p116 = scmp.ne.s32.totalorder %s101, %s115
      %p117 = scmp.eq.s32.totalorder %s23, 0
      %p118 = por %p116, %p117
      %s120 = sadd.s32 %s119, 1
      %p123 = scmp.eq.s32.totalorder %s17, 1
      %p124 = scmp.ne.s32.totalorder %s119, %s121
      %p125 = scmp.eq.s32.totalorder %s17, 0
      %p126 = por %p124, %p125
      %p127 = scmp.ne.s32.totalorder %s119, %s121
      %p128 = scmp.eq.s32.totalorder %s22, 1
      %p129 = por %p127, %p128
      %p130 = scmp.ne.s32.totalorder %s121, %s122
      %p131 = scmp.eq.s32.totalorder %s22, 0
      %p132 = por %p130, %p131
      %p133 = scmp.ne.s32.totalorder %s121, %s122
      %p134 = scmp.eq.s32.totalorder %s23, 1
      %p135 = por %p133, %p134
      %p137 = scmp.ne.s32.totalorder %s122, %s136
      %p138 = scmp.eq.s32.totalorder %s23, 0
      %p139 = por %p137, %p138
      %s141 = sadd.s32 %s140, 1
      %p144 = scmp.eq.s32.totalorder %s17, 1
      %p145 = scmp.ne.s32.totalorder %s140, %s142
      %p146 = scmp.eq.s32.totalorder %s17, 0
      %p147 = por %p145, %p146
      %p148 = scmp.ne.s32.totalorder %s140, %s142
      %p149 = scmp.eq.s32.totalorder %s22, 1
      %p150 = por %p148, %p149
      %p151 = scmp.ne.s32.totalorder %s142, %s143
      %p152 = scmp.eq.s32.totalorder %s22, 0
      %p153 = por %p151, %p152
      %p154 = scmp.ne.s32.totalorder %s142, %s143
      %p155 = scmp.eq.s32.totalorder %s23, 1
      %p156 = por %p154, %p155
      %p158 = scmp.ne.s32.totalorder %s143, %s157
      %p159 = scmp.eq.s32.totalorder %s23, 0
      %p160 = por %p158, %p159
      %p161 = scmp.le.s32.totalorder 1, %s17
      %p162 = scmp.lt.s32.totalorder %s17, 3
      %p163 = pnand %p161, %p162
      %p164 = pneg %p163
      // Predicated region
      $region9: #{dqn_cnn_forward.3} parent=5 // pred_check
        _
      $region10: #{dqn_cnn_forward.3} parent=5 // pred_check_branch
        %166 = sbr.rel (%p163) target = $region12
      $region11: #{dqn_cnn_forward.3} parent=5 // pred_region
        %s167 = ssub.s32 %s17, 1
        // Predicated region
        $region13: #{dqn_cnn_forward.3} parent=11 // pred_check
          %p168 = pneg %p90
        $region14: #{dqn_cnn_forward.3} parent=11 // pred_check_branch
          %170 = sbr.rel (%p168) target = $region16
        $region15: #{dqn_cnn_forward.3} parent=11 // pred_region
          %s172 = ssub.s32 16, 16
          %173 = vsyncadd [#allocation7], %s172
          %s175 = sshll.u32 [#allocation6], 4
          %s176 = int_to_ptr.vmem [resolvable:$true] %s175
          %178 = dma.hbm_to_vmem [thread:$0]  %s2, 16, %s176, [#allocation7]
        $region16: #{dqn_cnn_forward.3} parent=11 // pred_fallthru
          _
        // Predicated region
        $region17: #{dqn_cnn_forward.3} parent=11 // pred_check
          %p179 = pneg %p111
        $region18: #{dqn_cnn_forward.3} parent=11 // pred_check_branch
          %181 = sbr.rel (%p179) target = $region20
        $region19: #{dqn_cnn_forward.3} parent=11 // pred_region
          %s183 = ssub.s32 1024, 1024
          %184 = vsyncadd [#allocation7], %s183
          %s185 = sshll.u32 [#allocation8], 4
          %s186 = int_to_ptr.vmem [resolvable:$true] %s185
          %191 = dma.hbm_to_vmem [thread:$0]  %s3, 1024, %s186, [#allocation7], 64, 64, 4
        $region20: #{dqn_cnn_forward.3} parent=11 // pred_fallthru
          _
        // Predicated region
        $region21: #{dqn_cnn_forward.3} parent=11 // pred_check
          %p192 = pneg %p132
        $region22: #{dqn_cnn_forward.3} parent=11 // pred_check_branch
          %194 = sbr.rel (%p192) target = $region24
        $region23: #{dqn_cnn_forward.3} parent=11 // pred_region
          %s196 = ssub.s32 16, 16
          %197 = vsyncadd [#allocation10], %s196
          %s199 = sshll.u32 [#allocation9], 4
          %s200 = int_to_ptr.vmem [resolvable:$true] %s199
          %202 = dma.hbm_to_vmem [thread:$0]  %s4, 16, %s200, [#allocation10]
        $region24: #{dqn_cnn_forward.3} parent=11 // pred_fallthru
          _
      $region12: #{dqn_cnn_forward.3} parent=5 // pred_fallthru
        _
      %p203 = scmp.lt.s32.totalorder %s17, 2
      // Predicated region
      $region25: #{dqn_cnn_forward.3} parent=5 // pred_check
        %p204 = pneg %p203
      $region26: #{dqn_cnn_forward.3} parent=5 // pred_check_branch
        %206 = sbr.rel (%p204) target = $region28
      $region27: #{dqn_cnn_forward.3} parent=5 // pred_region
        // Predicated region
        $region29: #{dqn_cnn_forward.3} parent=27 // pred_check
          %p207 = pneg %p37
        $region30: #{dqn_cnn_forward.3} parent=27 // pred_check_branch
          %209 = sbr.rel (%p207) target = $region32
        $region31: #{dqn_cnn_forward.3} parent=27 // pred_region
          %s210 = smul.u32 78, %s17
          %p211 = scmp.lt.s32.totalorder %s210, 155
          %s212 = scalar_select %p211, %s210, 155
          %s213 = scalar_lea.vmem %s0, %s212
          %s214 = smul.u32 78, %s17
        $region32: #{dqn_cnn_forward.3} parent=27 // pred_fallthru
          _
        // Predicated region
        $region33: #{dqn_cnn_forward.3} parent=27 // pred_check
          %p215 = pneg %p63
        $region34: #{dqn_cnn_forward.3} parent=27 // pred_check_branch
          %217 = sbr.rel (%p215) target = $region36
        $region35: #{dqn_cnn_forward.3} parent=27 // pred_region
          %s218 = sand.u32 %s53, 1
          %s219 = scalar_lea.sflag [#allocation4], %s218
          %s220 = sand.u32 %s53, 1
          %s221 = smul.addr %s220, 4992
          %s222 = scalar_lea.vmem [#allocation3], %s221
          %s223 = smul.u32 1248, %s17
          %s225 = ssub.s32 79872, 79872
          %226 = vsyncadd %s219, %s225
          %s227 = smul.addr %s223, 64
          %s228 = scalar_lea.hbm %s1, %s227
          %s229 = sshll.u32 %s222, 4
          %s230 = int_to_ptr.vmem [resolvable:$true] %s229
          %235 = dma.hbm_to_vmem [thread:$0]  %s228, 79872, %s230, %s219, 64, 64, 4
        $region36: #{dqn_cnn_forward.3} parent=27 // pred_fallthru
          _
      $region28: #{dqn_cnn_forward.3} parent=5 // pred_fallthru
        _
      %p236 = scmp.le.s32.totalorder 1, %s17
      %p237 = scmp.lt.s32.totalorder %s17, 3
      %p238 = pnand %p236, %p237
      %p239 = pneg %p238
      // Predicated region
      $region37: #{dqn_cnn_forward.3} parent=5 // pred_check
        _
      $region38: #{dqn_cnn_forward.3} parent=5 // pred_check_branch
        %241 = sbr.rel (%p238) target = $region40
      $region39: #{dqn_cnn_forward.3} parent=5 // pred_region
        %s242 = ssub.s32 %s17, 1
        %s243 = sand.u32 %s56, 1
        %s244 = scalar_lea.sflag [#allocation4], %s243
        %s245 = sand.u32 %s56, 1
        %s246 = smul.addr %s245, 4992
        %s247 = scalar_lea.vmem [#allocation3], %s246
        // Predicated region
        $region41: #{dqn_cnn_forward.3} parent=39 // pred_check
          %p248 = pneg %p69
        $region42: #{dqn_cnn_forward.3} parent=39 // pred_check_branch
          %250 = sbr.rel (%p248) target = $region44
        $region43: #{dqn_cnn_forward.3} parent=39 // pred_region
          %251 = dma.done %s244, 79872
        $region44: #{dqn_cnn_forward.3} parent=39 // pred_fallthru
          _
        // Predicated region
        $region45: #{dqn_cnn_forward.3} parent=39 // pred_check
          %p252 = pneg %p90
        $region46: #{dqn_cnn_forward.3} parent=39 // pred_check_branch
          %254 = sbr.rel (%p252) target = $region48
        $region47: #{dqn_cnn_forward.3} parent=39 // pred_region
          %255 = dma.done [#allocation7], 16
        $region48: #{dqn_cnn_forward.3} parent=39 // pred_fallthru
          _
        // Predicated region
        $region49: #{dqn_cnn_forward.3} parent=39 // pred_check
          %p256 = pneg %p111
        $region50: #{dqn_cnn_forward.3} parent=39 // pred_check_branch
          %258 = sbr.rel (%p256) target = $region52
        $region51: #{dqn_cnn_forward.3} parent=39 // pred_region
          %259 = dma.done [#allocation7], 1024
        $region52: #{dqn_cnn_forward.3} parent=39 // pred_fallthru
          _
        // Predicated region
        $region53: #{dqn_cnn_forward.3} parent=39 // pred_check
          %p260 = pneg %p132
        $region54: #{dqn_cnn_forward.3} parent=39 // pred_check_branch
          %262 = sbr.rel (%p260) target = $region56
        $region55: #{dqn_cnn_forward.3} parent=39 // pred_region
          %263 = dma.done [#allocation10], 16
        $region56: #{dqn_cnn_forward.3} parent=39 // pred_fallthru
          _
        %s264 = smul.u32 78, %s22
        %p265 = scmp.lt.s32.totalorder %s264, 155
        %s266 = scalar_select %p265, %s264, 155
        %s267 = scalar_lea.vmem %s0, %s266
        %p268 = pneg %p43
        %p269 = pneg %p40
        %s270 = sand.u32 %s56, 1
        %s271 = scalar_lea.sflag [#allocation4], %s270
        %s272 = sand.u32 %s56, 1
        %s273 = smul.addr %s272, 4992
        %s274 = scalar_lea.vmem [#allocation3], %s273
        %p275 = pneg %p69
        %p276 = pneg %p66
        %p277 = pneg %p90
        %p278 = pneg %p87
        %p279 = pneg %p111
        %p280 = pneg %p108
        %p281 = pneg %p132
        %p282 = pneg %p129
        %p283 = pneg %p153
        %p284 = pneg %p150
        %s285 = smul.u32 78, %s22
        %p286 = scmp.lt.s32.totalorder %s285, 155
        %s287 = scalar_select %p286, %s285, 155
        %s288 = scalar_lea.vmem %s0, %s287
        %s289 = smul.u32 78, %s22
        %s290 = smul.u32 1248, %s22
        %p292 = scmp.eq.s32.totalorder %s22, 0
        // Predicated region
        $region57: #{dqn_cnn_forward.3} parent=39 // pred_check
          %p293 = pneg %p292
        $region58: #{dqn_cnn_forward.3} parent=39 // pred_check_branch
          %295 = sbr.rel (%p293) target = $region60
        $region59: #{dqn_cnn_forward.3} parent=39 // pred_region
          %296 = vst [vmem:[#allocation2] sm:$0x3] 0.0
        $region60: #{dqn_cnn_forward.3} parent=39 // pred_fallthru
          _
        %v297 = vld [vmem:[#allocation2] sm:$0x3]
        %v298 = vld [vmem:[%s288] sm:$0xff]
        %v299 = vld [vmem:[%s288 + $0x8] sm:$0xff]
        %v300 = vld [vmem:[%s288 + $0x10] sm:$0xff]
        %v301 = vld [vmem:[%s288 + $0x18] sm:$0xff]
        %v302 = vld [vmem:[%s288 + $0x20] sm:$0xff]
        %v303 = vld [vmem:[%s288 + $0x28] sm:$0xff]
        %v304 = vld [vmem:[%s288 + $0x30] sm:$0xff]
        %v305 = vld [vmem:[%s288 + $0x38] sm:$0xff]
        %v306 = vld [vmem:[%s288 + $0x40] sm:$0xff]
        %v307 = vld [vmem:[%s288 + $0x48] sm:$0x3f]
        %v308 = vld [vmem:[%s247] sm:$0xf]
        %v309 = vld [vmem:[%s247 + $0x4] sm:$0xf]
        %v310 = vld [vmem:[%s247 + $0x8] sm:$0xf]
        %v311 = vld [vmem:[%s247 + $0xc] sm:$0xf]
        %v312 = vld [vmem:[%s247 + $0x10] sm:$0xf]
        %v313 = vld [vmem:[%s247 + $0x14] sm:$0xf]
        %v314 = vld [vmem:[%s247 + $0x18] sm:$0xf]
        %v315 = vld [vmem:[%s247 + $0x1c] sm:$0xf]
        %v316 = vld [vmem:[%s247 + $0x20] sm:$0xf]
        %v317 = vld [vmem:[%s247 + $0x24] sm:$0xf]
        %v318 = vld [vmem:[%s247 + $0x28] sm:$0xf]
        %v319 = vld [vmem:[%s247 + $0x2c] sm:$0xf]
        %v320 = vld [vmem:[%s247 + $0x30] sm:$0xf]
        %v321 = vld [vmem:[%s247 + $0x34] sm:$0xf]
        %v322 = vld [vmem:[%s247 + $0x38] sm:$0xf]
        %v323 = vld [vmem:[%s247 + $0x3c] sm:$0xf]
        %v324 = vld [vmem:[%s247 + $0x40] sm:$0xf]
        %v325 = vld [vmem:[%s247 + $0x44] sm:$0xf]
        %v326 = vld [vmem:[%s247 + $0x48] sm:$0xf]
        %v327 = vld [vmem:[%s247 + $0x4c] sm:$0xf]
        %v328 = vld [vmem:[%s247 + $0x50] sm:$0xf]
        %v329 = vld [vmem:[%s247 + $0x54] sm:$0xf]
        %v330 = vld [vmem:[%s247 + $0x58] sm:$0xf]
        %v331 = vld [vmem:[%s247 + $0x5c] sm:$0xf]
        %v332 = vld [vmem:[%s247 + $0x60] sm:$0xf]
        %v333 = vld [vmem:[%s247 + $0x64] sm:$0xf]
        %v334 = vld [vmem:[%s247 + $0x68] sm:$0xf]
        %v335 = vld [vmem:[%s247 + $0x6c] sm:$0xf]
        %v336 = vld [vmem:[%s247 + $0x70] sm:$0xf]
        %v337 = vld [vmem:[%s247 + $0x74] sm:$0xf]
        %v338 = vld [vmem:[%s247 + $0x78] sm:$0xf]
        %v339 = vld [vmem:[%s247 + $0x7c] sm:$0xf]
        %v340 = vld [vmem:[%s247 + $0x80] sm:$0xf]
        %v341 = vld [vmem:[%s247 + $0x84] sm:$0xf]
        %v342 = vld [vmem:[%s247 + $0x88] sm:$0xf]
        %v343 = vld [vmem:[%s247 + $0x8c] sm:$0xf]
        %v344 = vld [vmem:[%s247 + $0x90] sm:$0xf]
        %v345 = vld [vmem:[%s247 + $0x94] sm:$0xf]
        %v346 = vld [vmem:[%s247 + $0x98] sm:$0xf]
        %v347 = vld [vmem:[%s247 + $0x9c] sm:$0xf]
        %v348 = vld [vmem:[%s247 + $0xa0] sm:$0xf]
        %v349 = vld [vmem:[%s247 + $0xa4] sm:$0xf]
        %v350 = vld [vmem:[%s247 + $0xa8] sm:$0xf]
        %v351 = vld [vmem:[%s247 + $0xac] sm:$0xf]
        %v352 = vld [vmem:[%s247 + $0xb0] sm:$0xf]
        %v353 = vld [vmem:[%s247 + $0xb4] sm:$0xf]
        %v354 = vld [vmem:[%s247 + $0xb8] sm:$0xf]
        %v355 = vld [vmem:[%s247 + $0xbc] sm:$0xf]
        %v356 = vld [vmem:[%s247 + $0xc0] sm:$0xf]
        %v357 = vld [vmem:[%s247 + $0xc4] sm:$0xf]
        %v358 = vld [vmem:[%s247 + $0xc8] sm:$0xf]
        %v359 = vld [vmem:[%s247 + $0xcc] sm:$0xf]
        %v360 = vld [vmem:[%s247 + $0xd0] sm:$0xf]
        %v361 = vld [vmem:[%s247 + $0xd4] sm:$0xf]
        %v362 = vld [vmem:[%s247 + $0xd8] sm:$0xf]
        %v363 = vld [vmem:[%s247 + $0xdc] sm:$0xf]
        %v364 = vld [vmem:[%s247 + $0xe0] sm:$0xf]
        %v365 = vld [vmem:[%s247 + $0xe4] sm:$0xf]
        %v366 = vld [vmem:[%s247 + $0xe8] sm:$0xf]
        %v367 = vld [vmem:[%s247 + $0xec] sm:$0xf]
        %v368 = vld [vmem:[%s247 + $0xf0] sm:$0xf]
        %v369 = vld [vmem:[%s247 + $0xf4] sm:$0xf]
        %v370 = vld [vmem:[%s247 + $0xf8] sm:$0xf]
        %v371 = vld [vmem:[%s247 + $0xfc] sm:$0xf]
        %v372 = vld [vmem:[%s247 + $0x100] sm:$0xf]
        %v373 = vld [vmem:[%s247 + $0x104] sm:$0xf]
        %v374 = vld [vmem:[%s247 + $0x108] sm:$0xf]
        %v375 = vld [vmem:[%s247 + $0x10c] sm:$0xf]
        %v376 = vld [vmem:[%s247 + $0x110] sm:$0xf]
        %v377 = vld [vmem:[%s247 + $0x114] sm:$0xf]
        %v378 = vld [vmem:[%s247 + $0x118] sm:$0xf]
        %v379 = vld [vmem:[%s247 + $0x11c] sm:$0xf]
        %v380 = vld [vmem:[%s247 + $0x120] sm:$0xf]
        %v381 = vld [vmem:[%s247 + $0x124] sm:$0xf]
        %v382 = vld [vmem:[%s247 + $0x128] sm:$0xf]
        %v383 = vld [vmem:[%s247 + $0x12c] sm:$0xf]
        %v384 = vld [vmem:[%s247 + $0x130] sm:$0xf]
        %v385 = vld [vmem:[%s247 + $0x134] sm:$0xf]
        %v386 = vld [vmem:[%s247 + $0x138] sm:$0xf]
        %v387 = vld [vmem:[%s247 + $0x13c] sm:$0xf]
        %v388 = vld [vmem:[%s247 + $0x140] sm:$0xf]
        %v389 = vld [vmem:[%s247 + $0x144] sm:$0xf]
        %v390 = vld [vmem:[%s247 + $0x148] sm:$0xf]
        %v391 = vld [vmem:[%s247 + $0x14c] sm:$0xf]
        %v392 = vld [vmem:[%s247 + $0x150] sm:$0xf]
        %v393 = vld [vmem:[%s247 + $0x154] sm:$0xf]
        %v394 = vld [vmem:[%s247 + $0x158] sm:$0xf]
        %v395 = vld [vmem:[%s247 + $0x15c] sm:$0xf]
        %v396 = vld [vmem:[%s247 + $0x160] sm:$0xf]
        %v397 = vld [vmem:[%s247 + $0x164] sm:$0xf]
        %v398 = vld [vmem:[%s247 + $0x168] sm:$0xf]
        %v399 = vld [vmem:[%s247 + $0x16c] sm:$0xf]
        %v400 = vld [vmem:[%s247 + $0x170] sm:$0xf]
        %v401 = vld [vmem:[%s247 + $0x174] sm:$0xf]
        %v402 = vld [vmem:[%s247 + $0x178] sm:$0xf]
        %v403 = vld [vmem:[%s247 + $0x17c] sm:$0xf]
        %v404 = vld [vmem:[%s247 + $0x180] sm:$0xf]
        %v405 = vld [vmem:[%s247 + $0x184] sm:$0xf]
        %v406 = vld [vmem:[%s247 + $0x188] sm:$0xf]
        %v407 = vld [vmem:[%s247 + $0x18c] sm:$0xf]
        %v408 = vld [vmem:[%s247 + $0x190] sm:$0xf]
        %v409 = vld [vmem:[%s247 + $0x194] sm:$0xf]
        %v410 = vld [vmem:[%s247 + $0x198] sm:$0xf]
        %v411 = vld [vmem:[%s247 + $0x19c] sm:$0xf]
        %v412 = vld [vmem:[%s247 + $0x1a0] sm:$0xf]
        %v413 = vld [vmem:[%s247 + $0x1a4] sm:$0xf]
        %v414 = vld [vmem:[%s247 + $0x1a8] sm:$0xf]
        %v415 = vld [vmem:[%s247 + $0x1ac] sm:$0xf]
        %v416 = vld [vmem:[%s247 + $0x1b0] sm:$0xf]
        %v417 = vld [vmem:[%s247 + $0x1b4] sm:$0xf]
        %v418 = vld [vmem:[%s247 + $0x1b8] sm:$0xf]
        %v419 = vld [vmem:[%s247 + $0x1bc] sm:$0xf]
        %v420 = vld [vmem:[%s247 + $0x1c0] sm:$0xf]
        %v421 = vld [vmem:[%s247 + $0x1c4] sm:$0xf]
        %v422 = vld [vmem:[%s247 + $0x1c8] sm:$0xf]
        %v423 = vld [vmem:[%s247 + $0x1cc] sm:$0xf]
        %v424 = vld [vmem:[%s247 + $0x1d0] sm:$0xf]
        %v425 = vld [vmem:[%s247 + $0x1d4] sm:$0xf]
        %v426 = vld [vmem:[%s247 + $0x1d8] sm:$0xf]
        %v427 = vld [vmem:[%s247 + $0x1dc] sm:$0xf]
        %v428 = vld [vmem:[%s247 + $0x1e0] sm:$0xf]
        %v429 = vld [vmem:[%s247 + $0x1e4] sm:$0xf]
        %v430 = vld [vmem:[%s247 + $0x1e8] sm:$0xf]
        %v431 = vld [vmem:[%s247 + $0x1ec] sm:$0xf]
        %v432 = vld [vmem:[%s247 + $0x1f0] sm:$0xf]
        %v433 = vld [vmem:[%s247 + $0x1f4] sm:$0xf]
        %v434 = vld [vmem:[%s247 + $0x1f8] sm:$0xf]
        %v435 = vld [vmem:[%s247 + $0x1fc] sm:$0xf]
        %v436 = vld [vmem:[%s247 + $0x200] sm:$0xf]
        %v437 = vld [vmem:[%s247 + $0x204] sm:$0xf]
        %v438 = vld [vmem:[%s247 + $0x208] sm:$0xf]
        %v439 = vld [vmem:[%s247 + $0x20c] sm:$0xf]
        %v440 = vld [vmem:[%s247 + $0x210] sm:$0xf]
        %v441 = vld [vmem:[%s247 + $0x214] sm:$0xf]
        %v442 = vld [vmem:[%s247 + $0x218] sm:$0xf]
        %v443 = vld [vmem:[%s247 + $0x21c] sm:$0xf]
        %v444 = vld [vmem:[%s247 + $0x220] sm:$0xf]
        %v445 = vld [vmem:[%s247 + $0x224] sm:$0xf]
        %v446 = vld [vmem:[%s247 + $0x228] sm:$0xf]
        %v447 = vld [vmem:[%s247 + $0x22c] sm:$0xf]
        %v448 = vld [vmem:[%s247 + $0x230] sm:$0xf]
        %v449 = vld [vmem:[%s247 + $0x234] sm:$0xf]
        %v450 = vld [vmem:[%s247 + $0x238] sm:$0xf]
        %v451 = vld [vmem:[%s247 + $0x23c] sm:$0xf]
        %v452 = vld [vmem:[%s247 + $0x240] sm:$0xf]
        %v453 = vld [vmem:[%s247 + $0x244] sm:$0xf]
        %v454 = vld [vmem:[%s247 + $0x248] sm:$0xf]
        %v455 = vld [vmem:[%s247 + $0x24c] sm:$0xf]
        %v456 = vld [vmem:[%s247 + $0x250] sm:$0xf]
        %v457 = vld [vmem:[%s247 + $0x254] sm:$0xf]
        %v458 = vld [vmem:[%s247 + $0x258] sm:$0xf]
        %v459 = vld [vmem:[%s247 + $0x25c] sm:$0xf]
        %v460 = vld [vmem:[%s247 + $0x260] sm:$0xf]
        %v461 = vld [vmem:[%s247 + $0x264] sm:$0xf]
        %v462 = vld [vmem:[%s247 + $0x268] sm:$0xf]
        %v463 = vld [vmem:[%s247 + $0x26c] sm:$0xf]
        %v464 = vld [vmem:[%s247 + $0x270] sm:$0xf]
        %v465 = vld [vmem:[%s247 + $0x274] sm:$0xf]
        %v466 = vld [vmem:[%s247 + $0x278] sm:$0xf]
        %v467 = vld [vmem:[%s247 + $0x27c] sm:$0xf]
        %v468 = vld [vmem:[%s247 + $0x280] sm:$0xf]
        %v469 = vld [vmem:[%s247 + $0x284] sm:$0xf]
        %v470 = vld [vmem:[%s247 + $0x288] sm:$0xf]
        %v471 = vld [vmem:[%s247 + $0x28c] sm:$0xf]
        %v472 = vld [vmem:[%s247 + $0x290] sm:$0xf]
        %v473 = vld [vmem:[%s247 + $0x294] sm:$0xf]
        %v474 = vld [vmem:[%s247 + $0x298] sm:$0xf]
        %v475 = vld [vmem:[%s247 + $0x29c] sm:$0xf]
        %v476 = vld [vmem:[%s247 + $0x2a0] sm:$0xf]
        %v477 = vld [vmem:[%s247 + $0x2a4] sm:$0xf]
        %v478 = vld [vmem:[%s247 + $0x2a8] sm:$0xf]
        %v479 = vld [vmem:[%s247 + $0x2ac] sm:$0xf]
        %v480 = vld [vmem:[%s247 + $0x2b0] sm:$0xf]
        %v481 = vld [vmem:[%s247 + $0x2b4] sm:$0xf]
        %v482 = vld [vmem:[%s247 + $0x2b8] sm:$0xf]
        %v483 = vld [vmem:[%s247 + $0x2bc] sm:$0xf]
        %v484 = vld [vmem:[%s247 + $0x2c0] sm:$0xf]
        %v485 = vld [vmem:[%s247 + $0x2c4] sm:$0xf]
        %v486 = vld [vmem:[%s247 + $0x2c8] sm:$0xf]
        %v487 = vld [vmem:[%s247 + $0x2cc] sm:$0xf]
        %v488 = vld [vmem:[%s247 + $0x2d0] sm:$0xf]
        %v489 = vld [vmem:[%s247 + $0x2d4] sm:$0xf]
        %v490 = vld [vmem:[%s247 + $0x2d8] sm:$0xf]
        %v491 = vld [vmem:[%s247 + $0x2dc] sm:$0xf]
        %v492 = vld [vmem:[%s247 + $0x2e0] sm:$0xf]
        %v493 = vld [vmem:[%s247 + $0x2e4] sm:$0xf]
        %v494 = vld [vmem:[%s247 + $0x2e8] sm:$0xf]
        %v495 = vld [vmem:[%s247 + $0x2ec] sm:$0xf]
        %v496 = vld [vmem:[%s247 + $0x2f0] sm:$0xf]
        %v497 = vld [vmem:[%s247 + $0x2f4] sm:$0xf]
        %v498 = vld [vmem:[%s247 + $0x2f8] sm:$0xf]
        %v499 = vld [vmem:[%s247 + $0x2fc] sm:$0xf]
        %v500 = vld [vmem:[%s247 + $0x300] sm:$0xf]
        %v501 = vld [vmem:[%s247 + $0x304] sm:$0xf]
        %v502 = vld [vmem:[%s247 + $0x308] sm:$0xf]
        %v503 = vld [vmem:[%s247 + $0x30c] sm:$0xf]
        %v504 = vld [vmem:[%s247 + $0x310] sm:$0xf]
        %v505 = vld [vmem:[%s247 + $0x314] sm:$0xf]
        %v506 = vld [vmem:[%s247 + $0x318] sm:$0xf]
        %v507 = vld [vmem:[%s247 + $0x31c] sm:$0xf]
        %v508 = vld [vmem:[%s247 + $0x320] sm:$0xf]
        %v509 = vld [vmem:[%s247 + $0x324] sm:$0xf]
        %v510 = vld [vmem:[%s247 + $0x328] sm:$0xf]
        %v511 = vld [vmem:[%s247 + $0x32c] sm:$0xf]
        %v512 = vld [vmem:[%s247 + $0x330] sm:$0xf]
        %v513 = vld [vmem:[%s247 + $0x334] sm:$0xf]
        %v514 = vld [vmem:[%s247 + $0x338] sm:$0xf]
        %v515 = vld [vmem:[%s247 + $0x33c] sm:$0xf]
        %v516 = vld [vmem:[%s247 + $0x340] sm:$0xf]
        %v517 = vld [vmem:[%s247 + $0x344] sm:$0xf]
        %v518 = vld [vmem:[%s247 + $0x348] sm:$0xf]
        %v519 = vld [vmem:[%s247 + $0x34c] sm:$0xf]
        %v520 = vld [vmem:[%s247 + $0x350] sm:$0xf]
        %v521 = vld [vmem:[%s247 + $0x354] sm:$0xf]
        %v522 = vld [vmem:[%s247 + $0x358] sm:$0xf]
        %v523 = vld [vmem:[%s247 + $0x35c] sm:$0xf]
        %v524 = vld [vmem:[%s247 + $0x360] sm:$0xf]
        %v525 = vld [vmem:[%s247 + $0x364] sm:$0xf]
        %v526 = vld [vmem:[%s247 + $0x368] sm:$0xf]
        %v527 = vld [vmem:[%s247 + $0x36c] sm:$0xf]
        %v528 = vld [vmem:[%s247 + $0x370] sm:$0xf]
        %v529 = vld [vmem:[%s247 + $0x374] sm:$0xf]
        %v530 = vld [vmem:[%s247 + $0x378] sm:$0xf]
        %v531 = vld [vmem:[%s247 + $0x37c] sm:$0xf]
        %v532 = vld [vmem:[%s247 + $0x380] sm:$0xf]
        %v533 = vld [vmem:[%s247 + $0x384] sm:$0xf]
        %v534 = vld [vmem:[%s247 + $0x388] sm:$0xf]
        %v535 = vld [vmem:[%s247 + $0x38c] sm:$0xf]
        %v536 = vld [vmem:[%s247 + $0x390] sm:$0xf]
        %v537 = vld [vmem:[%s247 + $0x394] sm:$0xf]
        %v538 = vld [vmem:[%s247 + $0x398] sm:$0xf]
        %v539 = vld [vmem:[%s247 + $0x39c] sm:$0xf]
        %v540 = vld [vmem:[%s247 + $0x3a0] sm:$0xf]
        %v541 = vld [vmem:[%s247 + $0x3a4] sm:$0xf]
        %v542 = vld [vmem:[%s247 + $0x3a8] sm:$0xf]
        %v543 = vld [vmem:[%s247 + $0x3ac] sm:$0xf]
        %v544 = vld [vmem:[%s247 + $0x3b0] sm:$0xf]
        %v545 = vld [vmem:[%s247 + $0x3b4] sm:$0xf]
        %v546 = vld [vmem:[%s247 + $0x3b8] sm:$0xf]
        %v547 = vld [vmem:[%s247 + $0x3bc] sm:$0xf]
        %v548 = vld [vmem:[%s247 + $0x3c0] sm:$0xf]
        %v549 = vld [vmem:[%s247 + $0x3c4] sm:$0xf]
        %v550 = vld [vmem:[%s247 + $0x3c8] sm:$0xf]
        %v551 = vld [vmem:[%s247 + $0x3cc] sm:$0xf]
        %v552 = vld [vmem:[%s247 + $0x3d0] sm:$0xf]
        %v553 = vld [vmem:[%s247 + $0x3d4] sm:$0xf]
        %v554 = vld [vmem:[%s247 + $0x3d8] sm:$0xf]
        %v555 = vld [vmem:[%s247 + $0x3dc] sm:$0xf]
        %v556 = vld [vmem:[%s247 + $0x3e0] sm:$0xf]
        %v557 = vld [vmem:[%s247 + $0x3e4] sm:$0xf]
        %v558 = vld [vmem:[%s247 + $0x3e8] sm:$0xf]
        %v559 = vld [vmem:[%s247 + $0x3ec] sm:$0xf]
        %v560 = vld [vmem:[%s247 + $0x3f0] sm:$0xf]
        %v561 = vld [vmem:[%s247 + $0x3f4] sm:$0xf]
        %v562 = vld [vmem:[%s247 + $0x3f8] sm:$0xf]
        %v563 = vld [vmem:[%s247 + $0x3fc] sm:$0xf]
        %v564 = vld [vmem:[%s247 + $0x400] sm:$0xf]
        %v565 = vld [vmem:[%s247 + $0x404] sm:$0xf]
        %v566 = vld [vmem:[%s247 + $0x408] sm:$0xf]
        %v567 = vld [vmem:[%s247 + $0x40c] sm:$0xf]
        %v568 = vld [vmem:[%s247 + $0x410] sm:$0xf]
        %v569 = vld [vmem:[%s247 + $0x414] sm:$0xf]
        %v570 = vld [vmem:[%s247 + $0x418] sm:$0xf]
        %v571 = vld [vmem:[%s247 + $0x41c] sm:$0xf]
        %v572 = vld [vmem:[%s247 + $0x420] sm:$0xf]
        %v573 = vld [vmem:[%s247 + $0x424] sm:$0xf]
        %v574 = vld [vmem:[%s247 + $0x428] sm:$0xf]
        %v575 = vld [vmem:[%s247 + $0x42c] sm:$0xf]
        %v576 = vld [vmem:[%s247 + $0x430] sm:$0xf]
        %v577 = vld [vmem:[%s247 + $0x434] sm:$0xf]
        %v578 = vld [vmem:[%s247 + $0x438] sm:$0xf]
        %v579 = vld [vmem:[%s247 + $0x43c] sm:$0xf]
        %v580 = vld [vmem:[%s247 + $0x440] sm:$0xf]
        %v581 = vld [vmem:[%s247 + $0x444] sm:$0xf]
        %v582 = vld [vmem:[%s247 + $0x448] sm:$0xf]
        %v583 = vld [vmem:[%s247 + $0x44c] sm:$0xf]
        %v584 = vld [vmem:[%s247 + $0x450] sm:$0xf]
        %v585 = vld [vmem:[%s247 + $0x454] sm:$0xf]
        %v586 = vld [vmem:[%s247 + $0x458] sm:$0xf]
        %v587 = vld [vmem:[%s247 + $0x45c] sm:$0xf]
        %v588 = vld [vmem:[%s247 + $0x460] sm:$0xf]
        %v589 = vld [vmem:[%s247 + $0x464] sm:$0xf]
        %v590 = vld [vmem:[%s247 + $0x468] sm:$0xf]
        %v591 = vld [vmem:[%s247 + $0x46c] sm:$0xf]
        %v592 = vld [vmem:[%s247 + $0x470] sm:$0xf]
        %v593 = vld [vmem:[%s247 + $0x474] sm:$0xf]
        %v594 = vld [vmem:[%s247 + $0x478] sm:$0xf]
        %v595 = vld [vmem:[%s247 + $0x47c] sm:$0xf]
        %v596 = vld [vmem:[%s247 + $0x480] sm:$0xf]
        %v597 = vld [vmem:[%s247 + $0x484] sm:$0xf]
        %v598 = vld [vmem:[%s247 + $0x488] sm:$0xf]
        %v599 = vld [vmem:[%s247 + $0x48c] sm:$0xf]
        %v600 = vld [vmem:[%s247 + $0x490] sm:$0xf]
        %v601 = vld [vmem:[%s247 + $0x494] sm:$0xf]
        %v602 = vld [vmem:[%s247 + $0x498] sm:$0xf]
        %v603 = vld [vmem:[%s247 + $0x49c] sm:$0xf]
        %v604 = vld [vmem:[%s247 + $0x4a0] sm:$0xf]
        %v605 = vld [vmem:[%s247 + $0x4a4] sm:$0xf]
        %v606 = vld [vmem:[%s247 + $0x4a8] sm:$0xf]
        %v607 = vld [vmem:[%s247 + $0x4ac] sm:$0xf]
        %v608 = vld [vmem:[%s247 + $0x4b0] sm:$0xf]
        %v609 = vld [vmem:[%s247 + $0x4b4] sm:$0xf]
        %v610 = vld [vmem:[%s247 + $0x4b8] sm:$0xf]
        %v611 = vld [vmem:[%s247 + $0x4bc] sm:$0xf]
        %v612 = vld [vmem:[%s247 + $0x4c0] sm:$0xf]
        %v613 = vld [vmem:[%s247 + $0x4c4] sm:$0xf]
        %v614 = vld [vmem:[%s247 + $0x4c8] sm:$0xf]
        %v615 = vld [vmem:[%s247 + $0x4cc] sm:$0xf]
        %v616 = vld [vmem:[%s247 + $0x4d0] sm:$0xf]
        %v617 = vld [vmem:[%s247 + $0x4d4] sm:$0xf]
        %v618 = vld [vmem:[%s247 + $0x4d8] sm:$0xf]
        %v619 = vld [vmem:[%s247 + $0x4dc] sm:$0xf]
        %v620 = vld [vmem:[%s247 + $0x4e0] sm:$0xf]
        %v621 = vld [vmem:[%s247 + $0x4e4] sm:$0xf]
        %v622 = vld [vmem:[%s247 + $0x4e8] sm:$0xf]
        %v623 = vld [vmem:[%s247 + $0x4ec] sm:$0xf]
        %v624 = vld [vmem:[%s247 + $0x4f0] sm:$0xf]
        %v625 = vld [vmem:[%s247 + $0x4f4] sm:$0xf]
        %v626 = vld [vmem:[%s247 + $0x4f8] sm:$0xf]
        %v627 = vld [vmem:[%s247 + $0x4fc] sm:$0xf]
        %v628 = vld [vmem:[%s247 + $0x500] sm:$0xf]
        %v629 = vld [vmem:[%s247 + $0x504] sm:$0xf]
        %v630 = vld [vmem:[%s247 + $0x508] sm:$0xf]
        %v631 = vld [vmem:[%s247 + $0x50c] sm:$0xf]
        %v632 = vld [vmem:[%s247 + $0x510] sm:$0xf]
        %v633 = vld [vmem:[%s247 + $0x514] sm:$0xf]
        %v634 = vld [vmem:[%s247 + $0x518] sm:$0xf]
        %v635 = vld [vmem:[%s247 + $0x51c] sm:$0xf]
        %v636 = vld [vmem:[%s247 + $0x520] sm:$0xf]
        %v637 = vld [vmem:[%s247 + $0x524] sm:$0xf]
        %v638 = vld [vmem:[%s247 + $0x528] sm:$0xf]
        %v639 = vld [vmem:[%s247 + $0x52c] sm:$0xf]
        %v640 = vld [vmem:[%s247 + $0x530] sm:$0xf]
        %v641 = vld [vmem:[%s247 + $0x534] sm:$0xf]
        %v642 = vld [vmem:[%s247 + $0x538] sm:$0xf]
        %v643 = vld [vmem:[%s247 + $0x53c] sm:$0xf]
        %v644 = vld [vmem:[%s247 + $0x540] sm:$0xf]
        %v645 = vld [vmem:[%s247 + $0x544] sm:$0xf]
        %v646 = vld [vmem:[%s247 + $0x548] sm:$0xf]
        %v647 = vld [vmem:[%s247 + $0x54c] sm:$0xf]
        %v648 = vld [vmem:[%s247 + $0x550] sm:$0xf]
        %v649 = vld [vmem:[%s247 + $0x554] sm:$0xf]
        %v650 = vld [vmem:[%s247 + $0x558] sm:$0xf]
        %v651 = vld [vmem:[%s247 + $0x55c] sm:$0xf]
        %v652 = vld [vmem:[%s247 + $0x560] sm:$0xf]
        %v653 = vld [vmem:[%s247 + $0x564] sm:$0xf]
        %v654 = vld [vmem:[%s247 + $0x568] sm:$0xf]
        %v655 = vld [vmem:[%s247 + $0x56c] sm:$0xf]
        %v656 = vld [vmem:[%s247 + $0x570] sm:$0xf]
        %v657 = vld [vmem:[%s247 + $0x574] sm:$0xf]
        %v658 = vld [vmem:[%s247 + $0x578] sm:$0xf]
        %v659 = vld [vmem:[%s247 + $0x57c] sm:$0xf]
        %v660 = vld [vmem:[%s247 + $0x580] sm:$0xf]
        %v661 = vld [vmem:[%s247 + $0x584] sm:$0xf]
        %v662 = vld [vmem:[%s247 + $0x588] sm:$0xf]
        %v663 = vld [vmem:[%s247 + $0x58c] sm:$0xf]
        %v664 = vld [vmem:[%s247 + $0x590] sm:$0xf]
        %v665 = vld [vmem:[%s247 + $0x594] sm:$0xf]
        %v666 = vld [vmem:[%s247 + $0x598] sm:$0xf]
        %v667 = vld [vmem:[%s247 + $0x59c] sm:$0xf]
        %v668 = vld [vmem:[%s247 + $0x5a0] sm:$0xf]
        %v669 = vld [vmem:[%s247 + $0x5a4] sm:$0xf]
        %v670 = vld [vmem:[%s247 + $0x5a8] sm:$0xf]
        %v671 = vld [vmem:[%s247 + $0x5ac] sm:$0xf]
        %v672 = vld [vmem:[%s247 + $0x5b0] sm:$0xf]
        %v673 = vld [vmem:[%s247 + $0x5b4] sm:$0xf]
        %v674 = vld [vmem:[%s247 + $0x5b8] sm:$0xf]
        %v675 = vld [vmem:[%s247 + $0x5bc] sm:$0xf]
        %v676 = vld [vmem:[%s247 + $0x5c0] sm:$0xf]
        %v677 = vld [vmem:[%s247 + $0x5c4] sm:$0xf]
        %v678 = vld [vmem:[%s247 + $0x5c8] sm:$0xf]
        %v679 = vld [vmem:[%s247 + $0x5cc] sm:$0xf]
        %v680 = vld [vmem:[%s247 + $0x5d0] sm:$0xf]
        %v681 = vld [vmem:[%s247 + $0x5d4] sm:$0xf]
        %v682 = vld [vmem:[%s247 + $0x5d8] sm:$0xf]
        %v683 = vld [vmem:[%s247 + $0x5dc] sm:$0xf]
        %v684 = vld [vmem:[%s247 + $0x5e0] sm:$0xf]
        %v685 = vld [vmem:[%s247 + $0x5e4] sm:$0xf]
        %v686 = vld [vmem:[%s247 + $0x5e8] sm:$0xf]
        %v687 = vld [vmem:[%s247 + $0x5ec] sm:$0xf]
        %v688 = vld [vmem:[%s247 + $0x5f0] sm:$0xf]
        %v689 = vld [vmem:[%s247 + $0x5f4] sm:$0xf]
        %v690 = vld [vmem:[%s247 + $0x5f8] sm:$0xf]
        %v691 = vld [vmem:[%s247 + $0x5fc] sm:$0xf]
        %v692 = vld [vmem:[%s247 + $0x600] sm:$0xf]
        %v693 = vld [vmem:[%s247 + $0x604] sm:$0xf]
        %v694 = vld [vmem:[%s247 + $0x608] sm:$0xf]
        %v695 = vld [vmem:[%s247 + $0x60c] sm:$0xf]
        %v696 = vld [vmem:[%s247 + $0x610] sm:$0xf]
        %v697 = vld [vmem:[%s247 + $0x614] sm:$0xf]
        %v698 = vld [vmem:[%s247 + $0x618] sm:$0xf]
        %v699 = vld [vmem:[%s247 + $0x61c] sm:$0xf]
        %v700 = vld [vmem:[%s247 + $0x620] sm:$0xf]
        %v701 = vld [vmem:[%s247 + $0x624] sm:$0xf]
        %v702 = vld [vmem:[%s247 + $0x628] sm:$0xf]
        %v703 = vld [vmem:[%s247 + $0x62c] sm:$0xf]
        %v704 = vld [vmem:[%s247 + $0x630] sm:$0xf]
        %v705 = vld [vmem:[%s247 + $0x634] sm:$0xf]
        %v706 = vld [vmem:[%s247 + $0x638] sm:$0xf]
        %v707 = vld [vmem:[%s247 + $0x63c] sm:$0xf]
        %v708 = vld [vmem:[%s247 + $0x640] sm:$0xf]
        %v709 = vld [vmem:[%s247 + $0x644] sm:$0xf]
        %v710 = vld [vmem:[%s247 + $0x648] sm:$0xf]
        %v711 = vld [vmem:[%s247 + $0x64c] sm:$0xf]
        %v712 = vld [vmem:[%s247 + $0x650] sm:$0xf]
        %v713 = vld [vmem:[%s247 + $0x654] sm:$0xf]
        %v714 = vld [vmem:[%s247 + $0x658] sm:$0xf]
        %v715 = vld [vmem:[%s247 + $0x65c] sm:$0xf]
        %v716 = vld [vmem:[%s247 + $0x660] sm:$0xf]
        %v717 = vld [vmem:[%s247 + $0x664] sm:$0xf]
        %v718 = vld [vmem:[%s247 + $0x668] sm:$0xf]
        %v719 = vld [vmem:[%s247 + $0x66c] sm:$0xf]
        %v720 = vld [vmem:[%s247 + $0x670] sm:$0xf]
        %v721 = vld [vmem:[%s247 + $0x674] sm:$0xf]
        %v722 = vld [vmem:[%s247 + $0x678] sm:$0xf]
        %v723 = vld [vmem:[%s247 + $0x67c] sm:$0xf]
        %v724 = vld [vmem:[%s247 + $0x680] sm:$0xf]
        %v725 = vld [vmem:[%s247 + $0x684] sm:$0xf]
        %v726 = vld [vmem:[%s247 + $0x688] sm:$0xf]
        %v727 = vld [vmem:[%s247 + $0x68c] sm:$0xf]
        %v728 = vld [vmem:[%s247 + $0x690] sm:$0xf]
        %v729 = vld [vmem:[%s247 + $0x694] sm:$0xf]
        %v730 = vld [vmem:[%s247 + $0x698] sm:$0xf]
        %v731 = vld [vmem:[%s247 + $0x69c] sm:$0xf]
        %v732 = vld [vmem:[%s247 + $0x6a0] sm:$0xf]
        %v733 = vld [vmem:[%s247 + $0x6a4] sm:$0xf]
        %v734 = vld [vmem:[%s247 + $0x6a8] sm:$0xf]
        %v735 = vld [vmem:[%s247 + $0x6ac] sm:$0xf]
        %v736 = vld [vmem:[%s247 + $0x6b0] sm:$0xf]
        %v737 = vld [vmem:[%s247 + $0x6b4] sm:$0xf]
        %v738 = vld [vmem:[%s247 + $0x6b8] sm:$0xf]
        %v739 = vld [vmem:[%s247 + $0x6bc] sm:$0xf]
        %v740 = vld [vmem:[%s247 + $0x6c0] sm:$0xf]
        %v741 = vld [vmem:[%s247 + $0x6c4] sm:$0xf]
        %v742 = vld [vmem:[%s247 + $0x6c8] sm:$0xf]
        %v743 = vld [vmem:[%s247 + $0x6cc] sm:$0xf]
        %v744 = vld [vmem:[%s247 + $0x6d0] sm:$0xf]
        %v745 = vld [vmem:[%s247 + $0x6d4] sm:$0xf]
        %v746 = vld [vmem:[%s247 + $0x6d8] sm:$0xf]
        %v747 = vld [vmem:[%s247 + $0x6dc] sm:$0xf]
        %v748 = vld [vmem:[%s247 + $0x6e0] sm:$0xf]
        %v749 = vld [vmem:[%s247 + $0x6e4] sm:$0xf]
        %v750 = vld [vmem:[%s247 + $0x6e8] sm:$0xf]
        %v751 = vld [vmem:[%s247 + $0x6ec] sm:$0xf]
        %v752 = vld [vmem:[%s247 + $0x6f0] sm:$0xf]
        %v753 = vld [vmem:[%s247 + $0x6f4] sm:$0xf]
        %v754 = vld [vmem:[%s247 + $0x6f8] sm:$0xf]
        %v755 = vld [vmem:[%s247 + $0x6fc] sm:$0xf]
        %v756 = vld [vmem:[%s247 + $0x700] sm:$0xf]
        %v757 = vld [vmem:[%s247 + $0x704] sm:$0xf]
        %v758 = vld [vmem:[%s247 + $0x708] sm:$0xf]
        %v759 = vld [vmem:[%s247 + $0x70c] sm:$0xf]
        %v760 = vld [vmem:[%s247 + $0x710] sm:$0xf]
        %v761 = vld [vmem:[%s247 + $0x714] sm:$0xf]
        %v762 = vld [vmem:[%s247 + $0x718] sm:$0xf]
        %v763 = vld [vmem:[%s247 + $0x71c] sm:$0xf]
        %v764 = vld [vmem:[%s247 + $0x720] sm:$0xf]
        %v765 = vld [vmem:[%s247 + $0x724] sm:$0xf]
        %v766 = vld [vmem:[%s247 + $0x728] sm:$0xf]
        %v767 = vld [vmem:[%s247 + $0x72c] sm:$0xf]
        %v768 = vld [vmem:[%s247 + $0x730] sm:$0xf]
        %v769 = vld [vmem:[%s247 + $0x734] sm:$0xf]
        %v770 = vld [vmem:[%s247 + $0x738] sm:$0xf]
        %v771 = vld [vmem:[%s247 + $0x73c] sm:$0xf]
        %v772 = vld [vmem:[%s247 + $0x740] sm:$0xf]
        %v773 = vld [vmem:[%s247 + $0x744] sm:$0xf]
        %v774 = vld [vmem:[%s247 + $0x748] sm:$0xf]
        %v775 = vld [vmem:[%s247 + $0x74c] sm:$0xf]
        %v776 = vld [vmem:[%s247 + $0x750] sm:$0xf]
        %v777 = vld [vmem:[%s247 + $0x754] sm:$0xf]
        %v778 = vld [vmem:[%s247 + $0x758] sm:$0xf]
        %v779 = vld [vmem:[%s247 + $0x75c] sm:$0xf]
        %v780 = vld [vmem:[%s247 + $0x760] sm:$0xf]
        %v781 = vld [vmem:[%s247 + $0x764] sm:$0xf]
        %v782 = vld [vmem:[%s247 + $0x768] sm:$0xf]
        %v783 = vld [vmem:[%s247 + $0x76c] sm:$0xf]
        %v784 = vld [vmem:[%s247 + $0x770] sm:$0xf]
        %v785 = vld [vmem:[%s247 + $0x774] sm:$0xf]
        %v786 = vld [vmem:[%s247 + $0x778] sm:$0xf]
        %v787 = vld [vmem:[%s247 + $0x77c] sm:$0xf]
        %v788 = vld [vmem:[%s247 + $0x780] sm:$0xf]
        %v789 = vld [vmem:[%s247 + $0x784] sm:$0xf]
        %v790 = vld [vmem:[%s247 + $0x788] sm:$0xf]
        %v791 = vld [vmem:[%s247 + $0x78c] sm:$0xf]
        %v792 = vld [vmem:[%s247 + $0x790] sm:$0xf]
        %v793 = vld [vmem:[%s247 + $0x794] sm:$0xf]
        %v794 = vld [vmem:[%s247 + $0x798] sm:$0xf]
        %v795 = vld [vmem:[%s247 + $0x79c] sm:$0xf]
        %v796 = vld [vmem:[%s247 + $0x7a0] sm:$0xf]
        %v797 = vld [vmem:[%s247 + $0x7a4] sm:$0xf]
        %v798 = vld [vmem:[%s247 + $0x7a8] sm:$0xf]
        %v799 = vld [vmem:[%s247 + $0x7ac] sm:$0xf]
        %v800 = vld [vmem:[%s247 + $0x7b0] sm:$0xf]
        %v801 = vld [vmem:[%s247 + $0x7b4] sm:$0xf]
        %v802 = vld [vmem:[%s247 + $0x7b8] sm:$0xf]
        %v803 = vld [vmem:[%s247 + $0x7bc] sm:$0xf]
        %v804 = vld [vmem:[%s247 + $0x7c0] sm:$0xf]
        %v805 = vld [vmem:[%s247 + $0x7c4] sm:$0xf]
        %v806 = vld [vmem:[%s247 + $0x7c8] sm:$0xf]
        %v807 = vld [vmem:[%s247 + $0x7cc] sm:$0xf]
        %v808 = vld [vmem:[%s247 + $0x7d0] sm:$0xf]
        %v809 = vld [vmem:[%s247 + $0x7d4] sm:$0xf]
        %v810 = vld [vmem:[%s247 + $0x7d8] sm:$0xf]
        %v811 = vld [vmem:[%s247 + $0x7dc] sm:$0xf]
        %v812 = vld [vmem:[%s247 + $0x7e0] sm:$0xf]
        %v813 = vld [vmem:[%s247 + $0x7e4] sm:$0xf]
        %v814 = vld [vmem:[%s247 + $0x7e8] sm:$0xf]
        %v815 = vld [vmem:[%s247 + $0x7ec] sm:$0xf]
        %v816 = vld [vmem:[%s247 + $0x7f0] sm:$0xf]
        %v817 = vld [vmem:[%s247 + $0x7f4] sm:$0xf]
        %v818 = vld [vmem:[%s247 + $0x7f8] sm:$0xf]
        %v819 = vld [vmem:[%s247 + $0x7fc] sm:$0xf]
        %v820 = vld [vmem:[%s247 + $0x800] sm:$0xf]
        %v821 = vld [vmem:[%s247 + $0x804] sm:$0xf]
        %v822 = vld [vmem:[%s247 + $0x808] sm:$0xf]
        %v823 = vld [vmem:[%s247 + $0x80c] sm:$0xf]
        %v824 = vld [vmem:[%s247 + $0x810] sm:$0xf]
        %v825 = vld [vmem:[%s247 + $0x814] sm:$0xf]
        %v826 = vld [vmem:[%s247 + $0x818] sm:$0xf]
        %v827 = vld [vmem:[%s247 + $0x81c] sm:$0xf]
        %v828 = vld [vmem:[%s247 + $0x820] sm:$0xf]
        %v829 = vld [vmem:[%s247 + $0x824] sm:$0xf]
        %v830 = vld [vmem:[%s247 + $0x828] sm:$0xf]
        %v831 = vld [vmem:[%s247 + $0x82c] sm:$0xf]
        %v832 = vld [vmem:[%s247 + $0x830] sm:$0xf]
        %v833 = vld [vmem:[%s247 + $0x834] sm:$0xf]
        %v834 = vld [vmem:[%s247 + $0x838] sm:$0xf]
        %v835 = vld [vmem:[%s247 + $0x83c] sm:$0xf]
        %v836 = vld [vmem:[%s247 + $0x840] sm:$0xf]
        %v837 = vld [vmem:[%s247 + $0x844] sm:$0xf]
        %v838 = vld [vmem:[%s247 + $0x848] sm:$0xf]
        %v839 = vld [vmem:[%s247 + $0x84c] sm:$0xf]
        %v840 = vld [vmem:[%s247 + $0x850] sm:$0xf]
        %v841 = vld [vmem:[%s247 + $0x854] sm:$0xf]
        %v842 = vld [vmem:[%s247 + $0x858] sm:$0xf]
        %v843 = vld [vmem:[%s247 + $0x85c] sm:$0xf]
        %v844 = vld [vmem:[%s247 + $0x860] sm:$0xf]
        %v845 = vld [vmem:[%s247 + $0x864] sm:$0xf]
        %v846 = vld [vmem:[%s247 + $0x868] sm:$0xf]
        %v847 = vld [vmem:[%s247 + $0x86c] sm:$0xf]
        %v848 = vld [vmem:[%s247 + $0x870] sm:$0xf]
        %v849 = vld [vmem:[%s247 + $0x874] sm:$0xf]
        %v850 = vld [vmem:[%s247 + $0x878] sm:$0xf]
        %v851 = vld [vmem:[%s247 + $0x87c] sm:$0xf]
        %v852 = vld [vmem:[%s247 + $0x880] sm:$0xf]
        %v853 = vld [vmem:[%s247 + $0x884] sm:$0xf]
        %v854 = vld [vmem:[%s247 + $0x888] sm:$0xf]
        %v855 = vld [vmem:[%s247 + $0x88c] sm:$0xf]
        %v856 = vld [vmem:[%s247 + $0x890] sm:$0xf]
        %v857 = vld [vmem:[%s247 + $0x894] sm:$0xf]
        %v858 = vld [vmem:[%s247 + $0x898] sm:$0xf]
        %v859 = vld [vmem:[%s247 + $0x89c] sm:$0xf]
        %v860 = vld [vmem:[%s247 + $0x8a0] sm:$0xf]
        %v861 = vld [vmem:[%s247 + $0x8a4] sm:$0xf]
        %v862 = vld [vmem:[%s247 + $0x8a8] sm:$0xf]
        %v863 = vld [vmem:[%s247 + $0x8ac] sm:$0xf]
        %v864 = vld [vmem:[%s247 + $0x8b0] sm:$0xf]
        %v865 = vld [vmem:[%s247 + $0x8b4] sm:$0xf]
        %v866 = vld [vmem:[%s247 + $0x8b8] sm:$0xf]
        %v867 = vld [vmem:[%s247 + $0x8bc] sm:$0xf]
        %v868 = vld [vmem:[%s247 + $0x8c0] sm:$0xf]
        %v869 = vld [vmem:[%s247 + $0x8c4] sm:$0xf]
        %v870 = vld [vmem:[%s247 + $0x8c8] sm:$0xf]
        %v871 = vld [vmem:[%s247 + $0x8cc] sm:$0xf]
        %v872 = vld [vmem:[%s247 + $0x8d0] sm:$0xf]
        %v873 = vld [vmem:[%s247 + $0x8d4] sm:$0xf]
        %v874 = vld [vmem:[%s247 + $0x8d8] sm:$0xf]
        %v875 = vld [vmem:[%s247 + $0x8dc] sm:$0xf]
        %v876 = vld [vmem:[%s247 + $0x8e0] sm:$0xf]
        %v877 = vld [vmem:[%s247 + $0x8e4] sm:$0xf]
        %v878 = vld [vmem:[%s247 + $0x8e8] sm:$0xf]
        %v879 = vld [vmem:[%s247 + $0x8ec] sm:$0xf]
        %v880 = vld [vmem:[%s247 + $0x8f0] sm:$0xf]
        %v881 = vld [vmem:[%s247 + $0x8f4] sm:$0xf]
        %v882 = vld [vmem:[%s247 + $0x8f8] sm:$0xf]
        %v883 = vld [vmem:[%s247 + $0x8fc] sm:$0xf]
        %v884 = vld [vmem:[%s247 + $0x900] sm:$0xf]
        %v885 = vld [vmem:[%s247 + $0x904] sm:$0xf]
        %v886 = vld [vmem:[%s247 + $0x908] sm:$0xf]
        %v887 = vld [vmem:[%s247 + $0x90c] sm:$0xf]
        %v888 = vld [vmem:[%s247 + $0x910] sm:$0xf]
        %v889 = vld [vmem:[%s247 + $0x914] sm:$0xf]
        %v890 = vld [vmem:[%s247 + $0x918] sm:$0xf]
        %v891 = vld [vmem:[%s247 + $0x91c] sm:$0xf]
        %v892 = vld [vmem:[%s247 + $0x920] sm:$0xf]
        %v893 = vld [vmem:[%s247 + $0x924] sm:$0xf]
        %v894 = vld [vmem:[%s247 + $0x928] sm:$0xf]
        %v895 = vld [vmem:[%s247 + $0x92c] sm:$0xf]
        %v896 = vld [vmem:[%s247 + $0x930] sm:$0xf]
        %v897 = vld [vmem:[%s247 + $0x934] sm:$0xf]
        %v898 = vld [vmem:[%s247 + $0x938] sm:$0xf]
        %v899 = vld [vmem:[%s247 + $0x93c] sm:$0xf]
        %v900 = vld [vmem:[%s247 + $0x940] sm:$0xf]
        %v901 = vld [vmem:[%s247 + $0x944] sm:$0xf]
        %v902 = vld [vmem:[%s247 + $0x948] sm:$0xf]
        %v903 = vld [vmem:[%s247 + $0x94c] sm:$0xf]
        %v904 = vld [vmem:[%s247 + $0x950] sm:$0xf]
        %v905 = vld [vmem:[%s247 + $0x954] sm:$0xf]
        %v906 = vld [vmem:[%s247 + $0x958] sm:$0xf]
        %v907 = vld [vmem:[%s247 + $0x95c] sm:$0xf]
        %v908 = vld [vmem:[%s247 + $0x960] sm:$0xf]
        %v909 = vld [vmem:[%s247 + $0x964] sm:$0xf]
        %v910 = vld [vmem:[%s247 + $0x968] sm:$0xf]
        %v911 = vld [vmem:[%s247 + $0x96c] sm:$0xf]
        %v912 = vld [vmem:[%s247 + $0x970] sm:$0xf]
        %v913 = vld [vmem:[%s247 + $0x974] sm:$0xf]
        %v914 = vld [vmem:[%s247 + $0x978] sm:$0xf]
        %v915 = vld [vmem:[%s247 + $0x97c] sm:$0xf]
        %v916 = vld [vmem:[%s247 + $0x980] sm:$0xf]
        %v917 = vld [vmem:[%s247 + $0x984] sm:$0xf]
        %v918 = vld [vmem:[%s247 + $0x988] sm:$0xf]
        %v919 = vld [vmem:[%s247 + $0x98c] sm:$0xf]
        %v920 = vld [vmem:[%s247 + $0x990] sm:$0xf]
        %v921 = vld [vmem:[%s247 + $0x994] sm:$0xf]
        %v922 = vld [vmem:[%s247 + $0x998] sm:$0xf]
        %v923 = vld [vmem:[%s247 + $0x99c] sm:$0xf]
        %v924 = vld [vmem:[%s247 + $0x9a0] sm:$0xf]
        %v925 = vld [vmem:[%s247 + $0x9a4] sm:$0xf]
        %v926 = vld [vmem:[%s247 + $0x9a8] sm:$0xf]
        %v927 = vld [vmem:[%s247 + $0x9ac] sm:$0xf]
        %v928 = vld [vmem:[%s247 + $0x9b0] sm:$0xf]
        %v929 = vld [vmem:[%s247 + $0x9b4] sm:$0xf]
        %v930 = vld [vmem:[%s247 + $0x9b8] sm:$0xf]
        %v931 = vld [vmem:[%s247 + $0x9bc] sm:$0xf]
        %v932 = vld [vmem:[%s247 + $0x9c0] sm:$0xf]
        %v933 = vld [vmem:[%s247 + $0x9c4] sm:$0xf]
        %v934 = vld [vmem:[%s247 + $0x9c8] sm:$0xf]
        %v935 = vld [vmem:[%s247 + $0x9cc] sm:$0xf]
        %v936 = vld [vmem:[%s247 + $0x9d0] sm:$0xf]
        %v937 = vld [vmem:[%s247 + $0x9d4] sm:$0xf]
        %v938 = vld [vmem:[%s247 + $0x9d8] sm:$0xf]
        %v939 = vld [vmem:[%s247 + $0x9dc] sm:$0xf]
        %v940 = vld [vmem:[%s247 + $0x9e0] sm:$0xf]
        %v941 = vld [vmem:[%s247 + $0x9e4] sm:$0xf]
        %v942 = vld [vmem:[%s247 + $0x9e8] sm:$0xf]
        %v943 = vld [vmem:[%s247 + $0x9ec] sm:$0xf]
        %v944 = vld [vmem:[%s247 + $0x9f0] sm:$0xf]
        %v945 = vld [vmem:[%s247 + $0x9f4] sm:$0xf]
        %v946 = vld [vmem:[%s247 + $0x9f8] sm:$0xf]
        %v947 = vld [vmem:[%s247 + $0x9fc] sm:$0xf]
        %v948 = vld [vmem:[%s247 + $0xa00] sm:$0xf]
        %v949 = vld [vmem:[%s247 + $0xa04] sm:$0xf]
        %v950 = vld [vmem:[%s247 + $0xa08] sm:$0xf]
        %v951 = vld [vmem:[%s247 + $0xa0c] sm:$0xf]
        %v952 = vld [vmem:[%s247 + $0xa10] sm:$0xf]
        %v953 = vld [vmem:[%s247 + $0xa14] sm:$0xf]
        %v954 = vld [vmem:[%s247 + $0xa18] sm:$0xf]
        %v955 = vld [vmem:[%s247 + $0xa1c] sm:$0xf]
        %v956 = vld [vmem:[%s247 + $0xa20] sm:$0xf]
        %v957 = vld [vmem:[%s247 + $0xa24] sm:$0xf]
        %v958 = vld [vmem:[%s247 + $0xa28] sm:$0xf]
        %v959 = vld [vmem:[%s247 + $0xa2c] sm:$0xf]
        %v960 = vld [vmem:[%s247 + $0xa30] sm:$0xf]
        %v961 = vld [vmem:[%s247 + $0xa34] sm:$0xf]
        %v962 = vld [vmem:[%s247 + $0xa38] sm:$0xf]
        %v963 = vld [vmem:[%s247 + $0xa3c] sm:$0xf]
        %v964 = vld [vmem:[%s247 + $0xa40] sm:$0xf]
        %v965 = vld [vmem:[%s247 + $0xa44] sm:$0xf]
        %v966 = vld [vmem:[%s247 + $0xa48] sm:$0xf]
        %v967 = vld [vmem:[%s247 + $0xa4c] sm:$0xf]
        %v968 = vld [vmem:[%s247 + $0xa50] sm:$0xf]
        %v969 = vld [vmem:[%s247 + $0xa54] sm:$0xf]
        %v970 = vld [vmem:[%s247 + $0xa58] sm:$0xf]
        %v971 = vld [vmem:[%s247 + $0xa5c] sm:$0xf]
        %v972 = vld [vmem:[%s247 + $0xa60] sm:$0xf]
        %v973 = vld [vmem:[%s247 + $0xa64] sm:$0xf]
        %v974 = vld [vmem:[%s247 + $0xa68] sm:$0xf]
        %v975 = vld [vmem:[%s247 + $0xa6c] sm:$0xf]
        %v976 = vld [vmem:[%s247 + $0xa70] sm:$0xf]
        %v977 = vld [vmem:[%s247 + $0xa74] sm:$0xf]
        %v978 = vld [vmem:[%s247 + $0xa78] sm:$0xf]
        %v979 = vld [vmem:[%s247 + $0xa7c] sm:$0xf]
        %v980 = vld [vmem:[%s247 + $0xa80] sm:$0xf]
        %v981 = vld [vmem:[%s247 + $0xa84] sm:$0xf]
        %v982 = vld [vmem:[%s247 + $0xa88] sm:$0xf]
        %v983 = vld [vmem:[%s247 + $0xa8c] sm:$0xf]
        %v984 = vld [vmem:[%s247 + $0xa90] sm:$0xf]
        %v985 = vld [vmem:[%s247 + $0xa94] sm:$0xf]
        %v986 = vld [vmem:[%s247 + $0xa98] sm:$0xf]
        %v987 = vld [vmem:[%s247 + $0xa9c] sm:$0xf]
        %v988 = vld [vmem:[%s247 + $0xaa0] sm:$0xf]
        %v989 = vld [vmem:[%s247 + $0xaa4] sm:$0xf]
        %v990 = vld [vmem:[%s247 + $0xaa8] sm:$0xf]
        %v991 = vld [vmem:[%s247 + $0xaac] sm:$0xf]
        %v992 = vld [vmem:[%s247 + $0xab0] sm:$0xf]
        %v993 = vld [vmem:[%s247 + $0xab4] sm:$0xf]
        %v994 = vld [vmem:[%s247 + $0xab8] sm:$0xf]
        %v995 = vld [vmem:[%s247 + $0xabc] sm:$0xf]
        %v996 = vld [vmem:[%s247 + $0xac0] sm:$0xf]
        %v997 = vld [vmem:[%s247 + $0xac4] sm:$0xf]
        %v998 = vld [vmem:[%s247 + $0xac8] sm:$0xf]
        %v999 = vld [vmem:[%s247 + $0xacc] sm:$0xf]
        %v1000 = vld [vmem:[%s247 + $0xad0] sm:$0xf]
        %v1001 = vld [vmem:[%s247 + $0xad4] sm:$0xf]
        %v1002 = vld [vmem:[%s247 + $0xad8] sm:$0xf]
        %v1003 = vld [vmem:[%s247 + $0xadc] sm:$0xf]
        %v1004 = vld [vmem:[%s247 + $0xae0] sm:$0xf]
        %v1005 = vld [vmem:[%s247 + $0xae4] sm:$0xf]
        %v1006 = vld [vmem:[%s247 + $0xae8] sm:$0xf]
        %v1007 = vld [vmem:[%s247 + $0xaec] sm:$0xf]
        %v1008 = vld [vmem:[%s247 + $0xaf0] sm:$0xf]
        %v1009 = vld [vmem:[%s247 + $0xaf4] sm:$0xf]
        %v1010 = vld [vmem:[%s247 + $0xaf8] sm:$0xf]
        %v1011 = vld [vmem:[%s247 + $0xafc] sm:$0xf]
        %v1012 = vld [vmem:[%s247 + $0xb00] sm:$0xf]
        %v1013 = vld [vmem:[%s247 + $0xb04] sm:$0xf]
        %v1014 = vld [vmem:[%s247 + $0xb08] sm:$0xf]
        %v1015 = vld [vmem:[%s247 + $0xb0c] sm:$0xf]
        %v1016 = vld [vmem:[%s247 + $0xb10] sm:$0xf]
        %v1017 = vld [vmem:[%s247 + $0xb14] sm:$0xf]
        %v1018 = vld [vmem:[%s247 + $0xb18] sm:$0xf]
        %v1019 = vld [vmem:[%s247 + $0xb1c] sm:$0xf]
        %v1020 = vld [vmem:[%s247 + $0xb20] sm:$0xf]
        %v1021 = vld [vmem:[%s247 + $0xb24] sm:$0xf]
        %v1022 = vld [vmem:[%s247 + $0xb28] sm:$0xf]
        %v1023 = vld [vmem:[%s247 + $0xb2c] sm:$0xf]
        %v1024 = vld [vmem:[%s247 + $0xb30] sm:$0xf]
        %v1025 = vld [vmem:[%s247 + $0xb34] sm:$0xf]
        %v1026 = vld [vmem:[%s247 + $0xb38] sm:$0xf]
        %v1027 = vld [vmem:[%s247 + $0xb3c] sm:$0xf]
        %v1028 = vld [vmem:[%s247 + $0xb40] sm:$0xf]
        %v1029 = vld [vmem:[%s247 + $0xb44] sm:$0xf]
        %v1030 = vld [vmem:[%s247 + $0xb48] sm:$0xf]
        %v1031 = vld [vmem:[%s247 + $0xb4c] sm:$0xf]
        %v1032 = vld [vmem:[%s247 + $0xb50] sm:$0xf]
        %v1033 = vld [vmem:[%s247 + $0xb54] sm:$0xf]
        %v1034 = vld [vmem:[%s247 + $0xb58] sm:$0xf]
        %v1035 = vld [vmem:[%s247 + $0xb5c] sm:$0xf]
        %v1036 = vld [vmem:[%s247 + $0xb60] sm:$0xf]
        %v1037 = vld [vmem:[%s247 + $0xb64] sm:$0xf]
        %v1038 = vld [vmem:[%s247 + $0xb68] sm:$0xf]
        %v1039 = vld [vmem:[%s247 + $0xb6c] sm:$0xf]
        %v1040 = vld [vmem:[%s247 + $0xb70] sm:$0xf]
        %v1041 = vld [vmem:[%s247 + $0xb74] sm:$0xf]
        %v1042 = vld [vmem:[%s247 + $0xb78] sm:$0xf]
        %v1043 = vld [vmem:[%s247 + $0xb7c] sm:$0xf]
        %v1044 = vld [vmem:[%s247 + $0xb80] sm:$0xf]
        %v1045 = vld [vmem:[%s247 + $0xb84] sm:$0xf]
        %v1046 = vld [vmem:[%s247 + $0xb88] sm:$0xf]
        %v1047 = vld [vmem:[%s247 + $0xb8c] sm:$0xf]
        %v1048 = vld [vmem:[%s247 + $0xb90] sm:$0xf]
        %v1049 = vld [vmem:[%s247 + $0xb94] sm:$0xf]
        %v1050 = vld [vmem:[%s247 + $0xb98] sm:$0xf]
        %v1051 = vld [vmem:[%s247 + $0xb9c] sm:$0xf]
        %v1052 = vld [vmem:[%s247 + $0xba0] sm:$0xf]
        %v1053 = vld [vmem:[%s247 + $0xba4] sm:$0xf]
        %v1054 = vld [vmem:[%s247 + $0xba8] sm:$0xf]
        %v1055 = vld [vmem:[%s247 + $0xbac] sm:$0xf]
        %v1056 = vld [vmem:[%s247 + $0xbb0] sm:$0xf]
        %v1057 = vld [vmem:[%s247 + $0xbb4] sm:$0xf]
        %v1058 = vld [vmem:[%s247 + $0xbb8] sm:$0xf]
        %v1059 = vld [vmem:[%s247 + $0xbbc] sm:$0xf]
        %v1060 = vld [vmem:[%s247 + $0xbc0] sm:$0xf]
        %v1061 = vld [vmem:[%s247 + $0xbc4] sm:$0xf]
        %v1062 = vld [vmem:[%s247 + $0xbc8] sm:$0xf]
        %v1063 = vld [vmem:[%s247 + $0xbcc] sm:$0xf]
        %v1064 = vld [vmem:[%s247 + $0xbd0] sm:$0xf]
        %v1065 = vld [vmem:[%s247 + $0xbd4] sm:$0xf]
        %v1066 = vld [vmem:[%s247 + $0xbd8] sm:$0xf]
        %v1067 = vld [vmem:[%s247 + $0xbdc] sm:$0xf]
        %v1068 = vld [vmem:[%s247 + $0xbe0] sm:$0xf]
        %v1069 = vld [vmem:[%s247 + $0xbe4] sm:$0xf]
        %v1070 = vld [vmem:[%s247 + $0xbe8] sm:$0xf]
        %v1071 = vld [vmem:[%s247 + $0xbec] sm:$0xf]
        %v1072 = vld [vmem:[%s247 + $0xbf0] sm:$0xf]
        %v1073 = vld [vmem:[%s247 + $0xbf4] sm:$0xf]
        %v1074 = vld [vmem:[%s247 + $0xbf8] sm:$0xf]
        %v1075 = vld [vmem:[%s247 + $0xbfc] sm:$0xf]
        %v1076 = vld [vmem:[%s247 + $0xc00] sm:$0xf]
        %v1077 = vld [vmem:[%s247 + $0xc04] sm:$0xf]
        %v1078 = vld [vmem:[%s247 + $0xc08] sm:$0xf]
        %v1079 = vld [vmem:[%s247 + $0xc0c] sm:$0xf]
        %v1080 = vld [vmem:[%s247 + $0xc10] sm:$0xf]
        %v1081 = vld [vmem:[%s247 + $0xc14] sm:$0xf]
        %v1082 = vld [vmem:[%s247 + $0xc18] sm:$0xf]
        %v1083 = vld [vmem:[%s247 + $0xc1c] sm:$0xf]
        %v1084 = vld [vmem:[%s247 + $0xc20] sm:$0xf]
        %v1085 = vld [vmem:[%s247 + $0xc24] sm:$0xf]
        %v1086 = vld [vmem:[%s247 + $0xc28] sm:$0xf]
        %v1087 = vld [vmem:[%s247 + $0xc2c] sm:$0xf]
        %v1088 = vld [vmem:[%s247 + $0xc30] sm:$0xf]
        %v1089 = vld [vmem:[%s247 + $0xc34] sm:$0xf]
        %v1090 = vld [vmem:[%s247 + $0xc38] sm:$0xf]
        %v1091 = vld [vmem:[%s247 + $0xc3c] sm:$0xf]
        %v1092 = vld [vmem:[%s247 + $0xc40] sm:$0xf]
        %v1093 = vld [vmem:[%s247 + $0xc44] sm:$0xf]
        %v1094 = vld [vmem:[%s247 + $0xc48] sm:$0xf]
        %v1095 = vld [vmem:[%s247 + $0xc4c] sm:$0xf]
        %v1096 = vld [vmem:[%s247 + $0xc50] sm:$0xf]
        %v1097 = vld [vmem:[%s247 + $0xc54] sm:$0xf]
        %v1098 = vld [vmem:[%s247 + $0xc58] sm:$0xf]
        %v1099 = vld [vmem:[%s247 + $0xc5c] sm:$0xf]
        %v1100 = vld [vmem:[%s247 + $0xc60] sm:$0xf]
        %v1101 = vld [vmem:[%s247 + $0xc64] sm:$0xf]
        %v1102 = vld [vmem:[%s247 + $0xc68] sm:$0xf]
        %v1103 = vld [vmem:[%s247 + $0xc6c] sm:$0xf]
        %v1104 = vld [vmem:[%s247 + $0xc70] sm:$0xf]
        %v1105 = vld [vmem:[%s247 + $0xc74] sm:$0xf]
        %v1106 = vld [vmem:[%s247 + $0xc78] sm:$0xf]
        %v1107 = vld [vmem:[%s247 + $0xc7c] sm:$0xf]
        %v1108 = vld [vmem:[%s247 + $0xc80] sm:$0xf]
        %v1109 = vld [vmem:[%s247 + $0xc84] sm:$0xf]
        %v1110 = vld [vmem:[%s247 + $0xc88] sm:$0xf]
        %v1111 = vld [vmem:[%s247 + $0xc8c] sm:$0xf]
        %v1112 = vld [vmem:[%s247 + $0xc90] sm:$0xf]
        %v1113 = vld [vmem:[%s247 + $0xc94] sm:$0xf]
        %v1114 = vld [vmem:[%s247 + $0xc98] sm:$0xf]
        %v1115 = vld [vmem:[%s247 + $0xc9c] sm:$0xf]
        %v1116 = vld [vmem:[%s247 + $0xca0] sm:$0xf]
        %v1117 = vld [vmem:[%s247 + $0xca4] sm:$0xf]
        %v1118 = vld [vmem:[%s247 + $0xca8] sm:$0xf]
        %v1119 = vld [vmem:[%s247 + $0xcac] sm:$0xf]
        %v1120 = vld [vmem:[%s247 + $0xcb0] sm:$0xf]
        %v1121 = vld [vmem:[%s247 + $0xcb4] sm:$0xf]
        %v1122 = vld [vmem:[%s247 + $0xcb8] sm:$0xf]
        %v1123 = vld [vmem:[%s247 + $0xcbc] sm:$0xf]
        %v1124 = vld [vmem:[%s247 + $0xcc0] sm:$0xf]
        %v1125 = vld [vmem:[%s247 + $0xcc4] sm:$0xf]
        %v1126 = vld [vmem:[%s247 + $0xcc8] sm:$0xf]
        %v1127 = vld [vmem:[%s247 + $0xccc] sm:$0xf]
        %v1128 = vld [vmem:[%s247 + $0xcd0] sm:$0xf]
        %v1129 = vld [vmem:[%s247 + $0xcd4] sm:$0xf]
        %v1130 = vld [vmem:[%s247 + $0xcd8] sm:$0xf]
        %v1131 = vld [vmem:[%s247 + $0xcdc] sm:$0xf]
        %v1132 = vld [vmem:[%s247 + $0xce0] sm:$0xf]
        %v1133 = vld [vmem:[%s247 + $0xce4] sm:$0xf]
        %v1134 = vld [vmem:[%s247 + $0xce8] sm:$0xf]
        %v1135 = vld [vmem:[%s247 + $0xcec] sm:$0xf]
        %v1136 = vld [vmem:[%s247 + $0xcf0] sm:$0xf]
        %v1137 = vld [vmem:[%s247 + $0xcf4] sm:$0xf]
        %v1138 = vld [vmem:[%s247 + $0xcf8] sm:$0xf]
        %v1139 = vld [vmem:[%s247 + $0xcfc] sm:$0xf]
        %v1140 = vld [vmem:[%s247 + $0xd00] sm:$0xf]
        %v1141 = vld [vmem:[%s247 + $0xd04] sm:$0xf]
        %v1142 = vld [vmem:[%s247 + $0xd08] sm:$0xf]
        %v1143 = vld [vmem:[%s247 + $0xd0c] sm:$0xf]
        %v1144 = vld [vmem:[%s247 + $0xd10] sm:$0xf]
        %v1145 = vld [vmem:[%s247 + $0xd14] sm:$0xf]
        %v1146 = vld [vmem:[%s247 + $0xd18] sm:$0xf]
        %v1147 = vld [vmem:[%s247 + $0xd1c] sm:$0xf]
        %v1148 = vld [vmem:[%s247 + $0xd20] sm:$0xf]
        %v1149 = vld [vmem:[%s247 + $0xd24] sm:$0xf]
        %v1150 = vld [vmem:[%s247 + $0xd28] sm:$0xf]
        %v1151 = vld [vmem:[%s247 + $0xd2c] sm:$0xf]
        %v1152 = vld [vmem:[%s247 + $0xd30] sm:$0xf]
        %v1153 = vld [vmem:[%s247 + $0xd34] sm:$0xf]
        %v1154 = vld [vmem:[%s247 + $0xd38] sm:$0xf]
        %v1155 = vld [vmem:[%s247 + $0xd3c] sm:$0xf]
        %v1156 = vld [vmem:[%s247 + $0xd40] sm:$0xf]
        %v1157 = vld [vmem:[%s247 + $0xd44] sm:$0xf]
        %v1158 = vld [vmem:[%s247 + $0xd48] sm:$0xf]
        %v1159 = vld [vmem:[%s247 + $0xd4c] sm:$0xf]
        %v1160 = vld [vmem:[%s247 + $0xd50] sm:$0xf]
        %v1161 = vld [vmem:[%s247 + $0xd54] sm:$0xf]
        %v1162 = vld [vmem:[%s247 + $0xd58] sm:$0xf]
        %v1163 = vld [vmem:[%s247 + $0xd5c] sm:$0xf]
        %v1164 = vld [vmem:[%s247 + $0xd60] sm:$0xf]
        %v1165 = vld [vmem:[%s247 + $0xd64] sm:$0xf]
        %v1166 = vld [vmem:[%s247 + $0xd68] sm:$0xf]
        %v1167 = vld [vmem:[%s247 + $0xd6c] sm:$0xf]
        %v1168 = vld [vmem:[%s247 + $0xd70] sm:$0xf]
        %v1169 = vld [vmem:[%s247 + $0xd74] sm:$0xf]
        %v1170 = vld [vmem:[%s247 + $0xd78] sm:$0xf]
        %v1171 = vld [vmem:[%s247 + $0xd7c] sm:$0xf]
        %v1172 = vld [vmem:[%s247 + $0xd80] sm:$0xf]
        %v1173 = vld [vmem:[%s247 + $0xd84] sm:$0xf]
        %v1174 = vld [vmem:[%s247 + $0xd88] sm:$0xf]
        %v1175 = vld [vmem:[%s247 + $0xd8c] sm:$0xf]
        %v1176 = vld [vmem:[%s247 + $0xd90] sm:$0xf]
        %v1177 = vld [vmem:[%s247 + $0xd94] sm:$0xf]
        %v1178 = vld [vmem:[%s247 + $0xd98] sm:$0xf]
        %v1179 = vld [vmem:[%s247 + $0xd9c] sm:$0xf]
        %v1180 = vld [vmem:[%s247 + $0xda0] sm:$0xf]
        %v1181 = vld [vmem:[%s247 + $0xda4] sm:$0xf]
        %v1182 = vld [vmem:[%s247 + $0xda8] sm:$0xf]
        %v1183 = vld [vmem:[%s247 + $0xdac] sm:$0xf]
        %v1184 = vld [vmem:[%s247 + $0xdb0] sm:$0xf]
        %v1185 = vld [vmem:[%s247 + $0xdb4] sm:$0xf]
        %v1186 = vld [vmem:[%s247 + $0xdb8] sm:$0xf]
        %v1187 = vld [vmem:[%s247 + $0xdbc] sm:$0xf]
        %v1188 = vld [vmem:[%s247 + $0xdc0] sm:$0xf]
        %v1189 = vld [vmem:[%s247 + $0xdc4] sm:$0xf]
        %v1190 = vld [vmem:[%s247 + $0xdc8] sm:$0xf]
        %v1191 = vld [vmem:[%s247 + $0xdcc] sm:$0xf]
        %v1192 = vld [vmem:[%s247 + $0xdd0] sm:$0xf]
        %v1193 = vld [vmem:[%s247 + $0xdd4] sm:$0xf]
        %v1194 = vld [vmem:[%s247 + $0xdd8] sm:$0xf]
        %v1195 = vld [vmem:[%s247 + $0xddc] sm:$0xf]
        %v1196 = vld [vmem:[%s247 + $0xde0] sm:$0xf]
        %v1197 = vld [vmem:[%s247 + $0xde4] sm:$0xf]
        %v1198 = vld [vmem:[%s247 + $0xde8] sm:$0xf]
        %v1199 = vld [vmem:[%s247 + $0xdec] sm:$0xf]
        %v1200 = vld [vmem:[%s247 + $0xdf0] sm:$0xf]
        %v1201 = vld [vmem:[%s247 + $0xdf4] sm:$0xf]
        %v1202 = vld [vmem:[%s247 + $0xdf8] sm:$0xf]
        %v1203 = vld [vmem:[%s247 + $0xdfc] sm:$0xf]
        %v1204 = vld [vmem:[%s247 + $0xe00] sm:$0xf]
        %v1205 = vld [vmem:[%s247 + $0xe04] sm:$0xf]
        %v1206 = vld [vmem:[%s247 + $0xe08] sm:$0xf]
        %v1207 = vld [vmem:[%s247 + $0xe0c] sm:$0xf]
        %v1208 = vld [vmem:[%s247 + $0xe10] sm:$0xf]
        %v1209 = vld [vmem:[%s247 + $0xe14] sm:$0xf]
        %v1210 = vld [vmem:[%s247 + $0xe18] sm:$0xf]
        %v1211 = vld [vmem:[%s247 + $0xe1c] sm:$0xf]
        %v1212 = vld [vmem:[%s247 + $0xe20] sm:$0xf]
        %v1213 = vld [vmem:[%s247 + $0xe24] sm:$0xf]
        %v1214 = vld [vmem:[%s247 + $0xe28] sm:$0xf]
        %v1215 = vld [vmem:[%s247 + $0xe2c] sm:$0xf]
        %v1216 = vld [vmem:[%s247 + $0xe30] sm:$0xf]
        %v1217 = vld [vmem:[%s247 + $0xe34] sm:$0xf]
        %v1218 = vld [vmem:[%s247 + $0xe38] sm:$0xf]
        %v1219 = vld [vmem:[%s247 + $0xe3c] sm:$0xf]
        %v1220 = vld [vmem:[%s247 + $0xe40] sm:$0xf]
        %v1221 = vld [vmem:[%s247 + $0xe44] sm:$0xf]
        %v1222 = vld [vmem:[%s247 + $0xe48] sm:$0xf]
        %v1223 = vld [vmem:[%s247 + $0xe4c] sm:$0xf]
        %v1224 = vld [vmem:[%s247 + $0xe50] sm:$0xf]
        %v1225 = vld [vmem:[%s247 + $0xe54] sm:$0xf]
        %v1226 = vld [vmem:[%s247 + $0xe58] sm:$0xf]
        %v1227 = vld [vmem:[%s247 + $0xe5c] sm:$0xf]
        %v1228 = vld [vmem:[%s247 + $0xe60] sm:$0xf]
        %v1229 = vld [vmem:[%s247 + $0xe64] sm:$0xf]
        %v1230 = vld [vmem:[%s247 + $0xe68] sm:$0xf]
        %v1231 = vld [vmem:[%s247 + $0xe6c] sm:$0xf]
        %v1232 = vld [vmem:[%s247 + $0xe70] sm:$0xf]
        %v1233 = vld [vmem:[%s247 + $0xe74] sm:$0xf]
        %v1234 = vld [vmem:[%s247 + $0xe78] sm:$0xf]
        %v1235 = vld [vmem:[%s247 + $0xe7c] sm:$0xf]
        %v1236 = vld [vmem:[%s247 + $0xe80] sm:$0xf]
        %v1237 = vld [vmem:[%s247 + $0xe84] sm:$0xf]
        %v1238 = vld [vmem:[%s247 + $0xe88] sm:$0xf]
        %v1239 = vld [vmem:[%s247 + $0xe8c] sm:$0xf]
        %v1240 = vld [vmem:[%s247 + $0xe90] sm:$0xf]
        %v1241 = vld [vmem:[%s247 + $0xe94] sm:$0xf]
        %v1242 = vld [vmem:[%s247 + $0xe98] sm:$0xf]
        %v1243 = vld [vmem:[%s247 + $0xe9c] sm:$0xf]
        %v1244 = vld [vmem:[%s247 + $0xea0] sm:$0xf]
        %v1245 = vld [vmem:[%s247 + $0xea4] sm:$0xf]
        %v1246 = vld [vmem:[%s247 + $0xea8] sm:$0xf]
        %v1247 = vld [vmem:[%s247 + $0xeac] sm:$0xf]
        %v1248 = vld [vmem:[%s247 + $0xeb0] sm:$0xf]
        %v1249 = vld [vmem:[%s247 + $0xeb4] sm:$0xf]
        %v1250 = vld [vmem:[%s247 + $0xeb8] sm:$0xf]
        %v1251 = vld [vmem:[%s247 + $0xebc] sm:$0xf]
        %v1252 = vld [vmem:[%s247 + $0xec0] sm:$0xf]
        %v1253 = vld [vmem:[%s247 + $0xec4] sm:$0xf]
        %v1254 = vld [vmem:[%s247 + $0xec8] sm:$0xf]
        %v1255 = vld [vmem:[%s247 + $0xecc] sm:$0xf]
        %v1256 = vld [vmem:[%s247 + $0xed0] sm:$0xf]
        %v1257 = vld [vmem:[%s247 + $0xed4] sm:$0xf]
        %v1258 = vld [vmem:[%s247 + $0xed8] sm:$0xf]
        %v1259 = vld [vmem:[%s247 + $0xedc] sm:$0xf]
        %v1260 = vld [vmem:[%s247 + $0xee0] sm:$0xf]
        %v1261 = vld [vmem:[%s247 + $0xee4] sm:$0xf]
        %v1262 = vld [vmem:[%s247 + $0xee8] sm:$0xf]
        %v1263 = vld [vmem:[%s247 + $0xeec] sm:$0xf]
        %v1264 = vld [vmem:[%s247 + $0xef0] sm:$0xf]
        %v1265 = vld [vmem:[%s247 + $0xef4] sm:$0xf]
        %v1266 = vld [vmem:[%s247 + $0xef8] sm:$0xf]
        %v1267 = vld [vmem:[%s247 + $0xefc] sm:$0xf]
        %v1268 = vld [vmem:[%s247 + $0xf00] sm:$0xf]
        %v1269 = vld [vmem:[%s247 + $0xf04] sm:$0xf]
        %v1270 = vld [vmem:[%s247 + $0xf08] sm:$0xf]
        %v1271 = vld [vmem:[%s247 + $0xf0c] sm:$0xf]
        %v1272 = vld [vmem:[%s247 + $0xf10] sm:$0xf]
        %v1273 = vld [vmem:[%s247 + $0xf14] sm:$0xf]
        %v1274 = vld [vmem:[%s247 + $0xf18] sm:$0xf]
        %v1275 = vld [vmem:[%s247 + $0xf1c] sm:$0xf]
        %v1276 = vld [vmem:[%s247 + $0xf20] sm:$0xf]
        %v1277 = vld [vmem:[%s247 + $0xf24] sm:$0xf]
        %v1278 = vld [vmem:[%s247 + $0xf28] sm:$0xf]
        %v1279 = vld [vmem:[%s247 + $0xf2c] sm:$0xf]
        %v1280 = vld [vmem:[%s247 + $0xf30] sm:$0xf]
        %v1281 = vld [vmem:[%s247 + $0xf34] sm:$0xf]
        %v1282 = vld [vmem:[%s247 + $0xf38] sm:$0xf]
        %v1283 = vld [vmem:[%s247 + $0xf3c] sm:$0xf]
        %v1284 = vld [vmem:[%s247 + $0xf40] sm:$0xf]
        %v1285 = vld [vmem:[%s247 + $0xf44] sm:$0xf]
        %v1286 = vld [vmem:[%s247 + $0xf48] sm:$0xf]
        %v1287 = vld [vmem:[%s247 + $0xf4c] sm:$0xf]
        %v1288 = vld [vmem:[%s247 + $0xf50] sm:$0xf]
        %v1289 = vld [vmem:[%s247 + $0xf54] sm:$0xf]
        %v1290 = vld [vmem:[%s247 + $0xf58] sm:$0xf]
        %v1291 = vld [vmem:[%s247 + $0xf5c] sm:$0xf]
        %v1292 = vld [vmem:[%s247 + $0xf60] sm:$0xf]
        %v1293 = vld [vmem:[%s247 + $0xf64] sm:$0xf]
        %v1294 = vld [vmem:[%s247 + $0xf68] sm:$0xf]
        %v1295 = vld [vmem:[%s247 + $0xf6c] sm:$0xf]
        %v1296 = vld [vmem:[%s247 + $0xf70] sm:$0xf]
        %v1297 = vld [vmem:[%s247 + $0xf74] sm:$0xf]
        %v1298 = vld [vmem:[%s247 + $0xf78] sm:$0xf]
        %v1299 = vld [vmem:[%s247 + $0xf7c] sm:$0xf]
        %v1300 = vld [vmem:[%s247 + $0xf80] sm:$0xf]
        %v1301 = vld [vmem:[%s247 + $0xf84] sm:$0xf]
        %v1302 = vld [vmem:[%s247 + $0xf88] sm:$0xf]
        %v1303 = vld [vmem:[%s247 + $0xf8c] sm:$0xf]
        %v1304 = vld [vmem:[%s247 + $0xf90] sm:$0xf]
        %v1305 = vld [vmem:[%s247 + $0xf94] sm:$0xf]
        %v1306 = vld [vmem:[%s247 + $0xf98] sm:$0xf]
        %v1307 = vld [vmem:[%s247 + $0xf9c] sm:$0xf]
        %v1308 = vld [vmem:[%s247 + $0xfa0] sm:$0xf]
        %v1309 = vld [vmem:[%s247 + $0xfa4] sm:$0xf]
        %v1310 = vld [vmem:[%s247 + $0xfa8] sm:$0xf]
        %v1311 = vld [vmem:[%s247 + $0xfac] sm:$0xf]
        %v1312 = vld [vmem:[%s247 + $0xfb0] sm:$0xf]
        %v1313 = vld [vmem:[%s247 + $0xfb4] sm:$0xf]
        %v1314 = vld [vmem:[%s247 + $0xfb8] sm:$0xf]
        %v1315 = vld [vmem:[%s247 + $0xfbc] sm:$0xf]
        %v1316 = vld [vmem:[%s247 + $0xfc0] sm:$0xf]
        %v1317 = vld [vmem:[%s247 + $0xfc4] sm:$0xf]
        %v1318 = vld [vmem:[%s247 + $0xfc8] sm:$0xf]
        %v1319 = vld [vmem:[%s247 + $0xfcc] sm:$0xf]
        %v1320 = vld [vmem:[%s247 + $0xfd0] sm:$0xf]
        %v1321 = vld [vmem:[%s247 + $0xfd4] sm:$0xf]
        %v1322 = vld [vmem:[%s247 + $0xfd8] sm:$0xf]
        %v1323 = vld [vmem:[%s247 + $0xfdc] sm:$0xf]
        %v1324 = vld [vmem:[%s247 + $0xfe0] sm:$0xf]
        %v1325 = vld [vmem:[%s247 + $0xfe4] sm:$0xf]
        %v1326 = vld [vmem:[%s247 + $0xfe8] sm:$0xf]
        %v1327 = vld [vmem:[%s247 + $0xfec] sm:$0xf]
        %v1328 = vld [vmem:[%s247 + $0xff0] sm:$0xf]
        %v1329 = vld [vmem:[%s247 + $0xff4] sm:$0xf]
        %v1330 = vld [vmem:[%s247 + $0xff8] sm:$0xf]
        %v1331 = vld [vmem:[%s247 + $0xffc] sm:$0xf]
        %v1332 = vld [vmem:[%s247 + $0x1000] sm:$0xf]
        %v1333 = vld [vmem:[%s247 + $0x1004] sm:$0xf]
        %v1334 = vld [vmem:[%s247 + $0x1008] sm:$0xf]
        %v1335 = vld [vmem:[%s247 + $0x100c] sm:$0xf]
        %v1336 = vld [vmem:[%s247 + $0x1010] sm:$0xf]
        %v1337 = vld [vmem:[%s247 + $0x1014] sm:$0xf]
        %v1338 = vld [vmem:[%s247 + $0x1018] sm:$0xf]
        %v1339 = vld [vmem:[%s247 + $0x101c] sm:$0xf]
        %v1340 = vld [vmem:[%s247 + $0x1020] sm:$0xf]
        %v1341 = vld [vmem:[%s247 + $0x1024] sm:$0xf]
        %v1342 = vld [vmem:[%s247 + $0x1028] sm:$0xf]
        %v1343 = vld [vmem:[%s247 + $0x102c] sm:$0xf]
        %v1344 = vld [vmem:[%s247 + $0x1030] sm:$0xf]
        %v1345 = vld [vmem:[%s247 + $0x1034] sm:$0xf]
        %v1346 = vld [vmem:[%s247 + $0x1038] sm:$0xf]
        %v1347 = vld [vmem:[%s247 + $0x103c] sm:$0xf]
        %v1348 = vld [vmem:[%s247 + $0x1040] sm:$0xf]
        %v1349 = vld [vmem:[%s247 + $0x1044] sm:$0xf]
        %v1350 = vld [vmem:[%s247 + $0x1048] sm:$0xf]
        %v1351 = vld [vmem:[%s247 + $0x104c] sm:$0xf]
        %v1352 = vld [vmem:[%s247 + $0x1050] sm:$0xf]
        %v1353 = vld [vmem:[%s247 + $0x1054] sm:$0xf]
        %v1354 = vld [vmem:[%s247 + $0x1058] sm:$0xf]
        %v1355 = vld [vmem:[%s247 + $0x105c] sm:$0xf]
        %v1356 = vld [vmem:[%s247 + $0x1060] sm:$0xf]
        %v1357 = vld [vmem:[%s247 + $0x1064] sm:$0xf]
        %v1358 = vld [vmem:[%s247 + $0x1068] sm:$0xf]
        %v1359 = vld [vmem:[%s247 + $0x106c] sm:$0xf]
        %v1360 = vld [vmem:[%s247 + $0x1070] sm:$0xf]
        %v1361 = vld [vmem:[%s247 + $0x1074] sm:$0xf]
        %v1362 = vld [vmem:[%s247 + $0x1078] sm:$0xf]
        %v1363 = vld [vmem:[%s247 + $0x107c] sm:$0xf]
        %v1364 = vld [vmem:[%s247 + $0x1080] sm:$0xf]
        %v1365 = vld [vmem:[%s247 + $0x1084] sm:$0xf]
        %v1366 = vld [vmem:[%s247 + $0x1088] sm:$0xf]
        %v1367 = vld [vmem:[%s247 + $0x108c] sm:$0xf]
        %v1368 = vld [vmem:[%s247 + $0x1090] sm:$0xf]
        %v1369 = vld [vmem:[%s247 + $0x1094] sm:$0xf]
        %v1370 = vld [vmem:[%s247 + $0x1098] sm:$0xf]
        %v1371 = vld [vmem:[%s247 + $0x109c] sm:$0xf]
        %v1372 = vld [vmem:[%s247 + $0x10a0] sm:$0xf]
        %v1373 = vld [vmem:[%s247 + $0x10a4] sm:$0xf]
        %v1374 = vld [vmem:[%s247 + $0x10a8] sm:$0xf]
        %v1375 = vld [vmem:[%s247 + $0x10ac] sm:$0xf]
        %v1376 = vld [vmem:[%s247 + $0x10b0] sm:$0xf]
        %v1377 = vld [vmem:[%s247 + $0x10b4] sm:$0xf]
        %v1378 = vld [vmem:[%s247 + $0x10b8] sm:$0xf]
        %v1379 = vld [vmem:[%s247 + $0x10bc] sm:$0xf]
        %v1380 = vld [vmem:[%s247 + $0x10c0] sm:$0xf]
        %v1381 = vld [vmem:[%s247 + $0x10c4] sm:$0xf]
        %v1382 = vld [vmem:[%s247 + $0x10c8] sm:$0xf]
        %v1383 = vld [vmem:[%s247 + $0x10cc] sm:$0xf]
        %v1384 = vld [vmem:[%s247 + $0x10d0] sm:$0xf]
        %v1385 = vld [vmem:[%s247 + $0x10d4] sm:$0xf]
        %v1386 = vld [vmem:[%s247 + $0x10d8] sm:$0xf]
        %v1387 = vld [vmem:[%s247 + $0x10dc] sm:$0xf]
        %v1388 = vld [vmem:[%s247 + $0x10e0] sm:$0xf]
        %v1389 = vld [vmem:[%s247 + $0x10e4] sm:$0xf]
        %v1390 = vld [vmem:[%s247 + $0x10e8] sm:$0xf]
        %v1391 = vld [vmem:[%s247 + $0x10ec] sm:$0xf]
        %v1392 = vld [vmem:[%s247 + $0x10f0] sm:$0xf]
        %v1393 = vld [vmem:[%s247 + $0x10f4] sm:$0xf]
        %v1394 = vld [vmem:[%s247 + $0x10f8] sm:$0xf]
        %v1395 = vld [vmem:[%s247 + $0x10fc] sm:$0xf]
        %v1396 = vld [vmem:[%s247 + $0x1100] sm:$0xf]
        %v1397 = vld [vmem:[%s247 + $0x1104] sm:$0xf]
        %v1398 = vld [vmem:[%s247 + $0x1108] sm:$0xf]
        %v1399 = vld [vmem:[%s247 + $0x110c] sm:$0xf]
        %v1400 = vld [vmem:[%s247 + $0x1110] sm:$0xf]
        %v1401 = vld [vmem:[%s247 + $0x1114] sm:$0xf]
        %v1402 = vld [vmem:[%s247 + $0x1118] sm:$0xf]
        %v1403 = vld [vmem:[%s247 + $0x111c] sm:$0xf]
        %v1404 = vld [vmem:[%s247 + $0x1120] sm:$0xf]
        %v1405 = vld [vmem:[%s247 + $0x1124] sm:$0xf]
        %v1406 = vld [vmem:[%s247 + $0x1128] sm:$0xf]
        %v1407 = vld [vmem:[%s247 + $0x112c] sm:$0xf]
        %v1408 = vld [vmem:[%s247 + $0x1130] sm:$0xf]
        %v1409 = vld [vmem:[%s247 + $0x1134] sm:$0xf]
        %v1410 = vld [vmem:[%s247 + $0x1138] sm:$0xf]
        %v1411 = vld [vmem:[%s247 + $0x113c] sm:$0xf]
        %v1412 = vld [vmem:[%s247 + $0x1140] sm:$0xf]
        %v1413 = vld [vmem:[%s247 + $0x1144] sm:$0xf]
        %v1414 = vld [vmem:[%s247 + $0x1148] sm:$0xf]
        %v1415 = vld [vmem:[%s247 + $0x114c] sm:$0xf]
        %v1416 = vld [vmem:[%s247 + $0x1150] sm:$0xf]
        %v1417 = vld [vmem:[%s247 + $0x1154] sm:$0xf]
        %v1418 = vld [vmem:[%s247 + $0x1158] sm:$0xf]
        %v1419 = vld [vmem:[%s247 + $0x115c] sm:$0xf]
        %v1420 = vld [vmem:[%s247 + $0x1160] sm:$0xf]
        %v1421 = vld [vmem:[%s247 + $0x1164] sm:$0xf]
        %v1422 = vld [vmem:[%s247 + $0x1168] sm:$0xf]
        %v1423 = vld [vmem:[%s247 + $0x116c] sm:$0xf]
        %v1424 = vld [vmem:[%s247 + $0x1170] sm:$0xf]
        %v1425 = vld [vmem:[%s247 + $0x1174] sm:$0xf]
        %v1426 = vld [vmem:[%s247 + $0x1178] sm:$0xf]
        %v1427 = vld [vmem:[%s247 + $0x117c] sm:$0xf]
        %v1428 = vld [vmem:[%s247 + $0x1180] sm:$0xf]
        %v1429 = vld [vmem:[%s247 + $0x1184] sm:$0xf]
        %v1430 = vld [vmem:[%s247 + $0x1188] sm:$0xf]
        %v1431 = vld [vmem:[%s247 + $0x118c] sm:$0xf]
        %v1432 = vld [vmem:[%s247 + $0x1190] sm:$0xf]
        %v1433 = vld [vmem:[%s247 + $0x1194] sm:$0xf]
        %v1434 = vld [vmem:[%s247 + $0x1198] sm:$0xf]
        %v1435 = vld [vmem:[%s247 + $0x119c] sm:$0xf]
        %v1436 = vld [vmem:[%s247 + $0x11a0] sm:$0xf]
        %v1437 = vld [vmem:[%s247 + $0x11a4] sm:$0xf]
        %v1438 = vld [vmem:[%s247 + $0x11a8] sm:$0xf]
        %v1439 = vld [vmem:[%s247 + $0x11ac] sm:$0xf]
        %v1440 = vld [vmem:[%s247 + $0x11b0] sm:$0xf]
        %v1441 = vld [vmem:[%s247 + $0x11b4] sm:$0xf]
        %v1442 = vld [vmem:[%s247 + $0x11b8] sm:$0xf]
        %v1443 = vld [vmem:[%s247 + $0x11bc] sm:$0xf]
        %v1444 = vld [vmem:[%s247 + $0x11c0] sm:$0xf]
        %v1445 = vld [vmem:[%s247 + $0x11c4] sm:$0xf]
        %v1446 = vld [vmem:[%s247 + $0x11c8] sm:$0xf]
        %v1447 = vld [vmem:[%s247 + $0x11cc] sm:$0xf]
        %v1448 = vld [vmem:[%s247 + $0x11d0] sm:$0xf]
        %v1449 = vld [vmem:[%s247 + $0x11d4] sm:$0xf]
        %v1450 = vld [vmem:[%s247 + $0x11d8] sm:$0xf]
        %v1451 = vld [vmem:[%s247 + $0x11dc] sm:$0xf]
        %v1452 = vld [vmem:[%s247 + $0x11e0] sm:$0xf]
        %v1453 = vld [vmem:[%s247 + $0x11e4] sm:$0xf]
        %v1454 = vld [vmem:[%s247 + $0x11e8] sm:$0xf]
        %v1455 = vld [vmem:[%s247 + $0x11ec] sm:$0xf]
        %v1456 = vld [vmem:[%s247 + $0x11f0] sm:$0xf]
        %v1457 = vld [vmem:[%s247 + $0x11f4] sm:$0xf]
        %v1458 = vld [vmem:[%s247 + $0x11f8] sm:$0xf]
        %v1459 = vld [vmem:[%s247 + $0x11fc] sm:$0xf]
        %v1460 = vld [vmem:[%s247 + $0x1200] sm:$0xf]
        %v1461 = vld [vmem:[%s247 + $0x1204] sm:$0xf]
        %v1462 = vld [vmem:[%s247 + $0x1208] sm:$0xf]
        %v1463 = vld [vmem:[%s247 + $0x120c] sm:$0xf]
        %v1464 = vld [vmem:[%s247 + $0x1210] sm:$0xf]
        %v1465 = vld [vmem:[%s247 + $0x1214] sm:$0xf]
        %v1466 = vld [vmem:[%s247 + $0x1218] sm:$0xf]
        %v1467 = vld [vmem:[%s247 + $0x121c] sm:$0xf]
        %v1468 = vld [vmem:[%s247 + $0x1220] sm:$0xf]
        %v1469 = vld [vmem:[%s247 + $0x1224] sm:$0xf]
        %v1470 = vld [vmem:[%s247 + $0x1228] sm:$0xf]
        %v1471 = vld [vmem:[%s247 + $0x122c] sm:$0xf]
        %v1472 = vld [vmem:[%s247 + $0x1230] sm:$0xf]
        %v1473 = vld [vmem:[%s247 + $0x1234] sm:$0xf]
        %v1474 = vld [vmem:[%s247 + $0x1238] sm:$0xf]
        %v1475 = vld [vmem:[%s247 + $0x123c] sm:$0xf]
        %v1476 = vld [vmem:[%s247 + $0x1240] sm:$0xf]
        %v1477 = vld [vmem:[%s247 + $0x1244] sm:$0xf]
        %v1478 = vld [vmem:[%s247 + $0x1248] sm:$0xf]
        %v1479 = vld [vmem:[%s247 + $0x124c] sm:$0xf]
        %v1480 = vld [vmem:[%s247 + $0x1250] sm:$0xf]
        %v1481 = vld [vmem:[%s247 + $0x1254] sm:$0xf]
        %v1482 = vld [vmem:[%s247 + $0x1258] sm:$0xf]
        %v1483 = vld [vmem:[%s247 + $0x125c] sm:$0xf]
        %v1484 = vld [vmem:[%s247 + $0x1260] sm:$0xf]
        %v1485 = vld [vmem:[%s247 + $0x1264] sm:$0xf]
        %v1486 = vld [vmem:[%s247 + $0x1268] sm:$0xf]
        %v1487 = vld [vmem:[%s247 + $0x126c] sm:$0xf]
        %v1488 = vld [vmem:[%s247 + $0x1270] sm:$0xf]
        %v1489 = vld [vmem:[%s247 + $0x1274] sm:$0xf]
        %v1490 = vld [vmem:[%s247 + $0x1278] sm:$0xf]
        %v1491 = vld [vmem:[%s247 + $0x127c] sm:$0xf]
        %v1492 = vld [vmem:[%s247 + $0x1280] sm:$0xf]
        %v1493 = vld [vmem:[%s247 + $0x1284] sm:$0xf]
        %v1494 = vld [vmem:[%s247 + $0x1288] sm:$0xf]
        %v1495 = vld [vmem:[%s247 + $0x128c] sm:$0xf]
        %v1496 = vld [vmem:[%s247 + $0x1290] sm:$0xf]
        %v1497 = vld [vmem:[%s247 + $0x1294] sm:$0xf]
        %v1498 = vld [vmem:[%s247 + $0x1298] sm:$0xf]
        %v1499 = vld [vmem:[%s247 + $0x129c] sm:$0xf]
        %v1500 = vld [vmem:[%s247 + $0x12a0] sm:$0xf]
        %v1501 = vld [vmem:[%s247 + $0x12a4] sm:$0xf]
        %v1502 = vld [vmem:[%s247 + $0x12a8] sm:$0xf]
        %v1503 = vld [vmem:[%s247 + $0x12ac] sm:$0xf]
        %v1504 = vld [vmem:[%s247 + $0x12b0] sm:$0xf]
        %v1505 = vld [vmem:[%s247 + $0x12b4] sm:$0xf]
        %v1506 = vld [vmem:[%s247 + $0x12b8] sm:$0xf]
        %v1507 = vld [vmem:[%s247 + $0x12bc] sm:$0xf]
        %v1508 = vld [vmem:[%s247 + $0x12c0] sm:$0xf]
        %v1509 = vld [vmem:[%s247 + $0x12c4] sm:$0xf]
        %v1510 = vld [vmem:[%s247 + $0x12c8] sm:$0xf]
        %v1511 = vld [vmem:[%s247 + $0x12cc] sm:$0xf]
        %v1512 = vld [vmem:[%s247 + $0x12d0] sm:$0xf]
        %v1513 = vld [vmem:[%s247 + $0x12d4] sm:$0xf]
        %v1514 = vld [vmem:[%s247 + $0x12d8] sm:$0xf]
        %v1515 = vld [vmem:[%s247 + $0x12dc] sm:$0xf]
        %v1516 = vld [vmem:[%s247 + $0x12e0] sm:$0xf]
        %v1517 = vld [vmem:[%s247 + $0x12e4] sm:$0xf]
        %v1518 = vld [vmem:[%s247 + $0x12e8] sm:$0xf]
        %v1519 = vld [vmem:[%s247 + $0x12ec] sm:$0xf]
        %v1520 = vld [vmem:[%s247 + $0x12f0] sm:$0xf]
        %v1521 = vld [vmem:[%s247 + $0x12f4] sm:$0xf]
        %v1522 = vld [vmem:[%s247 + $0x12f8] sm:$0xf]
        %v1523 = vld [vmem:[%s247 + $0x12fc] sm:$0xf]
        %v1524 = vld [vmem:[%s247 + $0x1300] sm:$0xf]
        %v1525 = vld [vmem:[%s247 + $0x1304] sm:$0xf]
        %v1526 = vld [vmem:[%s247 + $0x1308] sm:$0xf]
        %v1527 = vld [vmem:[%s247 + $0x130c] sm:$0xf]
        %v1528 = vld [vmem:[%s247 + $0x1310] sm:$0xf]
        %v1529 = vld [vmem:[%s247 + $0x1314] sm:$0xf]
        %v1530 = vld [vmem:[%s247 + $0x1318] sm:$0xf]
        %v1531 = vld [vmem:[%s247 + $0x131c] sm:$0xf]
        %v1532 = vld [vmem:[%s247 + $0x1320] sm:$0xf]
        %v1533 = vld [vmem:[%s247 + $0x1324] sm:$0xf]
        %v1534 = vld [vmem:[%s247 + $0x1328] sm:$0xf]
        %v1535 = vld [vmem:[%s247 + $0x132c] sm:$0xf]
        %v1536 = vld [vmem:[%s247 + $0x1330] sm:$0xf]
        %v1537 = vld [vmem:[%s247 + $0x1334] sm:$0xf]
        %v1538 = vld [vmem:[%s247 + $0x1338] sm:$0xf]
        %v1539 = vld [vmem:[%s247 + $0x133c] sm:$0xf]
        %v1540 = vld [vmem:[%s247 + $0x1340] sm:$0xf]
        %v1541 = vld [vmem:[%s247 + $0x1344] sm:$0xf]
        %v1542 = vld [vmem:[%s247 + $0x1348] sm:$0xf]
        %v1543 = vld [vmem:[%s247 + $0x134c] sm:$0xf]
        %v1544 = vld [vmem:[%s247 + $0x1350] sm:$0xf]
        %v1545 = vld [vmem:[%s247 + $0x1354] sm:$0xf]
        %v1546 = vld [vmem:[%s247 + $0x1358] sm:$0xf]
        %v1547 = vld [vmem:[%s247 + $0x135c] sm:$0xf]
        %v1548 = vld [vmem:[%s247 + $0x1360] sm:$0xf]
        %v1549 = vld [vmem:[%s247 + $0x1364] sm:$0xf]
        %v1550 = vld [vmem:[%s247 + $0x1368] sm:$0xf]
        %v1551 = vld [vmem:[%s247 + $0x136c] sm:$0xf]
        %v1552 = vld [vmem:[%s247 + $0x1370] sm:$0xf]
        %v1553 = vld [vmem:[%s247 + $0x1374] sm:$0xf]
        %v1554 = vld [vmem:[%s247 + $0x1378] sm:$0xf]
        %v1555 = vld [vmem:[%s247 + $0x137c] sm:$0xf]
        %v1566 = vcombine.high %v298, %v298
        %v1568 = vunpack.c.l.s4 1966171168
        %v1569 = vunpack.c.0.s8 %v1568
        %v1570 = vlaneseq
        %v1571 = vshrl.u32 %v1570, 7
        %v1572 = vsub.s32 %v1569, %v1571
        %v1573 = vrot.slane %v298, %v1572
        %v1575 = vunpack.c.l.s4 1966171168
        %v1576 = vunpack.c.0.s8 %v1575
        %v1577 = vlaneseq
        %v1578 = vshrl.u32 %v1577, 7
        %v1579 = vsub.s32 %v1576, %v1578
        %v1580 = vrot.slane %v1566, %v1579
        %v1581 = vcombine.high %v1573, %v1573
        %v1582 = vcombine.high %v1580, %v1580
        %v1584 = vunpack.c.l.s4 1966171168
        %v1585 = vunpack.c.0.s8 %v1584
        %v1586 = vlaneseq
        %v1587 = vshrl.u32 %v1586, 7
        %v1588 = vsub.s32 %v1585, %v1587
        %v1589 = vrot.slane %v1573, %v1588
        %v1591 = vunpack.c.l.s4 1966171168
        %v1592 = vunpack.c.0.s8 %v1591
        %v1593 = vlaneseq
        %v1594 = vshrl.u32 %v1593, 7
        %v1595 = vsub.s32 %v1592, %v1594
        %v1596 = vrot.slane %v1580, %v1595
        %v1598 = vunpack.c.l.s4 1966171168
        %v1599 = vunpack.c.0.s8 %v1598
        %v1600 = vlaneseq
        %v1601 = vshrl.u32 %v1600, 7
        %v1602 = vsub.s32 %v1599, %v1601
        %v1603 = vrot.slane %v1581, %v1602
        %v1605 = vunpack.c.l.s4 1966171168
        %v1606 = vunpack.c.0.s8 %v1605
        %v1607 = vlaneseq
        %v1608 = vshrl.u32 %v1607, 7
        %v1609 = vsub.s32 %v1606, %v1608
        %v1610 = vrot.slane %v1582, %v1609
        %v1611 = vcombine.high %v1589, %v1589
        %v1612 = vcombine.high %v1596, %v1596
        %v1613 = vcombine.high %v1603, %v1603
        %v1614 = vcombine.high %v1610, %v1610
        %v1615 = vcombine.high %v299, %v299
        %v1617 = vunpack.c.l.s4 1966171168
        %v1618 = vunpack.c.0.s8 %v1617
        %v1619 = vlaneseq
        %v1620 = vshrl.u32 %v1619, 7
        %v1621 = vsub.s32 %v1618, %v1620
        %v1622 = vrot.slane %v299, %v1621
        %v1624 = vunpack.c.l.s4 1966171168
        %v1625 = vunpack.c.0.s8 %v1624
        %v1626 = vlaneseq
        %v1627 = vshrl.u32 %v1626, 7
        %v1628 = vsub.s32 %v1625, %v1627
        %v1629 = vrot.slane %v1615, %v1628
        %v1630 = vcombine.high %v1622, %v1622
        %v1631 = vcombine.high %v1629, %v1629
        %v1633 = vunpack.c.l.s4 1966171168
        %v1634 = vunpack.c.0.s8 %v1633
        %v1635 = vlaneseq
        %v1636 = vshrl.u32 %v1635, 7
        %v1637 = vsub.s32 %v1634, %v1636
        %v1638 = vrot.slane %v1622, %v1637
        %v1640 = vunpack.c.l.s4 1966171168
        %v1641 = vunpack.c.0.s8 %v1640
        %v1642 = vlaneseq
        %v1643 = vshrl.u32 %v1642, 7
        %v1644 = vsub.s32 %v1641, %v1643
        %v1645 = vrot.slane %v1629, %v1644
        %v1647 = vunpack.c.l.s4 1966171168
        %v1648 = vunpack.c.0.s8 %v1647
        %v1649 = vlaneseq
        %v1650 = vshrl.u32 %v1649, 7
        %v1651 = vsub.s32 %v1648, %v1650
        %v1652 = vrot.slane %v1630, %v1651
        %v1654 = vunpack.c.l.s4 1966171168
        %v1655 = vunpack.c.0.s8 %v1654
        %v1656 = vlaneseq
        %v1657 = vshrl.u32 %v1656, 7
        %v1658 = vsub.s32 %v1655, %v1657
        %v1659 = vrot.slane %v1631, %v1658
        %v1660 = vcombine.high %v1638, %v1638
        %v1661 = vcombine.high %v1645, %v1645
        %v1662 = vcombine.high %v1652, %v1652
        %v1663 = vcombine.high %v1659, %v1659
        %v1664 = vcombine.high %v300, %v300
        %v1666 = vunpack.c.l.s4 1966171168
        %v1667 = vunpack.c.0.s8 %v1666
        %v1668 = vlaneseq
        %v1669 = vshrl.u32 %v1668, 7
        %v1670 = vsub.s32 %v1667, %v1669
        %v1671 = vrot.slane %v300, %v1670
        %v1673 = vunpack.c.l.s4 1966171168
        %v1674 = vunpack.c.0.s8 %v1673
        %v1675 = vlaneseq
        %v1676 = vshrl.u32 %v1675, 7
        %v1677 = vsub.s32 %v1674, %v1676
        %v1678 = vrot.slane %v1664, %v1677
        %v1679 = vcombine.high %v1671, %v1671
        %v1680 = vcombine.high %v1678, %v1678
        %v1682 = vunpack.c.l.s4 1966171168
        %v1683 = vunpack.c.0.s8 %v1682
        %v1684 = vlaneseq
        %v1685 = vshrl.u32 %v1684, 7
        %v1686 = vsub.s32 %v1683, %v1685
        %v1687 = vrot.slane %v1671, %v1686
        %v1689 = vunpack.c.l.s4 1966171168
        %v1690 = vunpack.c.0.s8 %v1689
        %v1691 = vlaneseq
        %v1692 = vshrl.u32 %v1691, 7
        %v1693 = vsub.s32 %v1690, %v1692
        %v1694 = vrot.slane %v1678, %v1693
        %v1696 = vunpack.c.l.s4 1966171168
        %v1697 = vunpack.c.0.s8 %v1696
        %v1698 = vlaneseq
        %v1699 = vshrl.u32 %v1698, 7
        %v1700 = vsub.s32 %v1697, %v1699
        %v1701 = vrot.slane %v1679, %v1700
        %v1703 = vunpack.c.l.s4 1966171168
        %v1704 = vunpack.c.0.s8 %v1703
        %v1705 = vlaneseq
        %v1706 = vshrl.u32 %v1705, 7
        %v1707 = vsub.s32 %v1704, %v1706
        %v1708 = vrot.slane %v1680, %v1707
        %v1709 = vcombine.high %v1687, %v1687
        %v1710 = vcombine.high %v1694, %v1694
        %v1711 = vcombine.high %v1701, %v1701
        %v1712 = vcombine.high %v1708, %v1708
        %v1713 = vcombine.high %v301, %v301
        %v1715 = vunpack.c.l.s4 1966171168
        %v1716 = vunpack.c.0.s8 %v1715
        %v1717 = vlaneseq
        %v1718 = vshrl.u32 %v1717, 7
        %v1719 = vsub.s32 %v1716, %v1718
        %v1720 = vrot.slane %v301, %v1719
        %v1722 = vunpack.c.l.s4 1966171168
        %v1723 = vunpack.c.0.s8 %v1722
        %v1724 = vlaneseq
        %v1725 = vshrl.u32 %v1724, 7
        %v1726 = vsub.s32 %v1723, %v1725
        %v1727 = vrot.slane %v1713, %v1726
        %v1728 = vcombine.high %v1720, %v1720
        %v1729 = vcombine.high %v1727, %v1727
        %v1731 = vunpack.c.l.s4 1966171168
        %v1732 = vunpack.c.0.s8 %v1731
        %v1733 = vlaneseq
        %v1734 = vshrl.u32 %v1733, 7
        %v1735 = vsub.s32 %v1732, %v1734
        %v1736 = vrot.slane %v1720, %v1735
        %v1738 = vunpack.c.l.s4 1966171168
        %v1739 = vunpack.c.0.s8 %v1738
        %v1740 = vlaneseq
        %v1741 = vshrl.u32 %v1740, 7
        %v1742 = vsub.s32 %v1739, %v1741
        %v1743 = vrot.slane %v1727, %v1742
        %v1745 = vunpack.c.l.s4 1966171168
        %v1746 = vunpack.c.0.s8 %v1745
        %v1747 = vlaneseq
        %v1748 = vshrl.u32 %v1747, 7
        %v1749 = vsub.s32 %v1746, %v1748
        %v1750 = vrot.slane %v1728, %v1749
        %v1752 = vunpack.c.l.s4 1966171168
        %v1753 = vunpack.c.0.s8 %v1752
        %v1754 = vlaneseq
        %v1755 = vshrl.u32 %v1754, 7
        %v1756 = vsub.s32 %v1753, %v1755
        %v1757 = vrot.slane %v1729, %v1756
        %v1758 = vcombine.high %v1736, %v1736
        %v1759 = vcombine.high %v1743, %v1743
        %v1760 = vcombine.high %v1750, %v1750
        %v1761 = vcombine.high %v1757, %v1757
        %v1762 = vcombine.high %v302, %v302
        %v1764 = vunpack.c.l.s4 1966171168
        %v1765 = vunpack.c.0.s8 %v1764
        %v1766 = vlaneseq
        %v1767 = vshrl.u32 %v1766, 7
        %v1768 = vsub.s32 %v1765, %v1767
        %v1769 = vrot.slane %v302, %v1768
        %v1771 = vunpack.c.l.s4 1966171168
        %v1772 = vunpack.c.0.s8 %v1771
        %v1773 = vlaneseq
        %v1774 = vshrl.u32 %v1773, 7
        %v1775 = vsub.s32 %v1772, %v1774
        %v1776 = vrot.slane %v1762, %v1775
        %v1777 = vcombine.high %v1769, %v1769
        %v1778 = vcombine.high %v1776, %v1776
        %v1780 = vunpack.c.l.s4 1966171168
        %v1781 = vunpack.c.0.s8 %v1780
        %v1782 = vlaneseq
        %v1783 = vshrl.u32 %v1782, 7
        %v1784 = vsub.s32 %v1781, %v1783
        %v1785 = vrot.slane %v1769, %v1784
        %v1787 = vunpack.c.l.s4 1966171168
        %v1788 = vunpack.c.0.s8 %v1787
        %v1789 = vlaneseq
        %v1790 = vshrl.u32 %v1789, 7
        %v1791 = vsub.s32 %v1788, %v1790
        %v1792 = vrot.slane %v1776, %v1791
        %v1794 = vunpack.c.l.s4 1966171168
        %v1795 = vunpack.c.0.s8 %v1794
        %v1796 = vlaneseq
        %v1797 = vshrl.u32 %v1796, 7
        %v1798 = vsub.s32 %v1795, %v1797
        %v1799 = vrot.slane %v1777, %v1798
        %v1801 = vunpack.c.l.s4 1966171168
        %v1802 = vunpack.c.0.s8 %v1801
        %v1803 = vlaneseq
        %v1804 = vshrl.u32 %v1803, 7
        %v1805 = vsub.s32 %v1802, %v1804
        %v1806 = vrot.slane %v1778, %v1805
        %v1807 = vcombine.high %v1785, %v1785
        %v1808 = vcombine.high %v1792, %v1792
        %v1809 = vcombine.high %v1799, %v1799
        %v1810 = vcombine.high %v1806, %v1806
        %v1811 = vcombine.high %v303, %v303
        %v1813 = vunpack.c.l.s4 1966171168
        %v1814 = vunpack.c.0.s8 %v1813
        %v1815 = vlaneseq
        %v1816 = vshrl.u32 %v1815, 7
        %v1817 = vsub.s32 %v1814, %v1816
        %v1818 = vrot.slane %v303, %v1817
        %v1820 = vunpack.c.l.s4 1966171168
        %v1821 = vunpack.c.0.s8 %v1820
        %v1822 = vlaneseq
        %v1823 = vshrl.u32 %v1822, 7
        %v1824 = vsub.s32 %v1821, %v1823
        %v1825 = vrot.slane %v1811, %v1824
        %v1826 = vcombine.high %v1818, %v1818
        %v1827 = vcombine.high %v1825, %v1825
        %v1829 = vunpack.c.l.s4 1966171168
        %v1830 = vunpack.c.0.s8 %v1829
        %v1831 = vlaneseq
        %v1832 = vshrl.u32 %v1831, 7
        %v1833 = vsub.s32 %v1830, %v1832
        %v1834 = vrot.slane %v1818, %v1833
        %v1836 = vunpack.c.l.s4 1966171168
        %v1837 = vunpack.c.0.s8 %v1836
        %v1838 = vlaneseq
        %v1839 = vshrl.u32 %v1838, 7
        %v1840 = vsub.s32 %v1837, %v1839
        %v1841 = vrot.slane %v1825, %v1840
        %v1843 = vunpack.c.l.s4 1966171168
        %v1844 = vunpack.c.0.s8 %v1843
        %v1845 = vlaneseq
        %v1846 = vshrl.u32 %v1845, 7
        %v1847 = vsub.s32 %v1844, %v1846
        %v1848 = vrot.slane %v1826, %v1847
        %v1850 = vunpack.c.l.s4 1966171168
        %v1851 = vunpack.c.0.s8 %v1850
        %v1852 = vlaneseq
        %v1853 = vshrl.u32 %v1852, 7
        %v1854 = vsub.s32 %v1851, %v1853
        %v1855 = vrot.slane %v1827, %v1854
        %v1856 = vcombine.high %v1834, %v1834
        %v1857 = vcombine.high %v1841, %v1841
        %v1858 = vcombine.high %v1848, %v1848
        %v1859 = vcombine.high %v1855, %v1855
        %v1860 = vcombine.high %v304, %v304
        %v1862 = vunpack.c.l.s4 1966171168
        %v1863 = vunpack.c.0.s8 %v1862
        %v1864 = vlaneseq
        %v1865 = vshrl.u32 %v1864, 7
        %v1866 = vsub.s32 %v1863, %v1865
        %v1867 = vrot.slane %v304, %v1866
        %v1869 = vunpack.c.l.s4 1966171168
        %v1870 = vunpack.c.0.s8 %v1869
        %v1871 = vlaneseq
        %v1872 = vshrl.u32 %v1871, 7
        %v1873 = vsub.s32 %v1870, %v1872
        %v1874 = vrot.slane %v1860, %v1873
        %v1875 = vcombine.high %v1867, %v1867
        %v1876 = vcombine.high %v1874, %v1874
        %v1878 = vunpack.c.l.s4 1966171168
        %v1879 = vunpack.c.0.s8 %v1878
        %v1880 = vlaneseq
        %v1881 = vshrl.u32 %v1880, 7
        %v1882 = vsub.s32 %v1879, %v1881
        %v1883 = vrot.slane %v1867, %v1882
        %v1885 = vunpack.c.l.s4 1966171168
        %v1886 = vunpack.c.0.s8 %v1885
        %v1887 = vlaneseq
        %v1888 = vshrl.u32 %v1887, 7
        %v1889 = vsub.s32 %v1886, %v1888
        %v1890 = vrot.slane %v1874, %v1889
        %v1892 = vunpack.c.l.s4 1966171168
        %v1893 = vunpack.c.0.s8 %v1892
        %v1894 = vlaneseq
        %v1895 = vshrl.u32 %v1894, 7
        %v1896 = vsub.s32 %v1893, %v1895
        %v1897 = vrot.slane %v1875, %v1896
        %v1899 = vunpack.c.l.s4 1966171168
        %v1900 = vunpack.c.0.s8 %v1899
        %v1901 = vlaneseq
        %v1902 = vshrl.u32 %v1901, 7
        %v1903 = vsub.s32 %v1900, %v1902
        %v1904 = vrot.slane %v1876, %v1903
        %v1905 = vcombine.high %v1883, %v1883
        %v1906 = vcombine.high %v1890, %v1890
        %v1907 = vcombine.high %v1897, %v1897
        %v1908 = vcombine.high %v1904, %v1904
        %v1909 = vcombine.high %v305, %v305
        %v1911 = vunpack.c.l.s4 1966171168
        %v1912 = vunpack.c.0.s8 %v1911
        %v1913 = vlaneseq
        %v1914 = vshrl.u32 %v1913, 7
        %v1915 = vsub.s32 %v1912, %v1914
        %v1916 = vrot.slane %v305, %v1915
        %v1918 = vunpack.c.l.s4 1966171168
        %v1919 = vunpack.c.0.s8 %v1918
        %v1920 = vlaneseq
        %v1921 = vshrl.u32 %v1920, 7
        %v1922 = vsub.s32 %v1919, %v1921
        %v1923 = vrot.slane %v1909, %v1922
        %v1924 = vcombine.high %v1916, %v1916
        %v1925 = vcombine.high %v1923, %v1923
        %v1927 = vunpack.c.l.s4 1966171168
        %v1928 = vunpack.c.0.s8 %v1927
        %v1929 = vlaneseq
        %v1930 = vshrl.u32 %v1929, 7
        %v1931 = vsub.s32 %v1928, %v1930
        %v1932 = vrot.slane %v1916, %v1931
        %v1934 = vunpack.c.l.s4 1966171168
        %v1935 = vunpack.c.0.s8 %v1934
        %v1936 = vlaneseq
        %v1937 = vshrl.u32 %v1936, 7
        %v1938 = vsub.s32 %v1935, %v1937
        %v1939 = vrot.slane %v1923, %v1938
        %v1941 = vunpack.c.l.s4 1966171168
        %v1942 = vunpack.c.0.s8 %v1941
        %v1943 = vlaneseq
        %v1944 = vshrl.u32 %v1943, 7
        %v1945 = vsub.s32 %v1942, %v1944
        %v1946 = vrot.slane %v1924, %v1945
        %v1948 = vunpack.c.l.s4 1966171168
        %v1949 = vunpack.c.0.s8 %v1948
        %v1950 = vlaneseq
        %v1951 = vshrl.u32 %v1950, 7
        %v1952 = vsub.s32 %v1949, %v1951
        %v1953 = vrot.slane %v1925, %v1952
        %v1954 = vcombine.high %v1932, %v1932
        %v1955 = vcombine.high %v1939, %v1939
        %v1956 = vcombine.high %v1946, %v1946
        %v1957 = vcombine.high %v1953, %v1953
        %v1958 = vcombine.high %v306, %v306
        %v1960 = vunpack.c.l.s4 1966171168
        %v1961 = vunpack.c.0.s8 %v1960
        %v1962 = vlaneseq
        %v1963 = vshrl.u32 %v1962, 7
        %v1964 = vsub.s32 %v1961, %v1963
        %v1965 = vrot.slane %v306, %v1964
        %v1967 = vunpack.c.l.s4 1966171168
        %v1968 = vunpack.c.0.s8 %v1967
        %v1969 = vlaneseq
        %v1970 = vshrl.u32 %v1969, 7
        %v1971 = vsub.s32 %v1968, %v1970
        %v1972 = vrot.slane %v1958, %v1971
        %v1973 = vcombine.high %v1965, %v1965
        %v1974 = vcombine.high %v1972, %v1972
        %v1976 = vunpack.c.l.s4 1966171168
        %v1977 = vunpack.c.0.s8 %v1976
        %v1978 = vlaneseq
        %v1979 = vshrl.u32 %v1978, 7
        %v1980 = vsub.s32 %v1977, %v1979
        %v1981 = vrot.slane %v1965, %v1980
        %v1983 = vunpack.c.l.s4 1966171168
        %v1984 = vunpack.c.0.s8 %v1983
        %v1985 = vlaneseq
        %v1986 = vshrl.u32 %v1985, 7
        %v1987 = vsub.s32 %v1984, %v1986
        %v1988 = vrot.slane %v1972, %v1987
        %v1990 = vunpack.c.l.s4 1966171168
        %v1991 = vunpack.c.0.s8 %v1990
        %v1992 = vlaneseq
        %v1993 = vshrl.u32 %v1992, 7
        %v1994 = vsub.s32 %v1991, %v1993
        %v1995 = vrot.slane %v1973, %v1994
        %v1997 = vunpack.c.l.s4 1966171168
        %v1998 = vunpack.c.0.s8 %v1997
        %v1999 = vlaneseq
        %v2000 = vshrl.u32 %v1999, 7
        %v2001 = vsub.s32 %v1998, %v2000
        %v2002 = vrot.slane %v1974, %v2001
        %v2003 = vcombine.high %v1981, %v1981
        %v2004 = vcombine.high %v1988, %v1988
        %v2005 = vcombine.high %v1995, %v1995
        %v2006 = vcombine.high %v2002, %v2002
        %v2007 = vcombine.high %v307, %v307
        %v2009 = vunpack.c.l.s4 1966171168
        %v2010 = vunpack.c.0.s8 %v2009
        %v2011 = vlaneseq
        %v2012 = vshrl.u32 %v2011, 7
        %v2013 = vsub.s32 %v2010, %v2012
        %v2014 = vrot.slane %v307, %v2013
        %v2016 = vunpack.c.l.s4 1966171168
        %v2017 = vunpack.c.0.s8 %v2016
        %v2018 = vlaneseq
        %v2019 = vshrl.u32 %v2018, 7
        %v2020 = vsub.s32 %v2017, %v2019
        %v2021 = vrot.slane %v2007, %v2020
        %v2022 = vcombine.high %v2014, %v2014
        %v2023 = vcombine.high %v2021, %v2021
        %v2025 = vunpack.c.l.s4 1966171168
        %v2026 = vunpack.c.0.s8 %v2025
        %v2027 = vlaneseq
        %v2028 = vshrl.u32 %v2027, 7
        %v2029 = vsub.s32 %v2026, %v2028
        %v2030 = vrot.slane %v2014, %v2029
        %v2032 = vunpack.c.l.s4 1966171168
        %v2033 = vunpack.c.0.s8 %v2032
        %v2034 = vlaneseq
        %v2035 = vshrl.u32 %v2034, 7
        %v2036 = vsub.s32 %v2033, %v2035
        %v2037 = vrot.slane %v2021, %v2036
        %v2039 = vunpack.c.l.s4 1966171168
        %v2040 = vunpack.c.0.s8 %v2039
        %v2041 = vlaneseq
        %v2042 = vshrl.u32 %v2041, 7
        %v2043 = vsub.s32 %v2040, %v2042
        %v2044 = vrot.slane %v2022, %v2043
        %v2046 = vunpack.c.l.s4 1966171168
        %v2047 = vunpack.c.0.s8 %v2046
        %v2048 = vlaneseq
        %v2049 = vshrl.u32 %v2048, 7
        %v2050 = vsub.s32 %v2047, %v2049
        %v2051 = vrot.slane %v2023, %v2050
        %v2052 = vcombine.high %v2030, %v2030
        %v2053 = vcombine.high %v2044, %v2044
        %v3380 = vunpack.c.l.b16 %v308
        %v3381 = vunpack.c.l.b16 %v309
        %v3382 = vunpack.c.l.b16 %v310
        %v3383 = vunpack.c.l.b16 %v311
        %v3384 = vunpack.c.l.b16 %v312
        %v3385 = vunpack.c.l.b16 %v313
        %v3386 = vunpack.c.l.b16 %v314
        %v3387 = vunpack.c.l.b16 %v315
        %v3388 = vunpack.c.l.b16 %v316
        %v3389 = vunpack.c.l.b16 %v317
        %v3390 = vunpack.c.l.b16 %v318
        %v3391 = vunpack.c.l.b16 %v319
        %v3392 = vunpack.c.l.b16 %v320
        %v3393 = vunpack.c.l.b16 %v321
        %v3394 = vunpack.c.l.b16 %v322
        %v3395 = vunpack.c.l.b16 %v323
        %v3396 = vunpack.c.l.b16 %v324
        %v3397 = vunpack.c.l.b16 %v325
        %v3398 = vunpack.c.l.b16 %v326
        %v3399 = vunpack.c.l.b16 %v327
        %v3400 = vunpack.c.l.b16 %v328
        %v3401 = vunpack.c.l.b16 %v329
        %v3402 = vunpack.c.l.b16 %v330
        %v3403 = vunpack.c.l.b16 %v331
        %v3404 = vunpack.c.l.b16 %v332
        %v3405 = vunpack.c.l.b16 %v333
        %v3406 = vunpack.c.l.b16 %v334
        %v3407 = vunpack.c.l.b16 %v335
        %v3408 = vunpack.c.l.b16 %v336
        %v3409 = vunpack.c.l.b16 %v337
        %v3410 = vunpack.c.l.b16 %v338
        %v3411 = vunpack.c.l.b16 %v339
        %v3412 = vunpack.c.l.b16 %v340
        %v3413 = vunpack.c.l.b16 %v341
        %v3414 = vunpack.c.l.b16 %v342
        %v3415 = vunpack.c.l.b16 %v343
        %v3416 = vunpack.c.l.b16 %v344
        %v3417 = vunpack.c.l.b16 %v345
        %v3418 = vunpack.c.l.b16 %v346
        %v3419 = vunpack.c.l.b16 %v347
        %v3420 = vunpack.c.l.b16 %v348
        %v3421 = vunpack.c.l.b16 %v349
        %v3422 = vunpack.c.l.b16 %v350
        %v3423 = vunpack.c.l.b16 %v351
        %v3424 = vunpack.c.l.b16 %v352
        %v3425 = vunpack.c.l.b16 %v353
        %v3426 = vunpack.c.l.b16 %v354
        %v3427 = vunpack.c.l.b16 %v355
        %v3428 = vunpack.c.l.b16 %v356
        %v3429 = vunpack.c.l.b16 %v357
        %v3430 = vunpack.c.l.b16 %v358
        %v3431 = vunpack.c.l.b16 %v359
        %v3432 = vunpack.c.l.b16 %v360
        %v3433 = vunpack.c.l.b16 %v361
        %v3434 = vunpack.c.l.b16 %v362
        %v3435 = vunpack.c.l.b16 %v363
        %v3436 = vunpack.c.l.b16 %v364
        %v3437 = vunpack.c.l.b16 %v365
        %v3438 = vunpack.c.l.b16 %v366
        %v3439 = vunpack.c.l.b16 %v367
        %v3440 = vunpack.c.l.b16 %v368
        %v3441 = vunpack.c.l.b16 %v369
        %v3442 = vunpack.c.l.b16 %v370
        %v3443 = vunpack.c.l.b16 %v371
        %v3444 = vunpack.c.l.b16 %v372
        %v3445 = vunpack.c.l.b16 %v373
        %v3446 = vunpack.c.l.b16 %v374
        %v3447 = vunpack.c.l.b16 %v375
        %v3448 = vunpack.c.l.b16 %v376
        %v3449 = vunpack.c.l.b16 %v377
        %v3450 = vunpack.c.l.b16 %v378
        %v3451 = vunpack.c.l.b16 %v379
        %v3452 = vunpack.c.l.b16 %v380
        %v3453 = vunpack.c.l.b16 %v381
        %v3454 = vunpack.c.l.b16 %v382
        %v3455 = vunpack.c.l.b16 %v383
        %v3456 = vunpack.c.l.b16 %v384
        %v3457 = vunpack.c.l.b16 %v385
        %v3458 = vunpack.c.l.b16 %v386
        %v3459 = vunpack.c.l.b16 %v387
        %v3460 = vunpack.c.l.b16 %v388
        %v3461 = vunpack.c.l.b16 %v389
        %v3462 = vunpack.c.l.b16 %v390
        %v3463 = vunpack.c.l.b16 %v391
        %v3464 = vunpack.c.l.b16 %v392
        %v3465 = vunpack.c.l.b16 %v393
        %v3466 = vunpack.c.l.b16 %v394
        %v3467 = vunpack.c.l.b16 %v395
        %v3468 = vunpack.c.l.b16 %v396
        %v3469 = vunpack.c.l.b16 %v397
        %v3470 = vunpack.c.l.b16 %v398
        %v3471 = vunpack.c.l.b16 %v399
        %v3472 = vunpack.c.l.b16 %v400
        %v3473 = vunpack.c.l.b16 %v401
        %v3474 = vunpack.c.l.b16 %v402
        %v3475 = vunpack.c.l.b16 %v403
        %v3476 = vunpack.c.l.b16 %v404
        %v3477 = vunpack.c.l.b16 %v405
        %v3478 = vunpack.c.l.b16 %v406
        %v3479 = vunpack.c.l.b16 %v407
        %v3480 = vunpack.c.l.b16 %v408
        %v3481 = vunpack.c.l.b16 %v409
        %v3482 = vunpack.c.l.b16 %v410
        %v3483 = vunpack.c.l.b16 %v411
        %v3484 = vunpack.c.l.b16 %v412
        %v3485 = vunpack.c.l.b16 %v413
        %v3486 = vunpack.c.l.b16 %v414
        %v3487 = vunpack.c.l.b16 %v415
        %v3488 = vunpack.c.l.b16 %v416
        %v3489 = vunpack.c.l.b16 %v417
        %v3490 = vunpack.c.l.b16 %v418
        %v3491 = vunpack.c.l.b16 %v419
        %v3492 = vunpack.c.l.b16 %v420
        %v3493 = vunpack.c.l.b16 %v421
        %v3494 = vunpack.c.l.b16 %v422
        %v3495 = vunpack.c.l.b16 %v423
        %v3496 = vunpack.c.l.b16 %v424
        %v3497 = vunpack.c.l.b16 %v425
        %v3498 = vunpack.c.l.b16 %v426
        %v3499 = vunpack.c.l.b16 %v427
        %v3500 = vunpack.c.l.b16 %v428
        %v3501 = vunpack.c.l.b16 %v429
        %v3502 = vunpack.c.l.b16 %v430
        %v3503 = vunpack.c.l.b16 %v431
        %v3504 = vunpack.c.l.b16 %v432
        %v3505 = vunpack.c.l.b16 %v433
        %v3506 = vunpack.c.l.b16 %v434
        %v3507 = vunpack.c.l.b16 %v435
        %v3508 = vunpack.c.l.b16 %v436
        %v3509 = vunpack.c.l.b16 %v437
        %v3510 = vunpack.c.l.b16 %v438
        %v3511 = vunpack.c.l.b16 %v439
        %v3512 = vunpack.c.l.b16 %v440
        %v3513 = vunpack.c.l.b16 %v441
        %v3514 = vunpack.c.l.b16 %v442
        %v3515 = vunpack.c.l.b16 %v443
        %v3516 = vunpack.c.l.b16 %v444
        %v3517 = vunpack.c.l.b16 %v445
        %v3518 = vunpack.c.l.b16 %v446
        %v3519 = vunpack.c.l.b16 %v447
        %v3520 = vunpack.c.l.b16 %v448
        %v3521 = vunpack.c.l.b16 %v449
        %v3522 = vunpack.c.l.b16 %v450
        %v3523 = vunpack.c.l.b16 %v451
        %v3524 = vunpack.c.l.b16 %v452
        %v3525 = vunpack.c.l.b16 %v453
        %v3526 = vunpack.c.l.b16 %v454
        %v3527 = vunpack.c.l.b16 %v455
        %v3528 = vunpack.c.l.b16 %v456
        %v3529 = vunpack.c.l.b16 %v457
        %v3530 = vunpack.c.l.b16 %v458
        %v3531 = vunpack.c.l.b16 %v459
        %v3532 = vunpack.c.l.b16 %v460
        %v3533 = vunpack.c.l.b16 %v461
        %v3534 = vunpack.c.l.b16 %v462
        %v3535 = vunpack.c.l.b16 %v463
        %v3536 = vunpack.c.l.b16 %v464
        %v3537 = vunpack.c.l.b16 %v465
        %v3538 = vunpack.c.l.b16 %v466
        %v3539 = vunpack.c.l.b16 %v467
        %v3540 = vunpack.c.l.b16 %v468
        %v3541 = vunpack.c.l.b16 %v469
        %v3542 = vunpack.c.l.b16 %v470
        %v3543 = vunpack.c.l.b16 %v471
        %v3544 = vunpack.c.l.b16 %v472
        %v3545 = vunpack.c.l.b16 %v473
        %v3546 = vunpack.c.l.b16 %v474
        %v3547 = vunpack.c.l.b16 %v475
        %v3548 = vunpack.c.l.b16 %v476
        %v3549 = vunpack.c.l.b16 %v477
        %v3550 = vunpack.c.l.b16 %v478
        %v3551 = vunpack.c.l.b16 %v479
        %v3552 = vunpack.c.l.b16 %v480
        %v3553 = vunpack.c.l.b16 %v481
        %v3554 = vunpack.c.l.b16 %v482
        %v3555 = vunpack.c.l.b16 %v483
        %v3556 = vunpack.c.l.b16 %v484
        %v3557 = vunpack.c.l.b16 %v485
        %v3558 = vunpack.c.l.b16 %v486
        %v3559 = vunpack.c.l.b16 %v487
        %v3560 = vunpack.c.l.b16 %v488
        %v3561 = vunpack.c.l.b16 %v489
        %v3562 = vunpack.c.l.b16 %v490
        %v3563 = vunpack.c.l.b16 %v491
        %v3564 = vunpack.c.l.b16 %v492
        %v3565 = vunpack.c.l.b16 %v493
        %v3566 = vunpack.c.l.b16 %v494
        %v3567 = vunpack.c.l.b16 %v495
        %v3568 = vunpack.c.l.b16 %v496
        %v3569 = vunpack.c.l.b16 %v497
        %v3570 = vunpack.c.l.b16 %v498
        %v3571 = vunpack.c.l.b16 %v499
        %v3572 = vunpack.c.l.b16 %v500
        %v3573 = vunpack.c.l.b16 %v501
        %v3574 = vunpack.c.l.b16 %v502
        %v3575 = vunpack.c.l.b16 %v503
        %v3576 = vunpack.c.l.b16 %v504
        %v3577 = vunpack.c.l.b16 %v505
        %v3578 = vunpack.c.l.b16 %v506
        %v3579 = vunpack.c.l.b16 %v507
        %v3580 = vunpack.c.l.b16 %v508
        %v3581 = vunpack.c.l.b16 %v509
        %v3582 = vunpack.c.l.b16 %v510
        %v3583 = vunpack.c.l.b16 %v511
        %v3584 = vunpack.c.l.b16 %v512
        %v3585 = vunpack.c.l.b16 %v513
        %v3586 = vunpack.c.l.b16 %v514
        %v3587 = vunpack.c.l.b16 %v515
        %v3588 = vunpack.c.l.b16 %v516
        %v3589 = vunpack.c.l.b16 %v517
        %v3590 = vunpack.c.l.b16 %v518
        %v3591 = vunpack.c.l.b16 %v519
        %v3592 = vunpack.c.l.b16 %v520
        %v3593 = vunpack.c.l.b16 %v521
        %v3594 = vunpack.c.l.b16 %v522
        %v3595 = vunpack.c.l.b16 %v523
        %v3596 = vunpack.c.l.b16 %v524
        %v3597 = vunpack.c.l.b16 %v525
        %v3598 = vunpack.c.l.b16 %v526
        %v3599 = vunpack.c.l.b16 %v527
        %v3600 = vunpack.c.l.b16 %v528
        %v3601 = vunpack.c.l.b16 %v529
        %v3602 = vunpack.c.l.b16 %v530
        %v3603 = vunpack.c.l.b16 %v531
        %v3604 = vunpack.c.l.b16 %v532
        %v3605 = vunpack.c.l.b16 %v533
        %v3606 = vunpack.c.l.b16 %v534
        %v3607 = vunpack.c.l.b16 %v535
        %v3608 = vunpack.c.l.b16 %v536
        %v3609 = vunpack.c.l.b16 %v537
        %v3610 = vunpack.c.l.b16 %v538
        %v3611 = vunpack.c.l.b16 %v539
        %v3612 = vunpack.c.l.b16 %v540
        %v3613 = vunpack.c.l.b16 %v541
        %v3614 = vunpack.c.l.b16 %v542
        %v3615 = vunpack.c.l.b16 %v543
        %v3616 = vunpack.c.l.b16 %v544
        %v3617 = vunpack.c.l.b16 %v545
        %v3618 = vunpack.c.l.b16 %v546
        %v3619 = vunpack.c.l.b16 %v547
        %v3620 = vunpack.c.l.b16 %v548
        %v3621 = vunpack.c.l.b16 %v549
        %v3622 = vunpack.c.l.b16 %v550
        %v3623 = vunpack.c.l.b16 %v551
        %v3624 = vunpack.c.l.b16 %v552
        %v3625 = vunpack.c.l.b16 %v553
        %v3626 = vunpack.c.l.b16 %v554
        %v3627 = vunpack.c.l.b16 %v555
        %v3628 = vunpack.c.l.b16 %v556
        %v3629 = vunpack.c.l.b16 %v557
        %v3630 = vunpack.c.l.b16 %v558
        %v3631 = vunpack.c.l.b16 %v559
        %v3632 = vunpack.c.l.b16 %v560
        %v3633 = vunpack.c.l.b16 %v561
        %v3634 = vunpack.c.l.b16 %v562
        %v3635 = vunpack.c.l.b16 %v563
        %v3636 = vunpack.c.l.b16 %v564
        %v3637 = vunpack.c.l.b16 %v565
        %v3638 = vunpack.c.l.b16 %v566
        %v3639 = vunpack.c.l.b16 %v567
        %v3640 = vunpack.c.l.b16 %v568
        %v3641 = vunpack.c.l.b16 %v569
        %v3642 = vunpack.c.l.b16 %v570
        %v3643 = vunpack.c.l.b16 %v571
        %v3644 = vunpack.c.l.b16 %v572
        %v3645 = vunpack.c.l.b16 %v573
        %v3646 = vunpack.c.l.b16 %v574
        %v3647 = vunpack.c.l.b16 %v575
        %v3648 = vunpack.c.l.b16 %v576
        %v3649 = vunpack.c.l.b16 %v577
        %v3650 = vunpack.c.l.b16 %v578
        %v3651 = vunpack.c.l.b16 %v579
        %v3652 = vunpack.c.l.b16 %v580
        %v3653 = vunpack.c.l.b16 %v581
        %v3654 = vunpack.c.l.b16 %v582
        %v3655 = vunpack.c.l.b16 %v583
        %v3656 = vunpack.c.l.b16 %v584
        %v3657 = vunpack.c.l.b16 %v585
        %v3658 = vunpack.c.l.b16 %v586
        %v3659 = vunpack.c.l.b16 %v587
        %v3660 = vunpack.c.l.b16 %v588
        %v3661 = vunpack.c.l.b16 %v589
        %v3662 = vunpack.c.l.b16 %v590
        %v3663 = vunpack.c.l.b16 %v591
        %v3664 = vunpack.c.l.b16 %v592
        %v3665 = vunpack.c.l.b16 %v593
        %v3666 = vunpack.c.l.b16 %v594
        %v3667 = vunpack.c.l.b16 %v595
        %v3668 = vunpack.c.l.b16 %v596
        %v3669 = vunpack.c.l.b16 %v597
        %v3670 = vunpack.c.l.b16 %v598
        %v3671 = vunpack.c.l.b16 %v599
        %v3672 = vunpack.c.l.b16 %v600
        %v3673 = vunpack.c.l.b16 %v601
        %v3674 = vunpack.c.l.b16 %v602
        %v3675 = vunpack.c.l.b16 %v603
        %v3676 = vunpack.c.l.b16 %v604
        %v3677 = vunpack.c.l.b16 %v605
        %v3678 = vunpack.c.l.b16 %v606
        %v3679 = vunpack.c.l.b16 %v607
        %v3680 = vunpack.c.l.b16 %v608
        %v3681 = vunpack.c.l.b16 %v609
        %v3682 = vunpack.c.l.b16 %v610
        %v3683 = vunpack.c.l.b16 %v611
        %v3684 = vunpack.c.l.b16 %v612
        %v3685 = vunpack.c.l.b16 %v613
        %v3686 = vunpack.c.l.b16 %v614
        %v3687 = vunpack.c.l.b16 %v615
        %v3688 = vunpack.c.l.b16 %v616
        %v3689 = vunpack.c.l.b16 %v617
        %v3690 = vunpack.c.l.b16 %v618
        %v3691 = vunpack.c.l.b16 %v619
        %v3692 = vunpack.c.l.b16 %v620
        %v3693 = vunpack.c.l.b16 %v621
        %v3694 = vunpack.c.l.b16 %v622
        %v3695 = vunpack.c.l.b16 %v623
        %v3696 = vunpack.c.l.b16 %v624
        %v3697 = vunpack.c.l.b16 %v625
        %v3698 = vunpack.c.l.b16 %v626
        %v3699 = vunpack.c.l.b16 %v627
        %v3700 = vunpack.c.l.b16 %v628
        %v3701 = vunpack.c.l.b16 %v629
        %v3702 = vunpack.c.l.b16 %v630
        %v3703 = vunpack.c.l.b16 %v631
        %v3704 = vunpack.c.l.b16 %v632
        %v3705 = vunpack.c.l.b16 %v633
        %v3706 = vunpack.c.l.b16 %v634
        %v3707 = vunpack.c.l.b16 %v635
        %v3708 = vunpack.c.l.b16 %v636
        %v3709 = vunpack.c.l.b16 %v637
        %v3710 = vunpack.c.l.b16 %v638
        %v3711 = vunpack.c.l.b16 %v639
        %v3712 = vunpack.c.l.b16 %v640
        %v3713 = vunpack.c.l.b16 %v641
        %v3714 = vunpack.c.l.b16 %v642
        %v3715 = vunpack.c.l.b16 %v643
        %v3716 = vunpack.c.l.b16 %v644
        %v3717 = vunpack.c.l.b16 %v645
        %v3718 = vunpack.c.l.b16 %v646
        %v3719 = vunpack.c.l.b16 %v647
        %v3720 = vunpack.c.l.b16 %v648
        %v3721 = vunpack.c.l.b16 %v649
        %v3722 = vunpack.c.l.b16 %v650
        %v3723 = vunpack.c.l.b16 %v651
        %v3724 = vunpack.c.l.b16 %v652
        %v3725 = vunpack.c.l.b16 %v653
        %v3726 = vunpack.c.l.b16 %v654
        %v3727 = vunpack.c.l.b16 %v655
        %v3728 = vunpack.c.l.b16 %v656
        %v3729 = vunpack.c.l.b16 %v657
        %v3730 = vunpack.c.l.b16 %v658
        %v3731 = vunpack.c.l.b16 %v659
        %v3732 = vunpack.c.l.b16 %v660
        %v3733 = vunpack.c.l.b16 %v661
        %v3734 = vunpack.c.l.b16 %v662
        %v3735 = vunpack.c.l.b16 %v663
        %v3736 = vunpack.c.l.b16 %v664
        %v3737 = vunpack.c.l.b16 %v665
        %v3738 = vunpack.c.l.b16 %v666
        %v3739 = vunpack.c.l.b16 %v667
        %v3740 = vunpack.c.l.b16 %v668
        %v3741 = vunpack.c.l.b16 %v669
        %v3742 = vunpack.c.l.b16 %v670
        %v3743 = vunpack.c.l.b16 %v671
        %v3744 = vunpack.c.l.b16 %v672
        %v3745 = vunpack.c.l.b16 %v673
        %v3746 = vunpack.c.l.b16 %v674
        %v3747 = vunpack.c.l.b16 %v675
        %v3748 = vunpack.c.l.b16 %v676
        %v3749 = vunpack.c.l.b16 %v677
        %v3750 = vunpack.c.l.b16 %v678
        %v3751 = vunpack.c.l.b16 %v679
        %v3752 = vunpack.c.l.b16 %v680
        %v3753 = vunpack.c.l.b16 %v681
        %v3754 = vunpack.c.l.b16 %v682
        %v3755 = vunpack.c.l.b16 %v683
        %v3756 = vunpack.c.l.b16 %v684
        %v3757 = vunpack.c.l.b16 %v685
        %v3758 = vunpack.c.l.b16 %v686
        %v3759 = vunpack.c.l.b16 %v687
        %v3760 = vunpack.c.l.b16 %v688
        %v3761 = vunpack.c.l.b16 %v689
        %v3762 = vunpack.c.l.b16 %v690
        %v3763 = vunpack.c.l.b16 %v691
        %v3764 = vunpack.c.l.b16 %v692
        %v3765 = vunpack.c.l.b16 %v693
        %v3766 = vunpack.c.l.b16 %v694
        %v3767 = vunpack.c.l.b16 %v695
        %v3768 = vunpack.c.l.b16 %v696
        %v3769 = vunpack.c.l.b16 %v697
        %v3770 = vunpack.c.l.b16 %v698
        %v3771 = vunpack.c.l.b16 %v699
        %v3772 = vunpack.c.l.b16 %v700
        %v3773 = vunpack.c.l.b16 %v701
        %v3774 = vunpack.c.l.b16 %v702
        %v3775 = vunpack.c.l.b16 %v703
        %v3776 = vunpack.c.l.b16 %v704
        %v3777 = vunpack.c.l.b16 %v705
        %v3778 = vunpack.c.l.b16 %v706
        %v3779 = vunpack.c.l.b16 %v707
        %v3780 = vunpack.c.l.b16 %v708
        %v3781 = vunpack.c.l.b16 %v709
        %v3782 = vunpack.c.l.b16 %v710
        %v3783 = vunpack.c.l.b16 %v711
        %v3784 = vunpack.c.l.b16 %v712
        %v3785 = vunpack.c.l.b16 %v713
        %v3786 = vunpack.c.l.b16 %v714
        %v3787 = vunpack.c.l.b16 %v715
        %v3788 = vunpack.c.l.b16 %v716
        %v3789 = vunpack.c.l.b16 %v717
        %v3790 = vunpack.c.l.b16 %v718
        %v3791 = vunpack.c.l.b16 %v719
        %v3792 = vunpack.c.l.b16 %v720
        %v3793 = vunpack.c.l.b16 %v721
        %v3794 = vunpack.c.l.b16 %v722
        %v3795 = vunpack.c.l.b16 %v723
        %v3796 = vunpack.c.l.b16 %v724
        %v3797 = vunpack.c.l.b16 %v725
        %v3798 = vunpack.c.l.b16 %v726
        %v3799 = vunpack.c.l.b16 %v727
        %v3800 = vunpack.c.l.b16 %v728
        %v3801 = vunpack.c.l.b16 %v729
        %v3802 = vunpack.c.l.b16 %v730
        %v3803 = vunpack.c.l.b16 %v731
        %v3804 = vunpack.c.l.b16 %v732
        %v3805 = vunpack.c.l.b16 %v733
        %v3806 = vunpack.c.l.b16 %v734
        %v3807 = vunpack.c.l.b16 %v735
        %v3808 = vunpack.c.l.b16 %v736
        %v3809 = vunpack.c.l.b16 %v737
        %v3810 = vunpack.c.l.b16 %v738
        %v3811 = vunpack.c.l.b16 %v739
        %v3812 = vunpack.c.l.b16 %v740
        %v3813 = vunpack.c.l.b16 %v741
        %v3814 = vunpack.c.l.b16 %v742
        %v3815 = vunpack.c.l.b16 %v743
        %v3816 = vunpack.c.l.b16 %v744
        %v3817 = vunpack.c.l.b16 %v745
        %v3818 = vunpack.c.l.b16 %v746
        %v3819 = vunpack.c.l.b16 %v747
        %v3820 = vunpack.c.l.b16 %v748
        %v3821 = vunpack.c.l.b16 %v749
        %v3822 = vunpack.c.l.b16 %v750
        %v3823 = vunpack.c.l.b16 %v751
        %v3824 = vunpack.c.l.b16 %v752
        %v3825 = vunpack.c.l.b16 %v753
        %v3826 = vunpack.c.l.b16 %v754
        %v3827 = vunpack.c.l.b16 %v755
        %v3828 = vunpack.c.l.b16 %v756
        %v3829 = vunpack.c.l.b16 %v757
        %v3830 = vunpack.c.l.b16 %v758
        %v3831 = vunpack.c.l.b16 %v759
        %v3832 = vunpack.c.l.b16 %v760
        %v3833 = vunpack.c.l.b16 %v761
        %v3834 = vunpack.c.l.b16 %v762
        %v3835 = vunpack.c.l.b16 %v763
        %v3836 = vunpack.c.l.b16 %v764
        %v3837 = vunpack.c.l.b16 %v765
        %v3838 = vunpack.c.l.b16 %v766
        %v3839 = vunpack.c.l.b16 %v767
        %v3840 = vunpack.c.l.b16 %v768
        %v3841 = vunpack.c.l.b16 %v769
        %v3842 = vunpack.c.l.b16 %v770
        %v3843 = vunpack.c.l.b16 %v771
        %v3844 = vunpack.c.l.b16 %v772
        %v3845 = vunpack.c.l.b16 %v773
        %v3846 = vunpack.c.l.b16 %v774
        %v3847 = vunpack.c.l.b16 %v775
        %v3848 = vunpack.c.l.b16 %v776
        %v3849 = vunpack.c.l.b16 %v777
        %v3850 = vunpack.c.l.b16 %v778
        %v3851 = vunpack.c.l.b16 %v779
        %v3852 = vunpack.c.l.b16 %v780
        %v3853 = vunpack.c.l.b16 %v781
        %v3854 = vunpack.c.l.b16 %v782
        %v3855 = vunpack.c.l.b16 %v783
        %v3856 = vunpack.c.l.b16 %v784
        %v3857 = vunpack.c.l.b16 %v785
        %v3858 = vunpack.c.l.b16 %v786
        %v3859 = vunpack.c.l.b16 %v787
        %v3860 = vunpack.c.l.b16 %v788
        %v3861 = vunpack.c.l.b16 %v789
        %v3862 = vunpack.c.l.b16 %v790
        %v3863 = vunpack.c.l.b16 %v791
        %v3864 = vunpack.c.l.b16 %v792
        %v3865 = vunpack.c.l.b16 %v793
        %v3866 = vunpack.c.l.b16 %v794
        %v3867 = vunpack.c.l.b16 %v795
        %v3868 = vunpack.c.l.b16 %v796
        %v3869 = vunpack.c.l.b16 %v797
        %v3870 = vunpack.c.l.b16 %v798
        %v3871 = vunpack.c.l.b16 %v799
        %v3872 = vunpack.c.l.b16 %v800
        %v3873 = vunpack.c.l.b16 %v801
        %v3874 = vunpack.c.l.b16 %v802
        %v3875 = vunpack.c.l.b16 %v803
        %v3876 = vunpack.c.l.b16 %v804
        %v3877 = vunpack.c.l.b16 %v805
        %v3878 = vunpack.c.l.b16 %v806
        %v3879 = vunpack.c.l.b16 %v807
        %v3880 = vunpack.c.l.b16 %v808
        %v3881 = vunpack.c.l.b16 %v809
        %v3882 = vunpack.c.l.b16 %v810
        %v3883 = vunpack.c.l.b16 %v811
        %v3884 = vunpack.c.l.b16 %v812
        %v3885 = vunpack.c.l.b16 %v813
        %v3886 = vunpack.c.l.b16 %v814
        %v3887 = vunpack.c.l.b16 %v815
        %v3888 = vunpack.c.l.b16 %v816
        %v3889 = vunpack.c.l.b16 %v817
        %v3890 = vunpack.c.l.b16 %v818
        %v3891 = vunpack.c.l.b16 %v819
        %v3892 = vunpack.c.l.b16 %v820
        %v3893 = vunpack.c.l.b16 %v821
        %v3894 = vunpack.c.l.b16 %v822
        %v3895 = vunpack.c.l.b16 %v823
        %v3896 = vunpack.c.l.b16 %v824
        %v3897 = vunpack.c.l.b16 %v825
        %v3898 = vunpack.c.l.b16 %v826
        %v3899 = vunpack.c.l.b16 %v827
        %v3900 = vunpack.c.l.b16 %v828
        %v3901 = vunpack.c.l.b16 %v829
        %v3902 = vunpack.c.l.b16 %v830
        %v3903 = vunpack.c.l.b16 %v831
        %v3904 = vunpack.c.l.b16 %v832
        %v3905 = vunpack.c.l.b16 %v833
        %v3906 = vunpack.c.l.b16 %v834
        %v3907 = vunpack.c.l.b16 %v835
        %v3908 = vunpack.c.l.b16 %v836
        %v3909 = vunpack.c.l.b16 %v837
        %v3910 = vunpack.c.l.b16 %v838
        %v3911 = vunpack.c.l.b16 %v839
        %v3912 = vunpack.c.l.b16 %v840
        %v3913 = vunpack.c.l.b16 %v841
        %v3914 = vunpack.c.l.b16 %v842
        %v3915 = vunpack.c.l.b16 %v843
        %v3916 = vunpack.c.l.b16 %v844
        %v3917 = vunpack.c.l.b16 %v845
        %v3918 = vunpack.c.l.b16 %v846
        %v3919 = vunpack.c.l.b16 %v847
        %v3920 = vunpack.c.l.b16 %v848
        %v3921 = vunpack.c.l.b16 %v849
        %v3922 = vunpack.c.l.b16 %v850
        %v3923 = vunpack.c.l.b16 %v851
        %v3924 = vunpack.c.l.b16 %v852
        %v3925 = vunpack.c.l.b16 %v853
        %v3926 = vunpack.c.l.b16 %v854
        %v3927 = vunpack.c.l.b16 %v855
        %v3928 = vunpack.c.l.b16 %v856
        %v3929 = vunpack.c.l.b16 %v857
        %v3930 = vunpack.c.l.b16 %v858
        %v3931 = vunpack.c.l.b16 %v859
        %v3932 = vunpack.c.l.b16 %v860
        %v3933 = vunpack.c.l.b16 %v861
        %v3934 = vunpack.c.l.b16 %v862
        %v3935 = vunpack.c.l.b16 %v863
        %v3936 = vunpack.c.l.b16 %v864
        %v3937 = vunpack.c.l.b16 %v865
        %v3938 = vunpack.c.l.b16 %v866
        %v3939 = vunpack.c.l.b16 %v867
        %v3940 = vunpack.c.l.b16 %v868
        %v3941 = vunpack.c.l.b16 %v869
        %v3942 = vunpack.c.l.b16 %v870
        %v3943 = vunpack.c.l.b16 %v871
        %v3944 = vunpack.c.l.b16 %v872
        %v3945 = vunpack.c.l.b16 %v873
        %v3946 = vunpack.c.l.b16 %v874
        %v3947 = vunpack.c.l.b16 %v875
        %v3948 = vunpack.c.l.b16 %v876
        %v3949 = vunpack.c.l.b16 %v877
        %v3950 = vunpack.c.l.b16 %v878
        %v3951 = vunpack.c.l.b16 %v879
        %v3952 = vunpack.c.l.b16 %v880
        %v3953 = vunpack.c.l.b16 %v881
        %v3954 = vunpack.c.l.b16 %v882
        %v3955 = vunpack.c.l.b16 %v883
        %v3956 = vunpack.c.l.b16 %v884
        %v3957 = vunpack.c.l.b16 %v885
        %v3958 = vunpack.c.l.b16 %v886
        %v3959 = vunpack.c.l.b16 %v887
        %v3960 = vunpack.c.l.b16 %v888
        %v3961 = vunpack.c.l.b16 %v889
        %v3962 = vunpack.c.l.b16 %v890
        %v3963 = vunpack.c.l.b16 %v891
        %v3964 = vunpack.c.l.b16 %v892
        %v3965 = vunpack.c.l.b16 %v893
        %v3966 = vunpack.c.l.b16 %v894
        %v3967 = vunpack.c.l.b16 %v895
        %v3968 = vunpack.c.l.b16 %v896
        %v3969 = vunpack.c.l.b16 %v897
        %v3970 = vunpack.c.l.b16 %v898
        %v3971 = vunpack.c.l.b16 %v899
        %v3972 = vunpack.c.l.b16 %v900
        %v3973 = vunpack.c.l.b16 %v901
        %v3974 = vunpack.c.l.b16 %v902
        %v3975 = vunpack.c.l.b16 %v903
        %v3976 = vunpack.c.l.b16 %v904
        %v3977 = vunpack.c.l.b16 %v905
        %v3978 = vunpack.c.l.b16 %v906
        %v3979 = vunpack.c.l.b16 %v907
        %v3980 = vunpack.c.l.b16 %v908
        %v3981 = vunpack.c.l.b16 %v909
        %v3982 = vunpack.c.l.b16 %v910
        %v3983 = vunpack.c.l.b16 %v911
        %v3984 = vunpack.c.l.b16 %v912
        %v3985 = vunpack.c.l.b16 %v913
        %v3986 = vunpack.c.l.b16 %v914
        %v3987 = vunpack.c.l.b16 %v915
        %v3988 = vunpack.c.l.b16 %v916
        %v3989 = vunpack.c.l.b16 %v917
        %v3990 = vunpack.c.l.b16 %v918
        %v3991 = vunpack.c.l.b16 %v919
        %v3992 = vunpack.c.l.b16 %v920
        %v3993 = vunpack.c.l.b16 %v921
        %v3994 = vunpack.c.l.b16 %v922
        %v3995 = vunpack.c.l.b16 %v923
        %v3996 = vunpack.c.l.b16 %v924
        %v3997 = vunpack.c.l.b16 %v925
        %v3998 = vunpack.c.l.b16 %v926
        %v3999 = vunpack.c.l.b16 %v927
        %v4000 = vunpack.c.l.b16 %v928
        %v4001 = vunpack.c.l.b16 %v929
        %v4002 = vunpack.c.l.b16 %v930
        %v4003 = vunpack.c.l.b16 %v931
        %v4004 = vunpack.c.l.b16 %v932
        %v4005 = vunpack.c.l.b16 %v933
        %v4006 = vunpack.c.l.b16 %v934
        %v4007 = vunpack.c.l.b16 %v935
        %v4008 = vunpack.c.l.b16 %v936
        %v4009 = vunpack.c.l.b16 %v937
        %v4010 = vunpack.c.l.b16 %v938
        %v4011 = vunpack.c.l.b16 %v939
        %v4012 = vunpack.c.l.b16 %v940
        %v4013 = vunpack.c.l.b16 %v941
        %v4014 = vunpack.c.l.b16 %v942
        %v4015 = vunpack.c.l.b16 %v943
        %v4016 = vunpack.c.l.b16 %v944
        %v4017 = vunpack.c.l.b16 %v945
        %v4018 = vunpack.c.l.b16 %v946
        %v4019 = vunpack.c.l.b16 %v947
        %v4020 = vunpack.c.l.b16 %v948
        %v4021 = vunpack.c.l.b16 %v949
        %v4022 = vunpack.c.l.b16 %v950
        %v4023 = vunpack.c.l.b16 %v951
        %v4024 = vunpack.c.l.b16 %v952
        %v4025 = vunpack.c.l.b16 %v953
        %v4026 = vunpack.c.l.b16 %v954
        %v4027 = vunpack.c.l.b16 %v955
        %v4028 = vunpack.c.l.b16 %v956
        %v4029 = vunpack.c.l.b16 %v957
        %v4030 = vunpack.c.l.b16 %v958
        %v4031 = vunpack.c.l.b16 %v959
        %v4032 = vunpack.c.l.b16 %v960
        %v4033 = vunpack.c.l.b16 %v961
        %v4034 = vunpack.c.l.b16 %v962
        %v4035 = vunpack.c.l.b16 %v963
        %v4036 = vunpack.c.l.b16 %v964
        %v4037 = vunpack.c.l.b16 %v965
        %v4038 = vunpack.c.l.b16 %v966
        %v4039 = vunpack.c.l.b16 %v967
        %v4040 = vunpack.c.l.b16 %v968
        %v4041 = vunpack.c.l.b16 %v969
        %v4042 = vunpack.c.l.b16 %v970
        %v4043 = vunpack.c.l.b16 %v971
        %v4044 = vunpack.c.l.b16 %v972
        %v4045 = vunpack.c.l.b16 %v973
        %v4046 = vunpack.c.l.b16 %v974
        %v4047 = vunpack.c.l.b16 %v975
        %v4048 = vunpack.c.l.b16 %v976
        %v4049 = vunpack.c.l.b16 %v977
        %v4050 = vunpack.c.l.b16 %v978
        %v4051 = vunpack.c.l.b16 %v979
        %v4052 = vunpack.c.l.b16 %v980
        %v4053 = vunpack.c.l.b16 %v981
        %v4054 = vunpack.c.l.b16 %v982
        %v4055 = vunpack.c.l.b16 %v983
        %v4056 = vunpack.c.l.b16 %v984
        %v4057 = vunpack.c.l.b16 %v985
        %v4058 = vunpack.c.l.b16 %v986
        %v4059 = vunpack.c.l.b16 %v987
        %v4060 = vunpack.c.l.b16 %v988
        %v4061 = vunpack.c.l.b16 %v989
        %v4062 = vunpack.c.l.b16 %v990
        %v4063 = vunpack.c.l.b16 %v991
        %v4064 = vunpack.c.l.b16 %v992
        %v4065 = vunpack.c.l.b16 %v993
        %v4066 = vunpack.c.l.b16 %v994
        %v4067 = vunpack.c.l.b16 %v995
        %v4068 = vunpack.c.l.b16 %v996
        %v4069 = vunpack.c.l.b16 %v997
        %v4070 = vunpack.c.l.b16 %v998
        %v4071 = vunpack.c.l.b16 %v999
        %v4072 = vunpack.c.l.b16 %v1000
        %v4073 = vunpack.c.l.b16 %v1001
        %v4074 = vunpack.c.l.b16 %v1002
        %v4075 = vunpack.c.l.b16 %v1003
        %v4076 = vunpack.c.l.b16 %v1004
        %v4077 = vunpack.c.l.b16 %v1005
        %v4078 = vunpack.c.l.b16 %v1006
        %v4079 = vunpack.c.l.b16 %v1007
        %v4080 = vunpack.c.l.b16 %v1008
        %v4081 = vunpack.c.l.b16 %v1009
        %v4082 = vunpack.c.l.b16 %v1010
        %v4083 = vunpack.c.l.b16 %v1011
        %v4084 = vunpack.c.l.b16 %v1012
        %v4085 = vunpack.c.l.b16 %v1013
        %v4086 = vunpack.c.l.b16 %v1014
        %v4087 = vunpack.c.l.b16 %v1015
        %v4088 = vunpack.c.l.b16 %v1016
        %v4089 = vunpack.c.l.b16 %v1017
        %v4090 = vunpack.c.l.b16 %v1018
        %v4091 = vunpack.c.l.b16 %v1019
        %v4092 = vunpack.c.l.b16 %v1020
        %v4093 = vunpack.c.l.b16 %v1021
        %v4094 = vunpack.c.l.b16 %v1022
        %v4095 = vunpack.c.l.b16 %v1023
        %v4096 = vunpack.c.l.b16 %v1024
        %v4097 = vunpack.c.l.b16 %v1025
        %v4098 = vunpack.c.l.b16 %v1026
        %v4099 = vunpack.c.l.b16 %v1027
        %v4100 = vunpack.c.l.b16 %v1028
        %v4101 = vunpack.c.l.b16 %v1029
        %v4102 = vunpack.c.l.b16 %v1030
        %v4103 = vunpack.c.l.b16 %v1031
        %v4104 = vunpack.c.l.b16 %v1032
        %v4105 = vunpack.c.l.b16 %v1033
        %v4106 = vunpack.c.l.b16 %v1034
        %v4107 = vunpack.c.l.b16 %v1035
        %v4108 = vunpack.c.l.b16 %v1036
        %v4109 = vunpack.c.l.b16 %v1037
        %v4110 = vunpack.c.l.b16 %v1038
        %v4111 = vunpack.c.l.b16 %v1039
        %v4112 = vunpack.c.l.b16 %v1040
        %v4113 = vunpack.c.l.b16 %v1041
        %v4114 = vunpack.c.l.b16 %v1042
        %v4115 = vunpack.c.l.b16 %v1043
        %v4116 = vunpack.c.l.b16 %v1044
        %v4117 = vunpack.c.l.b16 %v1045
        %v4118 = vunpack.c.l.b16 %v1046
        %v4119 = vunpack.c.l.b16 %v1047
        %v4120 = vunpack.c.l.b16 %v1048
        %v4121 = vunpack.c.l.b16 %v1049
        %v4122 = vunpack.c.l.b16 %v1050
        %v4123 = vunpack.c.l.b16 %v1051
        %v4124 = vunpack.c.l.b16 %v1052
        %v4125 = vunpack.c.l.b16 %v1053
        %v4126 = vunpack.c.l.b16 %v1054
        %v4127 = vunpack.c.l.b16 %v1055
        %v4128 = vunpack.c.l.b16 %v1056
        %v4129 = vunpack.c.l.b16 %v1057
        %v4130 = vunpack.c.l.b16 %v1058
        %v4131 = vunpack.c.l.b16 %v1059
        %v4132 = vunpack.c.l.b16 %v1060
        %v4133 = vunpack.c.l.b16 %v1061
        %v4134 = vunpack.c.l.b16 %v1062
        %v4135 = vunpack.c.l.b16 %v1063
        %v4136 = vunpack.c.l.b16 %v1064
        %v4137 = vunpack.c.l.b16 %v1065
        %v4138 = vunpack.c.l.b16 %v1066
        %v4139 = vunpack.c.l.b16 %v1067
        %v4140 = vunpack.c.l.b16 %v1068
        %v4141 = vunpack.c.l.b16 %v1069
        %v4142 = vunpack.c.l.b16 %v1070
        %v4143 = vunpack.c.l.b16 %v1071
        %v4144 = vunpack.c.l.b16 %v1072
        %v4145 = vunpack.c.l.b16 %v1073
        %v4146 = vunpack.c.l.b16 %v1074
        %v4147 = vunpack.c.l.b16 %v1075
        %v4148 = vunpack.c.l.b16 %v1076
        %v4149 = vunpack.c.l.b16 %v1077
        %v4150 = vunpack.c.l.b16 %v1078
        %v4151 = vunpack.c.l.b16 %v1079
        %v4152 = vunpack.c.l.b16 %v1080
        %v4153 = vunpack.c.l.b16 %v1081
        %v4154 = vunpack.c.l.b16 %v1082
        %v4155 = vunpack.c.l.b16 %v1083
        %v4156 = vunpack.c.l.b16 %v1084
        %v4157 = vunpack.c.l.b16 %v1085
        %v4158 = vunpack.c.l.b16 %v1086
        %v4159 = vunpack.c.l.b16 %v1087
        %v4160 = vunpack.c.l.b16 %v1088
        %v4161 = vunpack.c.l.b16 %v1089
        %v4162 = vunpack.c.l.b16 %v1090
        %v4163 = vunpack.c.l.b16 %v1091
        %v4164 = vunpack.c.l.b16 %v1092
        %v4165 = vunpack.c.l.b16 %v1093
        %v4166 = vunpack.c.l.b16 %v1094
        %v4167 = vunpack.c.l.b16 %v1095
        %v4168 = vunpack.c.l.b16 %v1096
        %v4169 = vunpack.c.l.b16 %v1097
        %v4170 = vunpack.c.l.b16 %v1098
        %v4171 = vunpack.c.l.b16 %v1099
        %v4172 = vunpack.c.l.b16 %v1100
        %v4173 = vunpack.c.l.b16 %v1101
        %v4174 = vunpack.c.l.b16 %v1102
        %v4175 = vunpack.c.l.b16 %v1103
        %v4176 = vunpack.c.l.b16 %v1104
        %v4177 = vunpack.c.l.b16 %v1105
        %v4178 = vunpack.c.l.b16 %v1106
        %v4179 = vunpack.c.l.b16 %v1107
        %v4180 = vunpack.c.l.b16 %v1108
        %v4181 = vunpack.c.l.b16 %v1109
        %v4182 = vunpack.c.l.b16 %v1110
        %v4183 = vunpack.c.l.b16 %v1111
        %v4184 = vunpack.c.l.b16 %v1112
        %v4185 = vunpack.c.l.b16 %v1113
        %v4186 = vunpack.c.l.b16 %v1114
        %v4187 = vunpack.c.l.b16 %v1115
        %v4188 = vunpack.c.l.b16 %v1116
        %v4189 = vunpack.c.l.b16 %v1117
        %v4190 = vunpack.c.l.b16 %v1118
        %v4191 = vunpack.c.l.b16 %v1119
        %v4192 = vunpack.c.l.b16 %v1120
        %v4193 = vunpack.c.l.b16 %v1121
        %v4194 = vunpack.c.l.b16 %v1122
        %v4195 = vunpack.c.l.b16 %v1123
        %v4196 = vunpack.c.l.b16 %v1124
        %v4197 = vunpack.c.l.b16 %v1125
        %v4198 = vunpack.c.l.b16 %v1126
        %v4199 = vunpack.c.l.b16 %v1127
        %v4200 = vunpack.c.l.b16 %v1128
        %v4201 = vunpack.c.l.b16 %v1129
        %v4202 = vunpack.c.l.b16 %v1130
        %v4203 = vunpack.c.l.b16 %v1131
        %v4204 = vunpack.c.l.b16 %v1132
        %v4205 = vunpack.c.l.b16 %v1133
        %v4206 = vunpack.c.l.b16 %v1134
        %v4207 = vunpack.c.l.b16 %v1135
        %v4208 = vunpack.c.l.b16 %v1136
        %v4209 = vunpack.c.l.b16 %v1137
        %v4210 = vunpack.c.l.b16 %v1138
        %v4211 = vunpack.c.l.b16 %v1139
        %v4212 = vunpack.c.l.b16 %v1140
        %v4213 = vunpack.c.l.b16 %v1141
        %v4214 = vunpack.c.l.b16 %v1142
        %v4215 = vunpack.c.l.b16 %v1143
        %v4216 = vunpack.c.l.b16 %v1144
        %v4217 = vunpack.c.l.b16 %v1145
        %v4218 = vunpack.c.l.b16 %v1146
        %v4219 = vunpack.c.l.b16 %v1147
        %v4220 = vunpack.c.l.b16 %v1148
        %v4221 = vunpack.c.l.b16 %v1149
        %v4222 = vunpack.c.l.b16 %v1150
        %v4223 = vunpack.c.l.b16 %v1151
        %v4224 = vunpack.c.l.b16 %v1152
        %v4225 = vunpack.c.l.b16 %v1153
        %v4226 = vunpack.c.l.b16 %v1154
        %v4227 = vunpack.c.l.b16 %v1155
        %v4228 = vunpack.c.l.b16 %v1156
        %v4229 = vunpack.c.l.b16 %v1157
        %v4230 = vunpack.c.l.b16 %v1158
        %v4231 = vunpack.c.l.b16 %v1159
        %v4232 = vunpack.c.l.b16 %v1160
        %v4233 = vunpack.c.l.b16 %v1161
        %v4234 = vunpack.c.l.b16 %v1162
        %v4235 = vunpack.c.l.b16 %v1163
        %v4236 = vunpack.c.l.b16 %v1164
        %v4237 = vunpack.c.l.b16 %v1165
        %v4238 = vunpack.c.l.b16 %v1166
        %v4239 = vunpack.c.l.b16 %v1167
        %v4240 = vunpack.c.l.b16 %v1168
        %v4241 = vunpack.c.l.b16 %v1169
        %v4242 = vunpack.c.l.b16 %v1170
        %v4243 = vunpack.c.l.b16 %v1171
        %v4244 = vunpack.c.l.b16 %v1172
        %v4245 = vunpack.c.l.b16 %v1173
        %v4246 = vunpack.c.l.b16 %v1174
        %v4247 = vunpack.c.l.b16 %v1175
        %v4248 = vunpack.c.l.b16 %v1176
        %v4249 = vunpack.c.l.b16 %v1177
        %v4250 = vunpack.c.l.b16 %v1178
        %v4251 = vunpack.c.l.b16 %v1179
        %v4252 = vunpack.c.l.b16 %v1180
        %v4253 = vunpack.c.l.b16 %v1181
        %v4254 = vunpack.c.l.b16 %v1182
        %v4255 = vunpack.c.l.b16 %v1183
        %v4256 = vunpack.c.l.b16 %v1184
        %v4257 = vunpack.c.l.b16 %v1185
        %v4258 = vunpack.c.l.b16 %v1186
        %v4259 = vunpack.c.l.b16 %v1187
        %v4260 = vunpack.c.l.b16 %v1188
        %v4261 = vunpack.c.l.b16 %v1189
        %v4262 = vunpack.c.l.b16 %v1190
        %v4263 = vunpack.c.l.b16 %v1191
        %v4264 = vunpack.c.l.b16 %v1192
        %v4265 = vunpack.c.l.b16 %v1193
        %v4266 = vunpack.c.l.b16 %v1194
        %v4267 = vunpack.c.l.b16 %v1195
        %v4268 = vunpack.c.l.b16 %v1196
        %v4269 = vunpack.c.l.b16 %v1197
        %v4270 = vunpack.c.l.b16 %v1198
        %v4271 = vunpack.c.l.b16 %v1199
        %v4272 = vunpack.c.l.b16 %v1200
        %v4273 = vunpack.c.l.b16 %v1201
        %v4274 = vunpack.c.l.b16 %v1202
        %v4275 = vunpack.c.l.b16 %v1203
        %v4276 = vunpack.c.l.b16 %v1204
        %v4277 = vunpack.c.l.b16 %v1205
        %v4278 = vunpack.c.l.b16 %v1206
        %v4279 = vunpack.c.l.b16 %v1207
        %v4280 = vunpack.c.l.b16 %v1208
        %v4281 = vunpack.c.l.b16 %v1209
        %v4282 = vunpack.c.l.b16 %v1210
        %v4283 = vunpack.c.l.b16 %v1211
        %v4284 = vunpack.c.l.b16 %v1212
        %v4285 = vunpack.c.l.b16 %v1213
        %v4286 = vunpack.c.l.b16 %v1214
        %v4287 = vunpack.c.l.b16 %v1215
        %v4288 = vunpack.c.l.b16 %v1216
        %v4289 = vunpack.c.l.b16 %v1217
        %v4290 = vunpack.c.l.b16 %v1218
        %v4291 = vunpack.c.l.b16 %v1219
        %v4292 = vunpack.c.l.b16 %v1220
        %v4293 = vunpack.c.l.b16 %v1221
        %v4294 = vunpack.c.l.b16 %v1222
        %v4295 = vunpack.c.l.b16 %v1223
        %v4296 = vunpack.c.l.b16 %v1224
        %v4297 = vunpack.c.l.b16 %v1225
        %v4298 = vunpack.c.l.b16 %v1226
        %v4299 = vunpack.c.l.b16 %v1227
        %v4300 = vunpack.c.l.b16 %v1228
        %v4301 = vunpack.c.l.b16 %v1229
        %v4302 = vunpack.c.l.b16 %v1230
        %v4303 = vunpack.c.l.b16 %v1231
        %v4304 = vunpack.c.l.b16 %v1232
        %v4305 = vunpack.c.l.b16 %v1233
        %v4306 = vunpack.c.l.b16 %v1234
        %v4307 = vunpack.c.l.b16 %v1235
        %v4308 = vunpack.c.l.b16 %v1236
        %v4309 = vunpack.c.l.b16 %v1237
        %v4310 = vunpack.c.l.b16 %v1238
        %v4311 = vunpack.c.l.b16 %v1239
        %v4312 = vunpack.c.l.b16 %v1240
        %v4313 = vunpack.c.l.b16 %v1241
        %v4314 = vunpack.c.l.b16 %v1242
        %v4315 = vunpack.c.l.b16 %v1243
        %v4316 = vunpack.c.l.b16 %v1244
        %v4317 = vunpack.c.l.b16 %v1245
        %v4318 = vunpack.c.l.b16 %v1246
        %v4319 = vunpack.c.l.b16 %v1247
        %v4320 = vunpack.c.l.b16 %v1248
        %v4321 = vunpack.c.l.b16 %v1249
        %v4322 = vunpack.c.l.b16 %v1250
        %v4323 = vunpack.c.l.b16 %v1251
        %v4324 = vunpack.c.l.b16 %v1252
        %v4325 = vunpack.c.l.b16 %v1253
        %v4326 = vunpack.c.l.b16 %v1254
        %v4327 = vunpack.c.l.b16 %v1255
        %v4328 = vunpack.c.l.b16 %v1256
        %v4329 = vunpack.c.l.b16 %v1257
        %v4330 = vunpack.c.l.b16 %v1258
        %v4331 = vunpack.c.l.b16 %v1259
        %v4332 = vunpack.c.l.b16 %v1260
        %v4333 = vunpack.c.l.b16 %v1261
        %v4334 = vunpack.c.l.b16 %v1262
        %v4335 = vunpack.c.l.b16 %v1263
        %v4336 = vunpack.c.l.b16 %v1264
        %v4337 = vunpack.c.l.b16 %v1265
        %v4338 = vunpack.c.l.b16 %v1266
        %v4339 = vunpack.c.l.b16 %v1267
        %v4340 = vunpack.c.l.b16 %v1268
        %v4341 = vunpack.c.l.b16 %v1269
        %v4342 = vunpack.c.l.b16 %v1270
        %v4343 = vunpack.c.l.b16 %v1271
        %v4344 = vunpack.c.l.b16 %v1272
        %v4345 = vunpack.c.l.b16 %v1273
        %v4346 = vunpack.c.l.b16 %v1274
        %v4347 = vunpack.c.l.b16 %v1275
        %v4348 = vunpack.c.l.b16 %v1276
        %v4349 = vunpack.c.l.b16 %v1277
        %v4350 = vunpack.c.l.b16 %v1278
        %v4351 = vunpack.c.l.b16 %v1279
        %v4352 = vunpack.c.l.b16 %v1280
        %v4353 = vunpack.c.l.b16 %v1281
        %v4354 = vunpack.c.l.b16 %v1282
        %v4355 = vunpack.c.l.b16 %v1283
        %v4356 = vunpack.c.l.b16 %v1284
        %v4357 = vunpack.c.l.b16 %v1285
        %v4358 = vunpack.c.l.b16 %v1286
        %v4359 = vunpack.c.l.b16 %v1287
        %v4360 = vunpack.c.l.b16 %v1288
        %v4361 = vunpack.c.l.b16 %v1289
        %v4362 = vunpack.c.l.b16 %v1290
        %v4363 = vunpack.c.l.b16 %v1291
        %v4364 = vunpack.c.l.b16 %v1292
        %v4365 = vunpack.c.l.b16 %v1293
        %v4366 = vunpack.c.l.b16 %v1294
        %v4367 = vunpack.c.l.b16 %v1295
        %v4368 = vunpack.c.l.b16 %v1296
        %v4369 = vunpack.c.l.b16 %v1297
        %v4370 = vunpack.c.l.b16 %v1298
        %v4371 = vunpack.c.l.b16 %v1299
        %v4372 = vunpack.c.l.b16 %v1300
        %v4373 = vunpack.c.l.b16 %v1301
        %v4374 = vunpack.c.l.b16 %v1302
        %v4375 = vunpack.c.l.b16 %v1303
        %v4376 = vunpack.c.l.b16 %v1304
        %v4377 = vunpack.c.l.b16 %v1305
        %v4378 = vunpack.c.l.b16 %v1306
        %v4379 = vunpack.c.l.b16 %v1307
        %v4380 = vunpack.c.l.b16 %v1308
        %v4381 = vunpack.c.l.b16 %v1309
        %v4382 = vunpack.c.l.b16 %v1310
        %v4383 = vunpack.c.l.b16 %v1311
        %v4384 = vunpack.c.l.b16 %v1312
        %v4385 = vunpack.c.l.b16 %v1313
        %v4386 = vunpack.c.l.b16 %v1314
        %v4387 = vunpack.c.l.b16 %v1315
        %v4388 = vunpack.c.l.b16 %v1316
        %v4389 = vunpack.c.l.b16 %v1317
        %v4390 = vunpack.c.l.b16 %v1318
        %v4391 = vunpack.c.l.b16 %v1319
        %v4392 = vunpack.c.l.b16 %v1320
        %v4393 = vunpack.c.l.b16 %v1321
        %v4394 = vunpack.c.l.b16 %v1322
        %v4395 = vunpack.c.l.b16 %v1323
        %v4396 = vunpack.c.l.b16 %v1324
        %v4397 = vunpack.c.l.b16 %v1325
        %v4398 = vunpack.c.l.b16 %v1326
        %v4399 = vunpack.c.l.b16 %v1327
        %v4400 = vunpack.c.l.b16 %v1328
        %v4401 = vunpack.c.l.b16 %v1329
        %v4402 = vunpack.c.l.b16 %v1330
        %v4403 = vunpack.c.l.b16 %v1331
        %v4404 = vunpack.c.l.b16 %v1332
        %v4405 = vunpack.c.l.b16 %v1333
        %v4406 = vunpack.c.l.b16 %v1334
        %v4407 = vunpack.c.l.b16 %v1335
        %v4408 = vunpack.c.l.b16 %v1336
        %v4409 = vunpack.c.l.b16 %v1337
        %v4410 = vunpack.c.l.b16 %v1338
        %v4411 = vunpack.c.l.b16 %v1339
        %v4412 = vunpack.c.l.b16 %v1340
        %v4413 = vunpack.c.l.b16 %v1341
        %v4414 = vunpack.c.l.b16 %v1342
        %v4415 = vunpack.c.l.b16 %v1343
        %v4416 = vunpack.c.l.b16 %v1344
        %v4417 = vunpack.c.l.b16 %v1345
        %v4418 = vunpack.c.l.b16 %v1346
        %v4419 = vunpack.c.l.b16 %v1347
        %v4420 = vunpack.c.l.b16 %v1348
        %v4421 = vunpack.c.l.b16 %v1349
        %v4422 = vunpack.c.l.b16 %v1350
        %v4423 = vunpack.c.l.b16 %v1351
        %v4424 = vunpack.c.l.b16 %v1352
        %v4425 = vunpack.c.l.b16 %v1353
        %v4426 = vunpack.c.l.b16 %v1354
        %v4427 = vunpack.c.l.b16 %v1355
        %v4428 = vunpack.c.l.b16 %v1356
        %v4429 = vunpack.c.l.b16 %v1357
        %v4430 = vunpack.c.l.b16 %v1358
        %v4431 = vunpack.c.l.b16 %v1359
        %v4432 = vunpack.c.l.b16 %v1360
        %v4433 = vunpack.c.l.b16 %v1361
        %v4434 = vunpack.c.l.b16 %v1362
        %v4435 = vunpack.c.l.b16 %v1363
        %v4436 = vunpack.c.l.b16 %v1364
        %v4437 = vunpack.c.l.b16 %v1365
        %v4438 = vunpack.c.l.b16 %v1366
        %v4439 = vunpack.c.l.b16 %v1367
        %v4440 = vunpack.c.l.b16 %v1368
        %v4441 = vunpack.c.l.b16 %v1369
        %v4442 = vunpack.c.l.b16 %v1370
        %v4443 = vunpack.c.l.b16 %v1371
        %v4444 = vunpack.c.l.b16 %v1372
        %v4445 = vunpack.c.l.b16 %v1373
        %v4446 = vunpack.c.l.b16 %v1374
        %v4447 = vunpack.c.l.b16 %v1375
        %v4448 = vunpack.c.l.b16 %v1376
        %v4449 = vunpack.c.l.b16 %v1377
        %v4450 = vunpack.c.l.b16 %v1378
        %v4451 = vunpack.c.l.b16 %v1379
        %v4452 = vunpack.c.l.b16 %v1380
        %v4453 = vunpack.c.l.b16 %v1381
        %v4454 = vunpack.c.l.b16 %v1382
        %v4455 = vunpack.c.l.b16 %v1383
        %v4456 = vunpack.c.l.b16 %v1384
        %v4457 = vunpack.c.l.b16 %v1385
        %v4458 = vunpack.c.l.b16 %v1386
        %v4459 = vunpack.c.l.b16 %v1387
        %v4460 = vunpack.c.l.b16 %v1388
        %v4461 = vunpack.c.l.b16 %v1389
        %v4462 = vunpack.c.l.b16 %v1390
        %v4463 = vunpack.c.l.b16 %v1391
        %v4464 = vunpack.c.l.b16 %v1392
        %v4465 = vunpack.c.l.b16 %v1393
        %v4466 = vunpack.c.l.b16 %v1394
        %v4467 = vunpack.c.l.b16 %v1395
        %v4468 = vunpack.c.l.b16 %v1396
        %v4469 = vunpack.c.l.b16 %v1397
        %v4470 = vunpack.c.l.b16 %v1398
        %v4471 = vunpack.c.l.b16 %v1399
        %v4472 = vunpack.c.l.b16 %v1400
        %v4473 = vunpack.c.l.b16 %v1401
        %v4474 = vunpack.c.l.b16 %v1402
        %v4475 = vunpack.c.l.b16 %v1403
        %v4476 = vunpack.c.l.b16 %v1404
        %v4477 = vunpack.c.l.b16 %v1405
        %v4478 = vunpack.c.l.b16 %v1406
        %v4479 = vunpack.c.l.b16 %v1407
        %v4480 = vunpack.c.l.b16 %v1408
        %v4481 = vunpack.c.l.b16 %v1409
        %v4482 = vunpack.c.l.b16 %v1410
        %v4483 = vunpack.c.l.b16 %v1411
        %v4484 = vunpack.c.l.b16 %v1412
        %v4485 = vunpack.c.l.b16 %v1413
        %v4486 = vunpack.c.l.b16 %v1414
        %v4487 = vunpack.c.l.b16 %v1415
        %v4488 = vunpack.c.l.b16 %v1416
        %v4489 = vunpack.c.l.b16 %v1417
        %v4490 = vunpack.c.l.b16 %v1418
        %v4491 = vunpack.c.l.b16 %v1419
        %v4492 = vunpack.c.l.b16 %v1420
        %v4493 = vunpack.c.l.b16 %v1421
        %v4494 = vunpack.c.l.b16 %v1422
        %v4495 = vunpack.c.l.b16 %v1423
        %v4496 = vunpack.c.l.b16 %v1424
        %v4497 = vunpack.c.l.b16 %v1425
        %v4498 = vunpack.c.l.b16 %v1426
        %v4499 = vunpack.c.l.b16 %v1427
        %v4500 = vunpack.c.l.b16 %v1428
        %v4501 = vunpack.c.l.b16 %v1429
        %v4502 = vunpack.c.l.b16 %v1430
        %v4503 = vunpack.c.l.b16 %v1431
        %v4504 = vunpack.c.l.b16 %v1432
        %v4505 = vunpack.c.l.b16 %v1433
        %v4506 = vunpack.c.l.b16 %v1434
        %v4507 = vunpack.c.l.b16 %v1435
        %v4508 = vunpack.c.l.b16 %v1436
        %v4509 = vunpack.c.l.b16 %v1437
        %v4510 = vunpack.c.l.b16 %v1438
        %v4511 = vunpack.c.l.b16 %v1439
        %v4512 = vunpack.c.l.b16 %v1440
        %v4513 = vunpack.c.l.b16 %v1441
        %v4514 = vunpack.c.l.b16 %v1442
        %v4515 = vunpack.c.l.b16 %v1443
        %v4516 = vunpack.c.l.b16 %v1444
        %v4517 = vunpack.c.l.b16 %v1445
        %v4518 = vunpack.c.l.b16 %v1446
        %v4519 = vunpack.c.l.b16 %v1447
        %v4520 = vunpack.c.l.b16 %v1448
        %v4521 = vunpack.c.l.b16 %v1449
        %v4522 = vunpack.c.l.b16 %v1450
        %v4523 = vunpack.c.l.b16 %v1451
        %v4524 = vunpack.c.l.b16 %v1452
        %v4525 = vunpack.c.l.b16 %v1453
        %v4526 = vunpack.c.l.b16 %v1454
        %v4527 = vunpack.c.l.b16 %v1455
        %v4528 = vunpack.c.l.b16 %v1456
        %v4529 = vunpack.c.l.b16 %v1457
        %v4530 = vunpack.c.l.b16 %v1458
        %v4531 = vunpack.c.l.b16 %v1459
        %v4532 = vunpack.c.l.b16 %v1460
        %v4533 = vunpack.c.l.b16 %v1461
        %v4534 = vunpack.c.l.b16 %v1462
        %v4535 = vunpack.c.l.b16 %v1463
        %v4536 = vunpack.c.l.b16 %v1464
        %v4537 = vunpack.c.l.b16 %v1465
        %v4538 = vunpack.c.l.b16 %v1466
        %v4539 = vunpack.c.l.b16 %v1467
        %v4540 = vunpack.c.l.b16 %v1468
        %v4541 = vunpack.c.l.b16 %v1469
        %v4542 = vunpack.c.l.b16 %v1470
        %v4543 = vunpack.c.l.b16 %v1471
        %v4544 = vunpack.c.l.b16 %v1472
        %v4545 = vunpack.c.l.b16 %v1473
        %v4546 = vunpack.c.l.b16 %v1474
        %v4547 = vunpack.c.l.b16 %v1475
        %v4548 = vunpack.c.l.b16 %v1476
        %v4549 = vunpack.c.l.b16 %v1477
        %v4550 = vunpack.c.l.b16 %v1478
        %v4551 = vunpack.c.l.b16 %v1479
        %v4552 = vunpack.c.l.b16 %v1480
        %v4553 = vunpack.c.l.b16 %v1481
        %v4554 = vunpack.c.l.b16 %v1482
        %v4555 = vunpack.c.l.b16 %v1483
        %v4556 = vunpack.c.l.b16 %v1484
        %v4557 = vunpack.c.l.b16 %v1485
        %v4558 = vunpack.c.l.b16 %v1486
        %v4559 = vunpack.c.l.b16 %v1487
        %v4560 = vunpack.c.l.b16 %v1488
        %v4561 = vunpack.c.l.b16 %v1489
        %v4562 = vunpack.c.l.b16 %v1490
        %v4563 = vunpack.c.l.b16 %v1491
        %v4564 = vunpack.c.l.b16 %v1492
        %v4565 = vunpack.c.l.b16 %v1493
        %v4566 = vunpack.c.l.b16 %v1494
        %v4567 = vunpack.c.l.b16 %v1495
        %v4568 = vunpack.c.l.b16 %v1496
        %v4569 = vunpack.c.l.b16 %v1497
        %v4570 = vunpack.c.l.b16 %v1498
        %v4571 = vunpack.c.l.b16 %v1499
        %v4572 = vunpack.c.l.b16 %v1500
        %v4573 = vunpack.c.l.b16 %v1501
        %v4574 = vunpack.c.l.b16 %v1502
        %v4575 = vunpack.c.l.b16 %v1503
        %v4576 = vunpack.c.l.b16 %v1504
        %v4577 = vunpack.c.l.b16 %v1505
        %v4578 = vunpack.c.l.b16 %v1506
        %v4579 = vunpack.c.l.b16 %v1507
        %v4580 = vunpack.c.l.b16 %v1508
        %v4581 = vunpack.c.l.b16 %v1509
        %v4582 = vunpack.c.l.b16 %v1510
        %v4583 = vunpack.c.l.b16 %v1511
        %v4584 = vunpack.c.l.b16 %v1512
        %v4585 = vunpack.c.l.b16 %v1513
        %v4586 = vunpack.c.l.b16 %v1514
        %v4587 = vunpack.c.l.b16 %v1515
        %v4588 = vunpack.c.l.b16 %v1516
        %v4589 = vunpack.c.l.b16 %v1517
        %v4590 = vunpack.c.l.b16 %v1518
        %v4591 = vunpack.c.l.b16 %v1519
        %v4592 = vunpack.c.l.b16 %v1520
        %v4593 = vunpack.c.l.b16 %v1521
        %v4594 = vunpack.c.l.b16 %v1522
        %v4595 = vunpack.c.l.b16 %v1523
        %v4596 = vunpack.c.l.b16 %v1524
        %v4597 = vunpack.c.l.b16 %v1525
        %v4598 = vunpack.c.l.b16 %v1526
        %v4599 = vunpack.c.l.b16 %v1527
        %v4600 = vunpack.c.l.b16 %v1528
        %v4601 = vunpack.c.l.b16 %v1529
        %v4602 = vunpack.c.l.b16 %v1530
        %v4603 = vunpack.c.l.b16 %v1531
        %v4604 = vunpack.c.l.b16 %v1532
        %v4605 = vunpack.c.l.b16 %v1533
        %v4606 = vunpack.c.l.b16 %v1534
        %v4607 = vunpack.c.l.b16 %v1535
        %v4608 = vunpack.c.l.b16 %v1536
        %v4609 = vunpack.c.l.b16 %v1537
        %v4610 = vunpack.c.l.b16 %v1538
        %v4611 = vunpack.c.l.b16 %v1539
        %v4612 = vunpack.c.l.b16 %v1540
        %v4613 = vunpack.c.l.b16 %v1541
        %v4614 = vunpack.c.l.b16 %v1542
        %v4615 = vunpack.c.l.b16 %v1543
        %v4616 = vunpack.c.l.b16 %v1544
        %v4617 = vunpack.c.l.b16 %v1545
        %v4618 = vunpack.c.l.b16 %v1546
        %v4619 = vunpack.c.l.b16 %v1547
        %v4620 = vunpack.c.l.b16 %v1548
        %v4621 = vunpack.c.l.b16 %v1549
        %v4622 = vunpack.c.l.b16 %v1550
        %v4623 = vunpack.c.l.b16 %v1551
        %v4624 = vunpack.c.l.b16 %v1552
        %v4625 = vunpack.c.l.b16 %v1553
        %v4626 = vunpack.c.l.b16 %v1554
        %v4627 = vunpack.c.l.b16 %v1555
        %v4628 = vpack.c.b16 %v3381, %v3380
        %v4629 = vpack.c.b16 %v3383, %v3382
        %v4630 = vpack.c.b16 %v3385, %v3384
        %v4631 = vpack.c.b16 %v3387, %v3386
        %v4632 = vpack.c.b16 %v3389, %v3388
        %v4633 = vpack.c.b16 %v3391, %v3390
        %v4634 = vpack.c.b16 %v3393, %v3392
        %v4635 = vpack.c.b16 %v3395, %v3394
        %v4636 = vpack.c.b16 %v3397, %v3396
        %v4637 = vpack.c.b16 %v3399, %v3398
        %v4638 = vpack.c.b16 %v3401, %v3400
        %v4639 = vpack.c.b16 %v3403, %v3402
        %v4640 = vpack.c.b16 %v3405, %v3404
        %v4641 = vpack.c.b16 %v3407, %v3406
        %v4642 = vpack.c.b16 %v3409, %v3408
        %v4643 = vpack.c.b16 %v3411, %v3410
        %v4644 = vpack.c.b16 %v3413, %v3412
        %v4645 = vpack.c.b16 %v3415, %v3414
        %v4646 = vpack.c.b16 %v3417, %v3416
        %v4647 = vpack.c.b16 %v3419, %v3418
        %v4648 = vpack.c.b16 %v3421, %v3420
        %v4649 = vpack.c.b16 %v3423, %v3422
        %v4650 = vpack.c.b16 %v3425, %v3424
        %v4651 = vpack.c.b16 %v3427, %v3426
        %v4652 = vpack.c.b16 %v3429, %v3428
        %v4653 = vpack.c.b16 %v3431, %v3430
        %v4654 = vpack.c.b16 %v3433, %v3432
        %v4655 = vpack.c.b16 %v3435, %v3434
        %v4656 = vpack.c.b16 %v3437, %v3436
        %v4657 = vpack.c.b16 %v3439, %v3438
        %v4658 = vpack.c.b16 %v3441, %v3440
        %v4659 = vpack.c.b16 %v3443, %v3442
        %v4660 = vpack.c.b16 %v3445, %v3444
        %v4661 = vpack.c.b16 %v3447, %v3446
        %v4662 = vpack.c.b16 %v3449, %v3448
        %v4663 = vpack.c.b16 %v3451, %v3450
        %v4664 = vpack.c.b16 %v3453, %v3452
        %v4665 = vpack.c.b16 %v3455, %v3454
        %v4666 = vpack.c.b16 %v3457, %v3456
        %v4667 = vpack.c.b16 %v3459, %v3458
        %v4668 = vpack.c.b16 %v3461, %v3460
        %v4669 = vpack.c.b16 %v3463, %v3462
        %v4670 = vpack.c.b16 %v3465, %v3464
        %v4671 = vpack.c.b16 %v3467, %v3466
        %v4672 = vpack.c.b16 %v3469, %v3468
        %v4673 = vpack.c.b16 %v3471, %v3470
        %v4674 = vpack.c.b16 %v3473, %v3472
        %v4675 = vpack.c.b16 %v3475, %v3474
        %v4676 = vpack.c.b16 %v3477, %v3476
        %v4677 = vpack.c.b16 %v3479, %v3478
        %v4678 = vpack.c.b16 %v3481, %v3480
        %v4679 = vpack.c.b16 %v3483, %v3482
        %v4680 = vpack.c.b16 %v3485, %v3484
        %v4681 = vpack.c.b16 %v3487, %v3486
        %v4682 = vpack.c.b16 %v3489, %v3488
        %v4683 = vpack.c.b16 %v3491, %v3490
        %v4684 = vpack.c.b16 %v3493, %v3492
        %v4685 = vpack.c.b16 %v3495, %v3494
        %v4686 = vpack.c.b16 %v3497, %v3496
        %v4687 = vpack.c.b16 %v3499, %v3498
        %v4688 = vpack.c.b16 %v3501, %v3500
        %v4689 = vpack.c.b16 %v3503, %v3502
        %v4690 = vpack.c.b16 %v3505, %v3504
        %v4691 = vpack.c.b16 %v3507, %v3506
        %v4692 = vpack.c.b16 %v3509, %v3508
        %v4693 = vpack.c.b16 %v3511, %v3510
        %v4694 = vpack.c.b16 %v3513, %v3512
        %v4695 = vpack.c.b16 %v3515, %v3514
        %v4696 = vpack.c.b16 %v3517, %v3516
        %v4697 = vpack.c.b16 %v3519, %v3518
        %v4698 = vpack.c.b16 %v3521, %v3520
        %v4699 = vpack.c.b16 %v3523, %v3522
        %v4700 = vpack.c.b16 %v3525, %v3524
        %v4701 = vpack.c.b16 %v3527, %v3526
        %v4702 = vpack.c.b16 %v3529, %v3528
        %v4703 = vpack.c.b16 %v3531, %v3530
        %v4704 = vpack.c.b16 %v3533, %v3532
        %v4705 = vpack.c.b16 %v3535, %v3534
        %v4706 = vpack.c.b16 %v3537, %v3536
        %v4707 = vpack.c.b16 %v3539, %v3538
        %v4708 = vpack.c.b16 %v3541, %v3540
        %v4709 = vpack.c.b16 %v3543, %v3542
        %v4710 = vpack.c.b16 %v3545, %v3544
        %v4711 = vpack.c.b16 %v3547, %v3546
        %v4712 = vpack.c.b16 %v3549, %v3548
        %v4713 = vpack.c.b16 %v3551, %v3550
        %v4714 = vpack.c.b16 %v3553, %v3552
        %v4715 = vpack.c.b16 %v3555, %v3554
        %v4716 = vpack.c.b16 %v3557, %v3556
        %v4717 = vpack.c.b16 %v3559, %v3558
        %v4718 = vpack.c.b16 %v3561, %v3560
        %v4719 = vpack.c.b16 %v3563, %v3562
        %v4720 = vpack.c.b16 %v3565, %v3564
        %v4721 = vpack.c.b16 %v3567, %v3566
        %v4722 = vpack.c.b16 %v3569, %v3568
        %v4723 = vpack.c.b16 %v3571, %v3570
        %v4724 = vpack.c.b16 %v3573, %v3572
        %v4725 = vpack.c.b16 %v3575, %v3574
        %v4726 = vpack.c.b16 %v3577, %v3576
        %v4727 = vpack.c.b16 %v3579, %v3578
        %v4728 = vpack.c.b16 %v3581, %v3580
        %v4729 = vpack.c.b16 %v3583, %v3582
        %v4730 = vpack.c.b16 %v3585, %v3584
        %v4731 = vpack.c.b16 %v3587, %v3586
        %v4732 = vpack.c.b16 %v3589, %v3588
        %v4733 = vpack.c.b16 %v3591, %v3590
        %v4734 = vpack.c.b16 %v3593, %v3592
        %v4735 = vpack.c.b16 %v3595, %v3594
        %v4736 = vpack.c.b16 %v3597, %v3596
        %v4737 = vpack.c.b16 %v3599, %v3598
        %v4738 = vpack.c.b16 %v3601, %v3600
        %v4739 = vpack.c.b16 %v3603, %v3602
        %v4740 = vpack.c.b16 %v3605, %v3604
        %v4741 = vpack.c.b16 %v3607, %v3606
        %v4742 = vpack.c.b16 %v3609, %v3608
        %v4743 = vpack.c.b16 %v3611, %v3610
        %v4744 = vpack.c.b16 %v3613, %v3612
        %v4745 = vpack.c.b16 %v3615, %v3614
        %v4746 = vpack.c.b16 %v3617, %v3616
        %v4747 = vpack.c.b16 %v3619, %v3618
        %v4748 = vpack.c.b16 %v3621, %v3620
        %v4749 = vpack.c.b16 %v3623, %v3622
        %v4750 = vpack.c.b16 %v3625, %v3624
        %v4751 = vpack.c.b16 %v3627, %v3626
        %v4752 = vpack.c.b16 %v3629, %v3628
        %v4753 = vpack.c.b16 %v3631, %v3630
        %v4754 = vpack.c.b16 %v3633, %v3632
        %v4755 = vpack.c.b16 %v3635, %v3634
        %v4756 = vpack.c.b16 %v3637, %v3636
        %v4757 = vpack.c.b16 %v3639, %v3638
        %v4758 = vpack.c.b16 %v3641, %v3640
        %v4759 = vpack.c.b16 %v3643, %v3642
        %v4760 = vpack.c.b16 %v3645, %v3644
        %v4761 = vpack.c.b16 %v3647, %v3646
        %v4762 = vpack.c.b16 %v3649, %v3648
        %v4763 = vpack.c.b16 %v3651, %v3650
        %v4764 = vpack.c.b16 %v3653, %v3652
        %v4765 = vpack.c.b16 %v3655, %v3654
        %v4766 = vpack.c.b16 %v3657, %v3656
        %v4767 = vpack.c.b16 %v3659, %v3658
        %v4768 = vpack.c.b16 %v3661, %v3660
        %v4769 = vpack.c.b16 %v3663, %v3662
        %v4770 = vpack.c.b16 %v3665, %v3664
        %v4771 = vpack.c.b16 %v3667, %v3666
        %v4772 = vpack.c.b16 %v3669, %v3668
        %v4773 = vpack.c.b16 %v3671, %v3670
        %v4774 = vpack.c.b16 %v3673, %v3672
        %v4775 = vpack.c.b16 %v3675, %v3674
        %v4776 = vpack.c.b16 %v3677, %v3676
        %v4777 = vpack.c.b16 %v3679, %v3678
        %v4778 = vpack.c.b16 %v3681, %v3680
        %v4779 = vpack.c.b16 %v3683, %v3682
        %v4780 = vpack.c.b16 %v3685, %v3684
        %v4781 = vpack.c.b16 %v3687, %v3686
        %v4782 = vpack.c.b16 %v3689, %v3688
        %v4783 = vpack.c.b16 %v3691, %v3690
        %v4784 = vpack.c.b16 %v3693, %v3692
        %v4785 = vpack.c.b16 %v3695, %v3694
        %v4786 = vpack.c.b16 %v3697, %v3696
        %v4787 = vpack.c.b16 %v3699, %v3698
        %v4788 = vpack.c.b16 %v3701, %v3700
        %v4789 = vpack.c.b16 %v3703, %v3702
        %v4790 = vpack.c.b16 %v3705, %v3704
        %v4791 = vpack.c.b16 %v3707, %v3706
        %v4792 = vpack.c.b16 %v3709, %v3708
        %v4793 = vpack.c.b16 %v3711, %v3710
        %v4794 = vpack.c.b16 %v3713, %v3712
        %v4795 = vpack.c.b16 %v3715, %v3714
        %v4796 = vpack.c.b16 %v3717, %v3716
        %v4797 = vpack.c.b16 %v3719, %v3718
        %v4798 = vpack.c.b16 %v3721, %v3720
        %v4799 = vpack.c.b16 %v3723, %v3722
        %v4800 = vpack.c.b16 %v3725, %v3724
        %v4801 = vpack.c.b16 %v3727, %v3726
        %v4802 = vpack.c.b16 %v3729, %v3728
        %v4803 = vpack.c.b16 %v3731, %v3730
        %v4804 = vpack.c.b16 %v3733, %v3732
        %v4805 = vpack.c.b16 %v3735, %v3734
        %v4806 = vpack.c.b16 %v3737, %v3736
        %v4807 = vpack.c.b16 %v3739, %v3738
        %v4808 = vpack.c.b16 %v3741, %v3740
        %v4809 = vpack.c.b16 %v3743, %v3742
        %v4810 = vpack.c.b16 %v3745, %v3744
        %v4811 = vpack.c.b16 %v3747, %v3746
        %v4812 = vpack.c.b16 %v3749, %v3748
        %v4813 = vpack.c.b16 %v3751, %v3750
        %v4814 = vpack.c.b16 %v3753, %v3752
        %v4815 = vpack.c.b16 %v3755, %v3754
        %v4816 = vpack.c.b16 %v3757, %v3756
        %v4817 = vpack.c.b16 %v3759, %v3758
        %v4818 = vpack.c.b16 %v3761, %v3760
        %v4819 = vpack.c.b16 %v3763, %v3762
        %v4820 = vpack.c.b16 %v3765, %v3764
        %v4821 = vpack.c.b16 %v3767, %v3766
        %v4822 = vpack.c.b16 %v3769, %v3768
        %v4823 = vpack.c.b16 %v3771, %v3770
        %v4824 = vpack.c.b16 %v3773, %v3772
        %v4825 = vpack.c.b16 %v3775, %v3774
        %v4826 = vpack.c.b16 %v3777, %v3776
        %v4827 = vpack.c.b16 %v3779, %v3778
        %v4828 = vpack.c.b16 %v3781, %v3780
        %v4829 = vpack.c.b16 %v3783, %v3782
        %v4830 = vpack.c.b16 %v3785, %v3784
        %v4831 = vpack.c.b16 %v3787, %v3786
        %v4832 = vpack.c.b16 %v3789, %v3788
        %v4833 = vpack.c.b16 %v3791, %v3790
        %v4834 = vpack.c.b16 %v3793, %v3792
        %v4835 = vpack.c.b16 %v3795, %v3794
        %v4836 = vpack.c.b16 %v3797, %v3796
        %v4837 = vpack.c.b16 %v3799, %v3798
        %v4838 = vpack.c.b16 %v3801, %v3800
        %v4839 = vpack.c.b16 %v3803, %v3802
        %v4840 = vpack.c.b16 %v3805, %v3804
        %v4841 = vpack.c.b16 %v3807, %v3806
        %v4842 = vpack.c.b16 %v3809, %v3808
        %v4843 = vpack.c.b16 %v3811, %v3810
        %v4844 = vpack.c.b16 %v3813, %v3812
        %v4845 = vpack.c.b16 %v3815, %v3814
        %v4846 = vpack.c.b16 %v3817, %v3816
        %v4847 = vpack.c.b16 %v3819, %v3818
        %v4848 = vpack.c.b16 %v3821, %v3820
        %v4849 = vpack.c.b16 %v3823, %v3822
        %v4850 = vpack.c.b16 %v3825, %v3824
        %v4851 = vpack.c.b16 %v3827, %v3826
        %v4852 = vpack.c.b16 %v3829, %v3828
        %v4853 = vpack.c.b16 %v3831, %v3830
        %v4854 = vpack.c.b16 %v3833, %v3832
        %v4855 = vpack.c.b16 %v3835, %v3834
        %v4856 = vpack.c.b16 %v3837, %v3836
        %v4857 = vpack.c.b16 %v3839, %v3838
        %v4858 = vpack.c.b16 %v3841, %v3840
        %v4859 = vpack.c.b16 %v3843, %v3842
        %v4860 = vpack.c.b16 %v3845, %v3844
        %v4861 = vpack.c.b16 %v3847, %v3846
        %v4862 = vpack.c.b16 %v3849, %v3848
        %v4863 = vpack.c.b16 %v3851, %v3850
        %v4864 = vpack.c.b16 %v3853, %v3852
        %v4865 = vpack.c.b16 %v3855, %v3854
        %v4866 = vpack.c.b16 %v3857, %v3856
        %v4867 = vpack.c.b16 %v3859, %v3858
        %v4868 = vpack.c.b16 %v3861, %v3860
        %v4869 = vpack.c.b16 %v3863, %v3862
        %v4870 = vpack.c.b16 %v3865, %v3864
        %v4871 = vpack.c.b16 %v3867, %v3866
        %v4872 = vpack.c.b16 %v3869, %v3868
        %v4873 = vpack.c.b16 %v3871, %v3870
        %v4874 = vpack.c.b16 %v3873, %v3872
        %v4875 = vpack.c.b16 %v3875, %v3874
        %v4876 = vpack.c.b16 %v3877, %v3876
        %v4877 = vpack.c.b16 %v3879, %v3878
        %v4878 = vpack.c.b16 %v3881, %v3880
        %v4879 = vpack.c.b16 %v3883, %v3882
        %v4880 = vpack.c.b16 %v3885, %v3884
        %v4881 = vpack.c.b16 %v3887, %v3886
        %v4882 = vpack.c.b16 %v3889, %v3888
        %v4883 = vpack.c.b16 %v3891, %v3890
        %v4884 = vpack.c.b16 %v3893, %v3892
        %v4885 = vpack.c.b16 %v3895, %v3894
        %v4886 = vpack.c.b16 %v3897, %v3896
        %v4887 = vpack.c.b16 %v3899, %v3898
        %v4888 = vpack.c.b16 %v3901, %v3900
        %v4889 = vpack.c.b16 %v3903, %v3902
        %v4890 = vpack.c.b16 %v3905, %v3904
        %v4891 = vpack.c.b16 %v3907, %v3906
        %v4892 = vpack.c.b16 %v3909, %v3908
        %v4893 = vpack.c.b16 %v3911, %v3910
        %v4894 = vpack.c.b16 %v3913, %v3912
        %v4895 = vpack.c.b16 %v3915, %v3914
        %v4896 = vpack.c.b16 %v3917, %v3916
        %v4897 = vpack.c.b16 %v3919, %v3918
        %v4898 = vpack.c.b16 %v3921, %v3920
        %v4899 = vpack.c.b16 %v3923, %v3922
        %v4900 = vpack.c.b16 %v3925, %v3924
        %v4901 = vpack.c.b16 %v3927, %v3926
        %v4902 = vpack.c.b16 %v3929, %v3928
        %v4903 = vpack.c.b16 %v3931, %v3930
        %v4904 = vpack.c.b16 %v3933, %v3932
        %v4905 = vpack.c.b16 %v3935, %v3934
        %v4906 = vpack.c.b16 %v3937, %v3936
        %v4907 = vpack.c.b16 %v3939, %v3938
        %v4908 = vpack.c.b16 %v3941, %v3940
        %v4909 = vpack.c.b16 %v3943, %v3942
        %v4910 = vpack.c.b16 %v3945, %v3944
        %v4911 = vpack.c.b16 %v3947, %v3946
        %v4912 = vpack.c.b16 %v3949, %v3948
        %v4913 = vpack.c.b16 %v3951, %v3950
        %v4914 = vpack.c.b16 %v3953, %v3952
        %v4915 = vpack.c.b16 %v3955, %v3954
        %v4916 = vpack.c.b16 %v3957, %v3956
        %v4917 = vpack.c.b16 %v3959, %v3958
        %v4918 = vpack.c.b16 %v3961, %v3960
        %v4919 = vpack.c.b16 %v3963, %v3962
        %v4920 = vpack.c.b16 %v3965, %v3964
        %v4921 = vpack.c.b16 %v3967, %v3966
        %v4922 = vpack.c.b16 %v3969, %v3968
        %v4923 = vpack.c.b16 %v3971, %v3970
        %v4924 = vpack.c.b16 %v3973, %v3972
        %v4925 = vpack.c.b16 %v3975, %v3974
        %v4926 = vpack.c.b16 %v3977, %v3976
        %v4927 = vpack.c.b16 %v3979, %v3978
        %v4928 = vpack.c.b16 %v3981, %v3980
        %v4929 = vpack.c.b16 %v3983, %v3982
        %v4930 = vpack.c.b16 %v3985, %v3984
        %v4931 = vpack.c.b16 %v3987, %v3986
        %v4932 = vpack.c.b16 %v3989, %v3988
        %v4933 = vpack.c.b16 %v3991, %v3990
        %v4934 = vpack.c.b16 %v3993, %v3992
        %v4935 = vpack.c.b16 %v3995, %v3994
        %v4936 = vpack.c.b16 %v3997, %v3996
        %v4937 = vpack.c.b16 %v3999, %v3998
        %v4938 = vpack.c.b16 %v4001, %v4000
        %v4939 = vpack.c.b16 %v4003, %v4002
        %v4940 = vpack.c.b16 %v4005, %v4004
        %v4941 = vpack.c.b16 %v4007, %v4006
        %v4942 = vpack.c.b16 %v4009, %v4008
        %v4943 = vpack.c.b16 %v4011, %v4010
        %v4944 = vpack.c.b16 %v4013, %v4012
        %v4945 = vpack.c.b16 %v4015, %v4014
        %v4946 = vpack.c.b16 %v4017, %v4016
        %v4947 = vpack.c.b16 %v4019, %v4018
        %v4948 = vpack.c.b16 %v4021, %v4020
        %v4949 = vpack.c.b16 %v4023, %v4022
        %v4950 = vpack.c.b16 %v4025, %v4024
        %v4951 = vpack.c.b16 %v4027, %v4026
        %v4952 = vpack.c.b16 %v4029, %v4028
        %v4953 = vpack.c.b16 %v4031, %v4030
        %v4954 = vpack.c.b16 %v4033, %v4032
        %v4955 = vpack.c.b16 %v4035, %v4034
        %v4956 = vpack.c.b16 %v4037, %v4036
        %v4957 = vpack.c.b16 %v4039, %v4038
        %v4958 = vpack.c.b16 %v4041, %v4040
        %v4959 = vpack.c.b16 %v4043, %v4042
        %v4960 = vpack.c.b16 %v4045, %v4044
        %v4961 = vpack.c.b16 %v4047, %v4046
        %v4962 = vpack.c.b16 %v4049, %v4048
        %v4963 = vpack.c.b16 %v4051, %v4050
        %v4964 = vpack.c.b16 %v4053, %v4052
        %v4965 = vpack.c.b16 %v4055, %v4054
        %v4966 = vpack.c.b16 %v4057, %v4056
        %v4967 = vpack.c.b16 %v4059, %v4058
        %v4968 = vpack.c.b16 %v4061, %v4060
        %v4969 = vpack.c.b16 %v4063, %v4062
        %v4970 = vpack.c.b16 %v4065, %v4064
        %v4971 = vpack.c.b16 %v4067, %v4066
        %v4972 = vpack.c.b16 %v4069, %v4068
        %v4973 = vpack.c.b16 %v4071, %v4070
        %v4974 = vpack.c.b16 %v4073, %v4072
        %v4975 = vpack.c.b16 %v4075, %v4074
        %v4976 = vpack.c.b16 %v4077, %v4076
        %v4977 = vpack.c.b16 %v4079, %v4078
        %v4978 = vpack.c.b16 %v4081, %v4080
        %v4979 = vpack.c.b16 %v4083, %v4082
        %v4980 = vpack.c.b16 %v4085, %v4084
        %v4981 = vpack.c.b16 %v4087, %v4086
        %v4982 = vpack.c.b16 %v4089, %v4088
        %v4983 = vpack.c.b16 %v4091, %v4090
        %v4984 = vpack.c.b16 %v4093, %v4092
        %v4985 = vpack.c.b16 %v4095, %v4094
        %v4986 = vpack.c.b16 %v4097, %v4096
        %v4987 = vpack.c.b16 %v4099, %v4098
        %v4988 = vpack.c.b16 %v4101, %v4100
        %v4989 = vpack.c.b16 %v4103, %v4102
        %v4990 = vpack.c.b16 %v4105, %v4104
        %v4991 = vpack.c.b16 %v4107, %v4106
        %v4992 = vpack.c.b16 %v4109, %v4108
        %v4993 = vpack.c.b16 %v4111, %v4110
        %v4994 = vpack.c.b16 %v4113, %v4112
        %v4995 = vpack.c.b16 %v4115, %v4114
        %v4996 = vpack.c.b16 %v4117, %v4116
        %v4997 = vpack.c.b16 %v4119, %v4118
        %v4998 = vpack.c.b16 %v4121, %v4120
        %v4999 = vpack.c.b16 %v4123, %v4122
        %v5000 = vpack.c.b16 %v4125, %v4124
        %v5001 = vpack.c.b16 %v4127, %v4126
        %v5002 = vpack.c.b16 %v4129, %v4128
        %v5003 = vpack.c.b16 %v4131, %v4130
        %v5004 = vpack.c.b16 %v4133, %v4132
        %v5005 = vpack.c.b16 %v4135, %v4134
        %v5006 = vpack.c.b16 %v4137, %v4136
        %v5007 = vpack.c.b16 %v4139, %v4138
        %v5008 = vpack.c.b16 %v4141, %v4140
        %v5009 = vpack.c.b16 %v4143, %v4142
        %v5010 = vpack.c.b16 %v4145, %v4144
        %v5011 = vpack.c.b16 %v4147, %v4146
        %v5012 = vpack.c.b16 %v4149, %v4148
        %v5013 = vpack.c.b16 %v4151, %v4150
        %v5014 = vpack.c.b16 %v4153, %v4152
        %v5015 = vpack.c.b16 %v4155, %v4154
        %v5016 = vpack.c.b16 %v4157, %v4156
        %v5017 = vpack.c.b16 %v4159, %v4158
        %v5018 = vpack.c.b16 %v4161, %v4160
        %v5019 = vpack.c.b16 %v4163, %v4162
        %v5020 = vpack.c.b16 %v4165, %v4164
        %v5021 = vpack.c.b16 %v4167, %v4166
        %v5022 = vpack.c.b16 %v4169, %v4168
        %v5023 = vpack.c.b16 %v4171, %v4170
        %v5024 = vpack.c.b16 %v4173, %v4172
        %v5025 = vpack.c.b16 %v4175, %v4174
        %v5026 = vpack.c.b16 %v4177, %v4176
        %v5027 = vpack.c.b16 %v4179, %v4178
        %v5028 = vpack.c.b16 %v4181, %v4180
        %v5029 = vpack.c.b16 %v4183, %v4182
        %v5030 = vpack.c.b16 %v4185, %v4184
        %v5031 = vpack.c.b16 %v4187, %v4186
        %v5032 = vpack.c.b16 %v4189, %v4188
        %v5033 = vpack.c.b16 %v4191, %v4190
        %v5034 = vpack.c.b16 %v4193, %v4192
        %v5035 = vpack.c.b16 %v4195, %v4194
        %v5036 = vpack.c.b16 %v4197, %v4196
        %v5037 = vpack.c.b16 %v4199, %v4198
        %v5038 = vpack.c.b16 %v4201, %v4200
        %v5039 = vpack.c.b16 %v4203, %v4202
        %v5040 = vpack.c.b16 %v4205, %v4204
        %v5041 = vpack.c.b16 %v4207, %v4206
        %v5042 = vpack.c.b16 %v4209, %v4208
        %v5043 = vpack.c.b16 %v4211, %v4210
        %v5044 = vpack.c.b16 %v4213, %v4212
        %v5045 = vpack.c.b16 %v4215, %v4214
        %v5046 = vpack.c.b16 %v4217, %v4216
        %v5047 = vpack.c.b16 %v4219, %v4218
        %v5048 = vpack.c.b16 %v4221, %v4220
        %v5049 = vpack.c.b16 %v4223, %v4222
        %v5050 = vpack.c.b16 %v4225, %v4224
        %v5051 = vpack.c.b16 %v4227, %v4226
        %v5052 = vpack.c.b16 %v4229, %v4228
        %v5053 = vpack.c.b16 %v4231, %v4230
        %v5054 = vpack.c.b16 %v4233, %v4232
        %v5055 = vpack.c.b16 %v4235, %v4234
        %v5056 = vpack.c.b16 %v4237, %v4236
        %v5057 = vpack.c.b16 %v4239, %v4238
        %v5058 = vpack.c.b16 %v4241, %v4240
        %v5059 = vpack.c.b16 %v4243, %v4242
        %v5060 = vpack.c.b16 %v4245, %v4244
        %v5061 = vpack.c.b16 %v4247, %v4246
        %v5062 = vpack.c.b16 %v4249, %v4248
        %v5063 = vpack.c.b16 %v4251, %v4250
        %v5064 = vpack.c.b16 %v4253, %v4252
        %v5065 = vpack.c.b16 %v4255, %v4254
        %v5066 = vpack.c.b16 %v4257, %v4256
        %v5067 = vpack.c.b16 %v4259, %v4258
        %v5068 = vpack.c.b16 %v4261, %v4260
        %v5069 = vpack.c.b16 %v4263, %v4262
        %v5070 = vpack.c.b16 %v4265, %v4264
        %v5071 = vpack.c.b16 %v4267, %v4266
        %v5072 = vpack.c.b16 %v4269, %v4268
        %v5073 = vpack.c.b16 %v4271, %v4270
        %v5074 = vpack.c.b16 %v4273, %v4272
        %v5075 = vpack.c.b16 %v4275, %v4274
        %v5076 = vpack.c.b16 %v4277, %v4276
        %v5077 = vpack.c.b16 %v4279, %v4278
        %v5078 = vpack.c.b16 %v4281, %v4280
        %v5079 = vpack.c.b16 %v4283, %v4282
        %v5080 = vpack.c.b16 %v4285, %v4284
        %v5081 = vpack.c.b16 %v4287, %v4286
        %v5082 = vpack.c.b16 %v4289, %v4288
        %v5083 = vpack.c.b16 %v4291, %v4290
        %v5084 = vpack.c.b16 %v4293, %v4292
        %v5085 = vpack.c.b16 %v4295, %v4294
        %v5086 = vpack.c.b16 %v4297, %v4296
        %v5087 = vpack.c.b16 %v4299, %v4298
        %v5088 = vpack.c.b16 %v4301, %v4300
        %v5089 = vpack.c.b16 %v4303, %v4302
        %v5090 = vpack.c.b16 %v4305, %v4304
        %v5091 = vpack.c.b16 %v4307, %v4306
        %v5092 = vpack.c.b16 %v4309, %v4308
        %v5093 = vpack.c.b16 %v4311, %v4310
        %v5094 = vpack.c.b16 %v4313, %v4312
        %v5095 = vpack.c.b16 %v4315, %v4314
        %v5096 = vpack.c.b16 %v4317, %v4316
        %v5097 = vpack.c.b16 %v4319, %v4318
        %v5098 = vpack.c.b16 %v4321, %v4320
        %v5099 = vpack.c.b16 %v4323, %v4322
        %v5100 = vpack.c.b16 %v4325, %v4324
        %v5101 = vpack.c.b16 %v4327, %v4326
        %v5102 = vpack.c.b16 %v4329, %v4328
        %v5103 = vpack.c.b16 %v4331, %v4330
        %v5104 = vpack.c.b16 %v4333, %v4332
        %v5105 = vpack.c.b16 %v4335, %v4334
        %v5106 = vpack.c.b16 %v4337, %v4336
        %v5107 = vpack.c.b16 %v4339, %v4338
        %v5108 = vpack.c.b16 %v4341, %v4340
        %v5109 = vpack.c.b16 %v4343, %v4342
        %v5110 = vpack.c.b16 %v4345, %v4344
        %v5111 = vpack.c.b16 %v4347, %v4346
        %v5112 = vpack.c.b16 %v4349, %v4348
        %v5113 = vpack.c.b16 %v4351, %v4350
        %v5114 = vpack.c.b16 %v4353, %v4352
        %v5115 = vpack.c.b16 %v4355, %v4354
        %v5116 = vpack.c.b16 %v4357, %v4356
        %v5117 = vpack.c.b16 %v4359, %v4358
        %v5118 = vpack.c.b16 %v4361, %v4360
        %v5119 = vpack.c.b16 %v4363, %v4362
        %v5120 = vpack.c.b16 %v4365, %v4364
        %v5121 = vpack.c.b16 %v4367, %v4366
        %v5122 = vpack.c.b16 %v4369, %v4368
        %v5123 = vpack.c.b16 %v4371, %v4370
        %v5124 = vpack.c.b16 %v4373, %v4372
        %v5125 = vpack.c.b16 %v4375, %v4374
        %v5126 = vpack.c.b16 %v4377, %v4376
        %v5127 = vpack.c.b16 %v4379, %v4378
        %v5128 = vpack.c.b16 %v4381, %v4380
        %v5129 = vpack.c.b16 %v4383, %v4382
        %v5130 = vpack.c.b16 %v4385, %v4384
        %v5131 = vpack.c.b16 %v4387, %v4386
        %v5132 = vpack.c.b16 %v4389, %v4388
        %v5133 = vpack.c.b16 %v4391, %v4390
        %v5134 = vpack.c.b16 %v4393, %v4392
        %v5135 = vpack.c.b16 %v4395, %v4394
        %v5136 = vpack.c.b16 %v4397, %v4396
        %v5137 = vpack.c.b16 %v4399, %v4398
        %v5138 = vpack.c.b16 %v4401, %v4400
        %v5139 = vpack.c.b16 %v4403, %v4402
        %v5140 = vpack.c.b16 %v4405, %v4404
        %v5141 = vpack.c.b16 %v4407, %v4406
        %v5142 = vpack.c.b16 %v4409, %v4408
        %v5143 = vpack.c.b16 %v4411, %v4410
        %v5144 = vpack.c.b16 %v4413, %v4412
        %v5145 = vpack.c.b16 %v4415, %v4414
        %v5146 = vpack.c.b16 %v4417, %v4416
        %v5147 = vpack.c.b16 %v4419, %v4418
        %v5148 = vpack.c.b16 %v4421, %v4420
        %v5149 = vpack.c.b16 %v4423, %v4422
        %v5150 = vpack.c.b16 %v4425, %v4424
        %v5151 = vpack.c.b16 %v4427, %v4426
        %v5152 = vpack.c.b16 %v4429, %v4428
        %v5153 = vpack.c.b16 %v4431, %v4430
        %v5154 = vpack.c.b16 %v4433, %v4432
        %v5155 = vpack.c.b16 %v4435, %v4434
        %v5156 = vpack.c.b16 %v4437, %v4436
        %v5157 = vpack.c.b16 %v4439, %v4438
        %v5158 = vpack.c.b16 %v4441, %v4440
        %v5159 = vpack.c.b16 %v4443, %v4442
        %v5160 = vpack.c.b16 %v4445, %v4444
        %v5161 = vpack.c.b16 %v4447, %v4446
        %v5162 = vpack.c.b16 %v4449, %v4448
        %v5163 = vpack.c.b16 %v4451, %v4450
        %v5164 = vpack.c.b16 %v4453, %v4452
        %v5165 = vpack.c.b16 %v4455, %v4454
        %v5166 = vpack.c.b16 %v4457, %v4456
        %v5167 = vpack.c.b16 %v4459, %v4458
        %v5168 = vpack.c.b16 %v4461, %v4460
        %v5169 = vpack.c.b16 %v4463, %v4462
        %v5170 = vpack.c.b16 %v4465, %v4464
        %v5171 = vpack.c.b16 %v4467, %v4466
        %v5172 = vpack.c.b16 %v4469, %v4468
        %v5173 = vpack.c.b16 %v4471, %v4470
        %v5174 = vpack.c.b16 %v4473, %v4472
        %v5175 = vpack.c.b16 %v4475, %v4474
        %v5176 = vpack.c.b16 %v4477, %v4476
        %v5177 = vpack.c.b16 %v4479, %v4478
        %v5178 = vpack.c.b16 %v4481, %v4480
        %v5179 = vpack.c.b16 %v4483, %v4482
        %v5180 = vpack.c.b16 %v4485, %v4484
        %v5181 = vpack.c.b16 %v4487, %v4486
        %v5182 = vpack.c.b16 %v4489, %v4488
        %v5183 = vpack.c.b16 %v4491, %v4490
        %v5184 = vpack.c.b16 %v4493, %v4492
        %v5185 = vpack.c.b16 %v4495, %v4494
        %v5186 = vpack.c.b16 %v4497, %v4496
        %v5187 = vpack.c.b16 %v4499, %v4498
        %v5188 = vpack.c.b16 %v4501, %v4500
        %v5189 = vpack.c.b16 %v4503, %v4502
        %v5190 = vpack.c.b16 %v4505, %v4504
        %v5191 = vpack.c.b16 %v4507, %v4506
        %v5192 = vpack.c.b16 %v4509, %v4508
        %v5193 = vpack.c.b16 %v4511, %v4510
        %v5194 = vpack.c.b16 %v4513, %v4512
        %v5195 = vpack.c.b16 %v4515, %v4514
        %v5196 = vpack.c.b16 %v4517, %v4516
        %v5197 = vpack.c.b16 %v4519, %v4518
        %v5198 = vpack.c.b16 %v4521, %v4520
        %v5199 = vpack.c.b16 %v4523, %v4522
        %v5200 = vpack.c.b16 %v4525, %v4524
        %v5201 = vpack.c.b16 %v4527, %v4526
        %v5202 = vpack.c.b16 %v4529, %v4528
        %v5203 = vpack.c.b16 %v4531, %v4530
        %v5204 = vpack.c.b16 %v4533, %v4532
        %v5205 = vpack.c.b16 %v4535, %v4534
        %v5206 = vpack.c.b16 %v4537, %v4536
        %v5207 = vpack.c.b16 %v4539, %v4538
        %v5208 = vpack.c.b16 %v4541, %v4540
        %v5209 = vpack.c.b16 %v4543, %v4542
        %v5210 = vpack.c.b16 %v4545, %v4544
        %v5211 = vpack.c.b16 %v4547, %v4546
        %v5212 = vpack.c.b16 %v4549, %v4548
        %v5213 = vpack.c.b16 %v4551, %v4550
        %v5214 = vpack.c.b16 %v4553, %v4552
        %v5215 = vpack.c.b16 %v4555, %v4554
        %v5216 = vpack.c.b16 %v4557, %v4556
        %v5217 = vpack.c.b16 %v4559, %v4558
        %v5218 = vpack.c.b16 %v4561, %v4560
        %v5219 = vpack.c.b16 %v4563, %v4562
        %v5220 = vpack.c.b16 %v4565, %v4564
        %v5221 = vpack.c.b16 %v4567, %v4566
        %v5222 = vpack.c.b16 %v4569, %v4568
        %v5223 = vpack.c.b16 %v4571, %v4570
        %v5224 = vpack.c.b16 %v4573, %v4572
        %v5225 = vpack.c.b16 %v4575, %v4574
        %v5226 = vpack.c.b16 %v4577, %v4576
        %v5227 = vpack.c.b16 %v4579, %v4578
        %v5228 = vpack.c.b16 %v4581, %v4580
        %v5229 = vpack.c.b16 %v4583, %v4582
        %v5230 = vpack.c.b16 %v4585, %v4584
        %v5231 = vpack.c.b16 %v4587, %v4586
        %v5232 = vpack.c.b16 %v4589, %v4588
        %v5233 = vpack.c.b16 %v4591, %v4590
        %v5234 = vpack.c.b16 %v4593, %v4592
        %v5235 = vpack.c.b16 %v4595, %v4594
        %v5236 = vpack.c.b16 %v4597, %v4596
        %v5237 = vpack.c.b16 %v4599, %v4598
        %v5238 = vpack.c.b16 %v4601, %v4600
        %v5239 = vpack.c.b16 %v4603, %v4602
        %v5240 = vpack.c.b16 %v4605, %v4604
        %v5241 = vpack.c.b16 %v4607, %v4606
        %v5242 = vpack.c.b16 %v4609, %v4608
        %v5243 = vpack.c.b16 %v4611, %v4610
        %v5244 = vpack.c.b16 %v4613, %v4612
        %v5245 = vpack.c.b16 %v4615, %v4614
        %v5246 = vpack.c.b16 %v4617, %v4616
        %v5247 = vpack.c.b16 %v4619, %v4618
        %v5248 = vpack.c.b16 %v4621, %v4620
        %v5249 = vpack.c.b16 %v4623, %v4622
        %v5250 = vpack.c.b16 %v4625, %v4624
        %v5251 = vpack.c.b16 %v4627, %v4626
        %5876 = vmatprep.subr.bf16.mxu0 0
        %5877 = vmatpush1.bf16.msra.mxu0 %v4628
        %5878 = vmatprep.subr.bf16.mxu0 0
        %5879 = vmatpush1.bf16.msra.mxu0 %v4629
        %5880 = vmatprep.subr.bf16.mxu0 0
        %5881 = vmatpush1.bf16.msra.mxu0 %v4630
        %5882 = vmatprep.subr.bf16.mxu0 0
        %5883 = vmatpush1.bf16.msra.mxu0 %v4631
        %5884 = vmatprep.subr.bf16.mxu0 0
        %5885 = vmatpush1.bf16.msra.mxu0 %v4632
        %5886 = vmatprep.subr.bf16.mxu0 0
        %5887 = vmatpush1.bf16.msra.mxu0 %v4633
        %5888 = vmatprep.subr.bf16.mxu0 0
        %5889 = vmatpush1.bf16.msra.mxu0 %v4634
        %5890 = vmatprep.subr.bf16.mxu0 0
        %5891 = vmatpush1.bf16.msra.mxu0 %v4635
        %5892 = vmatprep.subr.bf16.mxu0 0
        %5893 = vmatpush1.bf16.msra.mxu0 %v4636
        %5894 = vmatprep.subr.bf16.mxu0 0
        %5895 = vmatpush1.bf16.msra.mxu0 %v4637
        %5896 = vmatprep.subr.bf16.mxu0 0
        %5897 = vmatpush1.bf16.msra.mxu0 %v4638
        %5898 = vmatprep.subr.bf16.mxu0 0
        %5899 = vmatpush1.bf16.msra.mxu0 %v4639
        %5900 = vmatprep.subr.bf16.mxu0 0
        %5901 = vmatpush1.bf16.msra.mxu0 %v4640
        %5902 = vmatprep.subr.bf16.mxu0 0
        %5903 = vmatpush1.bf16.msra.mxu0 %v4641
        %5904 = vmatprep.subr.bf16.mxu0 0
        %5905 = vmatpush1.bf16.msra.mxu0 %v4642
        %5906 = vmatprep.subr.bf16.mxu0 0
        %5907 = vmatpush1.bf16.msra.mxu0 %v4643
        %5908 = vmatprep.mubr.bf16.mxu0 %v1603
        %5909 = vmatmul.mubr.bf16.gmra.mrb[0].mxu0 %v1589
        %v5910 = vpop.f32.mrb[0].mxu0
        %v5911 = vadd.f32 0.0, %v5910
        %v5912 = vpop.f32.mrb[0].mxu0
        %v5913 = vpop.f32.mrb[0].mxu0
        %v5914 = vpop.f32.mrb[0].mxu0
        %5915 = vdwg.mxu0
        %5916 = vmatprep.subr.bf16.mxu0 0
        %5917 = vmatpush1.bf16.msra.mxu0 %v4644
        %5918 = vmatprep.subr.bf16.mxu0 0
        %5919 = vmatpush1.bf16.msra.mxu0 %v4645
        %5920 = vmatprep.subr.bf16.mxu0 0
        %5921 = vmatpush1.bf16.msra.mxu0 %v4646
        %5922 = vmatprep.subr.bf16.mxu0 0
        %5923 = vmatpush1.bf16.msra.mxu0 %v4647
        %5924 = vmatprep.subr.bf16.mxu0 0
        %5925 = vmatpush1.bf16.msra.mxu0 %v4648
        %5926 = vmatprep.subr.bf16.mxu0 0
        %5927 = vmatpush1.bf16.msra.mxu0 %v4649
        %5928 = vmatprep.subr.bf16.mxu0 0
        %5929 = vmatpush1.bf16.msra.mxu0 %v4650
        %5930 = vmatprep.subr.bf16.mxu0 0
        %5931 = vmatpush1.bf16.msra.mxu0 %v4651
        %5932 = vmatprep.subr.bf16.mxu0 0
        %5933 = vmatpush1.bf16.msra.mxu0 %v4652
        %5934 = vmatprep.subr.bf16.mxu0 0
        %5935 = vmatpush1.bf16.msra.mxu0 %v4653
        %5936 = vmatprep.subr.bf16.mxu0 0
        %5937 = vmatpush1.bf16.msra.mxu0 %v4654
        %5938 = vmatprep.subr.bf16.mxu0 0
        %5939 = vmatpush1.bf16.msra.mxu0 %v4655
        %5940 = vmatprep.subr.bf16.mxu0 0
        %5941 = vmatpush1.bf16.msra.mxu0 %v4656
        %5942 = vmatprep.subr.bf16.mxu0 0
        %5943 = vmatpush1.bf16.msra.mxu0 %v4657
        %5944 = vmatprep.subr.bf16.mxu0 0
        %5945 = vmatpush1.bf16.msra.mxu0 %v4658
        %5946 = vmatprep.subr.bf16.mxu0 0
        %5947 = vmatpush1.bf16.msra.mxu0 %v4659
        %5948 = vmatprep.mubr.bf16.mxu0 %v1613
        %5949 = vmatmul.mubr.bf16.gmra.mrb[0].mxu0 %v1611
        %v5950 = vpop.f32.mrb[0].mxu0
        %v5951 = vadd.f32 %v5911, %v5950
        %v5952 = vpop.f32.mrb[0].mxu0
        %v5953 = vpop.f32.mrb[0].mxu0
        %v5954 = vpop.f32.mrb[0].mxu0
        %5955 = vdwg.mxu0
        %5956 = vmatprep.subr.bf16.mxu0 0
        %5957 = vmatpush1.bf16.msra.mxu0 %v4660
        %5958 = vmatprep.subr.bf16.mxu0 0
        %5959 = vmatpush1.bf16.msra.mxu0 %v4661
        %5960 = vmatprep.subr.bf16.mxu0 0
        %5961 = vmatpush1.bf16.msra.mxu0 %v4662
        %5962 = vmatprep.subr.bf16.mxu0 0
        %5963 = vmatpush1.bf16.msra.mxu0 %v4663
        %5964 = vmatprep.subr.bf16.mxu0 0
        %5965 = vmatpush1.bf16.msra.mxu0 %v4664
        %5966 = vmatprep.subr.bf16.mxu0 0
        %5967 = vmatpush1.bf16.msra.mxu0 %v4665
        %5968 = vmatprep.subr.bf16.mxu0 0
        %5969 = vmatpush1.bf16.msra.mxu0 %v4666
        %5970 = vmatprep.subr.bf16.mxu0 0
        %5971 = vmatpush1.bf16.msra.mxu0 %v4667
        %5972 = vmatprep.subr.bf16.mxu0 0
        %5973 = vmatpush1.bf16.msra.mxu0 %v4668
        %5974 = vmatprep.subr.bf16.mxu0 0
        %5975 = vmatpush1.bf16.msra.mxu0 %v4669
        %5976 = vmatprep.subr.bf16.mxu0 0
        %5977 = vmatpush1.bf16.msra.mxu0 %v4670
        %5978 = vmatprep.subr.bf16.mxu0 0
        %5979 = vmatpush1.bf16.msra.mxu0 %v4671
        %5980 = vmatprep.subr.bf16.mxu0 0
        %5981 = vmatpush1.bf16.msra.mxu0 %v4672
        %5982 = vmatprep.subr.bf16.mxu0 0
        %5983 = vmatpush1.bf16.msra.mxu0 %v4673
        %5984 = vmatprep.subr.bf16.mxu0 0
        %5985 = vmatpush1.bf16.msra.mxu0 %v4674
        %5986 = vmatprep.subr.bf16.mxu0 0
        %5987 = vmatpush1.bf16.msra.mxu0 %v4675
        %5988 = vmatprep.mubr.bf16.mxu0 %v1610
        %5989 = vmatmul.mubr.bf16.gmra.mrb[0].mxu0 %v1596
        %v5990 = vpop.f32.mrb[0].mxu0
        %v5991 = vadd.f32 %v5951, %v5990
        %v5992 = vpop.f32.mrb[0].mxu0
        %v5993 = vpop.f32.mrb[0].mxu0
        %v5994 = vpop.f32.mrb[0].mxu0
        %5995 = vdwg.mxu0
        %5996 = vmatprep.subr.bf16.mxu0 0
        %5997 = vmatpush1.bf16.msra.mxu0 %v4676
        %5998 = vmatprep.subr.bf16.mxu0 0
        %5999 = vmatpush1.bf16.msra.mxu0 %v4677
        %6000 = vmatprep.subr.bf16.mxu0 0
        %6001 = vmatpush1.bf16.msra.mxu0 %v4678
        %6002 = vmatprep.subr.bf16.mxu0 0
        %6003 = vmatpush1.bf16.msra.mxu0 %v4679
        %6004 = vmatprep.subr.bf16.mxu0 0
        %6005 = vmatpush1.bf16.msra.mxu0 %v4680
        %6006 = vmatprep.subr.bf16.mxu0 0
        %6007 = vmatpush1.bf16.msra.mxu0 %v4681
        %6008 = vmatprep.subr.bf16.mxu0 0
        %6009 = vmatpush1.bf16.msra.mxu0 %v4682
        %6010 = vmatprep.subr.bf16.mxu0 0
        %6011 = vmatpush1.bf16.msra.mxu0 %v4683
        %6012 = vmatprep.subr.bf16.mxu0 0
        %6013 = vmatpush1.bf16.msra.mxu0 %v4684
        %6014 = vmatprep.subr.bf16.mxu0 0
        %6015 = vmatpush1.bf16.msra.mxu0 %v4685
        %6016 = vmatprep.subr.bf16.mxu0 0
        %6017 = vmatpush1.bf16.msra.mxu0 %v4686
        %6018 = vmatprep.subr.bf16.mxu0 0
        %6019 = vmatpush1.bf16.msra.mxu0 %v4687
        %6020 = vmatprep.subr.bf16.mxu0 0
        %6021 = vmatpush1.bf16.msra.mxu0 %v4688
        %6022 = vmatprep.subr.bf16.mxu0 0
        %6023 = vmatpush1.bf16.msra.mxu0 %v4689
        %6024 = vmatprep.subr.bf16.mxu0 0
        %6025 = vmatpush1.bf16.msra.mxu0 %v4690
        %6026 = vmatprep.subr.bf16.mxu0 0
        %6027 = vmatpush1.bf16.msra.mxu0 %v4691
        %6028 = vmatprep.mubr.bf16.mxu0 %v1614
        %6029 = vmatmul.mubr.bf16.gmra.mrb[0].mxu0 %v1612
        %v6030 = vpop.f32.mrb[0].mxu0
        %v6031 = vadd.f32 %v5991, %v6030
        %v6032 = vpop.f32.mrb[0].mxu0
        %v6033 = vpop.f32.mrb[0].mxu0
        %v6034 = vpop.f32.mrb[0].mxu0
        %6035 = vdwg.mxu0
        %6036 = vmatprep.subr.bf16.mxu0 0
        %6037 = vmatpush1.bf16.msra.mxu0 %v4692
        %6038 = vmatprep.subr.bf16.mxu0 0
        %6039 = vmatpush1.bf16.msra.mxu0 %v4693
        %6040 = vmatprep.subr.bf16.mxu0 0
        %6041 = vmatpush1.bf16.msra.mxu0 %v4694
        %6042 = vmatprep.subr.bf16.mxu0 0
        %6043 = vmatpush1.bf16.msra.mxu0 %v4695
        %6044 = vmatprep.subr.bf16.mxu0 0
        %6045 = vmatpush1.bf16.msra.mxu0 %v4696
        %6046 = vmatprep.subr.bf16.mxu0 0
        %6047 = vmatpush1.bf16.msra.mxu0 %v4697
        %6048 = vmatprep.subr.bf16.mxu0 0
        %6049 = vmatpush1.bf16.msra.mxu0 %v4698
        %6050 = vmatprep.subr.bf16.mxu0 0
        %6051 = vmatpush1.bf16.msra.mxu0 %v4699
        %6052 = vmatprep.subr.bf16.mxu0 0
        %6053 = vmatpush1.bf16.msra.mxu0 %v4700
        %6054 = vmatprep.subr.bf16.mxu0 0
        %6055 = vmatpush1.bf16.msra.mxu0 %v4701
        %6056 = vmatprep.subr.bf16.mxu0 0
        %6057 = vmatpush1.bf16.msra.mxu0 %v4702
        %6058 = vmatprep.subr.bf16.mxu0 0
        %6059 = vmatpush1.bf16.msra.mxu0 %v4703
        %6060 = vmatprep.subr.bf16.mxu0 0
        %6061 = vmatpush1.bf16.msra.mxu0 %v4704
        %6062 = vmatprep.subr.bf16.mxu0 0
        %6063 = vmatpush1.bf16.msra.mxu0 %v4705
        %6064 = vmatprep.subr.bf16.mxu0 0
        %6065 = vmatpush1.bf16.msra.mxu0 %v4706
        %6066 = vmatprep.subr.bf16.mxu0 0
        %6067 = vmatpush1.bf16.msra.mxu0 %v4707
        %6068 = vmatprep.mubr.bf16.mxu0 %v1652
        %6069 = vmatmul.mubr.bf16.gmra.mrb[0].mxu0 %v1638
        %v6070 = vpop.f32.mrb[0].mxu0
        %v6071 = vadd.f32 %v6031, %v6070
        %v6072 = vpop.f32.mrb[0].mxu0
        %v6073 = vpop.f32.mrb[0].mxu0
        %v6074 = vpop.f32.mrb[0].mxu0
        %6075 = vdwg.mxu0
        %6076 = vmatprep.subr.bf16.mxu0 0
        %6077 = vmatpush1.bf16.msra.mxu0 %v4708
        %6078 = vmatprep.subr.bf16.mxu0 0
        %6079 = vmatpush1.bf16.msra.mxu0 %v4709
        %6080 = vmatprep.subr.bf16.mxu0 0
        %6081 = vmatpush1.bf16.msra.mxu0 %v4710
        %6082 = vmatprep.subr.bf16.mxu0 0
        %6083 = vmatpush1.bf16.msra.mxu0 %v4711
        %6084 = vmatprep.subr.bf16.mxu0 0
        %6085 = vmatpush1.bf16.msra.mxu0 %v4712
        %6086 = vmatprep.subr.bf16.mxu0 0
        %6087 = vmatpush1.bf16.msra.mxu0 %v4713
        %6088 = vmatprep.subr.bf16.mxu0 0
        %6089 = vmatpush1.bf16.msra.mxu0 %v4714
        %6090 = vmatprep.subr.bf16.mxu0 0
        %6091 = vmatpush1.bf16.msra.mxu0 %v4715
        %6092 = vmatprep.subr.bf16.mxu0 0
        %6093 = vmatpush1.bf16.msra.mxu0 %v4716
        %6094 = vmatprep.subr.bf16.mxu0 0
        %6095 = vmatpush1.bf16.msra.mxu0 %v4717
        %6096 = vmatprep.subr.bf16.mxu0 0
        %6097 = vmatpush1.bf16.msra.mxu0 %v4718
        %6098 = vmatprep.subr.bf16.mxu0 0
        %6099 = vmatpush1.bf16.msra.mxu0 %v4719
        %6100 = vmatprep.subr.bf16.mxu0 0
        %6101 = vmatpush1.bf16.msra.mxu0 %v4720
        %6102 = vmatprep.subr.bf16.mxu0 0
        %6103 = vmatpush1.bf16.msra.mxu0 %v4721
        %6104 = vmatprep.subr.bf16.mxu0 0
        %6105 = vmatpush1.bf16.msra.mxu0 %v4722
        %6106 = vmatprep.subr.bf16.mxu0 0
        %6107 = vmatpush1.bf16.msra.mxu0 %v4723
        %6108 = vmatprep.mubr.bf16.mxu0 %v1662
        %6109 = vmatmul.mubr.bf16.gmra.mrb[0].mxu0 %v1660
        %v6110 = vpop.f32.mrb[0].mxu0
        %v6111 = vadd.f32 %v6071, %v6110
        %v6112 = vpop.f32.mrb[0].mxu0
        %v6113 = vpop.f32.mrb[0].mxu0
        %v6114 = vpop.f32.mrb[0].mxu0
        %6115 = vdwg.mxu0
        %6116 = vmatprep.subr.bf16.mxu0 0
        %6117 = vmatpush1.bf16.msra.mxu0 %v4724
        %6118 = vmatprep.subr.bf16.mxu0 0
        %6119 = vmatpush1.bf16.msra.mxu0 %v4725
        %6120 = vmatprep.subr.bf16.mxu0 0
        %6121 = vmatpush1.bf16.msra.mxu0 %v4726
        %6122 = vmatprep.subr.bf16.mxu0 0
        %6123 = vmatpush1.bf16.msra.mxu0 %v4727
        %6124 = vmatprep.subr.bf16.mxu0 0
        %6125 = vmatpush1.bf16.msra.mxu0 %v4728
        %6126 = vmatprep.subr.bf16.mxu0 0
        %6127 = vmatpush1.bf16.msra.mxu0 %v4729
        %6128 = vmatprep.subr.bf16.mxu0 0
        %6129 = vmatpush1.bf16.msra.mxu0 %v4730
        %6130 = vmatprep.subr.bf16.mxu0 0
        %6131 = vmatpush1.bf16.msra.mxu0 %v4731
        %6132 = vmatprep.subr.bf16.mxu0 0
        %6133 = vmatpush1.bf16.msra.mxu0 %v4732
        %6134 = vmatprep.subr.bf16.mxu0 0
        %6135 = vmatpush1.bf16.msra.mxu0 %v4733
        %6136 = vmatprep.subr.bf16.mxu0 0
        %6137 = vmatpush1.bf16.msra.mxu0 %v4734
        %6138 = vmatprep.subr.bf16.mxu0 0
        %6139 = vmatpush1.bf16.msra.mxu0 %v4735
        %6140 = vmatprep.subr.bf16.mxu0 0
        %6141 = vmatpush1.bf16.msra.mxu0 %v4736
        %6142 = vmatprep.subr.bf16.mxu0 0
        %6143 = vmatpush1.bf16.msra.mxu0 %v4737
        %6144 = vmatprep.subr.bf16.mxu0 0
        %6145 = vmatpush1.bf16.msra.mxu0 %v4738
        %6146 = vmatprep.subr.bf16.mxu0 0
        %6147 = vmatpush1.bf16.msra.mxu0 %v4739
        %6148 = vmatprep.mubr.bf16.mxu0 %v1659
        %6149 = vmatmul.mubr.bf16.gmra.mrb[0].mxu0 %v1645
        %v6150 = vpop.f32.mrb[0].mxu0
        %v6151 = vadd.f32 %v6111, %v6150
        %v6152 = vpop.f32.mrb[0].mxu0
        %v6153 = vpop.f32.mrb[0].mxu0
        %v6154 = vpop.f32.mrb[0].mxu0
        %6155 = vdwg.mxu0
        %6156 = vmatprep.subr.bf16.mxu0 0
        %6157 = vmatpush1.bf16.msra.mxu0 %v4740
        %6158 = vmatprep.subr.bf16.mxu0 0
        %6159 = vmatpush1.bf16.msra.mxu0 %v4741
        %6160 = vmatprep.subr.bf16.mxu0 0
        %6161 = vmatpush1.bf16.msra.mxu0 %v4742
        %6162 = vmatprep.subr.bf16.mxu0 0
        %6163 = vmatpush1.bf16.msra.mxu0 %v4743
        %6164 = vmatprep.subr.bf16.mxu0 0
        %6165 = vmatpush1.bf16.msra.mxu0 %v4744
        %6166 = vmatprep.subr.bf16.mxu0 0
        %6167 = vmatpush1.bf16.msra.mxu0 %v4745
        %6168 = vmatprep.subr.bf16.mxu0 0
        %6169 = vmatpush1.bf16.msra.mxu0 %v4746
        %6170 = vmatprep.subr.bf16.mxu0 0
        %6171 = vmatpush1.bf16.msra.mxu0 %v4747
        %6172 = vmatprep.subr.bf16.mxu0 0
        %6173 = vmatpush1.bf16.msra.mxu0 %v4748
        %6174 = vmatprep.subr.bf16.mxu0 0
        %6175 = vmatpush1.bf16.msra.mxu0 %v4749
        %6176 = vmatprep.subr.bf16.mxu0 0
        %6177 = vmatpush1.bf16.msra.mxu0 %v4750
        %6178 = vmatprep.subr.bf16.mxu0 0
        %6179 = vmatpush1.bf16.msra.mxu0 %v4751
        %6180 = vmatprep.subr.bf16.mxu0 0
        %6181 = vmatpush1.bf16.msra.mxu0 %v4752
        %6182 = vmatprep.subr.bf16.mxu0 0
        %6183 = vmatpush1.bf16.msra.mxu0 %v4753
        %6184 = vmatprep.subr.bf16.mxu0 0
        %6185 = vmatpush1.bf16.msra.mxu0 %v4754
        %6186 = vmatprep.subr.bf16.mxu0 0
        %6187 = vmatpush1.bf16.msra.mxu0 %v4755
        %6188 = vmatprep.mubr.bf16.mxu0 %v1663
        %6189 = vmatmul.mubr.bf16.gmra.mrb[0].mxu0 %v1661
        %v6190 = vpop.f32.mrb[0].mxu0
        %v6191 = vadd.f32 %v6151, %v6190
        %v6192 = vpop.f32.mrb[0].mxu0
        %v6193 = vpop.f32.mrb[0].mxu0
        %v6194 = vpop.f32.mrb[0].mxu0
        %6195 = vdwg.mxu0
        %6196 = vmatprep.subr.bf16.mxu0 0
        %6197 = vmatpush1.bf16.msra.mxu0 %v4756
        %6198 = vmatprep.subr.bf16.mxu0 0
        %6199 = vmatpush1.bf16.msra.mxu0 %v4757
        %6200 = vmatprep.subr.bf16.mxu0 0
        %6201 = vmatpush1.bf16.msra.mxu0 %v4758
        %6202 = vmatprep.subr.bf16.mxu0 0
        %6203 = vmatpush1.bf16.msra.mxu0 %v4759
        %6204 = vmatprep.subr.bf16.mxu0 0
        %6205 = vmatpush1.bf16.msra.mxu0 %v4760
        %6206 = vmatprep.subr.bf16.mxu0 0
        %6207 = vmatpush1.bf16.msra.mxu0 %v4761
        %6208 = vmatprep.subr.bf16.mxu0 0
        %6209 = vmatpush1.bf16.msra.mxu0 %v4762
        %6210 = vmatprep.subr.bf16.mxu0 0
        %6211 = vmatpush1.bf16.msra.mxu0 %v4763
        %6212 = vmatprep.subr.bf16.mxu0 0
        %6213 = vmatpush1.bf16.msra.mxu0 %v4764
        %6214 = vmatprep.subr.bf16.mxu0 0
        %6215 = vmatpush1.bf16.msra.mxu0 %v4765
        %6216 = vmatprep.subr.bf16.mxu0 0
        %6217 = vmatpush1.bf16.msra.mxu0 %v4766
        %6218 = vmatprep.subr.bf16.mxu0 0
        %6219 = vmatpush1.bf16.msra.mxu0 %v4767
        %6220 = vmatprep.subr.bf16.mxu0 0
        %6221 = vmatpush1.bf16.msra.mxu0 %v4768
        %6222 = vmatprep.subr.bf16.mxu0 0
        %6223 = vmatpush1.bf16.msra.mxu0 %v4769
        %6224 = vmatprep.subr.bf16.mxu0 0
        %6225 = vmatpush1.bf16.msra.mxu0 %v4770
        %6226 = vmatprep.subr.bf16.mxu0 0
        %6227 = vmatpush1.bf16.msra.mxu0 %v4771
        %6228 = vmatprep.mubr.bf16.mxu0 %v1701
        %6229 = vmatmul.mubr.bf16.gmra.mrb[0].mxu0 %v1687
        %v6230 = vpop.f32.mrb[0].mxu0
        %v6231 = vadd.f32 %v6191, %v6230
        %v6232 = vpop.f32.mrb[0].mxu0
        %v6233 = vpop.f32.mrb[0].mxu0
        %v6234 = vpop.f32.mrb[0].mxu0
        %6235 = vdwg.mxu0
        %6236 = vmatprep.subr.bf16.mxu0 0
        %6237 = vmatpush1.bf16.msra.mxu0 %v4772
        %6238 = vmatprep.subr.bf16.mxu0 0
        %6239 = vmatpush1.bf16.msra.mxu0 %v4773
        %6240 = vmatprep.subr.bf16.mxu0 0
        %6241 = vmatpush1.bf16.msra.mxu0 %v4774
        %6242 = vmatprep.subr.bf16.mxu0 0
        %6243 = vmatpush1.bf16.msra.mxu0 %v4775
        %6244 = vmatprep.subr.bf16.mxu0 0
        %6245 = vmatpush1.bf16.msra.mxu0 %v4776
        %6246 = vmatprep.subr.bf16.mxu0 0
        %6247 = vmatpush1.bf16.msra.mxu0 %v4777
        %6248 = vmatprep.subr.bf16.mxu0 0
        %6249 = vmatpush1.bf16.msra.mxu0 %v4778
        %6250 = vmatprep.subr.bf16.mxu0 0
        %6251 = vmatpush1.bf16.msra.mxu0 %v4779
        %6252 = vmatprep.subr.bf16.mxu0 0
        %6253 = vmatpush1.bf16.msra.mxu0 %v4780
        %6254 = vmatprep.subr.bf16.mxu0 0
        %6255 = vmatpush1.bf16.msra.mxu0 %v4781
        %6256 = vmatprep.subr.bf16.mxu0 0
        %6257 = vmatpush1.bf16.msra.mxu0 %v4782
        %6258 = vmatprep.subr.bf16.mxu0 0
        %6259 = vmatpush1.bf16.msra.mxu0 %v4783
        %6260 = vmatprep.subr.bf16.mxu0 0
        %6261 = vmatpush1.bf16.msra.mxu0 %v4784
        %6262 = vmatprep.subr.bf16.mxu0 0
        %6263 = vmatpush1.bf16.msra.mxu0 %v4785
        %6264 = vmatprep.subr.bf16.mxu0 0
        %6265 = vmatpush1.bf16.msra.mxu0 %v4786
        %6266 = vmatprep.subr.bf16.mxu0 0
        %6267 = vmatpush1.bf16.msra.mxu0 %v4787
        %6268 = vmatprep.mubr.bf16.mxu0 %v1711
        %6269 = vmatmul.mubr.bf16.gmra.mrb[0].mxu0 %v1709
        %v6270 = vpop.f32.mrb[0].mxu0
        %v6271 = vadd.f32 %v6231, %v6270
        %v6272 = vpop.f32.mrb[0].mxu0
        %v6273 = vpop.f32.mrb[0].mxu0
        %v6274 = vpop.f32.mrb[0].mxu0
        %6275 = vdwg.mxu0
        %6276 = vmatprep.subr.bf16.mxu0 0
        %6277 = vmatpush1.bf16.msra.mxu0 %v4788
        %6278 = vmatprep.subr.bf16.mxu0 0
        %6279 = vmatpush1.bf16.msra.mxu0 %v4789
        %6280 = vmatprep.subr.bf16.mxu0 0
        %6281 = vmatpush1.bf16.msra.mxu0 %v4790
        %6282 = vmatprep.subr.bf16.mxu0 0
        %6283 = vmatpush1.bf16.msra.mxu0 %v4791
        %6284 = vmatprep.subr.bf16.mxu0 0
        %6285 = vmatpush1.bf16.msra.mxu0 %v4792
        %6286 = vmatprep.subr.bf16.mxu0 0
        %6287 = vmatpush1.bf16.msra.mxu0 %v4793
        %6288 = vmatprep.subr.bf16.mxu0 0
        %6289 = vmatpush1.bf16.msra.mxu0 %v4794
        %6290 = vmatprep.subr.bf16.mxu0 0
        %6291 = vmatpush1.bf16.msra.mxu0 %v4795
        %6292 = vmatprep.subr.bf16.mxu0 0
        %6293 = vmatpush1.bf16.msra.mxu0 %v4796
        %6294 = vmatprep.subr.bf16.mxu0 0
        %6295 = vmatpush1.bf16.msra.mxu0 %v4797
        %6296 = vmatprep.subr.bf16.mxu0 0
        %6297 = vmatpush1.bf16.msra.mxu0 %v4798
        %6298 = vmatprep.subr.bf16.mxu0 0
        %6299 = vmatpush1.bf16.msra.mxu0 %v4799
        %6300 = vmatprep.subr.bf16.mxu0 0
        %6301 = vmatpush1.bf16.msra.mxu0 %v4800
        %6302 = vmatprep.subr.bf16.mxu0 0
        %6303 = vmatpush1.bf16.msra.mxu0 %v4801
        %6304 = vmatprep.subr.bf16.mxu0 0
        %6305 = vmatpush1.bf16.msra.mxu0 %v4802
        %6306 = vmatprep.subr.bf16.mxu0 0
        %6307 = vmatpush1.bf16.msra.mxu0 %v4803
        %6308 = vmatprep.mubr.bf16.mxu0 %v1708
        %6309 = vmatmul.mubr.bf16.gmra.mrb[0].mxu0 %v1694
        %v6310 = vpop.f32.mrb[0].mxu0
        %v6311 = vadd.f32 %v6271, %v6310
        %v6312 = vpop.f32.mrb[0].mxu0
        %v6313 = vpop.f32.mrb[0].mxu0
        %v6314 = vpop.f32.mrb[0].mxu0
        %6315 = vdwg.mxu0
        %6316 = vmatprep.subr.bf16.mxu0 0
        %6317 = vmatpush1.bf16.msra.mxu0 %v4804
        %6318 = vmatprep.subr.bf16.mxu0 0
        %6319 = vmatpush1.bf16.msra.mxu0 %v4805
        %6320 = vmatprep.subr.bf16.mxu0 0
        %6321 = vmatpush1.bf16.msra.mxu0 %v4806
        %6322 = vmatprep.subr.bf16.mxu0 0
        %6323 = vmatpush1.bf16.msra.mxu0 %v4807
        %6324 = vmatprep.subr.bf16.mxu0 0
        %6325 = vmatpush1.bf16.msra.mxu0 %v4808
        %6326 = vmatprep.subr.bf16.mxu0 0
        %6327 = vmatpush1.bf16.msra.mxu0 %v4809
        %6328 = vmatprep.subr.bf16.mxu0 0
        %6329 = vmatpush1.bf16.msra.mxu0 %v4810
        %6330 = vmatprep.subr.bf16.mxu0 0
        %6331 = vmatpush1.bf16.msra.mxu0 %v4811
        %6332 = vmatprep.subr.bf16.mxu0 0
        %6333 = vmatpush1.bf16.msra.mxu0 %v4812
        %6334 = vmatprep.subr.bf16.mxu0 0
        %6335 = vmatpush1.bf16.msra.mxu0 %v4813
        %6336 = vmatprep.subr.bf16.mxu0 0
        %6337 = vmatpush1.bf16.msra.mxu0 %v4814
        %6338 = vmatprep.subr.bf16.mxu0 0
        %6339 = vmatpush1.bf16.msra.mxu0 %v4815
        %6340 = vmatprep.subr.bf16.mxu0 0
        %6341 = vmatpush1.bf16.msra.mxu0 %v4816
        %6342 = vmatprep.subr.bf16.mxu0 0
        %6343 = vmatpush1.bf16.msra.mxu0 %v4817
        %6344 = vmatprep.subr.bf16.mxu0 0
        %6345 = vmatpush1.bf16.msra.mxu0 %v4818
        %6346 = vmatprep.subr.bf16.mxu0 0
        %6347 = vmatpush1.bf16.msra.mxu0 %v4819
        %6348 = vmatprep.mubr.bf16.mxu0 %v1712
        %6349 = vmatmul.mubr.bf16.gmra.mrb[0].mxu0 %v1710
        %v6350 = vpop.f32.mrb[0].mxu0
        %v6351 = vadd.f32 %v6311, %v6350
        %v6352 = vpop.f32.mrb[0].mxu0
        %v6353 = vpop.f32.mrb[0].mxu0
        %v6354 = vpop.f32.mrb[0].mxu0
        %6355 = vdwg.mxu0
        %6356 = vmatprep.subr.bf16.mxu0 0
        %6357 = vmatpush1.bf16.msra.mxu0 %v4820
        %6358 = vmatprep.subr.bf16.mxu0 0
        %6359 = vmatpush1.bf16.msra.mxu0 %v4821
        %6360 = vmatprep.subr.bf16.mxu0 0
        %6361 = vmatpush1.bf16.msra.mxu0 %v4822
        %6362 = vmatprep.subr.bf16.mxu0 0
        %6363 = vmatpush1.bf16.msra.mxu0 %v4823
        %6364 = vmatprep.subr.bf16.mxu0 0
        %6365 = vmatpush1.bf16.msra.mxu0 %v4824
        %6366 = vmatprep.subr.bf16.mxu0 0
        %6367 = vmatpush1.bf16.msra.mxu0 %v4825
        %6368 = vmatprep.subr.bf16.mxu0 0
        %6369 = vmatpush1.bf16.msra.mxu0 %v4826
        %6370 = vmatprep.subr.bf16.mxu0 0
        %6371 = vmatpush1.bf16.msra.mxu0 %v4827
        %6372 = vmatprep.subr.bf16.mxu0 0
        %6373 = vmatpush1.bf16.msra.mxu0 %v4828
        %6374 = vmatprep.subr.bf16.mxu0 0
        %6375 = vmatpush1.bf16.msra.mxu0 %v4829
        %6376 = vmatprep.subr.bf16.mxu0 0
        %6377 = vmatpush1.bf16.msra.mxu0 %v4830
        %6378 = vmatprep.subr.bf16.mxu0 0
        %6379 = vmatpush1.bf16.msra.mxu0 %v4831
        %6380 = vmatprep.subr.bf16.mxu0 0
        %6381 = vmatpush1.bf16.msra.mxu0 %v4832
        %6382 = vmatprep.subr.bf16.mxu0 0
        %6383 = vmatpush1.bf16.msra.mxu0 %v4833
        %6384 = vmatprep.subr.bf16.mxu0 0
        %6385 = vmatpush1.bf16.msra.mxu0 %v4834
        %6386 = vmatprep.subr.bf16.mxu0 0
        %6387 = vmatpush1.bf16.msra.mxu0 %v4835
        %6388 = vmatprep.mubr.bf16.mxu0 %v1750
        %6389 = vmatmul.mubr.bf16.gmra.mrb[0].mxu0 %v1736
        %v6390 = vpop.f32.mrb[0].mxu0
        %v6391 = vadd.f32 %v6351, %v6390
        %v6392 = vpop.f32.mrb[0].mxu0
        %v6393 = vpop.f32.mrb[0].mxu0
        %v6394 = vpop.f32.mrb[0].mxu0
        %6395 = vdwg.mxu0
        %6396 = vmatprep.subr.bf16.mxu0 0
        %6397 = vmatpush1.bf16.msra.mxu0 %v4836
        %6398 = vmatprep.subr.bf16.mxu0 0
        %6399 = vmatpush1.bf16.msra.mxu0 %v4837
        %6400 = vmatprep.subr.bf16.mxu0 0
        %6401 = vmatpush1.bf16.msra.mxu0 %v4838
        %6402 = vmatprep.subr.bf16.mxu0 0
        %6403 = vmatpush1.bf16.msra.mxu0 %v4839
        %6404 = vmatprep.subr.bf16.mxu0 0
        %6405 = vmatpush1.bf16.msra.mxu0 %v4840
        %6406 = vmatprep.subr.bf16.mxu0 0
        %6407 = vmatpush1.bf16.msra.mxu0 %v4841
        %6408 = vmatprep.subr.bf16.mxu0 0
        %6409 = vmatpush1.bf16.msra.mxu0 %v4842
        %6410 = vmatprep.subr.bf16.mxu0 0
        %6411 = vmatpush1.bf16.msra.mxu0 %v4843
        %6412 = vmatprep.subr.bf16.mxu0 0
        %6413 = vmatpush1.bf16.msra.mxu0 %v4844
        %6414 = vmatprep.subr.bf16.mxu0 0
        %6415 = vmatpush1.bf16.msra.mxu0 %v4845
        %6416 = vmatprep.subr.bf16.mxu0 0
        %6417 = vmatpush1.bf16.msra.mxu0 %v4846
        %6418 = vmatprep.subr.bf16.mxu0 0
        %6419 = vmatpush1.bf16.msra.mxu0 %v4847
        %6420 = vmatprep.subr.bf16.mxu0 0
        %6421 = vmatpush1.bf16.msra.mxu0 %v4848
        %6422 = vmatprep.subr.bf16.mxu0 0
        %6423 = vmatpush1.bf16.msra.mxu0 %v4849
        %6424 = vmatprep.subr.bf16.mxu0 0
        %6425 = vmatpush1.bf16.msra.mxu0 %v4850
        %6426 = vmatprep.subr.bf16.mxu0 0
        %6427 = vmatpush1.bf16.msra.mxu0 %v4851
        %6428 = vmatprep.mubr.bf16.mxu0 %v1760
        %6429 = vmatmul.mubr.bf16.gmra.mrb[0].mxu0 %v1758
        %v6430 = vpop.f32.mrb[0].mxu0
        %v6431 = vadd.f32 %v6391, %v6430
        %v6432 = vpop.f32.mrb[0].mxu0
        %v6433 = vpop.f32.mrb[0].mxu0
        %v6434 = vpop.f32.mrb[0].mxu0
        %6435 = vdwg.mxu0
        %6436 = vmatprep.subr.bf16.mxu0 0
        %6437 = vmatpush1.bf16.msra.mxu0 %v4852
        %6438 = vmatprep.subr.bf16.mxu0 0
        %6439 = vmatpush1.bf16.msra.mxu0 %v4853
        %6440 = vmatprep.subr.bf16.mxu0 0
        %6441 = vmatpush1.bf16.msra.mxu0 %v4854
        %6442 = vmatprep.subr.bf16.mxu0 0
        %6443 = vmatpush1.bf16.msra.mxu0 %v4855
        %6444 = vmatprep.subr.bf16.mxu0 0
        %6445 = vmatpush1.bf16.msra.mxu0 %v4856
        %6446 = vmatprep.subr.bf16.mxu0 0
        %6447 = vmatpush1.bf16.msra.mxu0 %v4857
        %6448 = vmatprep.subr.bf16.mxu0 0
        %6449 = vmatpush1.bf16.msra.mxu0 %v4858
        %6450 = vmatprep.subr.bf16.mxu0 0
        %6451 = vmatpush1.bf16.msra.mxu0 %v4859
        %6452 = vmatprep.subr.bf16.mxu0 0
        %6453 = vmatpush1.bf16.msra.mxu0 %v4860
        %6454 = vmatprep.subr.bf16.mxu0 0
        %6455 = vmatpush1.bf16.msra.mxu0 %v4861
        %6456 = vmatprep.subr.bf16.mxu0 0
        %6457 = vmatpush1.bf16.msra.mxu0 %v4862
        %6458 = vmatprep.subr.bf16.mxu0 0
        %6459 = vmatpush1.bf16.msra.mxu0 %v4863
        %6460 = vmatprep.subr.bf16.mxu0 0
        %6461 = vmatpush1.bf16.msra.mxu0 %v4864
        %6462 = vmatprep.subr.bf16.mxu0 0
        %6463 = vmatpush1.bf16.msra.mxu0 %v4865
        %6464 = vmatprep.subr.bf16.mxu0 0
        %6465 = vmatpush1.bf16.msra.mxu0 %v4866
        %6466 = vmatprep.subr.bf16.mxu0 0
        %6467 = vmatpush1.bf16.msra.mxu0 %v4867
        %6468 = vmatprep.mubr.bf16.mxu0 %v1757
        %6469 = vmatmul.mubr.bf16.gmra.mrb[0].mxu0 %v1743
        %v6470 = vpop.f32.mrb[0].mxu0
        %v6471 = vadd.f32 %v6431, %v6470
        %v6472 = vpop.f32.mrb[0].mxu0
        %v6473 = vpop.f32.mrb[0].mxu0
        %v6474 = vpop.f32.mrb[0].mxu0
        %6475 = vdwg.mxu0
        %6476 = vmatprep.subr.bf16.mxu0 0
        %6477 = vmatpush1.bf16.msra.mxu0 %v4868
        %6478 = vmatprep.subr.bf16.mxu0 0
        %6479 = vmatpush1.bf16.msra.mxu0 %v4869
        %6480 = vmatprep.subr.bf16.mxu0 0
        %6481 = vmatpush1.bf16.msra.mxu0 %v4870
        %6482 = vmatprep.subr.bf16.mxu0 0
        %6483 = vmatpush1.bf16.msra.mxu0 %v4871
        %6484 = vmatprep.subr.bf16.mxu0 0
        %6485 = vmatpush1.bf16.msra.mxu0 %v4872
        %6486 = vmatprep.subr.bf16.mxu0 0
        %6487 = vmatpush1.bf16.msra.mxu0 %v4873
        %6488 = vmatprep.subr.bf16.mxu0 0
        %6489 = vmatpush1.bf16.msra.mxu0 %v4874
        %6490 = vmatprep.subr.bf16.mxu0 0
        %6491 = vmatpush1.bf16.msra.mxu0 %v4875
        %6492 = vmatprep.subr.bf16.mxu0 0
        %6493 = vmatpush1.bf16.msra.mxu0 %v4876
        %6494 = vmatprep.subr.bf16.mxu0 0
        %6495 = vmatpush1.bf16.msra.mxu0 %v4877
        %6496 = vmatprep.subr.bf16.mxu0 0
        %6497 = vmatpush1.bf16.msra.mxu0 %v4878
        %6498 = vmatprep.subr.bf16.mxu0 0
        %6499 = vmatpush1.bf16.msra.mxu0 %v4879
        %6500 = vmatprep.subr.bf16.mxu0 0
        %6501 = vmatpush1.bf16.msra.mxu0 %v4880
        %6502 = vmatprep.subr.bf16.mxu0 0
        %6503 = vmatpush1.bf16.msra.mxu0 %v4881
        %6504 = vmatprep.subr.bf16.mxu0 0
        %6505 = vmatpush1.bf16.msra.mxu0 %v4882
        %6506 = vmatprep.subr.bf16.mxu0 0
        %6507 = vmatpush1.bf16.msra.mxu0 %v4883
        %6508 = vmatprep.mubr.bf16.mxu0 %v1761
        %6509 = vmatmul.mubr.bf16.gmra.mrb[0].mxu0 %v1759
        %v6510 = vpop.f32.mrb[0].mxu0
        %v6511 = vadd.f32 %v6471, %v6510
        %v6512 = vpop.f32.mrb[0].mxu0
        %v6513 = vpop.f32.mrb[0].mxu0
        %v6514 = vpop.f32.mrb[0].mxu0
        %6515 = vdwg.mxu0
        %6516 = vmatprep.subr.bf16.mxu0 0
        %6517 = vmatpush1.bf16.msra.mxu0 %v4884
        %6518 = vmatprep.subr.bf16.mxu0 0
        %6519 = vmatpush1.bf16.msra.mxu0 %v4885
        %6520 = vmatprep.subr.bf16.mxu0 0
        %6521 = vmatpush1.bf16.msra.mxu0 %v4886
        %6522 = vmatprep.subr.bf16.mxu0 0
        %6523 = vmatpush1.bf16.msra.mxu0 %v4887
        %6524 = vmatprep.subr.bf16.mxu0 0
        %6525 = vmatpush1.bf16.msra.mxu0 %v4888
        %6526 = vmatprep.subr.bf16.mxu0 0
        %6527 = vmatpush1.bf16.msra.mxu0 %v4889
        %6528 = vmatprep.subr.bf16.mxu0 0
        %6529 = vmatpush1.bf16.msra.mxu0 %v4890
        %6530 = vmatprep.subr.bf16.mxu0 0
        %6531 = vmatpush1.bf16.msra.mxu0 %v4891
        %6532 = vmatprep.subr.bf16.mxu0 0
        %6533 = vmatpush1.bf16.msra.mxu0 %v4892
        %6534 = vmatprep.subr.bf16.mxu0 0
        %6535 = vmatpush1.bf16.msra.mxu0 %v4893
        %6536 = vmatprep.subr.bf16.mxu0 0
        %6537 = vmatpush1.bf16.msra.mxu0 %v4894
        %6538 = vmatprep.subr.bf16.mxu0 0
        %6539 = vmatpush1.bf16.msra.mxu0 %v4895
        %6540 = vmatprep.subr.bf16.mxu0 0
        %6541 = vmatpush1.bf16.msra.mxu0 %v4896
        %6542 = vmatprep.subr.bf16.mxu0 0
        %6543 = vmatpush1.bf16.msra.mxu0 %v4897
        %6544 = vmatprep.subr.bf16.mxu0 0
        %6545 = vmatpush1.bf16.msra.mxu0 %v4898
        %6546 = vmatprep.subr.bf16.mxu0 0
        %6547 = vmatpush1.bf16.msra.mxu0 %v4899
        %6548 = vmatprep.mubr.bf16.mxu0 %v1799
        %6549 = vmatmul.mubr.bf16.gmra.mrb[0].mxu0 %v1785
        %v6550 = vpop.f32.mrb[0].mxu0
        %v6551 = vadd.f32 %v6511, %v6550
        %v6552 = vpop.f32.mrb[0].mxu0
        %v6553 = vpop.f32.mrb[0].mxu0
        %v6554 = vpop.f32.mrb[0].mxu0
        %6555 = vdwg.mxu0
        %6556 = vmatprep.subr.bf16.mxu0 0
        %6557 = vmatpush1.bf16.msra.mxu0 %v4900
        %6558 = vmatprep.subr.bf16.mxu0 0
        %6559 = vmatpush1.bf16.msra.mxu0 %v4901
        %6560 = vmatprep.subr.bf16.mxu0 0
        %6561 = vmatpush1.bf16.msra.mxu0 %v4902
        %6562 = vmatprep.subr.bf16.mxu0 0
        %6563 = vmatpush1.bf16.msra.mxu0 %v4903
        %6564 = vmatprep.subr.bf16.mxu0 0
        %6565 = vmatpush1.bf16.msra.mxu0 %v4904
        %6566 = vmatprep.subr.bf16.mxu0 0
        %6567 = vmatpush1.bf16.msra.mxu0 %v4905
        %6568 = vmatprep.subr.bf16.mxu0 0
        %6569 = vmatpush1.bf16.msra.mxu0 %v4906
        %6570 = vmatprep.subr.bf16.mxu0 0
        %6571 = vmatpush1.bf16.msra.mxu0 %v4907
        %6572 = vmatprep.subr.bf16.mxu0 0
        %6573 = vmatpush1.bf16.msra.mxu0 %v4908
        %6574 = vmatprep.subr.bf16.mxu0 0
        %6575 = vmatpush1.bf16.msra.mxu0 %v4909
        %6576 = vmatprep.subr.bf16.mxu0 0
        %6577 = vmatpush1.bf16.msra.mxu0 %v4910
        %6578 = vmatprep.subr.bf16.mxu0 0
        %6579 = vmatpush1.bf16.msra.mxu0 %v4911
        %6580 = vmatprep.subr.bf16.mxu0 0
        %6581 = vmatpush1.bf16.msra.mxu0 %v4912
        %6582 = vmatprep.subr.bf16.mxu0 0
        %6583 = vmatpush1.bf16.msra.mxu0 %v4913
        %6584 = vmatprep.subr.bf16.mxu0 0
        %6585 = vmatpush1.bf16.msra.mxu0 %v4914
        %6586 = vmatprep.subr.bf16.mxu0 0
        %6587 = vmatpush1.bf16.msra.mxu0 %v4915
        %6588 = vmatprep.mubr.bf16.mxu0 %v1809
        %6589 = vmatmul.mubr.bf16.gmra.mrb[0].mxu0 %v1807
        %v6590 = vpop.f32.mrb[0].mxu0
        %v6591 = vadd.f32 %v6551, %v6590
        %v6592 = vpop.f32.mrb[0].mxu0
        %v6593 = vpop.f32.mrb[0].mxu0
        %v6594 = vpop.f32.mrb[0].mxu0
        %6595 = vdwg.mxu0
        %6596 = vmatprep.subr.bf16.mxu0 0
        %6597 = vmatpush1.bf16.msra.mxu0 %v4916
        %6598 = vmatprep.subr.bf16.mxu0 0
        %6599 = vmatpush1.bf16.msra.mxu0 %v4917
        %6600 = vmatprep.subr.bf16.mxu0 0
        %6601 = vmatpush1.bf16.msra.mxu0 %v4918
        %6602 = vmatprep.subr.bf16.mxu0 0
        %6603 = vmatpush1.bf16.msra.mxu0 %v4919
        %6604 = vmatprep.subr.bf16.mxu0 0
        %6605 = vmatpush1.bf16.msra.mxu0 %v4920
        %6606 = vmatprep.subr.bf16.mxu0 0
        %6607 = vmatpush1.bf16.msra.mxu0 %v4921
        %6608 = vmatprep.subr.bf16.mxu0 0
        %6609 = vmatpush1.bf16.msra.mxu0 %v4922
        %6610 = vmatprep.subr.bf16.mxu0 0
        %6611 = vmatpush1.bf16.msra.mxu0 %v4923
        %6612 = vmatprep.subr.bf16.mxu0 0
        %6613 = vmatpush1.bf16.msra.mxu0 %v4924
        %6614 = vmatprep.subr.bf16.mxu0 0
        %6615 = vmatpush1.bf16.msra.mxu0 %v4925
        %6616 = vmatprep.subr.bf16.mxu0 0
        %6617 = vmatpush1.bf16.msra.mxu0 %v4926
        %6618 = vmatprep.subr.bf16.mxu0 0
        %6619 = vmatpush1.bf16.msra.mxu0 %v4927
        %6620 = vmatprep.subr.bf16.mxu0 0
        %6621 = vmatpush1.bf16.msra.mxu0 %v4928
        %6622 = vmatprep.subr.bf16.mxu0 0
        %6623 = vmatpush1.bf16.msra.mxu0 %v4929
        %6624 = vmatprep.subr.bf16.mxu0 0
        %6625 = vmatpush1.bf16.msra.mxu0 %v4930
        %6626 = vmatprep.subr.bf16.mxu0 0
        %6627 = vmatpush1.bf16.msra.mxu0 %v4931
        %6628 = vmatprep.mubr.bf16.mxu0 %v1806
        %6629 = vmatmul.mubr.bf16.gmra.mrb[0].mxu0 %v1792
        %v6630 = vpop.f32.mrb[0].mxu0
        %v6631 = vadd.f32 %v6591, %v6630
        %v6632 = vpop.f32.mrb[0].mxu0
        %v6633 = vpop.f32.mrb[0].mxu0
        %v6634 = vpop.f32.mrb[0].mxu0
        %6635 = vdwg.mxu0
        %6636 = vmatprep.subr.bf16.mxu0 0
        %6637 = vmatpush1.bf16.msra.mxu0 %v4932
        %6638 = vmatprep.subr.bf16.mxu0 0
        %6639 = vmatpush1.bf16.msra.mxu0 %v4933
        %6640 = vmatprep.subr.bf16.mxu0 0
        %6641 = vmatpush1.bf16.msra.mxu0 %v4934
        %6642 = vmatprep.subr.bf16.mxu0 0
        %6643 = vmatpush1.bf16.msra.mxu0 %v4935
        %6644 = vmatprep.subr.bf16.mxu0 0
        %6645 = vmatpush1.bf16.msra.mxu0 %v4936
        %6646 = vmatprep.subr.bf16.mxu0 0
        %6647 = vmatpush1.bf16.msra.mxu0 %v4937
        %6648 = vmatprep.subr.bf16.mxu0 0
        %6649 = vmatpush1.bf16.msra.mxu0 %v4938
        %6650 = vmatprep.subr.bf16.mxu0 0
        %6651 = vmatpush1.bf16.msra.mxu0 %v4939
        %6652 = vmatprep.subr.bf16.mxu0 0
        %6653 = vmatpush1.bf16.msra.mxu0 %v4940
        %6654 = vmatprep.subr.bf16.mxu0 0
        %6655 = vmatpush1.bf16.msra.mxu0 %v4941
        %6656 = vmatprep.subr.bf16.mxu0 0
        %6657 = vmatpush1.bf16.msra.mxu0 %v4942
        %6658 = vmatprep.subr.bf16.mxu0 0
        %6659 = vmatpush1.bf16.msra.mxu0 %v4943
        %6660 = vmatprep.subr.bf16.mxu0 0
        %6661 = vmatpush1.bf16.msra.mxu0 %v4944
        %6662 = vmatprep.subr.bf16.mxu0 0
        %6663 = vmatpush1.bf16.msra.mxu0 %v4945
        %6664 = vmatprep.subr.bf16.mxu0 0
        %6665 = vmatpush1.bf16.msra.mxu0 %v4946
        %6666 = vmatprep.subr.bf16.mxu0 0
        %6667 = vmatpush1.bf16.msra.mxu0 %v4947
        %6668 = vmatprep.mubr.bf16.mxu0 %v1810
        %6669 = vmatmul.mubr.bf16.gmra.mrb[0].mxu0 %v1808
        %v6670 = vpop.f32.mrb[0].mxu0
        %v6671 = vadd.f32 %v6631, %v6670
        %v6672 = vpop.f32.mrb[0].mxu0
        %v6673 = vpop.f32.mrb[0].mxu0
        %v6674 = vpop.f32.mrb[0].mxu0
        %6675 = vdwg.mxu0
        %6676 = vmatprep.subr.bf16.mxu0 0
        %6677 = vmatpush1.bf16.msra.mxu0 %v4948
        %6678 = vmatprep.subr.bf16.mxu0 0
        %6679 = vmatpush1.bf16.msra.mxu0 %v4949
        %6680 = vmatprep.subr.bf16.mxu0 0
        %6681 = vmatpush1.bf16.msra.mxu0 %v4950
        %6682 = vmatprep.subr.bf16.mxu0 0
        %6683 = vmatpush1.bf16.msra.mxu0 %v4951
        %6684 = vmatprep.subr.bf16.mxu0 0
        %6685 = vmatpush1.bf16.msra.mxu0 %v4952
        %6686 = vmatprep.subr.bf16.mxu0 0
        %6687 = vmatpush1.bf16.msra.mxu0 %v4953
        %6688 = vmatprep.subr.bf16.mxu0 0
        %6689 = vmatpush1.bf16.msra.mxu0 %v4954
        %6690 = vmatprep.subr.bf16.mxu0 0
        %6691 = vmatpush1.bf16.msra.mxu0 %v4955
        %6692 = vmatprep.subr.bf16.mxu0 0
        %6693 = vmatpush1.bf16.msra.mxu0 %v4956
        %6694 = vmatprep.subr.bf16.mxu0 0
        %6695 = vmatpush1.bf16.msra.mxu0 %v4957
        %6696 = vmatprep.subr.bf16.mxu0 0
        %6697 = vmatpush1.bf16.msra.mxu0 %v4958
        %6698 = vmatprep.subr.bf16.mxu0 0
        %6699 = vmatpush1.bf16.msra.mxu0 %v4959
        %6700 = vmatprep.subr.bf16.mxu0 0
        %6701 = vmatpush1.bf16.msra.mxu0 %v4960
        %6702 = vmatprep.subr.bf16.mxu0 0
        %6703 = vmatpush1.bf16.msra.mxu0 %v4961
        %6704 = vmatprep.subr.bf16.mxu0 0
        %6705 = vmatpush1.bf16.msra.mxu0 %v4962
        %6706 = vmatprep.subr.bf16.mxu0 0
        %6707 = vmatpush1.bf16.msra.mxu0 %v4963
        %6708 = vmatprep.mubr.bf16.mxu0 %v1848
        %6709 = vmatmul.mubr.bf16.gmra.mrb[0].mxu0 %v1834
        %v6710 = vpop.f32.mrb[0].mxu0
        %v6711 = vadd.f32 %v6671, %v6710
        %v6712 = vpop.f32.mrb[0].mxu0
        %v6713 = vpop.f32.mrb[0].mxu0
        %v6714 = vpop.f32.mrb[0].mxu0
        %6715 = vdwg.mxu0
        %6716 = vmatprep.subr.bf16.mxu0 0
        %6717 = vmatpush1.bf16.msra.mxu0 %v4964
        %6718 = vmatprep.subr.bf16.mxu0 0
        %6719 = vmatpush1.bf16.msra.mxu0 %v4965
        %6720 = vmatprep.subr.bf16.mxu0 0
        %6721 = vmatpush1.bf16.msra.mxu0 %v4966
        %6722 = vmatprep.subr.bf16.mxu0 0
        %6723 = vmatpush1.bf16.msra.mxu0 %v4967
        %6724 = vmatprep.subr.bf16.mxu0 0
        %6725 = vmatpush1.bf16.msra.mxu0 %v4968
        %6726 = vmatprep.subr.bf16.mxu0 0
        %6727 = vmatpush1.bf16.msra.mxu0 %v4969
        %6728 = vmatprep.subr.bf16.mxu0 0
        %6729 = vmatpush1.bf16.msra.mxu0 %v4970
        %6730 = vmatprep.subr.bf16.mxu0 0
        %6731 = vmatpush1.bf16.msra.mxu0 %v4971
        %6732 = vmatprep.subr.bf16.mxu0 0
        %6733 = vmatpush1.bf16.msra.mxu0 %v4972
        %6734 = vmatprep.subr.bf16.mxu0 0
        %6735 = vmatpush1.bf16.msra.mxu0 %v4973
        %6736 = vmatprep.subr.bf16.mxu0 0
        %6737 = vmatpush1.bf16.msra.mxu0 %v4974
        %6738 = vmatprep.subr.bf16.mxu0 0
        %6739 = vmatpush1.bf16.msra.mxu0 %v4975
        %6740 = vmatprep.subr.bf16.mxu0 0
        %6741 = vmatpush1.bf16.msra.mxu0 %v4976
        %6742 = vmatprep.subr.bf16.mxu0 0
        %6743 = vmatpush1.bf16.msra.mxu0 %v4977
        %6744 = vmatprep.subr.bf16.mxu0 0
        %6745 = vmatpush1.bf16.msra.mxu0 %v4978
        %6746 = vmatprep.subr.bf16.mxu0 0
        %6747 = vmatpush1.bf16.msra.mxu0 %v4979
        %6748 = vmatprep.mubr.bf16.mxu0 %v1858
        %6749 = vmatmul.mubr.bf16.gmra.mrb[0].mxu0 %v1856
        %v6750 = vpop.f32.mrb[0].mxu0
        %v6751 = vadd.f32 %v6711, %v6750
        %v6752 = vpop.f32.mrb[0].mxu0
        %v6753 = vpop.f32.mrb[0].mxu0
        %v6754 = vpop.f32.mrb[0].mxu0
        %6755 = vdwg.mxu0
        %6756 = vmatprep.subr.bf16.mxu0 0
        %6757 = vmatpush1.bf16.msra.mxu0 %v4980
        %6758 = vmatprep.subr.bf16.mxu0 0
        %6759 = vmatpush1.bf16.msra.mxu0 %v4981
        %6760 = vmatprep.subr.bf16.mxu0 0
        %6761 = vmatpush1.bf16.msra.mxu0 %v4982
        %6762 = vmatprep.subr.bf16.mxu0 0
        %6763 = vmatpush1.bf16.msra.mxu0 %v4983
        %6764 = vmatprep.subr.bf16.mxu0 0
        %6765 = vmatpush1.bf16.msra.mxu0 %v4984
        %6766 = vmatprep.subr.bf16.mxu0 0
        %6767 = vmatpush1.bf16.msra.mxu0 %v4985
        %6768 = vmatprep.subr.bf16.mxu0 0
        %6769 = vmatpush1.bf16.msra.mxu0 %v4986
        %6770 = vmatprep.subr.bf16.mxu0 0
        %6771 = vmatpush1.bf16.msra.mxu0 %v4987
        %6772 = vmatprep.subr.bf16.mxu0 0
        %6773 = vmatpush1.bf16.msra.mxu0 %v4988
        %6774 = vmatprep.subr.bf16.mxu0 0
        %6775 = vmatpush1.bf16.msra.mxu0 %v4989
        %6776 = vmatprep.subr.bf16.mxu0 0
        %6777 = vmatpush1.bf16.msra.mxu0 %v4990
        %6778 = vmatprep.subr.bf16.mxu0 0
        %6779 = vmatpush1.bf16.msra.mxu0 %v4991
        %6780 = vmatprep.subr.bf16.mxu0 0
        %6781 = vmatpush1.bf16.msra.mxu0 %v4992
        %6782 = vmatprep.subr.bf16.mxu0 0
        %6783 = vmatpush1.bf16.msra.mxu0 %v4993
        %6784 = vmatprep.subr.bf16.mxu0 0
        %6785 = vmatpush1.bf16.msra.mxu0 %v4994
        %6786 = vmatprep.subr.bf16.mxu0 0
        %6787 = vmatpush1.bf16.msra.mxu0 %v4995
        %6788 = vmatprep.mubr.bf16.mxu0 %v1855
        %6789 = vmatmul.mubr.bf16.gmra.mrb[0].mxu0 %v1841
        %v6790 = vpop.f32.mrb[0].mxu0
        %v6791 = vadd.f32 %v6751, %v6790
        %v6792 = vpop.f32.mrb[0].mxu0
        %v6793 = vpop.f32.mrb[0].mxu0
        %v6794 = vpop.f32.mrb[0].mxu0
        %6795 = vdwg.mxu0
        %6796 = vmatprep.subr.bf16.mxu0 0
        %6797 = vmatpush1.bf16.msra.mxu0 %v4996
        %6798 = vmatprep.subr.bf16.mxu0 0
        %6799 = vmatpush1.bf16.msra.mxu0 %v4997
        %6800 = vmatprep.subr.bf16.mxu0 0
        %6801 = vmatpush1.bf16.msra.mxu0 %v4998
        %6802 = vmatprep.subr.bf16.mxu0 0
        %6803 = vmatpush1.bf16.msra.mxu0 %v4999
        %6804 = vmatprep.subr.bf16.mxu0 0
        %6805 = vmatpush1.bf16.msra.mxu0 %v5000
        %6806 = vmatprep.subr.bf16.mxu0 0
        %6807 = vmatpush1.bf16.msra.mxu0 %v5001
        %6808 = vmatprep.subr.bf16.mxu0 0
        %6809 = vmatpush1.bf16.msra.mxu0 %v5002
        %6810 = vmatprep.subr.bf16.mxu0 0
        %6811 = vmatpush1.bf16.msra.mxu0 %v5003
        %6812 = vmatprep.subr.bf16.mxu0 0
        %6813 = vmatpush1.bf16.msra.mxu0 %v5004
        %6814 = vmatprep.subr.bf16.mxu0 0
        %6815 = vmatpush1.bf16.msra.mxu0 %v5005
        %6816 = vmatprep.subr.bf16.mxu0 0
        %6817 = vmatpush1.bf16.msra.mxu0 %v5006
        %6818 = vmatprep.subr.bf16.mxu0 0
        %6819 = vmatpush1.bf16.msra.mxu0 %v5007
        %6820 = vmatprep.subr.bf16.mxu0 0
        %6821 = vmatpush1.bf16.msra.mxu0 %v5008
        %6822 = vmatprep.subr.bf16.mxu0 0
        %6823 = vmatpush1.bf16.msra.mxu0 %v5009
        %6824 = vmatprep.subr.bf16.mxu0 0
        %6825 = vmatpush1.bf16.msra.mxu0 %v5010
        %6826 = vmatprep.subr.bf16.mxu0 0
        %6827 = vmatpush1.bf16.msra.mxu0 %v5011
        %6828 = vmatprep.mubr.bf16.mxu0 %v1859
        %6829 = vmatmul.mubr.bf16.gmra.mrb[0].mxu0 %v1857
        %v6830 = vpop.f32.mrb[0].mxu0
        %v6831 = vadd.f32 %v6791, %v6830
        %v6832 = vpop.f32.mrb[0].mxu0
        %v6833 = vpop.f32.mrb[0].mxu0
        %v6834 = vpop.f32.mrb[0].mxu0
        %6835 = vdwg.mxu0
        %6836 = vmatprep.subr.bf16.mxu0 0
        %6837 = vmatpush1.bf16.msra.mxu0 %v5012
        %6838 = vmatprep.subr.bf16.mxu0 0
        %6839 = vmatpush1.bf16.msra.mxu0 %v5013
        %6840 = vmatprep.subr.bf16.mxu0 0
        %6841 = vmatpush1.bf16.msra.mxu0 %v5014
        %6842 = vmatprep.subr.bf16.mxu0 0
        %6843 = vmatpush1.bf16.msra.mxu0 %v5015
        %6844 = vmatprep.subr.bf16.mxu0 0
        %6845 = vmatpush1.bf16.msra.mxu0 %v5016
        %6846 = vmatprep.subr.bf16.mxu0 0
        %6847 = vmatpush1.bf16.msra.mxu0 %v5017
        %6848 = vmatprep.subr.bf16.mxu0 0
        %6849 = vmatpush1.bf16.msra.mxu0 %v5018
        %6850 = vmatprep.subr.bf16.mxu0 0
        %6851 = vmatpush1.bf16.msra.mxu0 %v5019
        %6852 = vmatprep.subr.bf16.mxu0 0
        %6853 = vmatpush1.bf16.msra.mxu0 %v5020
        %6854 = vmatprep.subr.bf16.mxu0 0
        %6855 = vmatpush1.bf16.msra.mxu0 %v5021
        %6856 = vmatprep.subr.bf16.mxu0 0
        %6857 = vmatpush1.bf16.msra.mxu0 %v5022
        %6858 = vmatprep.subr.bf16.mxu0 0
        %6859 = vmatpush1.bf16.msra.mxu0 %v5023
        %6860 = vmatprep.subr.bf16.mxu0 0
        %6861 = vmatpush1.bf16.msra.mxu0 %v5024
        %6862 = vmatprep.subr.bf16.mxu0 0
        %6863 = vmatpush1.bf16.msra.mxu0 %v5025
        %6864 = vmatprep.subr.bf16.mxu0 0
        %6865 = vmatpush1.bf16.msra.mxu0 %v5026
        %6866 = vmatprep.subr.bf16.mxu0 0
        %6867 = vmatpush1.bf16.msra.mxu0 %v5027
        %6868 = vmatprep.mubr.bf16.mxu0 %v1897
        %6869 = vmatmul.mubr.bf16.gmra.mrb[0].mxu0 %v1883
        %v6870 = vpop.f32.mrb[0].mxu0
        %v6871 = vadd.f32 %v6831, %v6870
        %v6872 = vpop.f32.mrb[0].mxu0
        %v6873 = vpop.f32.mrb[0].mxu0
        %v6874 = vpop.f32.mrb[0].mxu0
        %6875 = vdwg.mxu0
        %6876 = vmatprep.subr.bf16.mxu0 0
        %6877 = vmatpush1.bf16.msra.mxu0 %v5028
        %6878 = vmatprep.subr.bf16.mxu0 0
        %6879 = vmatpush1.bf16.msra.mxu0 %v5029
        %6880 = vmatprep.subr.bf16.mxu0 0
        %6881 = vmatpush1.bf16.msra.mxu0 %v5030
        %6882 = vmatprep.subr.bf16.mxu0 0
        %6883 = vmatpush1.bf16.msra.mxu0 %v5031
        %6884 = vmatprep.subr.bf16.mxu0 0
        %6885 = vmatpush1.bf16.msra.mxu0 %v5032
        %6886 = vmatprep.subr.bf16.mxu0 0
        %6887 = vmatpush1.bf16.msra.mxu0 %v5033
        %6888 = vmatprep.subr.bf16.mxu0 0
        %6889 = vmatpush1.bf16.msra.mxu0 %v5034
        %6890 = vmatprep.subr.bf16.mxu0 0
        %6891 = vmatpush1.bf16.msra.mxu0 %v5035
        %6892 = vmatprep.subr.bf16.mxu0 0
        %6893 = vmatpush1.bf16.msra.mxu0 %v5036
        %6894 = vmatprep.subr.bf16.mxu0 0
        %6895 = vmatpush1.bf16.msra.mxu0 %v5037
        %6896 = vmatprep.subr.bf16.mxu0 0
        %6897 = vmatpush1.bf16.msra.mxu0 %v5038
        %6898 = vmatprep.subr.bf16.mxu0 0
        %6899 = vmatpush1.bf16.msra.mxu0 %v5039
        %6900 = vmatprep.subr.bf16.mxu0 0
        %6901 = vmatpush1.bf16.msra.mxu0 %v5040
        %6902 = vmatprep.subr.bf16.mxu0 0
        %6903 = vmatpush1.bf16.msra.mxu0 %v5041
        %6904 = vmatprep.subr.bf16.mxu0 0
        %6905 = vmatpush1.bf16.msra.mxu0 %v5042
        %6906 = vmatprep.subr.bf16.mxu0 0
        %6907 = vmatpush1.bf16.msra.mxu0 %v5043
        %6908 = vmatprep.mubr.bf16.mxu0 %v1907
        %6909 = vmatmul.mubr.bf16.gmra.mrb[0].mxu0 %v1905
        %v6910 = vpop.f32.mrb[0].mxu0
        %v6911 = vadd.f32 %v6871, %v6910
        %v6912 = vpop.f32.mrb[0].mxu0
        %v6913 = vpop.f32.mrb[0].mxu0
        %v6914 = vpop.f32.mrb[0].mxu0
        %6915 = vdwg.mxu0
        %6916 = vmatprep.subr.bf16.mxu0 0
        %6917 = vmatpush1.bf16.msra.mxu0 %v5044
        %6918 = vmatprep.subr.bf16.mxu0 0
        %6919 = vmatpush1.bf16.msra.mxu0 %v5045
        %6920 = vmatprep.subr.bf16.mxu0 0
        %6921 = vmatpush1.bf16.msra.mxu0 %v5046
        %6922 = vmatprep.subr.bf16.mxu0 0
        %6923 = vmatpush1.bf16.msra.mxu0 %v5047
        %6924 = vmatprep.subr.bf16.mxu0 0
        %6925 = vmatpush1.bf16.msra.mxu0 %v5048
        %6926 = vmatprep.subr.bf16.mxu0 0
        %6927 = vmatpush1.bf16.msra.mxu0 %v5049
        %6928 = vmatprep.subr.bf16.mxu0 0
        %6929 = vmatpush1.bf16.msra.mxu0 %v5050
        %6930 = vmatprep.subr.bf16.mxu0 0
        %6931 = vmatpush1.bf16.msra.mxu0 %v5051
        %6932 = vmatprep.subr.bf16.mxu0 0
        %6933 = vmatpush1.bf16.msra.mxu0 %v5052
        %6934 = vmatprep.subr.bf16.mxu0 0
        %6935 = vmatpush1.bf16.msra.mxu0 %v5053
        %6936 = vmatprep.subr.bf16.mxu0 0
        %6937 = vmatpush1.bf16.msra.mxu0 %v5054
        %6938 = vmatprep.subr.bf16.mxu0 0
        %6939 = vmatpush1.bf16.msra.mxu0 %v5055
        %6940 = vmatprep.subr.bf16.mxu0 0
        %6941 = vmatpush1.bf16.msra.mxu0 %v5056
        %6942 = vmatprep.subr.bf16.mxu0 0
        %6943 = vmatpush1.bf16.msra.mxu0 %v5057
        %6944 = vmatprep.subr.bf16.mxu0 0
        %6945 = vmatpush1.bf16.msra.mxu0 %v5058
        %6946 = vmatprep.subr.bf16.mxu0 0
        %6947 = vmatpush1.bf16.msra.mxu0 %v5059
        %6948 = vmatprep.mubr.bf16.mxu0 %v1904
        %6949 = vmatmul.mubr.bf16.gmra.mrb[0].mxu0 %v1890
        %v6950 = vpop.f32.mrb[0].mxu0
        %v6951 = vadd.f32 %v6911, %v6950
        %v6952 = vpop.f32.mrb[0].mxu0
        %v6953 = vpop.f32.mrb[0].mxu0
        %v6954 = vpop.f32.mrb[0].mxu0
        %6955 = vdwg.mxu0
        %6956 = vmatprep.subr.bf16.mxu0 0
        %6957 = vmatpush1.bf16.msra.mxu0 %v5060
        %6958 = vmatprep.subr.bf16.mxu0 0
        %6959 = vmatpush1.bf16.msra.mxu0 %v5061
        %6960 = vmatprep.subr.bf16.mxu0 0
        %6961 = vmatpush1.bf16.msra.mxu0 %v5062
        %6962 = vmatprep.subr.bf16.mxu0 0
        %6963 = vmatpush1.bf16.msra.mxu0 %v5063
        %6964 = vmatprep.subr.bf16.mxu0 0
        %6965 = vmatpush1.bf16.msra.mxu0 %v5064
        %6966 = vmatprep.subr.bf16.mxu0 0
        %6967 = vmatpush1.bf16.msra.mxu0 %v5065
        %6968 = vmatprep.subr.bf16.mxu0 0
        %6969 = vmatpush1.bf16.msra.mxu0 %v5066
        %6970 = vmatprep.subr.bf16.mxu0 0
        %6971 = vmatpush1.bf16.msra.mxu0 %v5067
        %6972 = vmatprep.subr.bf16.mxu0 0
        %6973 = vmatpush1.bf16.msra.mxu0 %v5068
        %6974 = vmatprep.subr.bf16.mxu0 0
        %6975 = vmatpush1.bf16.msra.mxu0 %v5069
        %6976 = vmatprep.subr.bf16.mxu0 0
        %6977 = vmatpush1.bf16.msra.mxu0 %v5070
        %6978 = vmatprep.subr.bf16.mxu0 0
        %6979 = vmatpush1.bf16.msra.mxu0 %v5071
        %6980 = vmatprep.subr.bf16.mxu0 0
        %6981 = vmatpush1.bf16.msra.mxu0 %v5072
        %6982 = vmatprep.subr.bf16.mxu0 0
        %6983 = vmatpush1.bf16.msra.mxu0 %v5073
        %6984 = vmatprep.subr.bf16.mxu0 0
        %6985 = vmatpush1.bf16.msra.mxu0 %v5074
        %6986 = vmatprep.subr.bf16.mxu0 0
        %6987 = vmatpush1.bf16.msra.mxu0 %v5075
        %6988 = vmatprep.mubr.bf16.mxu0 %v1908
        %6989 = vmatmul.mubr.bf16.gmra.mrb[0].mxu0 %v1906
        %v6990 = vpop.f32.mrb[0].mxu0
        %v6991 = vadd.f32 %v6951, %v6990
        %v6992 = vpop.f32.mrb[0].mxu0
        %v6993 = vpop.f32.mrb[0].mxu0
        %v6994 = vpop.f32.mrb[0].mxu0
        %6995 = vdwg.mxu0
        %6996 = vmatprep.subr.bf16.mxu0 0
        %6997 = vmatpush1.bf16.msra.mxu0 %v5076
        %6998 = vmatprep.subr.bf16.mxu0 0
        %6999 = vmatpush1.bf16.msra.mxu0 %v5077
        %7000 = vmatprep.subr.bf16.mxu0 0
        %7001 = vmatpush1.bf16.msra.mxu0 %v5078
        %7002 = vmatprep.subr.bf16.mxu0 0
        %7003 = vmatpush1.bf16.msra.mxu0 %v5079
        %7004 = vmatprep.subr.bf16.mxu0 0
        %7005 = vmatpush1.bf16.msra.mxu0 %v5080
        %7006 = vmatprep.subr.bf16.mxu0 0
        %7007 = vmatpush1.bf16.msra.mxu0 %v5081
        %7008 = vmatprep.subr.bf16.mxu0 0
        %7009 = vmatpush1.bf16.msra.mxu0 %v5082
        %7010 = vmatprep.subr.bf16.mxu0 0
        %7011 = vmatpush1.bf16.msra.mxu0 %v5083
        %7012 = vmatprep.subr.bf16.mxu0 0
        %7013 = vmatpush1.bf16.msra.mxu0 %v5084
        %7014 = vmatprep.subr.bf16.mxu0 0
        %7015 = vmatpush1.bf16.msra.mxu0 %v5085
        %7016 = vmatprep.subr.bf16.mxu0 0
        %7017 = vmatpush1.bf16.msra.mxu0 %v5086
        %7018 = vmatprep.subr.bf16.mxu0 0
        %7019 = vmatpush1.bf16.msra.mxu0 %v5087
        %7020 = vmatprep.subr.bf16.mxu0 0
        %7021 = vmatpush1.bf16.msra.mxu0 %v5088
        %7022 = vmatprep.subr.bf16.mxu0 0
        %7023 = vmatpush1.bf16.msra.mxu0 %v5089
        %7024 = vmatprep.subr.bf16.mxu0 0
        %7025 = vmatpush1.bf16.msra.mxu0 %v5090
        %7026 = vmatprep.subr.bf16.mxu0 0
        %7027 = vmatpush1.bf16.msra.mxu0 %v5091
        %7028 = vmatprep.mubr.bf16.mxu0 %v1946
        %7029 = vmatmul.mubr.bf16.gmra.mrb[0].mxu0 %v1932
        %v7030 = vpop.f32.mrb[0].mxu0
        %v7031 = vadd.f32 %v6991, %v7030
        %v7032 = vpop.f32.mrb[0].mxu0
        %v7033 = vpop.f32.mrb[0].mxu0
        %v7034 = vpop.f32.mrb[0].mxu0
        %7035 = vdwg.mxu0
        %7036 = vmatprep.subr.bf16.mxu0 0
        %7037 = vmatpush1.bf16.msra.mxu0 %v5092
        %7038 = vmatprep.subr.bf16.mxu0 0
        %7039 = vmatpush1.bf16.msra.mxu0 %v5093
        %7040 = vmatprep.subr.bf16.mxu0 0
        %7041 = vmatpush1.bf16.msra.mxu0 %v5094
        %7042 = vmatprep.subr.bf16.mxu0 0
        %7043 = vmatpush1.bf16.msra.mxu0 %v5095
        %7044 = vmatprep.subr.bf16.mxu0 0
        %7045 = vmatpush1.bf16.msra.mxu0 %v5096
        %7046 = vmatprep.subr.bf16.mxu0 0
        %7047 = vmatpush1.bf16.msra.mxu0 %v5097
        %7048 = vmatprep.subr.bf16.mxu0 0
        %7049 = vmatpush1.bf16.msra.mxu0 %v5098
        %7050 = vmatprep.subr.bf16.mxu0 0
        %7051 = vmatpush1.bf16.msra.mxu0 %v5099
        %7052 = vmatprep.subr.bf16.mxu0 0
        %7053 = vmatpush1.bf16.msra.mxu0 %v5100
        %7054 = vmatprep.subr.bf16.mxu0 0
        %7055 = vmatpush1.bf16.msra.mxu0 %v5101
        %7056 = vmatprep.subr.bf16.mxu0 0
        %7057 = vmatpush1.bf16.msra.mxu0 %v5102
        %7058 = vmatprep.subr.bf16.mxu0 0
        %7059 = vmatpush1.bf16.msra.mxu0 %v5103
        %7060 = vmatprep.subr.bf16.mxu0 0
        %7061 = vmatpush1.bf16.msra.mxu0 %v5104
        %7062 = vmatprep.subr.bf16.mxu0 0
        %7063 = vmatpush1.bf16.msra.mxu0 %v5105
        %7064 = vmatprep.subr.bf16.mxu0 0
        %7065 = vmatpush1.bf16.msra.mxu0 %v5106
        %7066 = vmatprep.subr.bf16.mxu0 0
        %7067 = vmatpush1.bf16.msra.mxu0 %v5107
        %7068 = vmatprep.mubr.bf16.mxu0 %v1956
        %7069 = vmatmul.mubr.bf16.gmra.mrb[0].mxu0 %v1954
        %v7070 = vpop.f32.mrb[0].mxu0
        %v7071 = vadd.f32 %v7031, %v7070
        %v7072 = vpop.f32.mrb[0].mxu0
        %v7073 = vpop.f32.mrb[0].mxu0
        %v7074 = vpop.f32.mrb[0].mxu0
        %7075 = vdwg.mxu0
        %7076 = vmatprep.subr.bf16.mxu0 0
        %7077 = vmatpush1.bf16.msra.mxu0 %v5108
        %7078 = vmatprep.subr.bf16.mxu0 0
        %7079 = vmatpush1.bf16.msra.mxu0 %v5109
        %7080 = vmatprep.subr.bf16.mxu0 0
        %7081 = vmatpush1.bf16.msra.mxu0 %v5110
        %7082 = vmatprep.subr.bf16.mxu0 0
        %7083 = vmatpush1.bf16.msra.mxu0 %v5111
        %7084 = vmatprep.subr.bf16.mxu0 0
        %7085 = vmatpush1.bf16.msra.mxu0 %v5112
        %7086 = vmatprep.subr.bf16.mxu0 0
        %7087 = vmatpush1.bf16.msra.mxu0 %v5113
        %7088 = vmatprep.subr.bf16.mxu0 0
        %7089 = vmatpush1.bf16.msra.mxu0 %v5114
        %7090 = vmatprep.subr.bf16.mxu0 0
        %7091 = vmatpush1.bf16.msra.mxu0 %v5115
        %7092 = vmatprep.subr.bf16.mxu0 0
        %7093 = vmatpush1.bf16.msra.mxu0 %v5116
        %7094 = vmatprep.subr.bf16.mxu0 0
        %7095 = vmatpush1.bf16.msra.mxu0 %v5117
        %7096 = vmatprep.subr.bf16.mxu0 0
        %7097 = vmatpush1.bf16.msra.mxu0 %v5118
        %7098 = vmatprep.subr.bf16.mxu0 0
        %7099 = vmatpush1.bf16.msra.mxu0 %v5119
        %7100 = vmatprep.subr.bf16.mxu0 0
        %7101 = vmatpush1.bf16.msra.mxu0 %v5120
        %7102 = vmatprep.subr.bf16.mxu0 0
        %7103 = vmatpush1.bf16.msra.mxu0 %v5121
        %7104 = vmatprep.subr.bf16.mxu0 0
        %7105 = vmatpush1.bf16.msra.mxu0 %v5122
        %7106 = vmatprep.subr.bf16.mxu0 0
        %7107 = vmatpush1.bf16.msra.mxu0 %v5123
        %7108 = vmatprep.mubr.bf16.mxu0 %v1953
        %7109 = vmatmul.mubr.bf16.gmra.mrb[0].mxu0 %v1939
        %v7110 = vpop.f32.mrb[0].mxu0
        %v7111 = vadd.f32 %v7071, %v7110
        %v7112 = vpop.f32.mrb[0].mxu0
        %v7113 = vpop.f32.mrb[0].mxu0
        %v7114 = vpop.f32.mrb[0].mxu0
        %7115 = vdwg.mxu0
        %7116 = vmatprep.subr.bf16.mxu0 0
        %7117 = vmatpush1.bf16.msra.mxu0 %v5124
        %7118 = vmatprep.subr.bf16.mxu0 0
        %7119 = vmatpush1.bf16.msra.mxu0 %v5125
        %7120 = vmatprep.subr.bf16.mxu0 0
        %7121 = vmatpush1.bf16.msra.mxu0 %v5126
        %7122 = vmatprep.subr.bf16.mxu0 0
        %7123 = vmatpush1.bf16.msra.mxu0 %v5127
        %7124 = vmatprep.subr.bf16.mxu0 0
        %7125 = vmatpush1.bf16.msra.mxu0 %v5128
        %7126 = vmatprep.subr.bf16.mxu0 0
        %7127 = vmatpush1.bf16.msra.mxu0 %v5129
        %7128 = vmatprep.subr.bf16.mxu0 0
        %7129 = vmatpush1.bf16.msra.mxu0 %v5130
        %7130 = vmatprep.subr.bf16.mxu0 0
        %7131 = vmatpush1.bf16.msra.mxu0 %v5131
        %7132 = vmatprep.subr.bf16.mxu0 0
        %7133 = vmatpush1.bf16.msra.mxu0 %v5132
        %7134 = vmatprep.subr.bf16.mxu0 0
        %7135 = vmatpush1.bf16.msra.mxu0 %v5133
        %7136 = vmatprep.subr.bf16.mxu0 0
        %7137 = vmatpush1.bf16.msra.mxu0 %v5134
        %7138 = vmatprep.subr.bf16.mxu0 0
        %7139 = vmatpush1.bf16.msra.mxu0 %v5135
        %7140 = vmatprep.subr.bf16.mxu0 0
        %7141 = vmatpush1.bf16.msra.mxu0 %v5136
        %7142 = vmatprep.subr.bf16.mxu0 0
        %7143 = vmatpush1.bf16.msra.mxu0 %v5137
        %7144 = vmatprep.subr.bf16.mxu0 0
        %7145 = vmatpush1.bf16.msra.mxu0 %v5138
        %7146 = vmatprep.subr.bf16.mxu0 0
        %7147 = vmatpush1.bf16.msra.mxu0 %v5139
        %7148 = vmatprep.mubr.bf16.mxu0 %v1957
        %7149 = vmatmul.mubr.bf16.gmra.mrb[0].mxu0 %v1955
        %v7150 = vpop.f32.mrb[0].mxu0
        %v7151 = vadd.f32 %v7111, %v7150
        %v7152 = vpop.f32.mrb[0].mxu0
        %v7153 = vpop.f32.mrb[0].mxu0
        %v7154 = vpop.f32.mrb[0].mxu0
        %7155 = vdwg.mxu0
        %7156 = vmatprep.subr.bf16.mxu0 0
        %7157 = vmatpush1.bf16.msra.mxu0 %v5140
        %7158 = vmatprep.subr.bf16.mxu0 0
        %7159 = vmatpush1.bf16.msra.mxu0 %v5141
        %7160 = vmatprep.subr.bf16.mxu0 0
        %7161 = vmatpush1.bf16.msra.mxu0 %v5142
        %7162 = vmatprep.subr.bf16.mxu0 0
        %7163 = vmatpush1.bf16.msra.mxu0 %v5143
        %7164 = vmatprep.subr.bf16.mxu0 0
        %7165 = vmatpush1.bf16.msra.mxu0 %v5144
        %7166 = vmatprep.subr.bf16.mxu0 0
        %7167 = vmatpush1.bf16.msra.mxu0 %v5145
        %7168 = vmatprep.subr.bf16.mxu0 0
        %7169 = vmatpush1.bf16.msra.mxu0 %v5146
        %7170 = vmatprep.subr.bf16.mxu0 0
        %7171 = vmatpush1.bf16.msra.mxu0 %v5147
        %7172 = vmatprep.subr.bf16.mxu0 0
        %7173 = vmatpush1.bf16.msra.mxu0 %v5148
        %7174 = vmatprep.subr.bf16.mxu0 0
        %7175 = vmatpush1.bf16.msra.mxu0 %v5149
        %7176 = vmatprep.subr.bf16.mxu0 0
        %7177 = vmatpush1.bf16.msra.mxu0 %v5150
        %7178 = vmatprep.subr.bf16.mxu0 0
        %7179 = vmatpush1.bf16.msra.mxu0 %v5151
        %7180 = vmatprep.subr.bf16.mxu0 0
        %7181 = vmatpush1.bf16.msra.mxu0 %v5152
        %7182 = vmatprep.subr.bf16.mxu0 0
        %7183 = vmatpush1.bf16.msra.mxu0 %v5153
        %7184 = vmatprep.subr.bf16.mxu0 0
        %7185 = vmatpush1.bf16.msra.mxu0 %v5154
        %7186 = vmatprep.subr.bf16.mxu0 0
        %7187 = vmatpush1.bf16.msra.mxu0 %v5155
        %7188 = vmatprep.mubr.bf16.mxu0 %v1995
        %7189 = vmatmul.mubr.bf16.gmra.mrb[0].mxu0 %v1981
        %v7190 = vpop.f32.mrb[0].mxu0
        %v7191 = vadd.f32 %v7151, %v7190
        %v7192 = vpop.f32.mrb[0].mxu0
        %v7193 = vpop.f32.mrb[0].mxu0
        %v7194 = vpop.f32.mrb[0].mxu0
        %7195 = vdwg.mxu0
        %7196 = vmatprep.subr.bf16.mxu0 0
        %7197 = vmatpush1.bf16.msra.mxu0 %v5156
        %7198 = vmatprep.subr.bf16.mxu0 0
        %7199 = vmatpush1.bf16.msra.mxu0 %v5157
        %7200 = vmatprep.subr.bf16.mxu0 0
        %7201 = vmatpush1.bf16.msra.mxu0 %v5158
        %7202 = vmatprep.subr.bf16.mxu0 0
        %7203 = vmatpush1.bf16.msra.mxu0 %v5159
        %7204 = vmatprep.subr.bf16.mxu0 0
        %7205 = vmatpush1.bf16.msra.mxu0 %v5160
        %7206 = vmatprep.subr.bf16.mxu0 0
        %7207 = vmatpush1.bf16.msra.mxu0 %v5161
        %7208 = vmatprep.subr.bf16.mxu0 0
        %7209 = vmatpush1.bf16.msra.mxu0 %v5162
        %7210 = vmatprep.subr.bf16.mxu0 0
        %7211 = vmatpush1.bf16.msra.mxu0 %v5163
        %7212 = vmatprep.subr.bf16.mxu0 0
        %7213 = vmatpush1.bf16.msra.mxu0 %v5164
        %7214 = vmatprep.subr.bf16.mxu0 0
        %7215 = vmatpush1.bf16.msra.mxu0 %v5165
        %7216 = vmatprep.subr.bf16.mxu0 0
        %7217 = vmatpush1.bf16.msra.mxu0 %v5166
        %7218 = vmatprep.subr.bf16.mxu0 0
        %7219 = vmatpush1.bf16.msra.mxu0 %v5167
        %7220 = vmatprep.subr.bf16.mxu0 0
        %7221 = vmatpush1.bf16.msra.mxu0 %v5168
        %7222 = vmatprep.subr.bf16.mxu0 0
        %7223 = vmatpush1.bf16.msra.mxu0 %v5169
        %7224 = vmatprep.subr.bf16.mxu0 0
        %7225 = vmatpush1.bf16.msra.mxu0 %v5170
        %7226 = vmatprep.subr.bf16.mxu0 0
        %7227 = vmatpush1.bf16.msra.mxu0 %v5171
        %7228 = vmatprep.mubr.bf16.mxu0 %v2005
        %7229 = vmatmul.mubr.bf16.gmra.mrb[0].mxu0 %v2003
        %v7230 = vpop.f32.mrb[0].mxu0
        %v7231 = vadd.f32 %v7191, %v7230
        %v7232 = vpop.f32.mrb[0].mxu0
        %v7233 = vpop.f32.mrb[0].mxu0
        %v7234 = vpop.f32.mrb[0].mxu0
        %7235 = vdwg.mxu0
        %7236 = vmatprep.subr.bf16.mxu0 0
        %7237 = vmatpush1.bf16.msra.mxu0 %v5172
        %7238 = vmatprep.subr.bf16.mxu0 0
        %7239 = vmatpush1.bf16.msra.mxu0 %v5173
        %7240 = vmatprep.subr.bf16.mxu0 0
        %7241 = vmatpush1.bf16.msra.mxu0 %v5174
        %7242 = vmatprep.subr.bf16.mxu0 0
        %7243 = vmatpush1.bf16.msra.mxu0 %v5175
        %7244 = vmatprep.subr.bf16.mxu0 0
        %7245 = vmatpush1.bf16.msra.mxu0 %v5176
        %7246 = vmatprep.subr.bf16.mxu0 0
        %7247 = vmatpush1.bf16.msra.mxu0 %v5177
        %7248 = vmatprep.subr.bf16.mxu0 0
        %7249 = vmatpush1.bf16.msra.mxu0 %v5178
        %7250 = vmatprep.subr.bf16.mxu0 0
        %7251 = vmatpush1.bf16.msra.mxu0 %v5179
        %7252 = vmatprep.subr.bf16.mxu0 0
        %7253 = vmatpush1.bf16.msra.mxu0 %v5180
        %7254 = vmatprep.subr.bf16.mxu0 0
        %7255 = vmatpush1.bf16.msra.mxu0 %v5181
        %7256 = vmatprep.subr.bf16.mxu0 0
        %7257 = vmatpush1.bf16.msra.mxu0 %v5182
        %7258 = vmatprep.subr.bf16.mxu0 0
        %7259 = vmatpush1.bf16.msra.mxu0 %v5183
        %7260 = vmatprep.subr.bf16.mxu0 0
        %7261 = vmatpush1.bf16.msra.mxu0 %v5184
        %7262 = vmatprep.subr.bf16.mxu0 0
        %7263 = vmatpush1.bf16.msra.mxu0 %v5185
        %7264 = vmatprep.subr.bf16.mxu0 0
        %7265 = vmatpush1.bf16.msra.mxu0 %v5186
        %7266 = vmatprep.subr.bf16.mxu0 0
        %7267 = vmatpush1.bf16.msra.mxu0 %v5187
        %7268 = vmatprep.mubr.bf16.mxu0 %v2002
        %7269 = vmatmul.mubr.bf16.gmra.mrb[0].mxu0 %v1988
        %v7270 = vpop.f32.mrb[0].mxu0
        %v7271 = vadd.f32 %v7231, %v7270
        %v7272 = vpop.f32.mrb[0].mxu0
        %v7273 = vpop.f32.mrb[0].mxu0
        %v7274 = vpop.f32.mrb[0].mxu0
        %7275 = vdwg.mxu0
        %7276 = vmatprep.subr.bf16.mxu0 0
        %7277 = vmatpush1.bf16.msra.mxu0 %v5188
        %7278 = vmatprep.subr.bf16.mxu0 0
        %7279 = vmatpush1.bf16.msra.mxu0 %v5189
        %7280 = vmatprep.subr.bf16.mxu0 0
        %7281 = vmatpush1.bf16.msra.mxu0 %v5190
        %7282 = vmatprep.subr.bf16.mxu0 0
        %7283 = vmatpush1.bf16.msra.mxu0 %v5191
        %7284 = vmatprep.subr.bf16.mxu0 0
        %7285 = vmatpush1.bf16.msra.mxu0 %v5192
        %7286 = vmatprep.subr.bf16.mxu0 0
        %7287 = vmatpush1.bf16.msra.mxu0 %v5193
        %7288 = vmatprep.subr.bf16.mxu0 0
        %7289 = vmatpush1.bf16.msra.mxu0 %v5194
        %7290 = vmatprep.subr.bf16.mxu0 0
        %7291 = vmatpush1.bf16.msra.mxu0 %v5195
        %7292 = vmatprep.subr.bf16.mxu0 0
        %7293 = vmatpush1.bf16.msra.mxu0 %v5196
        %7294 = vmatprep.subr.bf16.mxu0 0
        %7295 = vmatpush1.bf16.msra.mxu0 %v5197
        %7296 = vmatprep.subr.bf16.mxu0 0
        %7297 = vmatpush1.bf16.msra.mxu0 %v5198
        %7298 = vmatprep.subr.bf16.mxu0 0
        %7299 = vmatpush1.bf16.msra.mxu0 %v5199
        %7300 = vmatprep.subr.bf16.mxu0 0
        %7301 = vmatpush1.bf16.msra.mxu0 %v5200
        %7302 = vmatprep.subr.bf16.mxu0 0
        %7303 = vmatpush1.bf16.msra.mxu0 %v5201
        %7304 = vmatprep.subr.bf16.mxu0 0
        %7305 = vmatpush1.bf16.msra.mxu0 %v5202
        %7306 = vmatprep.subr.bf16.mxu0 0
        %7307 = vmatpush1.bf16.msra.mxu0 %v5203
        %7308 = vmatprep.mubr.bf16.mxu0 %v2006
        %7309 = vmatmul.mubr.bf16.gmra.mrb[0].mxu0 %v2004
        %v7310 = vpop.f32.mrb[0].mxu0
        %v7311 = vadd.f32 %v7271, %v7310
        %v7312 = vpop.f32.mrb[0].mxu0
        %v7313 = vpop.f32.mrb[0].mxu0
        %v7314 = vpop.f32.mrb[0].mxu0
        %7315 = vdwg.mxu0
        %7316 = vmatprep.subr.bf16.mxu0 0
        %7317 = vmatpush1.bf16.msra.mxu0 %v5204
        %7318 = vmatprep.subr.bf16.mxu0 0
        %7319 = vmatpush1.bf16.msra.mxu0 %v5205
        %7320 = vmatprep.subr.bf16.mxu0 0
        %7321 = vmatpush1.bf16.msra.mxu0 %v5206
        %7322 = vmatprep.subr.bf16.mxu0 0
        %7323 = vmatpush1.bf16.msra.mxu0 %v5207
        %7324 = vmatprep.subr.bf16.mxu0 0
        %7325 = vmatpush1.bf16.msra.mxu0 %v5208
        %7326 = vmatprep.subr.bf16.mxu0 0
        %7327 = vmatpush1.bf16.msra.mxu0 %v5209
        %7328 = vmatprep.subr.bf16.mxu0 0
        %7329 = vmatpush1.bf16.msra.mxu0 %v5210
        %7330 = vmatprep.subr.bf16.mxu0 0
        %7331 = vmatpush1.bf16.msra.mxu0 %v5211
        %7332 = vmatprep.subr.bf16.mxu0 0
        %7333 = vmatpush1.bf16.msra.mxu0 %v5212
        %7334 = vmatprep.subr.bf16.mxu0 0
        %7335 = vmatpush1.bf16.msra.mxu0 %v5213
        %7336 = vmatprep.subr.bf16.mxu0 0
        %7337 = vmatpush1.bf16.msra.mxu0 %v5214
        %7338 = vmatprep.subr.bf16.mxu0 0
        %7339 = vmatpush1.bf16.msra.mxu0 %v5215
        %7340 = vmatprep.subr.bf16.mxu0 0
        %7341 = vmatpush1.bf16.msra.mxu0 %v5216
        %7342 = vmatprep.subr.bf16.mxu0 0
        %7343 = vmatpush1.bf16.msra.mxu0 %v5217
        %7344 = vmatprep.subr.bf16.mxu0 0
        %7345 = vmatpush1.bf16.msra.mxu0 %v5218
        %7346 = vmatprep.subr.bf16.mxu0 0
        %7347 = vmatpush1.bf16.msra.mxu0 %v5219
        %7348 = vmatprep.mubr.bf16.mxu0 %v2044
        %7349 = vmatmul.mubr.bf16.gmra.mrb[0].mxu0 %v2030
        %v7350 = vpop.f32.mrb[0].mxu0
        %v7351 = vadd.f32 %v7311, %v7350
        %v7352 = vpop.f32.mrb[0].mxu0
        %v7353 = vpop.f32.mrb[0].mxu0
        %v7354 = vpop.f32.mrb[0].mxu0
        %7355 = vdwg.mxu0
        %7356 = vmatprep.subr.bf16.mxu0 0
        %7357 = vmatpush1.bf16.msra.mxu0 %v5220
        %7358 = vmatprep.subr.bf16.mxu0 0
        %7359 = vmatpush1.bf16.msra.mxu0 %v5221
        %7360 = vmatprep.subr.bf16.mxu0 0
        %7361 = vmatpush1.bf16.msra.mxu0 %v5222
        %7362 = vmatprep.subr.bf16.mxu0 0
        %7363 = vmatpush1.bf16.msra.mxu0 %v5223
        %7364 = vmatprep.subr.bf16.mxu0 0
        %7365 = vmatpush1.bf16.msra.mxu0 %v5224
        %7366 = vmatprep.subr.bf16.mxu0 0
        %7367 = vmatpush1.bf16.msra.mxu0 %v5225
        %7368 = vmatprep.subr.bf16.mxu0 0
        %7369 = vmatpush1.bf16.msra.mxu0 %v5226
        %7370 = vmatprep.subr.bf16.mxu0 0
        %7371 = vmatpush1.bf16.msra.mxu0 %v5227
        %7372 = vmatprep.subr.bf16.mxu0 0
        %7373 = vmatpush1.bf16.msra.mxu0 %v5228
        %7374 = vmatprep.subr.bf16.mxu0 0
        %7375 = vmatpush1.bf16.msra.mxu0 %v5229
        %7376 = vmatprep.subr.bf16.mxu0 0
        %7377 = vmatpush1.bf16.msra.mxu0 %v5230
        %7378 = vmatprep.subr.bf16.mxu0 0
        %7379 = vmatpush1.bf16.msra.mxu0 %v5231
        %7380 = vmatprep.subr.bf16.mxu0 0
        %7381 = vmatpush1.bf16.msra.mxu0 %v5232
        %7382 = vmatprep.subr.bf16.mxu0 0
        %7383 = vmatpush1.bf16.msra.mxu0 %v5233
        %7384 = vmatprep.subr.bf16.mxu0 0
        %7385 = vmatpush1.bf16.msra.mxu0 %v5234
        %7386 = vmatprep.subr.bf16.mxu0 0
        %7387 = vmatpush1.bf16.msra.mxu0 %v5235
        %7388 = vmatprep.mubr.bf16.mxu0 %v2053
        %7389 = vmatmul.mubr.bf16.gmra.mrb[0].mxu0 %v2052
        %v7390 = vpop.f32.mrb[0].mxu0
        %v7391 = vadd.f32 %v7351, %v7390
        %v7392 = vpop.f32.mrb[0].mxu0
        %v7393 = vpop.f32.mrb[0].mxu0
        %v7394 = vpop.f32.mrb[0].mxu0
        %7395 = vdwg.mxu0
        %7396 = vmatprep.subr.bf16.mxu0 0
        %7397 = vmatpush1.bf16.msra.mxu0 %v5236
        %7398 = vmatprep.subr.bf16.mxu0 0
        %7399 = vmatpush1.bf16.msra.mxu0 %v5237
        %7400 = vmatprep.subr.bf16.mxu0 0
        %7401 = vmatpush1.bf16.msra.mxu0 %v5238
        %7402 = vmatprep.subr.bf16.mxu0 0
        %7403 = vmatpush1.bf16.msra.mxu0 %v5239
        %7404 = vmatprep.subr.bf16.mxu0 0
        %7405 = vmatpush1.bf16.msra.mxu0 %v5240
        %7406 = vmatprep.subr.bf16.mxu0 0
        %7407 = vmatpush1.bf16.msra.mxu0 %v5241
        %7408 = vmatprep.subr.bf16.mxu0 0
        %7409 = vmatpush1.bf16.msra.mxu0 %v5242
        %7410 = vmatprep.subr.bf16.mxu0 0
        %7411 = vmatpush1.bf16.msra.mxu0 %v5243
        %7412 = vmatprep.subr.bf16.mxu0 0
        %7413 = vmatpush1.bf16.msra.mxu0 %v5244
        %7414 = vmatprep.subr.bf16.mxu0 0
        %7415 = vmatpush1.bf16.msra.mxu0 %v5245
        %7416 = vmatprep.subr.bf16.mxu0 0
        %7417 = vmatpush1.bf16.msra.mxu0 %v5246
        %7418 = vmatprep.subr.bf16.mxu0 0
        %7419 = vmatpush1.bf16.msra.mxu0 %v5247
        %7420 = vmatprep.subr.bf16.mxu0 0
        %7421 = vmatpush1.bf16.msra.mxu0 %v5248
        %7422 = vmatprep.subr.bf16.mxu0 0
        %7423 = vmatpush1.bf16.msra.mxu0 %v5249
        %7424 = vmatprep.subr.bf16.mxu0 0
        %7425 = vmatpush1.bf16.msra.mxu0 %v5250
        %7426 = vmatprep.subr.bf16.mxu0 0
        %7427 = vmatpush1.bf16.msra.mxu0 %v5251
        %7428 = vmatprep.mubr.bf16.mxu0 %v2051
        %7429 = vmatmul.mubr.bf16.gmra.mrb[0].mxu0 %v2037
        %v7430 = vpop.f32.mrb[0].mxu0
        %v7431 = vadd.f32 %v7391, %v7430
        %v7432 = vpop.f32.mrb[0].mxu0
        %v7433 = vpop.f32.mrb[0].mxu0
        %v7434 = vpop.f32.mrb[0].mxu0
        %7435 = vdwg.mxu0
        %v7436 = vadd.f32 %v297, %v7431
        %7437 = vst [vmem:[#allocation2] sm:$0x3] %v7436
        %p7438 = scmp.eq.s32.totalorder %s22, 1
        // Predicated region
        $region61: #{dqn_cnn_forward.3} parent=39 // pred_check
          %p7439 = pneg %p7438
        $region62: #{dqn_cnn_forward.3} parent=39 // pred_check_branch
          %7441 = sbr.rel (%p7439) target = $region64
        $region63: #{dqn_cnn_forward.3} parent=39 // pred_region
          %v7442 = vld [vmem:[#allocation2] sm:$0x3]
          %v7443 = vld [vmem:[#allocation6] sm:$0x1]
          %v7445 = vlaneseq
          %v7446 = vshrl.u32 %v7445, 7
          %v7447 = vsub.s32 0, %v7446
          %v7448 = vrot.slane %v7443, %v7447
          %v7450 = vadd.f32 %v7442, %v7448
          %v7451 = vmax.f32 %v7450, 0.0
          %v7452 = vpack.c.bf16 %v7451, %v7451
          %v7453 = vld [vmem:[#allocation8] sm:$0xf]
          %v7454 = vld [vmem:[#allocation8 + $0x4] sm:$0xf]
          %v7455 = vld [vmem:[#allocation8 + $0x8] sm:$0xf]
          %v7456 = vld [vmem:[#allocation8 + $0xc] sm:$0xf]
          %v7457 = vld [vmem:[#allocation8 + $0x10] sm:$0xf]
          %v7458 = vld [vmem:[#allocation8 + $0x14] sm:$0xf]
          %v7459 = vld [vmem:[#allocation8 + $0x18] sm:$0xf]
          %v7460 = vld [vmem:[#allocation8 + $0x1c] sm:$0xf]
          %v7461 = vld [vmem:[#allocation8 + $0x20] sm:$0xf]
          %v7462 = vld [vmem:[#allocation8 + $0x24] sm:$0xf]
          %v7463 = vld [vmem:[#allocation8 + $0x28] sm:$0xf]
          %v7464 = vld [vmem:[#allocation8 + $0x2c] sm:$0xf]
          %v7465 = vld [vmem:[#allocation8 + $0x30] sm:$0xf]
          %v7466 = vld [vmem:[#allocation8 + $0x34] sm:$0xf]
          %v7467 = vld [vmem:[#allocation8 + $0x38] sm:$0xf]
          %v7468 = vld [vmem:[#allocation8 + $0x3c] sm:$0xf]
          %v7469 = vld [vmem:[#allocation9] sm:$0x1]
          %v7471 = vlaneseq
          %v7472 = vshrl.u32 %v7471, 7
          %v7473 = vsub.s32 0, %v7472
          %v7474 = vrot.slane %v7469, %v7473
          %v7492 = vunpack.c.l.b16 %v7453
          %v7493 = vunpack.c.l.b16 %v7454
          %v7494 = vunpack.c.l.b16 %v7455
          %v7495 = vunpack.c.l.b16 %v7456
          %v7496 = vunpack.c.l.b16 %v7457
          %v7497 = vunpack.c.l.b16 %v7458
          %v7498 = vunpack.c.l.b16 %v7459
          %v7499 = vunpack.c.l.b16 %v7460
          %v7500 = vunpack.c.l.b16 %v7461
          %v7501 = vunpack.c.l.b16 %v7462
          %v7502 = vunpack.c.l.b16 %v7463
          %v7503 = vunpack.c.l.b16 %v7464
          %v7504 = vunpack.c.l.b16 %v7465
          %v7505 = vunpack.c.l.b16 %v7466
          %v7506 = vunpack.c.l.b16 %v7467
          %v7507 = vunpack.c.l.b16 %v7468
          %v7508 = vpack.c.b16 %v7493, %v7492
          %v7509 = vpack.c.b16 %v7495, %v7494
          %v7510 = vpack.c.b16 %v7497, %v7496
          %v7511 = vpack.c.b16 %v7499, %v7498
          %v7512 = vpack.c.b16 %v7501, %v7500
          %v7513 = vpack.c.b16 %v7503, %v7502
          %v7514 = vpack.c.b16 %v7505, %v7504
          %v7515 = vpack.c.b16 %v7507, %v7506
          %7524 = vmatprep.subr.bf16.mxu0 0
          %7525 = vmatpush1.bf16.msra.mxu0 %v7508
          %7526 = vmatprep.subr.bf16.mxu0 0
          %7527 = vmatpush1.bf16.msra.mxu0 %v7509
          %7528 = vmatprep.subr.bf16.mxu0 0
          %7529 = vmatpush1.bf16.msra.mxu0 %v7510
          %7530 = vmatprep.subr.bf16.mxu0 0
          %7531 = vmatpush1.bf16.msra.mxu0 %v7511
          %7532 = vmatprep.subr.bf16.mxu0 0
          %7533 = vmatpush1.bf16.msra.mxu0 %v7512
          %7534 = vmatprep.subr.bf16.mxu0 0
          %7535 = vmatpush1.bf16.msra.mxu0 %v7513
          %7536 = vmatprep.subr.bf16.mxu0 0
          %7537 = vmatpush1.bf16.msra.mxu0 %v7514
          %7538 = vmatprep.subr.bf16.mxu0 0
          %7539 = vmatpush1.bf16.msra.mxu0 %v7515
          %7540 = vmatprep.subr.bf16.mxu0 0
          %7541 = vmatpush1.bf16.msra.mxu0 0
          %7542 = vmatprep.subr.bf16.mxu0 0
          %7543 = vmatpush1.bf16.msra.mxu0 0
          %7544 = vmatprep.subr.bf16.mxu0 0
          %7545 = vmatpush1.bf16.msra.mxu0 0
          %7546 = vmatprep.subr.bf16.mxu0 0
          %7547 = vmatpush1.bf16.msra.mxu0 0
          %7548 = vmatprep.subr.bf16.mxu0 0
          %7549 = vmatpush1.bf16.msra.mxu0 0
          %7550 = vmatprep.subr.bf16.mxu0 0
          %7551 = vmatpush1.bf16.msra.mxu0 0
          %7552 = vmatprep.subr.bf16.mxu0 0
          %7553 = vmatpush1.bf16.msra.mxu0 0
          %7554 = vmatprep.subr.bf16.mxu0 0
          %7555 = vmatpush1.bf16.msra.mxu0 0
          %7556 = vmatprep.mubr.bf16.mxu0 0
          %7557 = vmatmul.mubr.bf16.gmra.mrb[0].mxu0 %v7452
          %v7558 = vpop.f32.mrb[0].mxu0
          %v7559 = vadd.f32 %v7474, %v7558
          %v7560 = vpop.f32.mrb[0].mxu0
          %v7561 = vpop.f32.mrb[0].mxu0
          %v7562 = vpop.f32.mrb[0].mxu0
          %7563 = vdwg.mxu0
          %7564 = vst [vmem:[#allocation11] sm:$0x3] %v7559
        $region64: #{dqn_cnn_forward.3} parent=39 // pred_fallthru
          _
        // Predicated region
        $region65: #{dqn_cnn_forward.3} parent=39 // pred_check
          %p7565 = pneg %p150
        $region66: #{dqn_cnn_forward.3} parent=39 // pred_check_branch
          %7567 = sbr.rel (%p7565) target = $region68
        $region67: #{dqn_cnn_forward.3} parent=39 // pred_region
          %s7569 = ssub.s32 32, 32
          %7570 = vsyncadd [#allocation5], %s7569
          %s7572 = sshll.u32 [#allocation11], 4
          %s7573 = int_to_ptr.vmem [resolvable:$true] %s7572
          %7575 = dma.vmem_to_hbm [thread:$0]  %s7573, 32, %s5, [#allocation5]
        $region68: #{dqn_cnn_forward.3} parent=39 // pred_fallthru
          _
        // Predicated region
        $region69: #{dqn_cnn_forward.3} parent=39 // pred_check
          %p7576 = pneg %p150
        $region70: #{dqn_cnn_forward.3} parent=39 // pred_check_branch
          %7578 = sbr.rel (%p7576) target = $region72
        $region71: #{dqn_cnn_forward.3} parent=39 // pred_region
          %7579 = dma.done [#allocation5], 32
        $region72: #{dqn_cnn_forward.3} parent=39 // pred_fallthru
          _
      $region40: #{dqn_cnn_forward.3} parent=5 // pred_fallthru
        _
      %p7580 = scmp.le.s32.totalorder 2, %s17
      // Predicated region
      $region73: #{dqn_cnn_forward.3} parent=5 // pred_check
        %p7581 = pneg %p7580
      $region74: #{dqn_cnn_forward.3} parent=5 // pred_check_branch
        %7583 = sbr.rel (%p7581) target = $region76
      $region75: #{dqn_cnn_forward.3} parent=5 // pred_region
        %s7584 = ssub.s32 %s17, 2
      $region76: #{dqn_cnn_forward.3} parent=5 // pred_fallthru
        _
    $region6: #{dqn_cnn_forward.3} parent=1 // loop_footer
      %s21 = sadd.s32 1, %s17
    $region7: #{dqn_cnn_forward.3} parent=1 // loop_footer_branch
      %16 = sbr.rel target = $region3
    $region8: #{dqn_cnn_forward.3} parent=1 // loop_exit
      _
    %7585 = vsyncpa [#allocation4], 1
    %s7586 = scalar_lea.sflag [#allocation4], 1
    %7587 = vsyncpa %s7586, 1
    %7588 = vsyncpa [#allocation7], 1
    %7589 = vsyncpa [#allocation10], 1
    %7590 = vsyncpa [#allocation5], 1
    %s7591 = scalar_lea.sflag [#allocation5], 1
    %7592 = vsyncpa %s7591, 1

</llo_original>
